<compile_context>
chip_gen: v6e
topology: v6e:2x2x1
jax: 0.10.0
libtpu: 0.0.40
codegen_flags: <defaults>
</compile_context>

<pallas_src>
import functools

import jax
import jax.numpy as jnp
import numpy as np
from jax.experimental import pallas as pl
from jax.experimental.pallas import tpu as pltpu


def _attention_pool_kernel(x_ref, pos_ref, wq_ref, wkv_ref, wc_ref,
                           hch_ref, hhc_ref, bq_ref, bkv_ref, bc_ref,
                           out_ref):
    f32 = jnp.float32
    mxu_dt = wq_ref.dtype                        # bf16 in production; f32 opt-out

    xs = x_ref[...].astype(f32)                  # (BT, HW, C) spatial tokens
    BT, HW, C = xs.shape
    L = HW + 1                                   # +1 CLS/mean token
    T = BT * L
    H = hhc_ref.shape[0]                         # num_heads
    pos = pos_ref[...].astype(f32)               # (L, C)

    # ---- fused token construction: mean (CLS) token + positional embedding ----
    cls = jnp.mean(xs, axis=1, keepdims=True)                  # (BT, 1, C)
    tok = jnp.concatenate([cls, xs], axis=1) + pos[None]       # (BT, L, C), f32
    tok2 = tok.reshape(T, C)

    # ---- projections (1/sqrt(head_dim) already folded into wq / bq) ----
    # The only query per batch element is the CLS (mean) token; reuse it
    # directly instead of gathering it back out of `tok`.
    q_in = cls.reshape(BT, C) + pos[0:1, :]                    # (BT, C)
    q = jnp.dot(q_in.astype(mxu_dt), wq_ref[...],
                preferred_element_type=f32) + bq_ref[...]      # (BT, C)

    # Fused k/v projection: ONE (T, C) @ (C, 2C) matmul with bf16 operands and
    # f32 accumulation.  This is the dominant MXU work of the kernel.
    kv = jnp.dot(tok2.astype(mxu_dt), wkv_ref[...],
                 preferred_element_type=f32) + bkv_ref[...]    # (T, 2C)
    k = kv[:, :C]
    v = kv[:, C:]

    # ---- per-head single-query scores ----
    # s[b, l, h] = sum_{c in head h} q[b, c] * k[b, l, c]
    qk = k.reshape(BT, L, C) * q[:, None, :]                   # VPU broadcast mult
    s = jnp.dot(qk.reshape(T, C).astype(mxu_dt), hch_ref[...],
                preferred_element_type=f32).reshape(BT, L, H)

    # ---- numerically-stable softmax over the L keys (all f32, exact) ----
    p = jnp.exp(s - jnp.max(s, axis=1, keepdims=True))         # (BT, L, H)
    denom = jnp.sum(p, axis=1, keepdims=True)                  # (BT, 1, H), XLU
    p = p * (1.0 / denom)                                      # exact normalisation

    # ---- context: expand head probs to channel lanes, weighted sum over L ----
    p_c = jnp.dot(p.reshape(T, H).astype(mxu_dt), hhc_ref[...],
                  preferred_element_type=f32)                  # (T, C)
    ctx = jnp.sum(p_c.reshape(BT, L, C) * v.reshape(BT, L, C), axis=1)  # (BT, C)

    # ---- output projection (c_proj) ----
    out = jnp.dot(ctx.astype(mxu_dt), wc_ref[...],
                  preferred_element_type=f32) + bc_ref[...]    # (BT, Cout)
    out_ref[...] = out.astype(out_ref.dtype)


def prepare_params(params, num_heads, compute_dtype=jnp.bfloat16):
    """One-time weight preparation (hoisted out of the per-call path).

    * transposes for the x @ W layout,
    * k/v weight fusion into a single (C, 2C) matrix,
    * folding of the 1/sqrt(head_dim) softmax scale into the q projection,
    * 0/1 head routing matrices (channel->head and head->channel),
    * cast of all MXU operands to `compute_dtype` (bf16 by default) so the
      single-buffered resident weights fit v7x's 64 MiB VMEM and the MXU runs
      at bf16 rate.  Biases / positional embedding stay f32 (applied after the
      f32-accumulated matmuls).
    """
    embed_dim = params["wq"].shape[1]
    assert embed_dim % num_heads == 0
    hd = embed_dim // num_heads
    scale = hd ** -0.5

    # 0/1 routing matrices (exact in bf16): channel c belongs to head c // hd.
    heads_of_c = np.arange(embed_dim) // hd                                  # (C,)
    head_hc = (heads_of_c[None, :] == np.arange(num_heads)[:, None])         # (H, C)
    head_hc = head_hc.astype(np.float32)

    f32 = jnp.float32
    return {
        "pos": params["pos_emb"].astype(f32),                                # (L, C)
        "wq": (params["wq"].T * scale).astype(compute_dtype),                # (C, C)
        "bq": (params["bq"] * scale).reshape(1, -1).astype(f32),             # (1, C)
        "wkv": jnp.concatenate([params["wk"].T, params["wv"].T],
                               axis=1).astype(compute_dtype),                # (C, 2C)
        "bkv": jnp.concatenate([params["bk"], params["bv"]]
                               ).reshape(1, -1).astype(f32),                 # (1, 2C)
        "wc": params["wc"].T.astype(compute_dtype),                          # (C, Cout)
        "bc": params["bc"].reshape(1, -1).astype(f32),                       # (1, Cout)
        "head_ch": jnp.asarray(head_hc.T, compute_dtype),                    # (C, H)
        "head_hc": jnp.asarray(head_hc, compute_dtype),                      # (H, C)
    }


@functools.partial(jax.jit,
                   static_argnames=("num_heads", "block_batch", "vmem_limit_mb"))
def attention_pool_2d(x, prepared, *, num_heads, block_batch=8, vmem_limit_mb=56):
    """x: (N, C, H, W) float32 (NCHW, like the PyTorch module).
    Returns (N, output_dim): the MHA output for the prepended mean token.

    block_batch: batch rows per grid step.  8 fits v7x's 64 MiB VMEM at CLIP
    sizes; v5e/v6e (128 MiB VMEM, higher vmem_limit_mb) can use 16-32 to
    amortise per-step overhead and improve MXU row fill.  On v7x pick it so
    the grid length is >= 2 and even, so the "parallel" batch axis balances
    across the two TensorCores.
    """
    N, C, H, W = x.shape
    HW = H * W
    L = HW + 1
    Cout = prepared["wc"].shape[1]
    assert prepared["head_hc"].shape == (num_heads, C)

    # Only remaining plain-XLA glue: the NCHW -> (N, HW, C) layout permute
    # (expected to fuse with the producer of x).  Token construction, pos-emb
    # and all projections happen inside the kernel.
    xs = jnp.transpose(x.reshape(N, C, HW), (0, 2, 1))          # (N, HW, C)

    bt = N if N <= block_batch else block_batch

    const = dict(pipeline_mode=pl.Buffered(1))   # resident weights: single-buffered
    return pl.pallas_call(
        _attention_pool_kernel,
        out_shape=jax.ShapeDtypeStruct((N, Cout), x.dtype),
        grid=(pl.cdiv(N, bt),),
        in_specs=[
            pl.BlockSpec((bt, HW, C), lambda b: (b, 0, 0)),              # x spatial tokens
            pl.BlockSpec((L, C), lambda b: (0, 0), **const),             # pos_emb (f32)
            pl.BlockSpec((C, C), lambda b: (0, 0), **const),             # Wq^T * scale
            pl.BlockSpec((C, 2 * C), lambda b: (0, 0), **const),         # [Wk^T | Wv^T]
            pl.BlockSpec((C, Cout), lambda b: (0, 0), **const),          # Wc^T
            pl.BlockSpec((C, num_heads), lambda b: (0, 0), **const),     # channel->head
            pl.BlockSpec((num_heads, C), lambda b: (0, 0), **const),     # head->channel
            pl.BlockSpec((1, C), lambda b: (0, 0), **const),             # bq * scale (f32)
            pl.BlockSpec((1, 2 * C), lambda b: (0, 0), **const),         # [bk | bv] (f32)
            pl.BlockSpec((1, Cout), lambda b: (0, 0), **const),          # bc (f32)
        ],
        out_specs=pl.BlockSpec((bt, Cout), lambda b: (b, 0)),
        compiler_params=pltpu.CompilerParams(
            dimension_semantics=("parallel",),      # independent batch tiles
            vmem_limit_bytes=vmem_limit_mb * 1024 * 1024),
    )(xs, prepared["pos"], prepared["wq"], prepared["wkv"], prepared["wc"],
      prepared["head_ch"], prepared["head_hc"],
      prepared["bq"], prepared["bkv"], prepared["bc"])


def _reference(x, params, num_heads):
    """Pure-JAX f32 reference mirroring F.multi_head_attention_forward."""
    N, C, H, W = x.shape
    tokens = x.reshape(N, C, H * W).transpose(0, 2, 1)
    tokens = jnp.concatenate(
        [jnp.mean(tokens, axis=1, keepdims=True), tokens], axis=1)
    tokens = tokens + params["pos_emb"][None]
    q = tokens @ params["wq"].T + params["bq"]
    k = tokens @ params["wk"].T + params["bk"]
    v = tokens @ params["wv"].T + params["bv"]
    hd = C // num_heads
    L = tokens.shape[1]
    q = q.reshape(N, L, num_heads, hd).transpose(0, 2, 1, 3) * (hd ** -0.5)
    k = k.reshape(N, L, num_heads, hd).transpose(0, 2, 1, 3)
    v = v.reshape(N, L, num_heads, hd).transpose(0, 2, 1, 3)
    attn = jax.nn.softmax(q @ k.transpose(0, 1, 3, 2), axis=-1)
    o = (attn @ v).transpose(0, 2, 1, 3).reshape(N, L, C)
    out = o @ params["wc"].T + params["bc"]
    return out[:, 0]


if __name__ == "__main__":
    # Small shapes consistent with the module:
    # spacial_dim=4, embed_dim=32, num_heads=4, output_dim=16.
    # batch=16 with block_batch=8 exercises a 2-step batch-tiled grid with
    # fully (8,128)-friendly blocks.
    batch, embed_dim, spacial_dim, num_heads, output_dim = 16, 32, 4, 4, 16
    L = spacial_dim * spacial_dim + 1

    key = jax.random.PRNGKey(0)
    keys = jax.random.split(key, 10)
    std = embed_dim ** (-0.5)
    params = {
        "pos_emb": jax.random.normal(keys[0], (L, embed_dim), jnp.float32) * std,
        "wq": jax.random.normal(keys[1], (embed_dim, embed_dim), jnp.float32) * std,
        "bq": jax.random.normal(keys[2], (embed_dim,), jnp.float32) * 0.02,
        "wk": jax.random.normal(keys[3], (embed_dim, embed_dim), jnp.float32) * std,
        "bk": jax.random.normal(keys[4], (embed_dim,), jnp.float32) * 0.02,
        "wv": jax.random.normal(keys[5], (embed_dim, embed_dim), jnp.float32) * std,
        "bv": jax.random.normal(keys[6], (embed_dim,), jnp.float32) * 0.02,
        "wc": jax.random.normal(keys[7], (output_dim, embed_dim), jnp.float32) * std,
        "bc": jax.random.normal(keys[8], (output_dim,), jnp.float32) * 0.02,
    }
    x = jax.random.normal(keys[9],
                          (batch, embed_dim, spacial_dim, spacial_dim),
                          jnp.float32)

    prepared = prepare_params(params, num_heads)          # bf16 MXU operands
    out = attention_pool_2d(x, prepared, num_heads=num_heads, block_batch=8)
    out = jax.block_until_ready(out)

    ref = _reference(x, params, num_heads)
    # The kernel feeds bf16 operands to the MXU (f32 accumulation, exact f32
    # softmax); the reference is pure f32, so the comparison tolerance is set
    # at bf16 level.
    np.testing.assert_allclose(np.asarray(out), np.asarray(ref),
                               rtol=5e-2, atol=3e-2)
    print("KERNEL_OK")
</pallas_src>

<mosaic_0001>
module attributes {stable_mosaic.version = 11 : i64} {
  func.func @_attention_pool_kernel(%arg0: i32, %arg1: memref<8x16x32xf32, #tpu.memory_space<vmem>>, %arg2: memref<17x32xf32, #tpu.memory_space<vmem>>, %arg3: memref<32x32xbf16, #tpu.memory_space<vmem>>, %arg4: memref<32x64xbf16, #tpu.memory_space<vmem>>, %arg5: memref<32x16xbf16, #tpu.memory_space<vmem>>, %arg6: memref<32x4xbf16, #tpu.memory_space<vmem>>, %arg7: memref<4x32xbf16, #tpu.memory_space<vmem>>, %arg8: memref<1x32xf32, #tpu.memory_space<vmem>>, %arg9: memref<1x64xf32, #tpu.memory_space<vmem>>, %arg10: memref<1x16xf32, #tpu.memory_space<vmem>>, %arg11: memref<8x16xf32, #tpu.memory_space<vmem>>) attributes {dimension_semantics = [#tpu.dimension_semantics<parallel>], iteration_bounds = array<i64: 2>, scalar_prefetch = 0 : i64, scratch_operands = 0 : i64, tpu.core_type = #tpu.core_type<tc>, window_params = [{transform_indices = @transform_0, window_bounds = array<i64: 8, 16, 32>}, {pipeline_mode = #tpu.pipeline_mode<synchronous>, transform_indices = @transform_1, window_bounds = array<i64: 17, 32>}, {pipeline_mode = #tpu.pipeline_mode<synchronous>, transform_indices = @transform_2, window_bounds = array<i64: 32, 32>}, {pipeline_mode = #tpu.pipeline_mode<synchronous>, transform_indices = @transform_3, window_bounds = array<i64: 32, 64>}, {pipeline_mode = #tpu.pipeline_mode<synchronous>, transform_indices = @transform_4, window_bounds = array<i64: 32, 16>}, {pipeline_mode = #tpu.pipeline_mode<synchronous>, transform_indices = @transform_5, window_bounds = array<i64: 32, 4>}, {pipeline_mode = #tpu.pipeline_mode<synchronous>, transform_indices = @transform_6, window_bounds = array<i64: 4, 32>}, {pipeline_mode = #tpu.pipeline_mode<synchronous>, transform_indices = @transform_7, window_bounds = array<i64: 1, 32>}, {pipeline_mode = #tpu.pipeline_mode<synchronous>, transform_indices = @transform_8, window_bounds = array<i64: 1, 64>}, {pipeline_mode = #tpu.pipeline_mode<synchronous>, transform_indices = @transform_9, window_bounds = array<i64: 1, 16>}, {transform_indices = @transform_10, window_bounds = array<i64: 8, 16>}]} {
    %c0 = arith.constant 0 : index
    %c0_0 = arith.constant 0 : index
    %c0_1 = arith.constant 0 : index
    %0 = vector.load %arg1[%c0, %c0_0, %c0_1] : memref<8x16x32xf32, #tpu.memory_space<vmem>>, vector<8x16x32xf32>
    %c0_2 = arith.constant 0 : index
    %c0_3 = arith.constant 0 : index
    %1 = vector.load %arg2[%c0_2, %c0_3] : memref<17x32xf32, #tpu.memory_space<vmem>>, vector<17x32xf32>
    %cst = arith.constant dense<0.000000e+00> : vector<8x32xf32>
    %2 = vector.multi_reduction <add>, %0, %cst [1] : vector<8x16x32xf32> to vector<8x32xf32>
    %3 = vector.shape_cast %2 : vector<8x32xf32> to vector<8x1x32xf32>
    %cst_4 = arith.constant 1.600000e+01 : f32
    %4 = vector.broadcast %cst_4 : f32 to vector<8x1x32xf32>
    %5 = arith.divf %3, %4 : vector<8x1x32xf32>
    %6 = tpu.concatenate %5, %0 in 1 : vector<8x1x32xf32>, vector<8x16x32xf32> -> vector<8x17x32xf32>
    %7 = vector.shape_cast %1 : vector<17x32xf32> to vector<1x17x32xf32>
    %8 = vector.broadcast %7 : vector<1x17x32xf32> to vector<8x17x32xf32>
    %9 = arith.addf %6, %8 : vector<8x17x32xf32>
    %10 = vector.shape_cast %9 : vector<8x17x32xf32> to vector<136x32xf32>
    %11 = vector.shape_cast %5 : vector<8x1x32xf32> to vector<8x32xf32>
    %12 = vector.extract_strided_slice %1 {offsets = [0, 0], sizes = [1, 32], strides = [1, 1]} : vector<17x32xf32> to vector<1x32xf32>
    %13 = vector.broadcast %12 : vector<1x32xf32> to vector<8x32xf32>
    %14 = arith.addf %11, %13 : vector<8x32xf32>
    %15 = arith.truncf %14 : vector<8x32xf32> to vector<8x32xbf16>
    %c0_5 = arith.constant 0 : index
    %c0_6 = arith.constant 0 : index
    %16 = vector.load %arg3[%c0_5, %c0_6] : memref<32x32xbf16, #tpu.memory_space<vmem>>, vector<32x32xbf16>
    %cst_7 = arith.constant dense<0.000000e+00> : vector<8x32xf32>
    %17 = tpu.matmul %15, %16, %cst_7 {dimension_numbers = #tpu.dot_dimension_numbers<[1], [0], [0], [1], [0, 0, 1, 1], [], []>} : vector<8x32xbf16>, vector<32x32xbf16>, vector<8x32xf32> -> vector<8x32xf32>
    %c0_8 = arith.constant 0 : index
    %c0_9 = arith.constant 0 : index
    %18 = vector.load %arg8[%c0_8, %c0_9] : memref<1x32xf32, #tpu.memory_space<vmem>>, vector<1x32xf32>
    %19 = vector.broadcast %18 : vector<1x32xf32> to vector<8x32xf32>
    %20 = arith.addf %17, %19 : vector<8x32xf32>
    %21 = arith.truncf %10 : vector<136x32xf32> to vector<136x32xbf16>
    %c0_10 = arith.constant 0 : index
    %c0_11 = arith.constant 0 : index
    %22 = vector.load %arg4[%c0_10, %c0_11] : memref<32x64xbf16, #tpu.memory_space<vmem>>, vector<32x64xbf16>
    %cst_12 = arith.constant dense<0.000000e+00> : vector<136x64xf32>
    %23 = tpu.matmul %21, %22, %cst_12 {dimension_numbers = #tpu.dot_dimension_numbers<[1], [0], [0], [1], [0, 0, 1, 1], [], []>} : vector<136x32xbf16>, vector<32x64xbf16>, vector<136x64xf32> -> vector<136x64xf32>
    %c0_13 = arith.constant 0 : index
    %c0_14 = arith.constant 0 : index
    %24 = vector.load %arg9[%c0_13, %c0_14] : memref<1x64xf32, #tpu.memory_space<vmem>>, vector<1x64xf32>
    %25 = vector.broadcast %24 : vector<1x64xf32> to vector<136x64xf32>
    %26 = arith.addf %23, %25 : vector<136x64xf32>
    %27 = vector.extract_strided_slice %26 {offsets = [0, 0], sizes = [136, 32], strides = [1, 1]} : vector<136x64xf32> to vector<136x32xf32>
    %28 = vector.extract_strided_slice %26 {offsets = [0, 32], sizes = [136, 32], strides = [1, 1]} : vector<136x64xf32> to vector<136x32xf32>
    %29 = vector.shape_cast %27 : vector<136x32xf32> to vector<8x17x32xf32>
    %30 = vector.shape_cast %20 : vector<8x32xf32> to vector<8x1x32xf32>
    %31 = vector.broadcast %30 : vector<8x1x32xf32> to vector<8x17x32xf32>
    %32 = arith.mulf %29, %31 : vector<8x17x32xf32>
    %33 = vector.shape_cast %32 : vector<8x17x32xf32> to vector<136x32xf32>
    %34 = arith.truncf %33 : vector<136x32xf32> to vector<136x32xbf16>
    %c0_15 = arith.constant 0 : index
    %c0_16 = arith.constant 0 : index
    %35 = vector.load %arg6[%c0_15, %c0_16] : memref<32x4xbf16, #tpu.memory_space<vmem>>, vector<32x4xbf16>
    %cst_17 = arith.constant dense<0.000000e+00> : vector<136x4xf32>
    %36 = tpu.matmul %34, %35, %cst_17 {dimension_numbers = #tpu.dot_dimension_numbers<[1], [0], [0], [1], [0, 0, 1, 1], [], []>} : vector<136x32xbf16>, vector<32x4xbf16>, vector<136x4xf32> -> vector<136x4xf32>
    %37 = vector.shape_cast %36 : vector<136x4xf32> to vector<8x17x4xf32>
    %cst_18 = arith.constant dense<0xFF800000> : vector<8x4xf32>
    %38 = vector.multi_reduction <maximumf>, %37, %cst_18 [1] : vector<8x17x4xf32> to vector<8x4xf32>
    %39 = vector.shape_cast %38 : vector<8x4xf32> to vector<8x1x4xf32>
    %40 = vector.broadcast %39 : vector<8x1x4xf32> to vector<8x17x4xf32>
    %41 = arith.subf %37, %40 : vector<8x17x4xf32>
    %42 = math.exp %41 : vector<8x17x4xf32>
    %cst_19 = arith.constant dense<0.000000e+00> : vector<8x4xf32>
    %43 = vector.multi_reduction <add>, %42, %cst_19 [1] : vector<8x17x4xf32> to vector<8x4xf32>
    %44 = vector.shape_cast %43 : vector<8x4xf32> to vector<8x1x4xf32>
    %cst_20 = arith.constant 1.000000e+00 : f32
    %45 = vector.broadcast %cst_20 : f32 to vector<8x1x4xf32>
    %46 = arith.divf %45, %44 : vector<8x1x4xf32>
    %47 = vector.broadcast %46 : vector<8x1x4xf32> to vector<8x17x4xf32>
    %48 = arith.mulf %42, %47 : vector<8x17x4xf32>
    %49 = vector.shape_cast %48 : vector<8x17x4xf32> to vector<136x4xf32>
    %50 = arith.truncf %49 : vector<136x4xf32> to vector<136x4xbf16>
    %c0_21 = arith.constant 0 : index
    %c0_22 = arith.constant 0 : index
    %51 = vector.load %arg7[%c0_21, %c0_22] : memref<4x32xbf16, #tpu.memory_space<vmem>>, vector<4x32xbf16>
    %cst_23 = arith.constant dense<0.000000e+00> : vector<136x32xf32>
    %52 = tpu.matmul %50, %51, %cst_23 {dimension_numbers = #tpu.dot_dimension_numbers<[1], [0], [0], [1], [0, 0, 1, 1], [], []>} : vector<136x4xbf16>, vector<4x32xbf16>, vector<136x32xf32> -> vector<136x32xf32>
    %53 = vector.shape_cast %52 : vector<136x32xf32> to vector<8x17x32xf32>
    %54 = vector.shape_cast %28 : vector<136x32xf32> to vector<8x17x32xf32>
    %55 = arith.mulf %53, %54 : vector<8x17x32xf32>
    %cst_24 = arith.constant dense<0.000000e+00> : vector<8x32xf32>
    %56 = vector.multi_reduction <add>, %55, %cst_24 [1] : vector<8x17x32xf32> to vector<8x32xf32>
    %57 = arith.truncf %56 : vector<8x32xf32> to vector<8x32xbf16>
    %c0_25 = arith.constant 0 : index
    %c0_26 = arith.constant 0 : index
    %58 = vector.load %arg5[%c0_25, %c0_26] : memref<32x16xbf16, #tpu.memory_space<vmem>>, vector<32x16xbf16>
    %cst_27 = arith.constant dense<0.000000e+00> : vector<8x16xf32>
    %59 = tpu.matmul %57, %58, %cst_27 {dimension_numbers = #tpu.dot_dimension_numbers<[1], [0], [0], [1], [0, 0, 1, 1], [], []>} : vector<8x32xbf16>, vector<32x16xbf16>, vector<8x16xf32> -> vector<8x16xf32>
    %c0_28 = arith.constant 0 : index
    %c0_29 = arith.constant 0 : index
    %60 = vector.load %arg10[%c0_28, %c0_29] : memref<1x16xf32, #tpu.memory_space<vmem>>, vector<1x16xf32>
    %61 = vector.broadcast %60 : vector<1x16xf32> to vector<8x16xf32>
    %62 = arith.addf %59, %61 : vector<8x16xf32>
    %c0_30 = arith.constant 0 : index
    %c0_31 = arith.constant 0 : index
    %63 = vector.load %arg11[%c0_30, %c0_31] : memref<8x16xf32, #tpu.memory_space<vmem>>, vector<8x16xf32>
    tpu.vector_store %arg11[%c0_30, %c0_31], %62 {strides = array<i32>} : memref<8x16xf32, #tpu.memory_space<vmem>>, vector<8x16xf32>,
    return
  }
  func.func @transform_0(%arg0: i32) -> (i32, i32, i32) {
    %c0_i32 = arith.constant 0 : i32
    %c0_i32_0 = arith.constant 0 : i32
    %c0_i32_1 = arith.constant 0 : i32
    return %arg0, %c0_i32, %c0_i32_0 : i32, i32, i32
  }
  func.func @transform_1(%arg0: i32) -> (i32, i32) {
    %c0_i32 = arith.constant 0 : i32
    %c0_i32_0 = arith.constant 0 : i32
    %c0_i32_1 = arith.constant 0 : i32
    return %c0_i32, %c0_i32_0 : i32, i32
  }
  func.func @transform_2(%arg0: i32) -> (i32, i32) {
    %c0_i32 = arith.constant 0 : i32
    %c0_i32_0 = arith.constant 0 : i32
    %c0_i32_1 = arith.constant 0 : i32
    return %c0_i32, %c0_i32_0 : i32, i32
  }
  func.func @transform_3(%arg0: i32) -> (i32, i32) {
    %c0_i32 = arith.constant 0 : i32
    %c0_i32_0 = arith.constant 0 : i32
    %c0_i32_1 = arith.constant 0 : i32
    return %c0_i32, %c0_i32_0 : i32, i32
  }
  func.func @transform_4(%arg0: i32) -> (i32, i32) {
    %c0_i32 = arith.constant 0 : i32
    %c0_i32_0 = arith.constant 0 : i32
    %c0_i32_1 = arith.constant 0 : i32
    return %c0_i32, %c0_i32_0 : i32, i32
  }
  func.func @transform_5(%arg0: i32) -> (i32, i32) {
    %c0_i32 = arith.constant 0 : i32
    %c0_i32_0 = arith.constant 0 : i32
    %c0_i32_1 = arith.constant 0 : i32
    return %c0_i32, %c0_i32_0 : i32, i32
  }
  func.func @transform_6(%arg0: i32) -> (i32, i32) {
    %c0_i32 = arith.constant 0 : i32
    %c0_i32_0 = arith.constant 0 : i32
    %c0_i32_1 = arith.constant 0 : i32
    return %c0_i32, %c0_i32_0 : i32, i32
  }
  func.func @transform_7(%arg0: i32) -> (i32, i32) {
    %c0_i32 = arith.constant 0 : i32
    %c0_i32_0 = arith.constant 0 : i32
    %c0_i32_1 = arith.constant 0 : i32
    return %c0_i32, %c0_i32_0 : i32, i32
  }
  func.func @transform_8(%arg0: i32) -> (i32, i32) {
    %c0_i32 = arith.constant 0 : i32
    %c0_i32_0 = arith.constant 0 : i32
    %c0_i32_1 = arith.constant 0 : i32
    return %c0_i32, %c0_i32_0 : i32, i32
  }
  func.func @transform_9(%arg0: i32) -> (i32, i32) {
    %c0_i32 = arith.constant 0 : i32
    %c0_i32_0 = arith.constant 0 : i32
    %c0_i32_1 = arith.constant 0 : i32
    return %c0_i32, %c0_i32_0 : i32, i32
  }
  func.func @transform_10(%arg0: i32) -> (i32, i32) {
    %c0_i32 = arith.constant 0 : i32
    %c0_i32_0 = arith.constant 0 : i32
    return %arg0, %c0_i32 : i32, i32
  }
}

</mosaic_0001>

<llo_original>
// kernel: attention_pool_2d.1
$region0: #{attention_pool_2d.1}
  #allocation0 [shape = 'u32[]', space=smem, size = 0x4, offset = 0x4, fixed_abs, tag = 'smem constant byte address 0x4 - core index']
  #allocation1 [shape = 'u32[144,128]{1,0:T(1,128)}', space=vmem, size = 0x12000, scoped, tag = 'internal scratch']
  %s0 = inlined_call_operand.hbm [shape: f32[16,16,32], index: 0, kind: input, shape index: {}]
  %s1 = inlined_call_operand.vmem [shape: f32[17,32], index: 1, kind: input, shape index: {}]
  %s2 = inlined_call_operand.vmem [shape: bf16[32,32], index: 2, kind: input, shape index: {}]
  %s3 = inlined_call_operand.vmem [shape: bf16[32,64], index: 3, kind: input, shape index: {}]
  %s4 = inlined_call_operand.vmem [shape: bf16[32,16], index: 4, kind: input, shape index: {}]
  %s5 = inlined_call_operand.vmem [shape: bf16[32,4], index: 5, kind: input, shape index: {}]
  %s6 = inlined_call_operand.hbm [shape: bf16[4,32], index: 6, kind: input, shape index: {}]
  %s7 = inlined_call_operand.hbm [shape: f32[1,32], index: 7, kind: input, shape index: {}]
  %s8 = inlined_call_operand.hbm [shape: f32[1,64], index: 8, kind: input, shape index: {}]
  %s9 = inlined_call_operand.hbm [shape: f32[1,16], index: 9, kind: input, shape index: {}]
  %s10 = inlined_call_operand.hbm [shape: f32[16,16], index: 10, kind: output, shape index: {}]
  %s11 = sld [smem:[#allocation0]]
  $region93: #{attention_pool_2d.1} parent=0
    _
  %s13 = ssub.s32 1, %s11
  %s14 = scalar_select 0, %s13, %s11
  $region1: #{attention_pool_2d.1} parent=0
    #allocation2 [shape = 'u8[131072]{0}', space=vmem, size = 0x20000, scoped, tag = 'input window, operand 0']
    #allocation3 [shape = 's32[2]{0}', space=sflag, size = 0x8, scoped, tag = 'scoped memory for attention_pool_2d.1']
    #allocation4 [shape = 's32[2]{0}', space=sflag, size = 0x8, scoped, tag = 'scoped memory for attention_pool_2d.1']
    #allocation5 [shape = 'u8[1024]{0}', space=vmem, size = 0x400, scoped, tag = 'input window, operand 6, single buffered']
    #allocation6 [shape = 's32[1]{0}', space=sflag, size = 0x4, scoped, tag = 'scoped memory for attention_pool_2d.1']
    #allocation7 [shape = 'u8[512]{0}', space=vmem, size = 0x400, scoped, tag = 'input window, operand 7, single buffered']
    #allocation8 [shape = 'u8[512]{0}', space=vmem, size = 0x400, scoped, tag = 'input window, operand 8, single buffered']
    #allocation9 [shape = 's32[1]{0}', space=sflag, size = 0x4, scoped, tag = 'scoped memory for attention_pool_2d.1']
    #allocation10 [shape = 'u8[512]{0}', space=vmem, size = 0x400, scoped, tag = 'input window, operand 9, single buffered']
    #allocation11 [shape = 'u8[8192]{0}', space=vmem, size = 0x2000, scoped, tag = 'output window, operand 0']
    %15 = vsyncpa [#allocation3], 0
    %s16 = scalar_lea.sflag [#allocation3], 1
    %17 = vsyncpa %s16, 0
    %18 = vsyncpa [#allocation6], 0
    %19 = vsyncpa [#allocation9], 0
    %20 = vsyncpa [#allocation4], 0
    %s21 = scalar_lea.sflag [#allocation4], 1
    %22 = vsyncpa %s21, 0
    loop: start=0, step=1, limit=4
    $region2: #{attention_pool_2d.1} parent=1 // loop_pre_header
      _
    $region3: #{attention_pool_2d.1} parent=1 // loop_header
      %s24 = sphi 0, %s28
      %p25 = scmp.ge.s32.totalorder %s24, 4
      %s34 = sphi 0, %s36
      %s37 = sphi 0, %s34
      %s38 = sphi 0, %s37
      %s54 = sphi 0, %s38
      %s58 = sphi 0, %s58
      %s60 = sphi 0, %s58
      %s61 = sphi 0, %s60
      %s75 = sphi 0, %s61
      %s79 = sphi 0, %s79
      %s81 = sphi 0, %s79
      %s82 = sphi 0, %s81
      %s96 = sphi 0, %s82
      %s100 = sphi 0, %s100
      %s102 = sphi 0, %s100
      %s103 = sphi 0, %s102
      %s117 = sphi 0, %s103
      %s121 = sphi 0, %s121
      %s123 = sphi 0, %s121
      %s124 = sphi 0, %s123
      %s138 = sphi 0, %s124
      %s142 = sphi 0, %s142
      %s144 = sphi 0, %s142
      %s145 = sphi 0, %s144
      %s159 = sphi 0, %s145
      %s163 = sphi 0, %s163
      %s165 = sphi 0, %s163
      %s166 = sphi 0, %s165
      %s180 = sphi 0, %s166
      %s184 = sphi 0, %s184
      %s186 = sphi 0, %s184
      %s187 = sphi 0, %s186
      %s201 = sphi 0, %s187
      %s205 = sphi 0, %s205
      %s207 = sphi 0, %s205
      %s208 = sphi 0, %s207
      %s222 = sphi 0, %s208
      %s226 = sphi 0, %s226
      %s228 = sphi 0, %s226
      %s229 = sphi 0, %s228
      %s243 = sphi 0, %s229
      %s249 = sphi 0, %s251
      %s252 = sphi 0, %s249
      %s253 = sphi 0, %s252
      %s269 = sphi 0, %s253
    $region4: #{attention_pool_2d.1} parent=1 // loop_header_branch
      %27 = sbr.rel (%p25) target = $region8
    $region5: #{attention_pool_2d.1} parent=1 // loop_body
      %s29 = ssub.s32 %s24, 1
      %s30 = ssub.s32 %s24, 2
      %s31 = sadd.s32 %s24, 1
      %s32 = ssub.s32 %s24, %s31
      %p33 = scmp.eq.s32.totalorder %s32, 0
      %s35 = sadd.s32 %s34, 1
      %s36 = scalar_select %p33, %s34, %s35
      %p39 = pneg %p33
      %p40 = scmp.eq.s32.totalorder %s24, 1
      %p41 = por %p39, %p40
      %p42 = scmp.ne.s32.totalorder %s34, %s37
      %p43 = scmp.eq.s32.totalorder %s24, 0
      %p44 = por %p42, %p43
      %p45 = scmp.ne.s32.totalorder %s34, %s37
      %p46 = scmp.eq.s32.totalorder %s29, 1
      %p47 = por %p45, %p46
      %p48 = scmp.ne.s32.totalorder %s37, %s38
      %p49 = scmp.eq.s32.totalorder %s29, 0
      %p50 = por %p48, %p49
      %p51 = scmp.ne.s32.totalorder %s37, %s38
      %p52 = scmp.eq.s32.totalorder %s30, 1
      %p53 = por %p51, %p52
      %p55 = scmp.ne.s32.totalorder %s38, %s54
      %p56 = scmp.eq.s32.totalorder %s30, 0
      %p57 = por %p55, %p56
      %s59 = sadd.s32 %s58, 1
      %p62 = scmp.eq.s32.totalorder %s24, 1
      %p63 = scmp.ne.s32.totalorder %s58, %s60
      %p64 = scmp.eq.s32.totalorder %s24, 0
      %p65 = por %p63, %p64
      %p66 = scmp.ne.s32.totalorder %s58, %s60
      %p67 = scmp.eq.s32.totalorder %s29, 1
      %p68 = por %p66, %p67
      %p69 = scmp.ne.s32.totalorder %s60, %s61
      %p70 = scmp.eq.s32.totalorder %s29, 0
      %p71 = por %p69, %p70
      %p72 = scmp.ne.s32.totalorder %s60, %s61
      %p73 = scmp.eq.s32.totalorder %s30, 1
      %p74 = por %p72, %p73
      %p76 = scmp.ne.s32.totalorder %s61, %s75
      %p77 = scmp.eq.s32.totalorder %s30, 0
      %p78 = por %p76, %p77
      %s80 = sadd.s32 %s79, 1
      %p83 = scmp.eq.s32.totalorder %s24, 1
      %p84 = scmp.ne.s32.totalorder %s79, %s81
      %p85 = scmp.eq.s32.totalorder %s24, 0
      %p86 = por %p84, %p85
      %p87 = scmp.ne.s32.totalorder %s79, %s81
      %p88 = scmp.eq.s32.totalorder %s29, 1
      %p89 = por %p87, %p88
      %p90 = scmp.ne.s32.totalorder %s81, %s82
      %p91 = scmp.eq.s32.totalorder %s29, 0
      %p92 = por %p90, %p91
      %p93 = scmp.ne.s32.totalorder %s81, %s82
      %p94 = scmp.eq.s32.totalorder %s30, 1
      %p95 = por %p93, %p94
      %p97 = scmp.ne.s32.totalorder %s82, %s96
      %p98 = scmp.eq.s32.totalorder %s30, 0
      %p99 = por %p97, %p98
      %s101 = sadd.s32 %s100, 1
      %p104 = scmp.eq.s32.totalorder %s24, 1
      %p105 = scmp.ne.s32.totalorder %s100, %s102
      %p106 = scmp.eq.s32.totalorder %s24, 0
      %p107 = por %p105, %p106
      %p108 = scmp.ne.s32.totalorder %s100, %s102
      %p109 = scmp.eq.s32.totalorder %s29, 1
      %p110 = por %p108, %p109
      %p111 = scmp.ne.s32.totalorder %s102, %s103
      %p112 = scmp.eq.s32.totalorder %s29, 0
      %p113 = por %p111, %p112
      %p114 = scmp.ne.s32.totalorder %s102, %s103
      %p115 = scmp.eq.s32.totalorder %s30, 1
      %p116 = por %p114, %p115
      %p118 = scmp.ne.s32.totalorder %s103, %s117
      %p119 = scmp.eq.s32.totalorder %s30, 0
      %p120 = por %p118, %p119
      %s122 = sadd.s32 %s121, 1
      %p125 = scmp.eq.s32.totalorder %s24, 1
      %p126 = scmp.ne.s32.totalorder %s121, %s123
      %p127 = scmp.eq.s32.totalorder %s24, 0
      %p128 = por %p126, %p127
      %p129 = scmp.ne.s32.totalorder %s121, %s123
      %p130 = scmp.eq.s32.totalorder %s29, 1
      %p131 = por %p129, %p130
      %p132 = scmp.ne.s32.totalorder %s123, %s124
      %p133 = scmp.eq.s32.totalorder %s29, 0
      %p134 = por %p132, %p133
      %p135 = scmp.ne.s32.totalorder %s123, %s124
      %p136 = scmp.eq.s32.totalorder %s30, 1
      %p137 = por %p135, %p136
      %p139 = scmp.ne.s32.totalorder %s124, %s138
      %p140 = scmp.eq.s32.totalorder %s30, 0
      %p141 = por %p139, %p140
      %s143 = sadd.s32 %s142, 1
      %p146 = scmp.eq.s32.totalorder %s24, 1
      %p147 = scmp.ne.s32.totalorder %s142, %s144
      %p148 = scmp.eq.s32.totalorder %s24, 0
      %p149 = por %p147, %p148
      %p150 = scmp.ne.s32.totalorder %s142, %s144
      %p151 = scmp.eq.s32.totalorder %s29, 1
      %p152 = por %p150, %p151
      %p153 = scmp.ne.s32.totalorder %s144, %s145
      %p154 = scmp.eq.s32.totalorder %s29, 0
      %p155 = por %p153, %p154
      %p156 = scmp.ne.s32.totalorder %s144, %s145
      %p157 = scmp.eq.s32.totalorder %s30, 1
      %p158 = por %p156, %p157
      %p160 = scmp.ne.s32.totalorder %s145, %s159
      %p161 = scmp.eq.s32.totalorder %s30, 0
      %p162 = por %p160, %p161
      %s164 = sadd.s32 %s163, 1
      %p167 = scmp.eq.s32.totalorder %s24, 1
      %p168 = scmp.ne.s32.totalorder %s163, %s165
      %p169 = scmp.eq.s32.totalorder %s24, 0
      %p170 = por %p168, %p169
      %p171 = scmp.ne.s32.totalorder %s163, %s165
      %p172 = scmp.eq.s32.totalorder %s29, 1
      %p173 = por %p171, %p172
      %p174 = scmp.ne.s32.totalorder %s165, %s166
      %p175 = scmp.eq.s32.totalorder %s29, 0
      %p176 = por %p174, %p175
      %p177 = scmp.ne.s32.totalorder %s165, %s166
      %p178 = scmp.eq.s32.totalorder %s30, 1
      %p179 = por %p177, %p178
      %p181 = scmp.ne.s32.totalorder %s166, %s180
      %p182 = scmp.eq.s32.totalorder %s30, 0
      %p183 = por %p181, %p182
      %s185 = sadd.s32 %s184, 1
      %p188 = scmp.eq.s32.totalorder %s24, 1
      %p189 = scmp.ne.s32.totalorder %s184, %s186
      %p190 = scmp.eq.s32.totalorder %s24, 0
      %p191 = por %p189, %p190
      %p192 = scmp.ne.s32.totalorder %s184, %s186
      %p193 = scmp.eq.s32.totalorder %s29, 1
      %p194 = por %p192, %p193
      %p195 = scmp.ne.s32.totalorder %s186, %s187
      %p196 = scmp.eq.s32.totalorder %s29, 0
      %p197 = por %p195, %p196
      %p198 = scmp.ne.s32.totalorder %s186, %s187
      %p199 = scmp.eq.s32.totalorder %s30, 1
      %p200 = por %p198, %p199
      %p202 = scmp.ne.s32.totalorder %s187, %s201
      %p203 = scmp.eq.s32.totalorder %s30, 0
      %p204 = por %p202, %p203
      %s206 = sadd.s32 %s205, 1
      %p209 = scmp.eq.s32.totalorder %s24, 1
      %p210 = scmp.ne.s32.totalorder %s205, %s207
      %p211 = scmp.eq.s32.totalorder %s24, 0
      %p212 = por %p210, %p211
      %p213 = scmp.ne.s32.totalorder %s205, %s207
      %p214 = scmp.eq.s32.totalorder %s29, 1
      %p215 = por %p213, %p214
      %p216 = scmp.ne.s32.totalorder %s207, %s208
      %p217 = scmp.eq.s32.totalorder %s29, 0
      %p218 = por %p216, %p217
      %p219 = scmp.ne.s32.totalorder %s207, %s208
      %p220 = scmp.eq.s32.totalorder %s30, 1
      %p221 = por %p219, %p220
      %p223 = scmp.ne.s32.totalorder %s208, %s222
      %p224 = scmp.eq.s32.totalorder %s30, 0
      %p225 = por %p223, %p224
      %s227 = sadd.s32 %s226, 1
      %p230 = scmp.eq.s32.totalorder %s24, 1
      %p231 = scmp.ne.s32.totalorder %s226, %s228
      %p232 = scmp.eq.s32.totalorder %s24, 0
      %p233 = por %p231, %p232
      %p234 = scmp.ne.s32.totalorder %s226, %s228
      %p235 = scmp.eq.s32.totalorder %s29, 1
      %p236 = por %p234, %p235
      %p237 = scmp.ne.s32.totalorder %s228, %s229
      %p238 = scmp.eq.s32.totalorder %s29, 0
      %p239 = por %p237, %p238
      %p240 = scmp.ne.s32.totalorder %s228, %s229
      %p241 = scmp.eq.s32.totalorder %s30, 1
      %p242 = por %p240, %p241
      %p244 = scmp.ne.s32.totalorder %s229, %s243
      %p245 = scmp.eq.s32.totalorder %s30, 0
      %p246 = por %p244, %p245
      %s247 = ssub.s32 %s24, %s31
      %p248 = scmp.eq.s32.totalorder %s247, 0
      %s250 = sadd.s32 %s249, 1
      %s251 = scalar_select %p248, %s249, %s250
      %p254 = pneg %p248
      %p255 = scmp.eq.s32.totalorder %s24, 1
      %p256 = por %p254, %p255
      %p257 = scmp.ne.s32.totalorder %s249, %s252
      %p258 = scmp.eq.s32.totalorder %s24, 0
      %p259 = por %p257, %p258
      %p260 = scmp.ne.s32.totalorder %s249, %s252
      %p261 = scmp.eq.s32.totalorder %s29, 1
      %p262 = por %p260, %p261
      %p263 = scmp.ne.s32.totalorder %s252, %s253
      %p264 = scmp.eq.s32.totalorder %s29, 0
      %p265 = por %p263, %p264
      %p266 = scmp.ne.s32.totalorder %s252, %s253
      %p267 = scmp.eq.s32.totalorder %s30, 1
      %p268 = por %p266, %p267
      %p270 = scmp.ne.s32.totalorder %s253, %s269
      %p271 = scmp.eq.s32.totalorder %s30, 0
      %p272 = por %p270, %p271
      %p273 = scmp.le.s32.totalorder 1, %s24
      %p274 = scmp.lt.s32.totalorder %s24, 3
      %p275 = pnand %p273, %p274
      %p276 = pneg %p275
      // Predicated region
      $region9: #{attention_pool_2d.1} parent=5 // pred_check
        _
      $region10: #{attention_pool_2d.1} parent=5 // pred_check_branch
        %278 = sbr.rel (%p275) target = $region12
      $region11: #{attention_pool_2d.1} parent=5 // pred_region
        %s279 = ssub.s32 %s24, 1
        // Predicated region
        $region13: #{attention_pool_2d.1} parent=11 // pred_check
          %p280 = pneg %p71
        $region14: #{attention_pool_2d.1} parent=11 // pred_check_branch
          %282 = sbr.rel (%p280) target = $region16
        $region15: #{attention_pool_2d.1} parent=11 // pred_region
          _
        $region16: #{attention_pool_2d.1} parent=11 // pred_fallthru
          _
        // Predicated region
        $region17: #{attention_pool_2d.1} parent=11 // pred_check
          %p283 = pneg %p92
        $region18: #{attention_pool_2d.1} parent=11 // pred_check_branch
          %285 = sbr.rel (%p283) target = $region20
        $region19: #{attention_pool_2d.1} parent=11 // pred_region
          _
        $region20: #{attention_pool_2d.1} parent=11 // pred_fallthru
          _
        // Predicated region
        $region21: #{attention_pool_2d.1} parent=11 // pred_check
          %p286 = pneg %p113
        $region22: #{attention_pool_2d.1} parent=11 // pred_check_branch
          %288 = sbr.rel (%p286) target = $region24
        $region23: #{attention_pool_2d.1} parent=11 // pred_region
          _
        $region24: #{attention_pool_2d.1} parent=11 // pred_fallthru
          _
        // Predicated region
        $region25: #{attention_pool_2d.1} parent=11 // pred_check
          %p289 = pneg %p134
        $region26: #{attention_pool_2d.1} parent=11 // pred_check_branch
          %291 = sbr.rel (%p289) target = $region28
        $region27: #{attention_pool_2d.1} parent=11 // pred_region
          _
        $region28: #{attention_pool_2d.1} parent=11 // pred_fallthru
          _
        // Predicated region
        $region29: #{attention_pool_2d.1} parent=11 // pred_check
          %p292 = pneg %p155
        $region30: #{attention_pool_2d.1} parent=11 // pred_check_branch
          %294 = sbr.rel (%p292) target = $region32
        $region31: #{attention_pool_2d.1} parent=11 // pred_region
          _
        $region32: #{attention_pool_2d.1} parent=11 // pred_fallthru
          _
        // Predicated region
        $region33: #{attention_pool_2d.1} parent=11 // pred_check
          %p295 = pneg %p176
        $region34: #{attention_pool_2d.1} parent=11 // pred_check_branch
          %297 = sbr.rel (%p295) target = $region36
        $region35: #{attention_pool_2d.1} parent=11 // pred_region
          %s299 = ssub.s32 32, 32
          %300 = vsyncadd [#allocation6], %s299
          %s302 = sshll.u32 [#allocation5], 4
          %s303 = int_to_ptr.vmem [resolvable:$true] %s302
          %305 = dma.hbm_to_vmem [thread:$0]  %s6, 32, %s303, [#allocation6]
        $region36: #{attention_pool_2d.1} parent=11 // pred_fallthru
          _
        // Predicated region
        $region37: #{attention_pool_2d.1} parent=11 // pred_check
          %p306 = pneg %p197
        $region38: #{attention_pool_2d.1} parent=11 // pred_check_branch
          %308 = sbr.rel (%p306) target = $region40
        $region39: #{attention_pool_2d.1} parent=11 // pred_region
          %s310 = ssub.s32 16, 16
          %311 = vsyncadd [#allocation6], %s310
          %s313 = sshll.u32 [#allocation7], 4
          %s314 = int_to_ptr.vmem [resolvable:$true] %s313
          %316 = dma.hbm_to_vmem [thread:$0]  %s7, 16, %s314, [#allocation6]
        $region40: #{attention_pool_2d.1} parent=11 // pred_fallthru
          _
        // Predicated region
        $region41: #{attention_pool_2d.1} parent=11 // pred_check
          %p317 = pneg %p218
        $region42: #{attention_pool_2d.1} parent=11 // pred_check_branch
          %319 = sbr.rel (%p317) target = $region44
        $region43: #{attention_pool_2d.1} parent=11 // pred_region
          %s321 = ssub.s32 16, 16
          %322 = vsyncadd [#allocation9], %s321
          %s324 = sshll.u32 [#allocation8], 4
          %s325 = int_to_ptr.vmem [resolvable:$true] %s324
          %327 = dma.hbm_to_vmem [thread:$0]  %s8, 16, %s325, [#allocation9]
        $region44: #{attention_pool_2d.1} parent=11 // pred_fallthru
          _
        // Predicated region
        $region45: #{attention_pool_2d.1} parent=11 // pred_check
          %p328 = pneg %p239
        $region46: #{attention_pool_2d.1} parent=11 // pred_check_branch
          %330 = sbr.rel (%p328) target = $region48
        $region47: #{attention_pool_2d.1} parent=11 // pred_region
          %s332 = ssub.s32 16, 16
          %333 = vsyncadd [#allocation9], %s332
          %s335 = sshll.u32 [#allocation10], 4
          %s336 = int_to_ptr.vmem [resolvable:$true] %s335
          %338 = dma.hbm_to_vmem [thread:$0]  %s9, 16, %s336, [#allocation9]
        $region48: #{attention_pool_2d.1} parent=11 // pred_fallthru
          _
      $region12: #{attention_pool_2d.1} parent=5 // pred_fallthru
        _
      %p339 = scmp.lt.s32.totalorder %s24, 2
      // Predicated region
      $region49: #{attention_pool_2d.1} parent=5 // pred_check
        %p340 = pneg %p339
      $region50: #{attention_pool_2d.1} parent=5 // pred_check_branch
        %342 = sbr.rel (%p340) target = $region52
      $region51: #{attention_pool_2d.1} parent=5 // pred_region
        // Predicated region
        $region53: #{attention_pool_2d.1} parent=51 // pred_check
          %p343 = pneg %p44
        $region54: #{attention_pool_2d.1} parent=51 // pred_check_branch
          %345 = sbr.rel (%p343) target = $region56
        $region55: #{attention_pool_2d.1} parent=51 // pred_region
          %s346 = sand.u32 %s34, 1
          %s347 = scalar_lea.sflag [#allocation3], %s346
          %s348 = sand.u32 %s34, 1
          %s349 = smul.addr %s348, 128
          %s350 = scalar_lea.vmem [#allocation2], %s349
          %s351 = smul.u32 8, %s24
          %s353 = ssub.s32 2048, 2048
          %354 = vsyncadd %s347, %s353
          %s355 = smul.addr %s351, 2
          %s356 = smul.addr %s355, 128
          %s357 = scalar_lea.hbm %s0, %s356
          %s358 = sshll.u32 %s350, 4
          %s359 = int_to_ptr.vmem [resolvable:$true] %s358
          %364 = dma.hbm_to_vmem [thread:$0]  %s357, 2048, %s359, %s347, 128, 128, 8
        $region56: #{attention_pool_2d.1} parent=51 // pred_fallthru
          _
      $region52: #{attention_pool_2d.1} parent=5 // pred_fallthru
        _
      %p365 = scmp.le.s32.totalorder 1, %s24
      %p366 = scmp.lt.s32.totalorder %s24, 3
      %p367 = pnand %p365, %p366
      %p368 = pneg %p367
      // Predicated region
      $region57: #{attention_pool_2d.1} parent=5 // pred_check
        _
      $region58: #{attention_pool_2d.1} parent=5 // pred_check_branch
        %370 = sbr.rel (%p367) target = $region60
      $region59: #{attention_pool_2d.1} parent=5 // pred_region
        %s371 = ssub.s32 %s24, 1
        %s372 = sand.u32 %s37, 1
        %s373 = scalar_lea.sflag [#allocation3], %s372
        %s374 = sand.u32 %s37, 1
        %s375 = smul.addr %s374, 128
        %s376 = scalar_lea.vmem [#allocation2], %s375
        // Predicated region
        $region61: #{attention_pool_2d.1} parent=59 // pred_check
          %p377 = pneg %p50
        $region62: #{attention_pool_2d.1} parent=59 // pred_check_branch
          %379 = sbr.rel (%p377) target = $region64
        $region63: #{attention_pool_2d.1} parent=59 // pred_region
          %380 = dma.done %s373, 2048
        $region64: #{attention_pool_2d.1} parent=59 // pred_fallthru
          _
        // Predicated region
        $region65: #{attention_pool_2d.1} parent=59 // pred_check
          %p381 = pneg %p176
        $region66: #{attention_pool_2d.1} parent=59 // pred_check_branch
          %383 = sbr.rel (%p381) target = $region68
        $region67: #{attention_pool_2d.1} parent=59 // pred_region
          %384 = dma.done [#allocation6], 32
        $region68: #{attention_pool_2d.1} parent=59 // pred_fallthru
          _
        // Predicated region
        $region69: #{attention_pool_2d.1} parent=59 // pred_check
          %p385 = pneg %p197
        $region70: #{attention_pool_2d.1} parent=59 // pred_check_branch
          %387 = sbr.rel (%p385) target = $region72
        $region71: #{attention_pool_2d.1} parent=59 // pred_region
          %388 = dma.done [#allocation6], 16
        $region72: #{attention_pool_2d.1} parent=59 // pred_fallthru
          _
        // Predicated region
        $region73: #{attention_pool_2d.1} parent=59 // pred_check
          %p389 = pneg %p218
        $region74: #{attention_pool_2d.1} parent=59 // pred_check_branch
          %391 = sbr.rel (%p389) target = $region76
        $region75: #{attention_pool_2d.1} parent=59 // pred_region
          %392 = dma.done [#allocation9], 16
        $region76: #{attention_pool_2d.1} parent=59 // pred_fallthru
          _
        // Predicated region
        $region77: #{attention_pool_2d.1} parent=59 // pred_check
          %p393 = pneg %p239
        $region78: #{attention_pool_2d.1} parent=59 // pred_check_branch
          %395 = sbr.rel (%p393) target = $region80
        $region79: #{attention_pool_2d.1} parent=59 // pred_region
          %396 = dma.done [#allocation9], 16
        $region80: #{attention_pool_2d.1} parent=59 // pred_fallthru
          _
        %s397 = sand.u32 %s37, 1
        %s398 = scalar_lea.sflag [#allocation3], %s397
        %s399 = sand.u32 %s37, 1
        %s400 = smul.addr %s399, 128
        %s401 = scalar_lea.vmem [#allocation2], %s400
        %p402 = pneg %p50
        %p403 = pneg %p47
        %p404 = pneg %p71
        %p405 = pneg %p68
        %p406 = pneg %p92
        %p407 = pneg %p89
        %p408 = pneg %p113
        %p409 = pneg %p110
        %p410 = pneg %p134
        %p411 = pneg %p131
        %p412 = pneg %p155
        %p413 = pneg %p152
        %p414 = pneg %p176
        %p415 = pneg %p173
        %p416 = pneg %p197
        %p417 = pneg %p194
        %p418 = pneg %p218
        %p419 = pneg %p215
        %p420 = pneg %p239
        %p421 = pneg %p236
        %p422 = pneg %p265
        %p423 = pneg %p262
        %s424 = sand.u32 %s252, 1
        %s425 = scalar_lea.sflag [#allocation4], %s424
        %s426 = sand.u32 %s252, 1
        %s427 = smul.addr %s426, 8
        %s428 = scalar_lea.vmem [#allocation11], %s427
        %s429 = smul.u32 8, %s29
        %v431 = vld [vmem:[%s376] sm:$0xff]
        %v432 = vld [vmem:[%s376 + $0x8] sm:$0xff]
        %v433 = vld [vmem:[%s376 + $0x10] sm:$0xff]
        %v434 = vld [vmem:[%s376 + $0x18] sm:$0xff]
        %v435 = vld [vmem:[%s376 + $0x20] sm:$0xff]
        %v436 = vld [vmem:[%s376 + $0x28] sm:$0xff]
        %v437 = vld [vmem:[%s376 + $0x30] sm:$0xff]
        %v438 = vld [vmem:[%s376 + $0x38] sm:$0xff]
        %v439 = vld [vmem:[%s376 + $0x40] sm:$0xff]
        %v440 = vld [vmem:[%s376 + $0x48] sm:$0xff]
        %v441 = vld [vmem:[%s376 + $0x50] sm:$0xff]
        %v442 = vld [vmem:[%s376 + $0x58] sm:$0xff]
        %v443 = vld [vmem:[%s376 + $0x60] sm:$0xff]
        %v444 = vld [vmem:[%s376 + $0x68] sm:$0xff]
        %v445 = vld [vmem:[%s376 + $0x70] sm:$0xff]
        %v446 = vld [vmem:[%s376 + $0x78] sm:$0xff]
        %v447 = vld [vmem:[%s1] sm:$0xff]
        %v448 = vld [vmem:[%s1 + $0x8] sm:$0xff]
        %v449 = vld [vmem:[%s1 + $0x10] sm:$0x1]
        %vm450 = vcmask 261120
        %v451 = vsel %vm450, %v431, 0.0
        %v452 = vsel %vm450, %v432, 0.0
        %v453 = vadd.f32 %v451, %v452
        %v454 = vrot.slane %v453, 4
        %v455 = vadd.f32 %v453, %v454
        %v456 = vrot.slane %v455, 2
        %v457 = vadd.f32 %v455, %v456
        %v458 = vrot.slane %v457, 1
        %v459 = vadd.f32 %v457, %v458
        %v460 = vsel %vm450, %v433, 0.0
        %v461 = vsel %vm450, %v434, 0.0
        %v462 = vadd.f32 %v460, %v461
        %v463 = vrot.slane %v462, 4
        %v464 = vadd.f32 %v462, %v463
        %v465 = vrot.slane %v464, 2
        %v466 = vadd.f32 %v464, %v465
        %v467 = vrot.slane %v466, 1
        %v468 = vadd.f32 %v466, %v467
        %v469 = vsel %vm450, %v435, 0.0
        %v470 = vsel %vm450, %v436, 0.0
        %v471 = vadd.f32 %v469, %v470
        %v472 = vrot.slane %v471, 4
        %v473 = vadd.f32 %v471, %v472
        %v474 = vrot.slane %v473, 2
        %v475 = vadd.f32 %v473, %v474
        %v476 = vrot.slane %v475, 1
        %v477 = vadd.f32 %v475, %v476
        %v478 = vsel %vm450, %v437, 0.0
        %v479 = vsel %vm450, %v438, 0.0
        %v480 = vadd.f32 %v478, %v479
        %v481 = vrot.slane %v480, 4
        %v482 = vadd.f32 %v480, %v481
        %v483 = vrot.slane %v482, 2
        %v484 = vadd.f32 %v482, %v483
        %v485 = vrot.slane %v484, 1
        %v486 = vadd.f32 %v484, %v485
        %v487 = vsel %vm450, %v439, 0.0
        %v488 = vsel %vm450, %v440, 0.0
        %v489 = vadd.f32 %v487, %v488
        %v490 = vrot.slane %v489, 4
        %v491 = vadd.f32 %v489, %v490
        %v492 = vrot.slane %v491, 2
        %v493 = vadd.f32 %v491, %v492
        %v494 = vrot.slane %v493, 1
        %v495 = vadd.f32 %v493, %v494
        %v496 = vsel %vm450, %v441, 0.0
        %v497 = vsel %vm450, %v442, 0.0
        %v498 = vadd.f32 %v496, %v497
        %v499 = vrot.slane %v498, 4
        %v500 = vadd.f32 %v498, %v499
        %v501 = vrot.slane %v500, 2
        %v502 = vadd.f32 %v500, %v501
        %v503 = vrot.slane %v502, 1
        %v504 = vadd.f32 %v502, %v503
        %v505 = vsel %vm450, %v443, 0.0
        %v506 = vsel %vm450, %v444, 0.0
        %v507 = vadd.f32 %v505, %v506
        %v508 = vrot.slane %v507, 4
        %v509 = vadd.f32 %v507, %v508
        %v510 = vrot.slane %v509, 2
        %v511 = vadd.f32 %v509, %v510
        %v512 = vrot.slane %v511, 1
        %v513 = vadd.f32 %v511, %v512
        %v514 = vsel %vm450, %v445, 0.0
        %v515 = vsel %vm450, %v446, 0.0
        %v516 = vadd.f32 %v514, %v515
        %v517 = vrot.slane %v516, 4
        %v518 = vadd.f32 %v516, %v517
        %v519 = vrot.slane %v518, 2
        %v520 = vadd.f32 %v518, %v519
        %v521 = vrot.slane %v520, 1
        %v522 = vadd.f32 %v520, %v521
        %v523 = vrcp.pop 16.0
        %v524 = vmul.f32 %v459, %v523
        %v525 = vmul.f32 %v468, %v523
        %v526 = vmul.f32 %v477, %v523
        %v527 = vmul.f32 %v486, %v523
        %v528 = vmul.f32 %v495, %v523
        %v529 = vmul.f32 %v504, %v523
        %v530 = vmul.f32 %v513, %v523
        %v531 = vmul.f32 %v522, %v523
        %vm548 = vcmask 1040384
        %v549 = vrot.slane %v431, 7
        %v550 = vrot.slane %v432, 7
        %v551 = vsel %vm548, %v549, %v550
        %v552 = vrot.slane %v433, 7
        %v553 = vrot.slane %v434, 7
        %v554 = vsel %vm548, %v552, %v553
        %v555 = vrot.slane %v435, 7
        %v556 = vrot.slane %v436, 7
        %v557 = vsel %vm548, %v555, %v556
        %v558 = vrot.slane %v437, 7
        %v559 = vrot.slane %v438, 7
        %v560 = vsel %vm548, %v558, %v559
        %v561 = vrot.slane %v439, 7
        %v562 = vrot.slane %v440, 7
        %v563 = vsel %vm548, %v561, %v562
        %v564 = vrot.slane %v441, 7
        %v565 = vrot.slane %v442, 7
        %v566 = vsel %vm548, %v564, %v565
        %v567 = vrot.slane %v443, 7
        %v568 = vrot.slane %v444, 7
        %v569 = vsel %vm548, %v567, %v568
        %v570 = vrot.slane %v445, 7
        %v571 = vrot.slane %v446, 7
        %v572 = vsel %vm548, %v570, %v571
        %v597 = vsel %vm548, %v524, %v549
        %v598 = vsel %vm548, %v525, %v552
        %v599 = vsel %vm548, %v526, %v555
        %v600 = vsel %vm548, %v527, %v558
        %v601 = vsel %vm548, %v528, %v561
        %v602 = vsel %vm548, %v529, %v564
        %v603 = vsel %vm548, %v530, %v567
        %v604 = vsel %vm548, %v531, %v570
        %v605 = vadd.f32 %v597, %v447
        %v606 = vadd.f32 %v551, %v448
        %v607 = vadd.f32 %v550, %v449
        %v608 = vadd.f32 %v598, %v447
        %v609 = vadd.f32 %v554, %v448
        %v610 = vadd.f32 %v553, %v449
        %v611 = vadd.f32 %v599, %v447
        %v612 = vadd.f32 %v557, %v448
        %v613 = vadd.f32 %v556, %v449
        %v614 = vadd.f32 %v600, %v447
        %v615 = vadd.f32 %v560, %v448
        %v616 = vadd.f32 %v559, %v449
        %v617 = vadd.f32 %v601, %v447
        %v618 = vadd.f32 %v563, %v448
        %v619 = vadd.f32 %v562, %v449
        %v620 = vadd.f32 %v602, %v447
        %v621 = vadd.f32 %v566, %v448
        %v622 = vadd.f32 %v565, %v449
        %v623 = vadd.f32 %v603, %v447
        %v624 = vadd.f32 %v569, %v448
        %v625 = vadd.f32 %v568, %v449
        %v626 = vadd.f32 %v604, %v447
        %v627 = vadd.f32 %v572, %v448
        %v628 = vadd.f32 %v571, %v449
        %v653 = vcombine.high %v605, %v605
        %v655 = vunpack.c.l.s4 1966171168
        %v656 = vunpack.c.0.s8 %v655
        %v657 = vlaneseq
        %v658 = vshrl.u32 %v657, 7
        %v659 = vsub.s32 %v656, %v658
        %v660 = vrot.slane %v605, %v659
        %v662 = vunpack.c.l.s4 1966171168
        %v663 = vunpack.c.0.s8 %v662
        %v664 = vlaneseq
        %v665 = vshrl.u32 %v664, 7
        %v666 = vsub.s32 %v663, %v665
        %v667 = vrot.slane %v653, %v666
        %v668 = vcombine.high %v660, %v660
        %v669 = vcombine.high %v667, %v667
        %v671 = vunpack.c.l.s4 1966171168
        %v672 = vunpack.c.0.s8 %v671
        %v673 = vlaneseq
        %v674 = vshrl.u32 %v673, 7
        %v675 = vsub.s32 %v672, %v674
        %v676 = vrot.slane %v660, %v675
        %v678 = vunpack.c.l.s4 1966171168
        %v679 = vunpack.c.0.s8 %v678
        %v680 = vlaneseq
        %v681 = vshrl.u32 %v680, 7
        %v682 = vsub.s32 %v679, %v681
        %v683 = vrot.slane %v667, %v682
        %v685 = vunpack.c.l.s4 1966171168
        %v686 = vunpack.c.0.s8 %v685
        %v687 = vlaneseq
        %v688 = vshrl.u32 %v687, 7
        %v689 = vsub.s32 %v686, %v688
        %v690 = vrot.slane %v668, %v689
        %v692 = vunpack.c.l.s4 1966171168
        %v693 = vunpack.c.0.s8 %v692
        %v694 = vlaneseq
        %v695 = vshrl.u32 %v694, 7
        %v696 = vsub.s32 %v693, %v695
        %v697 = vrot.slane %v669, %v696
        %v698 = vcombine.high %v676, %v676
        %v699 = vcombine.high %v683, %v683
        %v700 = vcombine.high %v690, %v690
        %v701 = vcombine.high %v697, %v697
        %v702 = vcombine.high %v606, %v606
        %v704 = vunpack.c.l.s4 1966171168
        %v705 = vunpack.c.0.s8 %v704
        %v706 = vlaneseq
        %v707 = vshrl.u32 %v706, 7
        %v708 = vsub.s32 %v705, %v707
        %v709 = vrot.slane %v606, %v708
        %v711 = vunpack.c.l.s4 1966171168
        %v712 = vunpack.c.0.s8 %v711
        %v713 = vlaneseq
        %v714 = vshrl.u32 %v713, 7
        %v715 = vsub.s32 %v712, %v714
        %v716 = vrot.slane %v702, %v715
        %v717 = vcombine.high %v709, %v709
        %v718 = vcombine.high %v716, %v716
        %v720 = vunpack.c.l.s4 1966171168
        %v721 = vunpack.c.0.s8 %v720
        %v722 = vlaneseq
        %v723 = vshrl.u32 %v722, 7
        %v724 = vsub.s32 %v721, %v723
        %v725 = vrot.slane %v709, %v724
        %v727 = vunpack.c.l.s4 1966171168
        %v728 = vunpack.c.0.s8 %v727
        %v729 = vlaneseq
        %v730 = vshrl.u32 %v729, 7
        %v731 = vsub.s32 %v728, %v730
        %v732 = vrot.slane %v716, %v731
        %v734 = vunpack.c.l.s4 1966171168
        %v735 = vunpack.c.0.s8 %v734
        %v736 = vlaneseq
        %v737 = vshrl.u32 %v736, 7
        %v738 = vsub.s32 %v735, %v737
        %v739 = vrot.slane %v717, %v738
        %v741 = vunpack.c.l.s4 1966171168
        %v742 = vunpack.c.0.s8 %v741
        %v743 = vlaneseq
        %v744 = vshrl.u32 %v743, 7
        %v745 = vsub.s32 %v742, %v744
        %v746 = vrot.slane %v718, %v745
        %v747 = vcombine.high %v725, %v725
        %v748 = vcombine.high %v732, %v732
        %v749 = vcombine.high %v739, %v739
        %v750 = vcombine.high %v746, %v746
        %v752 = vunpack.c.l.s4 1966171168
        %v753 = vunpack.c.0.s8 %v752
        %v754 = vlaneseq
        %v755 = vshrl.u32 %v754, 7
        %v756 = vsub.s32 %v753, %v755
        %v757 = vrot.slane %v607, %v756
        %v759 = vunpack.c.l.s4 1966171168
        %v760 = vunpack.c.0.s8 %v759
        %v761 = vlaneseq
        %v762 = vshrl.u32 %v761, 7
        %v763 = vsub.s32 %v760, %v762
        %v764 = vrot.slane %v757, %v763
        %v765 = vcombine.high %v608, %v608
        %v767 = vunpack.c.l.s4 1966171168
        %v768 = vunpack.c.0.s8 %v767
        %v769 = vlaneseq
        %v770 = vshrl.u32 %v769, 7
        %v771 = vsub.s32 %v768, %v770
        %v772 = vrot.slane %v608, %v771
        %v774 = vunpack.c.l.s4 1966171168
        %v775 = vunpack.c.0.s8 %v774
        %v776 = vlaneseq
        %v777 = vshrl.u32 %v776, 7
        %v778 = vsub.s32 %v775, %v777
        %v779 = vrot.slane %v765, %v778
        %v780 = vcombine.high %v772, %v772
        %v781 = vcombine.high %v779, %v779
        %v783 = vunpack.c.l.s4 1966171168
        %v784 = vunpack.c.0.s8 %v783
        %v785 = vlaneseq
        %v786 = vshrl.u32 %v785, 7
        %v787 = vsub.s32 %v784, %v786
        %v788 = vrot.slane %v772, %v787
        %v790 = vunpack.c.l.s4 1966171168
        %v791 = vunpack.c.0.s8 %v790
        %v792 = vlaneseq
        %v793 = vshrl.u32 %v792, 7
        %v794 = vsub.s32 %v791, %v793
        %v795 = vrot.slane %v779, %v794
        %v797 = vunpack.c.l.s4 1966171168
        %v798 = vunpack.c.0.s8 %v797
        %v799 = vlaneseq
        %v800 = vshrl.u32 %v799, 7
        %v801 = vsub.s32 %v798, %v800
        %v802 = vrot.slane %v780, %v801
        %v804 = vunpack.c.l.s4 1966171168
        %v805 = vunpack.c.0.s8 %v804
        %v806 = vlaneseq
        %v807 = vshrl.u32 %v806, 7
        %v808 = vsub.s32 %v805, %v807
        %v809 = vrot.slane %v781, %v808
        %v810 = vcombine.high %v788, %v788
        %v811 = vcombine.high %v795, %v795
        %v812 = vcombine.high %v802, %v802
        %v813 = vcombine.high %v809, %v809
        %v814 = vcombine.high %v609, %v609
        %v816 = vunpack.c.l.s4 1966171168
        %v817 = vunpack.c.0.s8 %v816
        %v818 = vlaneseq
        %v819 = vshrl.u32 %v818, 7
        %v820 = vsub.s32 %v817, %v819
        %v821 = vrot.slane %v609, %v820
        %v823 = vunpack.c.l.s4 1966171168
        %v824 = vunpack.c.0.s8 %v823
        %v825 = vlaneseq
        %v826 = vshrl.u32 %v825, 7
        %v827 = vsub.s32 %v824, %v826
        %v828 = vrot.slane %v814, %v827
        %v829 = vcombine.high %v821, %v821
        %v830 = vcombine.high %v828, %v828
        %v832 = vunpack.c.l.s4 1966171168
        %v833 = vunpack.c.0.s8 %v832
        %v834 = vlaneseq
        %v835 = vshrl.u32 %v834, 7
        %v836 = vsub.s32 %v833, %v835
        %v837 = vrot.slane %v821, %v836
        %v839 = vunpack.c.l.s4 1966171168
        %v840 = vunpack.c.0.s8 %v839
        %v841 = vlaneseq
        %v842 = vshrl.u32 %v841, 7
        %v843 = vsub.s32 %v840, %v842
        %v844 = vrot.slane %v828, %v843
        %v846 = vunpack.c.l.s4 1966171168
        %v847 = vunpack.c.0.s8 %v846
        %v848 = vlaneseq
        %v849 = vshrl.u32 %v848, 7
        %v850 = vsub.s32 %v847, %v849
        %v851 = vrot.slane %v829, %v850
        %v853 = vunpack.c.l.s4 1966171168
        %v854 = vunpack.c.0.s8 %v853
        %v855 = vlaneseq
        %v856 = vshrl.u32 %v855, 7
        %v857 = vsub.s32 %v854, %v856
        %v858 = vrot.slane %v830, %v857
        %v859 = vcombine.high %v837, %v837
        %v860 = vcombine.high %v844, %v844
        %v861 = vcombine.high %v851, %v851
        %v862 = vcombine.high %v858, %v858
        %v864 = vunpack.c.l.s4 1966171168
        %v865 = vunpack.c.0.s8 %v864
        %v866 = vlaneseq
        %v867 = vshrl.u32 %v866, 7
        %v868 = vsub.s32 %v865, %v867
        %v869 = vrot.slane %v610, %v868
        %v871 = vunpack.c.l.s4 1966171168
        %v872 = vunpack.c.0.s8 %v871
        %v873 = vlaneseq
        %v874 = vshrl.u32 %v873, 7
        %v875 = vsub.s32 %v872, %v874
        %v876 = vrot.slane %v869, %v875
        %v877 = vcombine.high %v611, %v611
        %v879 = vunpack.c.l.s4 1966171168
        %v880 = vunpack.c.0.s8 %v879
        %v881 = vlaneseq
        %v882 = vshrl.u32 %v881, 7
        %v883 = vsub.s32 %v880, %v882
        %v884 = vrot.slane %v611, %v883
        %v886 = vunpack.c.l.s4 1966171168
        %v887 = vunpack.c.0.s8 %v886
        %v888 = vlaneseq
        %v889 = vshrl.u32 %v888, 7
        %v890 = vsub.s32 %v887, %v889
        %v891 = vrot.slane %v877, %v890
        %v892 = vcombine.high %v884, %v884
        %v893 = vcombine.high %v891, %v891
        %v895 = vunpack.c.l.s4 1966171168
        %v896 = vunpack.c.0.s8 %v895
        %v897 = vlaneseq
        %v898 = vshrl.u32 %v897, 7
        %v899 = vsub.s32 %v896, %v898
        %v900 = vrot.slane %v884, %v899
        %v902 = vunpack.c.l.s4 1966171168
        %v903 = vunpack.c.0.s8 %v902
        %v904 = vlaneseq
        %v905 = vshrl.u32 %v904, 7
        %v906 = vsub.s32 %v903, %v905
        %v907 = vrot.slane %v891, %v906
        %v909 = vunpack.c.l.s4 1966171168
        %v910 = vunpack.c.0.s8 %v909
        %v911 = vlaneseq
        %v912 = vshrl.u32 %v911, 7
        %v913 = vsub.s32 %v910, %v912
        %v914 = vrot.slane %v892, %v913
        %v916 = vunpack.c.l.s4 1966171168
        %v917 = vunpack.c.0.s8 %v916
        %v918 = vlaneseq
        %v919 = vshrl.u32 %v918, 7
        %v920 = vsub.s32 %v917, %v919
        %v921 = vrot.slane %v893, %v920
        %v922 = vcombine.high %v900, %v900
        %v923 = vcombine.high %v907, %v907
        %v924 = vcombine.high %v914, %v914
        %v925 = vcombine.high %v921, %v921
        %v926 = vcombine.high %v612, %v612
        %v928 = vunpack.c.l.s4 1966171168
        %v929 = vunpack.c.0.s8 %v928
        %v930 = vlaneseq
        %v931 = vshrl.u32 %v930, 7
        %v932 = vsub.s32 %v929, %v931
        %v933 = vrot.slane %v612, %v932
        %v935 = vunpack.c.l.s4 1966171168
        %v936 = vunpack.c.0.s8 %v935
        %v937 = vlaneseq
        %v938 = vshrl.u32 %v937, 7
        %v939 = vsub.s32 %v936, %v938
        %v940 = vrot.slane %v926, %v939
        %v941 = vcombine.high %v933, %v933
        %v942 = vcombine.high %v940, %v940
        %v944 = vunpack.c.l.s4 1966171168
        %v945 = vunpack.c.0.s8 %v944
        %v946 = vlaneseq
        %v947 = vshrl.u32 %v946, 7
        %v948 = vsub.s32 %v945, %v947
        %v949 = vrot.slane %v933, %v948
        %v951 = vunpack.c.l.s4 1966171168
        %v952 = vunpack.c.0.s8 %v951
        %v953 = vlaneseq
        %v954 = vshrl.u32 %v953, 7
        %v955 = vsub.s32 %v952, %v954
        %v956 = vrot.slane %v940, %v955
        %v958 = vunpack.c.l.s4 1966171168
        %v959 = vunpack.c.0.s8 %v958
        %v960 = vlaneseq
        %v961 = vshrl.u32 %v960, 7
        %v962 = vsub.s32 %v959, %v961
        %v963 = vrot.slane %v941, %v962
        %v965 = vunpack.c.l.s4 1966171168
        %v966 = vunpack.c.0.s8 %v965
        %v967 = vlaneseq
        %v968 = vshrl.u32 %v967, 7
        %v969 = vsub.s32 %v966, %v968
        %v970 = vrot.slane %v942, %v969
        %v971 = vcombine.high %v949, %v949
        %v972 = vcombine.high %v956, %v956
        %v973 = vcombine.high %v963, %v963
        %v974 = vcombine.high %v970, %v970
        %v976 = vunpack.c.l.s4 1966171168
        %v977 = vunpack.c.0.s8 %v976
        %v978 = vlaneseq
        %v979 = vshrl.u32 %v978, 7
        %v980 = vsub.s32 %v977, %v979
        %v981 = vrot.slane %v613, %v980
        %v983 = vunpack.c.l.s4 1966171168
        %v984 = vunpack.c.0.s8 %v983
        %v985 = vlaneseq
        %v986 = vshrl.u32 %v985, 7
        %v987 = vsub.s32 %v984, %v986
        %v988 = vrot.slane %v981, %v987
        %v989 = vcombine.high %v614, %v614
        %v991 = vunpack.c.l.s4 1966171168
        %v992 = vunpack.c.0.s8 %v991
        %v993 = vlaneseq
        %v994 = vshrl.u32 %v993, 7
        %v995 = vsub.s32 %v992, %v994
        %v996 = vrot.slane %v614, %v995
        %v998 = vunpack.c.l.s4 1966171168
        %v999 = vunpack.c.0.s8 %v998
        %v1000 = vlaneseq
        %v1001 = vshrl.u32 %v1000, 7
        %v1002 = vsub.s32 %v999, %v1001
        %v1003 = vrot.slane %v989, %v1002
        %v1004 = vcombine.high %v996, %v996
        %v1005 = vcombine.high %v1003, %v1003
        %v1007 = vunpack.c.l.s4 1966171168
        %v1008 = vunpack.c.0.s8 %v1007
        %v1009 = vlaneseq
        %v1010 = vshrl.u32 %v1009, 7
        %v1011 = vsub.s32 %v1008, %v1010
        %v1012 = vrot.slane %v996, %v1011
        %v1014 = vunpack.c.l.s4 1966171168
        %v1015 = vunpack.c.0.s8 %v1014
        %v1016 = vlaneseq
        %v1017 = vshrl.u32 %v1016, 7
        %v1018 = vsub.s32 %v1015, %v1017
        %v1019 = vrot.slane %v1003, %v1018
        %v1021 = vunpack.c.l.s4 1966171168
        %v1022 = vunpack.c.0.s8 %v1021
        %v1023 = vlaneseq
        %v1024 = vshrl.u32 %v1023, 7
        %v1025 = vsub.s32 %v1022, %v1024
        %v1026 = vrot.slane %v1004, %v1025
        %v1028 = vunpack.c.l.s4 1966171168
        %v1029 = vunpack.c.0.s8 %v1028
        %v1030 = vlaneseq
        %v1031 = vshrl.u32 %v1030, 7
        %v1032 = vsub.s32 %v1029, %v1031
        %v1033 = vrot.slane %v1005, %v1032
        %v1034 = vcombine.high %v1012, %v1012
        %v1035 = vcombine.high %v1019, %v1019
        %v1036 = vcombine.high %v1026, %v1026
        %v1037 = vcombine.high %v1033, %v1033
        %v1038 = vcombine.high %v615, %v615
        %v1040 = vunpack.c.l.s4 1966171168
        %v1041 = vunpack.c.0.s8 %v1040
        %v1042 = vlaneseq
        %v1043 = vshrl.u32 %v1042, 7
        %v1044 = vsub.s32 %v1041, %v1043
        %v1045 = vrot.slane %v615, %v1044
        %v1047 = vunpack.c.l.s4 1966171168
        %v1048 = vunpack.c.0.s8 %v1047
        %v1049 = vlaneseq
        %v1050 = vshrl.u32 %v1049, 7
        %v1051 = vsub.s32 %v1048, %v1050
        %v1052 = vrot.slane %v1038, %v1051
        %v1053 = vcombine.high %v1045, %v1045
        %v1054 = vcombine.high %v1052, %v1052
        %v1056 = vunpack.c.l.s4 1966171168
        %v1057 = vunpack.c.0.s8 %v1056
        %v1058 = vlaneseq
        %v1059 = vshrl.u32 %v1058, 7
        %v1060 = vsub.s32 %v1057, %v1059
        %v1061 = vrot.slane %v1045, %v1060
        %v1063 = vunpack.c.l.s4 1966171168
        %v1064 = vunpack.c.0.s8 %v1063
        %v1065 = vlaneseq
        %v1066 = vshrl.u32 %v1065, 7
        %v1067 = vsub.s32 %v1064, %v1066
        %v1068 = vrot.slane %v1052, %v1067
        %v1070 = vunpack.c.l.s4 1966171168
        %v1071 = vunpack.c.0.s8 %v1070
        %v1072 = vlaneseq
        %v1073 = vshrl.u32 %v1072, 7
        %v1074 = vsub.s32 %v1071, %v1073
        %v1075 = vrot.slane %v1053, %v1074
        %v1077 = vunpack.c.l.s4 1966171168
        %v1078 = vunpack.c.0.s8 %v1077
        %v1079 = vlaneseq
        %v1080 = vshrl.u32 %v1079, 7
        %v1081 = vsub.s32 %v1078, %v1080
        %v1082 = vrot.slane %v1054, %v1081
        %v1083 = vcombine.high %v1061, %v1061
        %v1084 = vcombine.high %v1068, %v1068
        %v1085 = vcombine.high %v1075, %v1075
        %v1086 = vcombine.high %v1082, %v1082
        %v1088 = vunpack.c.l.s4 1966171168
        %v1089 = vunpack.c.0.s8 %v1088
        %v1090 = vlaneseq
        %v1091 = vshrl.u32 %v1090, 7
        %v1092 = vsub.s32 %v1089, %v1091
        %v1093 = vrot.slane %v616, %v1092
        %v1095 = vunpack.c.l.s4 1966171168
        %v1096 = vunpack.c.0.s8 %v1095
        %v1097 = vlaneseq
        %v1098 = vshrl.u32 %v1097, 7
        %v1099 = vsub.s32 %v1096, %v1098
        %v1100 = vrot.slane %v1093, %v1099
        %v1101 = vcombine.high %v617, %v617
        %v1103 = vunpack.c.l.s4 1966171168
        %v1104 = vunpack.c.0.s8 %v1103
        %v1105 = vlaneseq
        %v1106 = vshrl.u32 %v1105, 7
        %v1107 = vsub.s32 %v1104, %v1106
        %v1108 = vrot.slane %v617, %v1107
        %v1110 = vunpack.c.l.s4 1966171168
        %v1111 = vunpack.c.0.s8 %v1110
        %v1112 = vlaneseq
        %v1113 = vshrl.u32 %v1112, 7
        %v1114 = vsub.s32 %v1111, %v1113
        %v1115 = vrot.slane %v1101, %v1114
        %v1116 = vcombine.high %v1108, %v1108
        %v1117 = vcombine.high %v1115, %v1115
        %v1119 = vunpack.c.l.s4 1966171168
        %v1120 = vunpack.c.0.s8 %v1119
        %v1121 = vlaneseq
        %v1122 = vshrl.u32 %v1121, 7
        %v1123 = vsub.s32 %v1120, %v1122
        %v1124 = vrot.slane %v1108, %v1123
        %v1126 = vunpack.c.l.s4 1966171168
        %v1127 = vunpack.c.0.s8 %v1126
        %v1128 = vlaneseq
        %v1129 = vshrl.u32 %v1128, 7
        %v1130 = vsub.s32 %v1127, %v1129
        %v1131 = vrot.slane %v1115, %v1130
        %v1133 = vunpack.c.l.s4 1966171168
        %v1134 = vunpack.c.0.s8 %v1133
        %v1135 = vlaneseq
        %v1136 = vshrl.u32 %v1135, 7
        %v1137 = vsub.s32 %v1134, %v1136
        %v1138 = vrot.slane %v1116, %v1137
        %v1140 = vunpack.c.l.s4 1966171168
        %v1141 = vunpack.c.0.s8 %v1140
        %v1142 = vlaneseq
        %v1143 = vshrl.u32 %v1142, 7
        %v1144 = vsub.s32 %v1141, %v1143
        %v1145 = vrot.slane %v1117, %v1144
        %v1146 = vcombine.high %v1124, %v1124
        %v1147 = vcombine.high %v1131, %v1131
        %v1148 = vcombine.high %v1138, %v1138
        %v1149 = vcombine.high %v1145, %v1145
        %v1150 = vcombine.high %v618, %v618
        %v1152 = vunpack.c.l.s4 1966171168
        %v1153 = vunpack.c.0.s8 %v1152
        %v1154 = vlaneseq
        %v1155 = vshrl.u32 %v1154, 7
        %v1156 = vsub.s32 %v1153, %v1155
        %v1157 = vrot.slane %v618, %v1156
        %v1159 = vunpack.c.l.s4 1966171168
        %v1160 = vunpack.c.0.s8 %v1159
        %v1161 = vlaneseq
        %v1162 = vshrl.u32 %v1161, 7
        %v1163 = vsub.s32 %v1160, %v1162
        %v1164 = vrot.slane %v1150, %v1163
        %v1165 = vcombine.high %v1157, %v1157
        %v1166 = vcombine.high %v1164, %v1164
        %v1168 = vunpack.c.l.s4 1966171168
        %v1169 = vunpack.c.0.s8 %v1168
        %v1170 = vlaneseq
        %v1171 = vshrl.u32 %v1170, 7
        %v1172 = vsub.s32 %v1169, %v1171
        %v1173 = vrot.slane %v1157, %v1172
        %v1175 = vunpack.c.l.s4 1966171168
        %v1176 = vunpack.c.0.s8 %v1175
        %v1177 = vlaneseq
        %v1178 = vshrl.u32 %v1177, 7
        %v1179 = vsub.s32 %v1176, %v1178
        %v1180 = vrot.slane %v1164, %v1179
        %v1182 = vunpack.c.l.s4 1966171168
        %v1183 = vunpack.c.0.s8 %v1182
        %v1184 = vlaneseq
        %v1185 = vshrl.u32 %v1184, 7
        %v1186 = vsub.s32 %v1183, %v1185
        %v1187 = vrot.slane %v1165, %v1186
        %v1189 = vunpack.c.l.s4 1966171168
        %v1190 = vunpack.c.0.s8 %v1189
        %v1191 = vlaneseq
        %v1192 = vshrl.u32 %v1191, 7
        %v1193 = vsub.s32 %v1190, %v1192
        %v1194 = vrot.slane %v1166, %v1193
        %v1195 = vcombine.high %v1173, %v1173
        %v1196 = vcombine.high %v1180, %v1180
        %v1197 = vcombine.high %v1187, %v1187
        %v1198 = vcombine.high %v1194, %v1194
        %v1200 = vunpack.c.l.s4 1966171168
        %v1201 = vunpack.c.0.s8 %v1200
        %v1202 = vlaneseq
        %v1203 = vshrl.u32 %v1202, 7
        %v1204 = vsub.s32 %v1201, %v1203
        %v1205 = vrot.slane %v619, %v1204
        %v1207 = vunpack.c.l.s4 1966171168
        %v1208 = vunpack.c.0.s8 %v1207
        %v1209 = vlaneseq
        %v1210 = vshrl.u32 %v1209, 7
        %v1211 = vsub.s32 %v1208, %v1210
        %v1212 = vrot.slane %v1205, %v1211
        %v1213 = vcombine.high %v620, %v620
        %v1215 = vunpack.c.l.s4 1966171168
        %v1216 = vunpack.c.0.s8 %v1215
        %v1217 = vlaneseq
        %v1218 = vshrl.u32 %v1217, 7
        %v1219 = vsub.s32 %v1216, %v1218
        %v1220 = vrot.slane %v620, %v1219
        %v1222 = vunpack.c.l.s4 1966171168
        %v1223 = vunpack.c.0.s8 %v1222
        %v1224 = vlaneseq
        %v1225 = vshrl.u32 %v1224, 7
        %v1226 = vsub.s32 %v1223, %v1225
        %v1227 = vrot.slane %v1213, %v1226
        %v1228 = vcombine.high %v1220, %v1220
        %v1229 = vcombine.high %v1227, %v1227
        %v1231 = vunpack.c.l.s4 1966171168
        %v1232 = vunpack.c.0.s8 %v1231
        %v1233 = vlaneseq
        %v1234 = vshrl.u32 %v1233, 7
        %v1235 = vsub.s32 %v1232, %v1234
        %v1236 = vrot.slane %v1220, %v1235
        %v1238 = vunpack.c.l.s4 1966171168
        %v1239 = vunpack.c.0.s8 %v1238
        %v1240 = vlaneseq
        %v1241 = vshrl.u32 %v1240, 7
        %v1242 = vsub.s32 %v1239, %v1241
        %v1243 = vrot.slane %v1227, %v1242
        %v1245 = vunpack.c.l.s4 1966171168
        %v1246 = vunpack.c.0.s8 %v1245
        %v1247 = vlaneseq
        %v1248 = vshrl.u32 %v1247, 7
        %v1249 = vsub.s32 %v1246, %v1248
        %v1250 = vrot.slane %v1228, %v1249
        %v1252 = vunpack.c.l.s4 1966171168
        %v1253 = vunpack.c.0.s8 %v1252
        %v1254 = vlaneseq
        %v1255 = vshrl.u32 %v1254, 7
        %v1256 = vsub.s32 %v1253, %v1255
        %v1257 = vrot.slane %v1229, %v1256
        %v1258 = vcombine.high %v1236, %v1236
        %v1259 = vcombine.high %v1243, %v1243
        %v1260 = vcombine.high %v1250, %v1250
        %v1261 = vcombine.high %v1257, %v1257
        %v1262 = vcombine.high %v621, %v621
        %v1264 = vunpack.c.l.s4 1966171168
        %v1265 = vunpack.c.0.s8 %v1264
        %v1266 = vlaneseq
        %v1267 = vshrl.u32 %v1266, 7
        %v1268 = vsub.s32 %v1265, %v1267
        %v1269 = vrot.slane %v621, %v1268
        %v1271 = vunpack.c.l.s4 1966171168
        %v1272 = vunpack.c.0.s8 %v1271
        %v1273 = vlaneseq
        %v1274 = vshrl.u32 %v1273, 7
        %v1275 = vsub.s32 %v1272, %v1274
        %v1276 = vrot.slane %v1262, %v1275
        %v1277 = vcombine.high %v1269, %v1269
        %v1278 = vcombine.high %v1276, %v1276
        %v1280 = vunpack.c.l.s4 1966171168
        %v1281 = vunpack.c.0.s8 %v1280
        %v1282 = vlaneseq
        %v1283 = vshrl.u32 %v1282, 7
        %v1284 = vsub.s32 %v1281, %v1283
        %v1285 = vrot.slane %v1269, %v1284
        %v1287 = vunpack.c.l.s4 1966171168
        %v1288 = vunpack.c.0.s8 %v1287
        %v1289 = vlaneseq
        %v1290 = vshrl.u32 %v1289, 7
        %v1291 = vsub.s32 %v1288, %v1290
        %v1292 = vrot.slane %v1276, %v1291
        %v1294 = vunpack.c.l.s4 1966171168
        %v1295 = vunpack.c.0.s8 %v1294
        %v1296 = vlaneseq
        %v1297 = vshrl.u32 %v1296, 7
        %v1298 = vsub.s32 %v1295, %v1297
        %v1299 = vrot.slane %v1277, %v1298
        %v1301 = vunpack.c.l.s4 1966171168
        %v1302 = vunpack.c.0.s8 %v1301
        %v1303 = vlaneseq
        %v1304 = vshrl.u32 %v1303, 7
        %v1305 = vsub.s32 %v1302, %v1304
        %v1306 = vrot.slane %v1278, %v1305
        %v1307 = vcombine.high %v1285, %v1285
        %v1308 = vcombine.high %v1292, %v1292
        %v1309 = vcombine.high %v1299, %v1299
        %v1310 = vcombine.high %v1306, %v1306
        %v1312 = vunpack.c.l.s4 1966171168
        %v1313 = vunpack.c.0.s8 %v1312
        %v1314 = vlaneseq
        %v1315 = vshrl.u32 %v1314, 7
        %v1316 = vsub.s32 %v1313, %v1315
        %v1317 = vrot.slane %v622, %v1316
        %v1319 = vunpack.c.l.s4 1966171168
        %v1320 = vunpack.c.0.s8 %v1319
        %v1321 = vlaneseq
        %v1322 = vshrl.u32 %v1321, 7
        %v1323 = vsub.s32 %v1320, %v1322
        %v1324 = vrot.slane %v1317, %v1323
        %v1325 = vcombine.high %v623, %v623
        %v1327 = vunpack.c.l.s4 1966171168
        %v1328 = vunpack.c.0.s8 %v1327
        %v1329 = vlaneseq
        %v1330 = vshrl.u32 %v1329, 7
        %v1331 = vsub.s32 %v1328, %v1330
        %v1332 = vrot.slane %v623, %v1331
        %v1334 = vunpack.c.l.s4 1966171168
        %v1335 = vunpack.c.0.s8 %v1334
        %v1336 = vlaneseq
        %v1337 = vshrl.u32 %v1336, 7
        %v1338 = vsub.s32 %v1335, %v1337
        %v1339 = vrot.slane %v1325, %v1338
        %v1340 = vcombine.high %v1332, %v1332
        %v1341 = vcombine.high %v1339, %v1339
        %v1343 = vunpack.c.l.s4 1966171168
        %v1344 = vunpack.c.0.s8 %v1343
        %v1345 = vlaneseq
        %v1346 = vshrl.u32 %v1345, 7
        %v1347 = vsub.s32 %v1344, %v1346
        %v1348 = vrot.slane %v1332, %v1347
        %v1350 = vunpack.c.l.s4 1966171168
        %v1351 = vunpack.c.0.s8 %v1350
        %v1352 = vlaneseq
        %v1353 = vshrl.u32 %v1352, 7
        %v1354 = vsub.s32 %v1351, %v1353
        %v1355 = vrot.slane %v1339, %v1354
        %v1357 = vunpack.c.l.s4 1966171168
        %v1358 = vunpack.c.0.s8 %v1357
        %v1359 = vlaneseq
        %v1360 = vshrl.u32 %v1359, 7
        %v1361 = vsub.s32 %v1358, %v1360
        %v1362 = vrot.slane %v1340, %v1361
        %v1364 = vunpack.c.l.s4 1966171168
        %v1365 = vunpack.c.0.s8 %v1364
        %v1366 = vlaneseq
        %v1367 = vshrl.u32 %v1366, 7
        %v1368 = vsub.s32 %v1365, %v1367
        %v1369 = vrot.slane %v1341, %v1368
        %v1370 = vcombine.high %v1348, %v1348
        %v1371 = vcombine.high %v1355, %v1355
        %v1372 = vcombine.high %v1362, %v1362
        %v1373 = vcombine.high %v1369, %v1369
        %v1374 = vcombine.high %v624, %v624
        %v1376 = vunpack.c.l.s4 1966171168
        %v1377 = vunpack.c.0.s8 %v1376
        %v1378 = vlaneseq
        %v1379 = vshrl.u32 %v1378, 7
        %v1380 = vsub.s32 %v1377, %v1379
        %v1381 = vrot.slane %v624, %v1380
        %v1383 = vunpack.c.l.s4 1966171168
        %v1384 = vunpack.c.0.s8 %v1383
        %v1385 = vlaneseq
        %v1386 = vshrl.u32 %v1385, 7
        %v1387 = vsub.s32 %v1384, %v1386
        %v1388 = vrot.slane %v1374, %v1387
        %v1389 = vcombine.high %v1381, %v1381
        %v1390 = vcombine.high %v1388, %v1388
        %v1392 = vunpack.c.l.s4 1966171168
        %v1393 = vunpack.c.0.s8 %v1392
        %v1394 = vlaneseq
        %v1395 = vshrl.u32 %v1394, 7
        %v1396 = vsub.s32 %v1393, %v1395
        %v1397 = vrot.slane %v1381, %v1396
        %v1399 = vunpack.c.l.s4 1966171168
        %v1400 = vunpack.c.0.s8 %v1399
        %v1401 = vlaneseq
        %v1402 = vshrl.u32 %v1401, 7
        %v1403 = vsub.s32 %v1400, %v1402
        %v1404 = vrot.slane %v1388, %v1403
        %v1406 = vunpack.c.l.s4 1966171168
        %v1407 = vunpack.c.0.s8 %v1406
        %v1408 = vlaneseq
        %v1409 = vshrl.u32 %v1408, 7
        %v1410 = vsub.s32 %v1407, %v1409
        %v1411 = vrot.slane %v1389, %v1410
        %v1413 = vunpack.c.l.s4 1966171168
        %v1414 = vunpack.c.0.s8 %v1413
        %v1415 = vlaneseq
        %v1416 = vshrl.u32 %v1415, 7
        %v1417 = vsub.s32 %v1414, %v1416
        %v1418 = vrot.slane %v1390, %v1417
        %v1419 = vcombine.high %v1397, %v1397
        %v1420 = vcombine.high %v1404, %v1404
        %v1421 = vcombine.high %v1411, %v1411
        %v1422 = vcombine.high %v1418, %v1418
        %v1424 = vunpack.c.l.s4 1966171168
        %v1425 = vunpack.c.0.s8 %v1424
        %v1426 = vlaneseq
        %v1427 = vshrl.u32 %v1426, 7
        %v1428 = vsub.s32 %v1425, %v1427
        %v1429 = vrot.slane %v625, %v1428
        %v1431 = vunpack.c.l.s4 1966171168
        %v1432 = vunpack.c.0.s8 %v1431
        %v1433 = vlaneseq
        %v1434 = vshrl.u32 %v1433, 7
        %v1435 = vsub.s32 %v1432, %v1434
        %v1436 = vrot.slane %v1429, %v1435
        %v1437 = vcombine.high %v626, %v626
        %v1439 = vunpack.c.l.s4 1966171168
        %v1440 = vunpack.c.0.s8 %v1439
        %v1441 = vlaneseq
        %v1442 = vshrl.u32 %v1441, 7
        %v1443 = vsub.s32 %v1440, %v1442
        %v1444 = vrot.slane %v626, %v1443
        %v1446 = vunpack.c.l.s4 1966171168
        %v1447 = vunpack.c.0.s8 %v1446
        %v1448 = vlaneseq
        %v1449 = vshrl.u32 %v1448, 7
        %v1450 = vsub.s32 %v1447, %v1449
        %v1451 = vrot.slane %v1437, %v1450
        %v1452 = vcombine.high %v1444, %v1444
        %v1453 = vcombine.high %v1451, %v1451
        %v1455 = vunpack.c.l.s4 1966171168
        %v1456 = vunpack.c.0.s8 %v1455
        %v1457 = vlaneseq
        %v1458 = vshrl.u32 %v1457, 7
        %v1459 = vsub.s32 %v1456, %v1458
        %v1460 = vrot.slane %v1444, %v1459
        %v1462 = vunpack.c.l.s4 1966171168
        %v1463 = vunpack.c.0.s8 %v1462
        %v1464 = vlaneseq
        %v1465 = vshrl.u32 %v1464, 7
        %v1466 = vsub.s32 %v1463, %v1465
        %v1467 = vrot.slane %v1451, %v1466
        %v1469 = vunpack.c.l.s4 1966171168
        %v1470 = vunpack.c.0.s8 %v1469
        %v1471 = vlaneseq
        %v1472 = vshrl.u32 %v1471, 7
        %v1473 = vsub.s32 %v1470, %v1472
        %v1474 = vrot.slane %v1452, %v1473
        %v1476 = vunpack.c.l.s4 1966171168
        %v1477 = vunpack.c.0.s8 %v1476
        %v1478 = vlaneseq
        %v1479 = vshrl.u32 %v1478, 7
        %v1480 = vsub.s32 %v1477, %v1479
        %v1481 = vrot.slane %v1453, %v1480
        %v1482 = vcombine.high %v1460, %v1460
        %v1483 = vcombine.high %v1467, %v1467
        %v1484 = vcombine.high %v1474, %v1474
        %v1485 = vcombine.high %v1481, %v1481
        %v1486 = vcombine.high %v627, %v627
        %v1488 = vunpack.c.l.s4 1966171168
        %v1489 = vunpack.c.0.s8 %v1488
        %v1490 = vlaneseq
        %v1491 = vshrl.u32 %v1490, 7
        %v1492 = vsub.s32 %v1489, %v1491
        %v1493 = vrot.slane %v627, %v1492
        %v1495 = vunpack.c.l.s4 1966171168
        %v1496 = vunpack.c.0.s8 %v1495
        %v1497 = vlaneseq
        %v1498 = vshrl.u32 %v1497, 7
        %v1499 = vsub.s32 %v1496, %v1498
        %v1500 = vrot.slane %v1486, %v1499
        %v1501 = vcombine.high %v1493, %v1493
        %v1502 = vcombine.high %v1500, %v1500
        %v1504 = vunpack.c.l.s4 1966171168
        %v1505 = vunpack.c.0.s8 %v1504
        %v1506 = vlaneseq
        %v1507 = vshrl.u32 %v1506, 7
        %v1508 = vsub.s32 %v1505, %v1507
        %v1509 = vrot.slane %v1493, %v1508
        %v1511 = vunpack.c.l.s4 1966171168
        %v1512 = vunpack.c.0.s8 %v1511
        %v1513 = vlaneseq
        %v1514 = vshrl.u32 %v1513, 7
        %v1515 = vsub.s32 %v1512, %v1514
        %v1516 = vrot.slane %v1500, %v1515
        %v1518 = vunpack.c.l.s4 1966171168
        %v1519 = vunpack.c.0.s8 %v1518
        %v1520 = vlaneseq
        %v1521 = vshrl.u32 %v1520, 7
        %v1522 = vsub.s32 %v1519, %v1521
        %v1523 = vrot.slane %v1501, %v1522
        %v1525 = vunpack.c.l.s4 1966171168
        %v1526 = vunpack.c.0.s8 %v1525
        %v1527 = vlaneseq
        %v1528 = vshrl.u32 %v1527, 7
        %v1529 = vsub.s32 %v1526, %v1528
        %v1530 = vrot.slane %v1502, %v1529
        %v1531 = vcombine.high %v1509, %v1509
        %v1532 = vcombine.high %v1516, %v1516
        %v1533 = vcombine.high %v1523, %v1523
        %v1534 = vcombine.high %v1530, %v1530
        %v1536 = vunpack.c.l.s4 1966171168
        %v1537 = vunpack.c.0.s8 %v1536
        %v1538 = vlaneseq
        %v1539 = vshrl.u32 %v1538, 7
        %v1540 = vsub.s32 %v1537, %v1539
        %v1541 = vrot.slane %v628, %v1540
        %v1543 = vunpack.c.l.s4 1966171168
        %v1544 = vunpack.c.0.s8 %v1543
        %v1545 = vlaneseq
        %v1546 = vshrl.u32 %v1545, 7
        %v1547 = vsub.s32 %v1544, %v1546
        %v1548 = vrot.slane %v1541, %v1547
        %v1549 = vlaneseq
        %v1550 = vshrl.u32 %v1549, 7
        %v1551 = vsub.s32 0, %v1550
        %v1552 = vrot.slane %v447, %v1551
        %v1553 = vadd.f32 %v524, %v1552
        %v1554 = vadd.f32 %v525, %v1552
        %v1555 = vadd.f32 %v526, %v1552
        %v1556 = vadd.f32 %v527, %v1552
        %v1557 = vadd.f32 %v528, %v1552
        %v1558 = vadd.f32 %v529, %v1552
        %v1559 = vadd.f32 %v530, %v1552
        %v1560 = vadd.f32 %v531, %v1552
        %v1561 = vpack.c.bf16 %v1553, %v1553
        %v1562 = vpack.c.bf16 %v1554, %v1554
        %v1563 = vpack.c.bf16 %v1555, %v1555
        %v1564 = vpack.c.bf16 %v1556, %v1556
        %v1565 = vpack.c.bf16 %v1557, %v1557
        %v1566 = vpack.c.bf16 %v1558, %v1558
        %v1567 = vpack.c.bf16 %v1559, %v1559
        %v1568 = vpack.c.bf16 %v1560, %v1560
        %v1569 = vld [vmem:[%s2] sm:$0xf]
        %v1570 = vld [vmem:[%s2 + $0x4] sm:$0xf]
        %v1571 = vld [vmem:[%s2 + $0x8] sm:$0xf]
        %v1572 = vld [vmem:[%s2 + $0xc] sm:$0xf]
        %v1573 = vld [vmem:[#allocation7] sm:$0x1]
        %v1575 = vlaneseq
        %v1576 = vshrl.u32 %v1575, 7
        %v1577 = vsub.s32 0, %v1576
        %v1578 = vrot.slane %v1573, %v1577
        %v1588 = vunpack.c.l.b16 %v1561
        %v1589 = vunpack.c.l.b16 %v1562
        %v1590 = vunpack.c.l.b16 %v1563
        %v1591 = vunpack.c.l.b16 %v1564
        %v1592 = vunpack.c.l.b16 %v1565
        %v1593 = vunpack.c.l.b16 %v1566
        %v1594 = vunpack.c.l.b16 %v1567
        %v1595 = vunpack.c.l.b16 %v1568
        %v1596 = vrot.slane %v1589, 7
        %vm1597 = vcmask 1041409
        %v1598 = vsel %vm1597, %v1596, %v1588
        %v1599 = vrot.slane %v1590, 6
        %vm1600 = vcmask 1042434
        %v1601 = vsel %vm1600, %v1599, %v1598
        %v1602 = vrot.slane %v1591, 5
        %vm1603 = vcmask 1043459
        %v1604 = vsel %vm1603, %v1602, %v1601
        %v1605 = vrot.slane %v1592, 4
        %vm1606 = vcmask 1044484
        %v1607 = vsel %vm1606, %v1605, %v1604
        %v1608 = vrot.slane %v1593, 3
        %vm1609 = vcmask 1045509
        %v1610 = vsel %vm1609, %v1608, %v1607
        %v1611 = vrot.slane %v1594, 2
        %vm1612 = vcmask 1046534
        %v1613 = vsel %vm1612, %v1611, %v1610
        %v1614 = vrot.slane %v1595, 1
        %vm1615 = vcmask 1047559
        %v1616 = vsel %vm1615, %v1614, %v1613
        %v1617 = vpack.c.b16 %v1616, %v1616
        %v1622 = vunpack.c.l.b16 %v1569
        %v1623 = vunpack.c.l.b16 %v1570
        %v1624 = vunpack.c.l.b16 %v1571
        %v1625 = vunpack.c.l.b16 %v1572
        %v1626 = vpack.c.b16 %v1623, %v1622
        %v1627 = vpack.c.b16 %v1625, %v1624
        %v1631 = vsel %vm450, %v1617, 0
        %1633 = vmatprep.subr.bf16.mxu0 0
        %1634 = vmatpush1.bf16.msra.mxu0 0
        %1635 = vmatprep.subr.bf16.mxu0 0
        %1636 = vmatpush1.bf16.msra.mxu0 0
        %1637 = vmatprep.subr.bf16.mxu0 0
        %1638 = vmatpush1.bf16.msra.mxu0 0
        %1639 = vmatprep.subr.bf16.mxu0 0
        %1640 = vmatpush1.bf16.msra.mxu0 0
        %1641 = vmatprep.subr.bf16.mxu0 0
        %1642 = vmatpush1.bf16.msra.mxu0 0
        %1643 = vmatprep.subr.bf16.mxu0 0
        %1644 = vmatpush1.bf16.msra.mxu0 0
        %1645 = vmatprep.subr.bf16.mxu0 0
        %1646 = vmatpush1.bf16.msra.mxu0 %v1627
        %1647 = vmatprep.subr.bf16.mxu0 0
        %1648 = vmatpush1.bf16.msra.mxu0 %v1626
        %1649 = vmatprep.subr.bf16.mxu0 0
        %1650 = vmatpush2.bf16.msra.mxu0 0
        %1651 = vmatprep.subr.bf16.mxu0 0
        %1652 = vmatpush2.bf16.msra.mxu0 0
        %1653 = vmatprep.subr.bf16.mxu0 0
        %1654 = vmatpush2.bf16.msra.mxu0 0
        %1655 = vmatprep.subr.bf16.mxu0 0
        %1656 = vmatpush2.bf16.msra.mxu0 0
        %1657 = vmatprep.subr.bf16.mxu0 0
        %1658 = vmatpush2.bf16.msra.mxu0 0
        %1659 = vmatprep.subr.bf16.mxu0 0
        %1660 = vmatpush2.bf16.msra.mxu0 0
        %1661 = vmatprep.subr.bf16.mxu0 0
        %1662 = vmatpush2.bf16.msra.mxu0 0
        %1663 = vmatprep.subr.bf16.mxu0 0
        %1664 = vmatpush2.bf16.msra.mxu0 0
        %1665 = vmatprep.mubr.bf16.mxu0 0
        %1666 = vmatmul.mubr.bf16.gmra.mxu0 %v1631
        %v1667 = vpop.f32.mrf.mxu0
        %v1668 = vadd.f32 %v1578, %v1667
        %v1669 = vpop.f32.mrf.mxu0
        %v1670 = vpop.f32.mrf.mxu0
        %v1671 = vpop.f32.mrf.mxu0
        %1672 = vdwg.mxu0
        %v1673 = vcombine.low %v676, %v690
        %v1674 = vcombine.low %v698, %v700
        %v1675 = vcombine.low %v683, %v697
        %v1676 = vcombine.low %v699, %v701
        %v1678 = vunpack.c.l.s4 1966171168
        %v1679 = vunpack.c.0.s8 %v1678
        %v1680 = vlaneseq
        %v1681 = vshrl.u32 %v1680, 7
        %v1682 = vsub.s32 %v1679, %v1681
        %v1683 = vrot.slane %v1673, %v1682
        %v1685 = vunpack.c.l.s4 1966171168
        %v1686 = vunpack.c.0.s8 %v1685
        %v1687 = vlaneseq
        %v1688 = vshrl.u32 %v1687, 7
        %v1689 = vsub.s32 %v1686, %v1688
        %v1690 = vrot.slane %v1674, %v1689
        %v1692 = vunpack.c.l.s4 1966171168
        %v1693 = vunpack.c.0.s8 %v1692
        %v1694 = vlaneseq
        %v1695 = vshrl.u32 %v1694, 7
        %v1696 = vsub.s32 %v1693, %v1695
        %v1697 = vrot.slane %v1675, %v1696
        %v1699 = vunpack.c.l.s4 1966171168
        %v1700 = vunpack.c.0.s8 %v1699
        %v1701 = vlaneseq
        %v1702 = vshrl.u32 %v1701, 7
        %v1703 = vsub.s32 %v1700, %v1702
        %v1704 = vrot.slane %v1676, %v1703
        %v1705 = vcombine.low %v1683, %v1690
        %v1706 = vcombine.low %v1697, %v1704
        %v1708 = vunpack.c.l.s4 1966171168
        %v1709 = vunpack.c.0.s8 %v1708
        %v1710 = vlaneseq
        %v1711 = vshrl.u32 %v1710, 7
        %v1712 = vsub.s32 %v1709, %v1711
        %v1713 = vrot.slane %v1705, %v1712
        %v1715 = vunpack.c.l.s4 1966171168
        %v1716 = vunpack.c.0.s8 %v1715
        %v1717 = vlaneseq
        %v1718 = vshrl.u32 %v1717, 7
        %v1719 = vsub.s32 %v1716, %v1718
        %v1720 = vrot.slane %v1706, %v1719
        %v1721 = vcombine.low %v1713, %v1720
        %v1722 = vcombine.low %v725, %v739
        %v1723 = vcombine.low %v747, %v749
        %v1724 = vcombine.low %v732, %v746
        %v1725 = vcombine.low %v748, %v750
        %v1727 = vunpack.c.l.s4 1966171168
        %v1728 = vunpack.c.0.s8 %v1727
        %v1729 = vlaneseq
        %v1730 = vshrl.u32 %v1729, 7
        %v1731 = vsub.s32 %v1728, %v1730
        %v1732 = vrot.slane %v1722, %v1731
        %v1734 = vunpack.c.l.s4 1966171168
        %v1735 = vunpack.c.0.s8 %v1734
        %v1736 = vlaneseq
        %v1737 = vshrl.u32 %v1736, 7
        %v1738 = vsub.s32 %v1735, %v1737
        %v1739 = vrot.slane %v1723, %v1738
        %v1741 = vunpack.c.l.s4 1966171168
        %v1742 = vunpack.c.0.s8 %v1741
        %v1743 = vlaneseq
        %v1744 = vshrl.u32 %v1743, 7
        %v1745 = vsub.s32 %v1742, %v1744
        %v1746 = vrot.slane %v1724, %v1745
        %v1748 = vunpack.c.l.s4 1966171168
        %v1749 = vunpack.c.0.s8 %v1748
        %v1750 = vlaneseq
        %v1751 = vshrl.u32 %v1750, 7
        %v1752 = vsub.s32 %v1749, %v1751
        %v1753 = vrot.slane %v1725, %v1752
        %v1754 = vcombine.low %v1732, %v1739
        %v1755 = vcombine.low %v1746, %v1753
        %v1757 = vunpack.c.l.s4 1966171168
        %v1758 = vunpack.c.0.s8 %v1757
        %v1759 = vlaneseq
        %v1760 = vshrl.u32 %v1759, 7
        %v1761 = vsub.s32 %v1758, %v1760
        %v1762 = vrot.slane %v1754, %v1761
        %v1764 = vunpack.c.l.s4 1966171168
        %v1765 = vunpack.c.0.s8 %v1764
        %v1766 = vlaneseq
        %v1767 = vshrl.u32 %v1766, 7
        %v1768 = vsub.s32 %v1765, %v1767
        %v1769 = vrot.slane %v1755, %v1768
        %v1770 = vcombine.low %v1762, %v1769
        %v1771 = vcombine.low %v764, %v788
        %v1772 = vcombine.low %v802, %v810
        %v1773 = vcombine.low %v812, %v795
        %v1774 = vcombine.low %v809, %v811
        %v1776 = vunpack.c.l.s4 1966171168
        %v1777 = vunpack.c.0.s8 %v1776
        %v1778 = vlaneseq
        %v1779 = vshrl.u32 %v1778, 7
        %v1780 = vsub.s32 %v1777, %v1779
        %v1781 = vrot.slane %v1771, %v1780
        %v1783 = vunpack.c.l.s4 1966171168
        %v1784 = vunpack.c.0.s8 %v1783
        %v1785 = vlaneseq
        %v1786 = vshrl.u32 %v1785, 7
        %v1787 = vsub.s32 %v1784, %v1786
        %v1788 = vrot.slane %v1772, %v1787
        %v1790 = vunpack.c.l.s4 1966171168
        %v1791 = vunpack.c.0.s8 %v1790
        %v1792 = vlaneseq
        %v1793 = vshrl.u32 %v1792, 7
        %v1794 = vsub.s32 %v1791, %v1793
        %v1795 = vrot.slane %v1773, %v1794
        %v1797 = vunpack.c.l.s4 1966171168
        %v1798 = vunpack.c.0.s8 %v1797
        %v1799 = vlaneseq
        %v1800 = vshrl.u32 %v1799, 7
        %v1801 = vsub.s32 %v1798, %v1800
        %v1802 = vrot.slane %v1774, %v1801
        %v1803 = vcombine.low %v1781, %v1788
        %v1804 = vcombine.low %v1795, %v1802
        %v1806 = vunpack.c.l.s4 1966171168
        %v1807 = vunpack.c.0.s8 %v1806
        %v1808 = vlaneseq
        %v1809 = vshrl.u32 %v1808, 7
        %v1810 = vsub.s32 %v1807, %v1809
        %v1811 = vrot.slane %v1803, %v1810
        %v1813 = vunpack.c.l.s4 1966171168
        %v1814 = vunpack.c.0.s8 %v1813
        %v1815 = vlaneseq
        %v1816 = vshrl.u32 %v1815, 7
        %v1817 = vsub.s32 %v1814, %v1816
        %v1818 = vrot.slane %v1804, %v1817
        %v1819 = vcombine.low %v1811, %v1818
        %v1820 = vcombine.low %v813, %v837
        %v1821 = vcombine.low %v851, %v859
        %v1822 = vcombine.low %v861, %v844
        %v1823 = vcombine.low %v858, %v860
        %v1825 = vunpack.c.l.s4 1966171168
        %v1826 = vunpack.c.0.s8 %v1825
        %v1827 = vlaneseq
        %v1828 = vshrl.u32 %v1827, 7
        %v1829 = vsub.s32 %v1826, %v1828
        %v1830 = vrot.slane %v1820, %v1829
        %v1832 = vunpack.c.l.s4 1966171168
        %v1833 = vunpack.c.0.s8 %v1832
        %v1834 = vlaneseq
        %v1835 = vshrl.u32 %v1834, 7
        %v1836 = vsub.s32 %v1833, %v1835
        %v1837 = vrot.slane %v1821, %v1836
        %v1839 = vunpack.c.l.s4 1966171168
        %v1840 = vunpack.c.0.s8 %v1839
        %v1841 = vlaneseq
        %v1842 = vshrl.u32 %v1841, 7
        %v1843 = vsub.s32 %v1840, %v1842
        %v1844 = vrot.slane %v1822, %v1843
        %v1846 = vunpack.c.l.s4 1966171168
        %v1847 = vunpack.c.0.s8 %v1846
        %v1848 = vlaneseq
        %v1849 = vshrl.u32 %v1848, 7
        %v1850 = vsub.s32 %v1847, %v1849
        %v1851 = vrot.slane %v1823, %v1850
        %v1852 = vcombine.low %v1830, %v1837
        %v1853 = vcombine.low %v1844, %v1851
        %v1855 = vunpack.c.l.s4 1966171168
        %v1856 = vunpack.c.0.s8 %v1855
        %v1857 = vlaneseq
        %v1858 = vshrl.u32 %v1857, 7
        %v1859 = vsub.s32 %v1856, %v1858
        %v1860 = vrot.slane %v1852, %v1859
        %v1862 = vunpack.c.l.s4 1966171168
        %v1863 = vunpack.c.0.s8 %v1862
        %v1864 = vlaneseq
        %v1865 = vshrl.u32 %v1864, 7
        %v1866 = vsub.s32 %v1863, %v1865
        %v1867 = vrot.slane %v1853, %v1866
        %v1868 = vcombine.low %v1860, %v1867
        %v1869 = vcombine.low %v862, %v876
        %v1870 = vcombine.low %v900, %v914
        %v1871 = vcombine.low %v922, %v924
        %v1872 = vcombine.low %v907, %v921
        %v1874 = vunpack.c.l.s4 1966171168
        %v1875 = vunpack.c.0.s8 %v1874
        %v1876 = vlaneseq
        %v1877 = vshrl.u32 %v1876, 7
        %v1878 = vsub.s32 %v1875, %v1877
        %v1879 = vrot.slane %v1869, %v1878
        %v1881 = vunpack.c.l.s4 1966171168
        %v1882 = vunpack.c.0.s8 %v1881
        %v1883 = vlaneseq
        %v1884 = vshrl.u32 %v1883, 7
        %v1885 = vsub.s32 %v1882, %v1884
        %v1886 = vrot.slane %v1870, %v1885
        %v1888 = vunpack.c.l.s4 1966171168
        %v1889 = vunpack.c.0.s8 %v1888
        %v1890 = vlaneseq
        %v1891 = vshrl.u32 %v1890, 7
        %v1892 = vsub.s32 %v1889, %v1891
        %v1893 = vrot.slane %v1871, %v1892
        %v1895 = vunpack.c.l.s4 1966171168
        %v1896 = vunpack.c.0.s8 %v1895
        %v1897 = vlaneseq
        %v1898 = vshrl.u32 %v1897, 7
        %v1899 = vsub.s32 %v1896, %v1898
        %v1900 = vrot.slane %v1872, %v1899
        %v1901 = vcombine.low %v1879, %v1886
        %v1902 = vcombine.low %v1893, %v1900
        %v1904 = vunpack.c.l.s4 1966171168
        %v1905 = vunpack.c.0.s8 %v1904
        %v1906 = vlaneseq
        %v1907 = vshrl.u32 %v1906, 7
        %v1908 = vsub.s32 %v1905, %v1907
        %v1909 = vrot.slane %v1901, %v1908
        %v1911 = vunpack.c.l.s4 1966171168
        %v1912 = vunpack.c.0.s8 %v1911
        %v1913 = vlaneseq
        %v1914 = vshrl.u32 %v1913, 7
        %v1915 = vsub.s32 %v1912, %v1914
        %v1916 = vrot.slane %v1902, %v1915
        %v1917 = vcombine.low %v1909, %v1916
        %v1918 = vcombine.low %v923, %v925
        %v1919 = vcombine.low %v949, %v963
        %v1920 = vcombine.low %v971, %v973
        %v1921 = vcombine.low %v956, %v970
        %v1923 = vunpack.c.l.s4 1966171168
        %v1924 = vunpack.c.0.s8 %v1923
        %v1925 = vlaneseq
        %v1926 = vshrl.u32 %v1925, 7
        %v1927 = vsub.s32 %v1924, %v1926
        %v1928 = vrot.slane %v1918, %v1927
        %v1930 = vunpack.c.l.s4 1966171168
        %v1931 = vunpack.c.0.s8 %v1930
        %v1932 = vlaneseq
        %v1933 = vshrl.u32 %v1932, 7
        %v1934 = vsub.s32 %v1931, %v1933
        %v1935 = vrot.slane %v1919, %v1934
        %v1937 = vunpack.c.l.s4 1966171168
        %v1938 = vunpack.c.0.s8 %v1937
        %v1939 = vlaneseq
        %v1940 = vshrl.u32 %v1939, 7
        %v1941 = vsub.s32 %v1938, %v1940
        %v1942 = vrot.slane %v1920, %v1941
        %v1944 = vunpack.c.l.s4 1966171168
        %v1945 = vunpack.c.0.s8 %v1944
        %v1946 = vlaneseq
        %v1947 = vshrl.u32 %v1946, 7
        %v1948 = vsub.s32 %v1945, %v1947
        %v1949 = vrot.slane %v1921, %v1948
        %v1950 = vcombine.low %v1928, %v1935
        %v1951 = vcombine.low %v1942, %v1949
        %v1953 = vunpack.c.l.s4 1966171168
        %v1954 = vunpack.c.0.s8 %v1953
        %v1955 = vlaneseq
        %v1956 = vshrl.u32 %v1955, 7
        %v1957 = vsub.s32 %v1954, %v1956
        %v1958 = vrot.slane %v1950, %v1957
        %v1960 = vunpack.c.l.s4 1966171168
        %v1961 = vunpack.c.0.s8 %v1960
        %v1962 = vlaneseq
        %v1963 = vshrl.u32 %v1962, 7
        %v1964 = vsub.s32 %v1961, %v1963
        %v1965 = vrot.slane %v1951, %v1964
        %v1966 = vcombine.low %v1958, %v1965
        %v1967 = vcombine.low %v972, %v974
        %v1968 = vcombine.low %v988, %v1012
        %v1969 = vcombine.low %v1026, %v1034
        %v1970 = vcombine.low %v1036, %v1019
        %v1972 = vunpack.c.l.s4 1966171168
        %v1973 = vunpack.c.0.s8 %v1972
        %v1974 = vlaneseq
        %v1975 = vshrl.u32 %v1974, 7
        %v1976 = vsub.s32 %v1973, %v1975
        %v1977 = vrot.slane %v1967, %v1976
        %v1979 = vunpack.c.l.s4 1966171168
        %v1980 = vunpack.c.0.s8 %v1979
        %v1981 = vlaneseq
        %v1982 = vshrl.u32 %v1981, 7
        %v1983 = vsub.s32 %v1980, %v1982
        %v1984 = vrot.slane %v1968, %v1983
        %v1986 = vunpack.c.l.s4 1966171168
        %v1987 = vunpack.c.0.s8 %v1986
        %v1988 = vlaneseq
        %v1989 = vshrl.u32 %v1988, 7
        %v1990 = vsub.s32 %v1987, %v1989
        %v1991 = vrot.slane %v1969, %v1990
        %v1993 = vunpack.c.l.s4 1966171168
        %v1994 = vunpack.c.0.s8 %v1993
        %v1995 = vlaneseq
        %v1996 = vshrl.u32 %v1995, 7
        %v1997 = vsub.s32 %v1994, %v1996
        %v1998 = vrot.slane %v1970, %v1997
        %v1999 = vcombine.low %v1977, %v1984
        %v2000 = vcombine.low %v1991, %v1998
        %v2002 = vunpack.c.l.s4 1966171168
        %v2003 = vunpack.c.0.s8 %v2002
        %v2004 = vlaneseq
        %v2005 = vshrl.u32 %v2004, 7
        %v2006 = vsub.s32 %v2003, %v2005
        %v2007 = vrot.slane %v1999, %v2006
        %v2009 = vunpack.c.l.s4 1966171168
        %v2010 = vunpack.c.0.s8 %v2009
        %v2011 = vlaneseq
        %v2012 = vshrl.u32 %v2011, 7
        %v2013 = vsub.s32 %v2010, %v2012
        %v2014 = vrot.slane %v2000, %v2013
        %v2015 = vcombine.low %v2007, %v2014
        %v2016 = vcombine.low %v1033, %v1035
        %v2017 = vcombine.low %v1037, %v1061
        %v2018 = vcombine.low %v1075, %v1083
        %v2019 = vcombine.low %v1085, %v1068
        %v2021 = vunpack.c.l.s4 1966171168
        %v2022 = vunpack.c.0.s8 %v2021
        %v2023 = vlaneseq
        %v2024 = vshrl.u32 %v2023, 7
        %v2025 = vsub.s32 %v2022, %v2024
        %v2026 = vrot.slane %v2016, %v2025
        %v2028 = vunpack.c.l.s4 1966171168
        %v2029 = vunpack.c.0.s8 %v2028
        %v2030 = vlaneseq
        %v2031 = vshrl.u32 %v2030, 7
        %v2032 = vsub.s32 %v2029, %v2031
        %v2033 = vrot.slane %v2017, %v2032
        %v2035 = vunpack.c.l.s4 1966171168
        %v2036 = vunpack.c.0.s8 %v2035
        %v2037 = vlaneseq
        %v2038 = vshrl.u32 %v2037, 7
        %v2039 = vsub.s32 %v2036, %v2038
        %v2040 = vrot.slane %v2018, %v2039
        %v2042 = vunpack.c.l.s4 1966171168
        %v2043 = vunpack.c.0.s8 %v2042
        %v2044 = vlaneseq
        %v2045 = vshrl.u32 %v2044, 7
        %v2046 = vsub.s32 %v2043, %v2045
        %v2047 = vrot.slane %v2019, %v2046
        %v2048 = vcombine.low %v2026, %v2033
        %v2049 = vcombine.low %v2040, %v2047
        %v2051 = vunpack.c.l.s4 1966171168
        %v2052 = vunpack.c.0.s8 %v2051
        %v2053 = vlaneseq
        %v2054 = vshrl.u32 %v2053, 7
        %v2055 = vsub.s32 %v2052, %v2054
        %v2056 = vrot.slane %v2048, %v2055
        %v2058 = vunpack.c.l.s4 1966171168
        %v2059 = vunpack.c.0.s8 %v2058
        %v2060 = vlaneseq
        %v2061 = vshrl.u32 %v2060, 7
        %v2062 = vsub.s32 %v2059, %v2061
        %v2063 = vrot.slane %v2049, %v2062
        %v2064 = vcombine.low %v2056, %v2063
        %v2065 = vcombine.low %v1082, %v1084
        %v2066 = vcombine.low %v1086, %v1100
        %v2067 = vcombine.low %v1124, %v1138
        %v2068 = vcombine.low %v1146, %v1148
        %v2070 = vunpack.c.l.s4 1966171168
        %v2071 = vunpack.c.0.s8 %v2070
        %v2072 = vlaneseq
        %v2073 = vshrl.u32 %v2072, 7
        %v2074 = vsub.s32 %v2071, %v2073
        %v2075 = vrot.slane %v2065, %v2074
        %v2077 = vunpack.c.l.s4 1966171168
        %v2078 = vunpack.c.0.s8 %v2077
        %v2079 = vlaneseq
        %v2080 = vshrl.u32 %v2079, 7
        %v2081 = vsub.s32 %v2078, %v2080
        %v2082 = vrot.slane %v2066, %v2081
        %v2084 = vunpack.c.l.s4 1966171168
        %v2085 = vunpack.c.0.s8 %v2084
        %v2086 = vlaneseq
        %v2087 = vshrl.u32 %v2086, 7
        %v2088 = vsub.s32 %v2085, %v2087
        %v2089 = vrot.slane %v2067, %v2088
        %v2091 = vunpack.c.l.s4 1966171168
        %v2092 = vunpack.c.0.s8 %v2091
        %v2093 = vlaneseq
        %v2094 = vshrl.u32 %v2093, 7
        %v2095 = vsub.s32 %v2092, %v2094
        %v2096 = vrot.slane %v2068, %v2095
        %v2097 = vcombine.low %v2075, %v2082
        %v2098 = vcombine.low %v2089, %v2096
        %v2100 = vunpack.c.l.s4 1966171168
        %v2101 = vunpack.c.0.s8 %v2100
        %v2102 = vlaneseq
        %v2103 = vshrl.u32 %v2102, 7
        %v2104 = vsub.s32 %v2101, %v2103
        %v2105 = vrot.slane %v2097, %v2104
        %v2107 = vunpack.c.l.s4 1966171168
        %v2108 = vunpack.c.0.s8 %v2107
        %v2109 = vlaneseq
        %v2110 = vshrl.u32 %v2109, 7
        %v2111 = vsub.s32 %v2108, %v2110
        %v2112 = vrot.slane %v2098, %v2111
        %v2113 = vcombine.low %v2105, %v2112
        %v2114 = vcombine.low %v1131, %v1145
        %v2115 = vcombine.low %v1147, %v1149
        %v2116 = vcombine.low %v1173, %v1187
        %v2117 = vcombine.low %v1195, %v1197
        %v2119 = vunpack.c.l.s4 1966171168
        %v2120 = vunpack.c.0.s8 %v2119
        %v2121 = vlaneseq
        %v2122 = vshrl.u32 %v2121, 7
        %v2123 = vsub.s32 %v2120, %v2122
        %v2124 = vrot.slane %v2114, %v2123
        %v2126 = vunpack.c.l.s4 1966171168
        %v2127 = vunpack.c.0.s8 %v2126
        %v2128 = vlaneseq
        %v2129 = vshrl.u32 %v2128, 7
        %v2130 = vsub.s32 %v2127, %v2129
        %v2131 = vrot.slane %v2115, %v2130
        %v2133 = vunpack.c.l.s4 1966171168
        %v2134 = vunpack.c.0.s8 %v2133
        %v2135 = vlaneseq
        %v2136 = vshrl.u32 %v2135, 7
        %v2137 = vsub.s32 %v2134, %v2136
        %v2138 = vrot.slane %v2116, %v2137
        %v2140 = vunpack.c.l.s4 1966171168
        %v2141 = vunpack.c.0.s8 %v2140
        %v2142 = vlaneseq
        %v2143 = vshrl.u32 %v2142, 7
        %v2144 = vsub.s32 %v2141, %v2143
        %v2145 = vrot.slane %v2117, %v2144
        %v2146 = vcombine.low %v2124, %v2131
        %v2147 = vcombine.low %v2138, %v2145
        %v2149 = vunpack.c.l.s4 1966171168
        %v2150 = vunpack.c.0.s8 %v2149
        %v2151 = vlaneseq
        %v2152 = vshrl.u32 %v2151, 7
        %v2153 = vsub.s32 %v2150, %v2152
        %v2154 = vrot.slane %v2146, %v2153
        %v2156 = vunpack.c.l.s4 1966171168
        %v2157 = vunpack.c.0.s8 %v2156
        %v2158 = vlaneseq
        %v2159 = vshrl.u32 %v2158, 7
        %v2160 = vsub.s32 %v2157, %v2159
        %v2161 = vrot.slane %v2147, %v2160
        %v2162 = vcombine.low %v2154, %v2161
        %v2163 = vcombine.low %v1180, %v1194
        %v2164 = vcombine.low %v1196, %v1198
        %v2165 = vcombine.low %v1212, %v1236
        %v2166 = vcombine.low %v1250, %v1258
        %v2168 = vunpack.c.l.s4 1966171168
        %v2169 = vunpack.c.0.s8 %v2168
        %v2170 = vlaneseq
        %v2171 = vshrl.u32 %v2170, 7
        %v2172 = vsub.s32 %v2169, %v2171
        %v2173 = vrot.slane %v2163, %v2172
        %v2175 = vunpack.c.l.s4 1966171168
        %v2176 = vunpack.c.0.s8 %v2175
        %v2177 = vlaneseq
        %v2178 = vshrl.u32 %v2177, 7
        %v2179 = vsub.s32 %v2176, %v2178
        %v2180 = vrot.slane %v2164, %v2179
        %v2182 = vunpack.c.l.s4 1966171168
        %v2183 = vunpack.c.0.s8 %v2182
        %v2184 = vlaneseq
        %v2185 = vshrl.u32 %v2184, 7
        %v2186 = vsub.s32 %v2183, %v2185
        %v2187 = vrot.slane %v2165, %v2186
        %v2189 = vunpack.c.l.s4 1966171168
        %v2190 = vunpack.c.0.s8 %v2189
        %v2191 = vlaneseq
        %v2192 = vshrl.u32 %v2191, 7
        %v2193 = vsub.s32 %v2190, %v2192
        %v2194 = vrot.slane %v2166, %v2193
        %v2195 = vcombine.low %v2173, %v2180
        %v2196 = vcombine.low %v2187, %v2194
        %v2198 = vunpack.c.l.s4 1966171168
        %v2199 = vunpack.c.0.s8 %v2198
        %v2200 = vlaneseq
        %v2201 = vshrl.u32 %v2200, 7
        %v2202 = vsub.s32 %v2199, %v2201
        %v2203 = vrot.slane %v2195, %v2202
        %v2205 = vunpack.c.l.s4 1966171168
        %v2206 = vunpack.c.0.s8 %v2205
        %v2207 = vlaneseq
        %v2208 = vshrl.u32 %v2207, 7
        %v2209 = vsub.s32 %v2206, %v2208
        %v2210 = vrot.slane %v2196, %v2209
        %v2211 = vcombine.low %v2203, %v2210
        %v2212 = vcombine.low %v1260, %v1243
        %v2213 = vcombine.low %v1257, %v1259
        %v2214 = vcombine.low %v1261, %v1285
        %v2215 = vcombine.low %v1299, %v1307
        %v2217 = vunpack.c.l.s4 1966171168
        %v2218 = vunpack.c.0.s8 %v2217
        %v2219 = vlaneseq
        %v2220 = vshrl.u32 %v2219, 7
        %v2221 = vsub.s32 %v2218, %v2220
        %v2222 = vrot.slane %v2212, %v2221
        %v2224 = vunpack.c.l.s4 1966171168
        %v2225 = vunpack.c.0.s8 %v2224
        %v2226 = vlaneseq
        %v2227 = vshrl.u32 %v2226, 7
        %v2228 = vsub.s32 %v2225, %v2227
        %v2229 = vrot.slane %v2213, %v2228
        %v2231 = vunpack.c.l.s4 1966171168
        %v2232 = vunpack.c.0.s8 %v2231
        %v2233 = vlaneseq
        %v2234 = vshrl.u32 %v2233, 7
        %v2235 = vsub.s32 %v2232, %v2234
        %v2236 = vrot.slane %v2214, %v2235
        %v2238 = vunpack.c.l.s4 1966171168
        %v2239 = vunpack.c.0.s8 %v2238
        %v2240 = vlaneseq
        %v2241 = vshrl.u32 %v2240, 7
        %v2242 = vsub.s32 %v2239, %v2241
        %v2243 = vrot.slane %v2215, %v2242
        %v2244 = vcombine.low %v2222, %v2229
        %v2245 = vcombine.low %v2236, %v2243
        %v2247 = vunpack.c.l.s4 1966171168
        %v2248 = vunpack.c.0.s8 %v2247
        %v2249 = vlaneseq
        %v2250 = vshrl.u32 %v2249, 7
        %v2251 = vsub.s32 %v2248, %v2250
        %v2252 = vrot.slane %v2244, %v2251
        %v2254 = vunpack.c.l.s4 1966171168
        %v2255 = vunpack.c.0.s8 %v2254
        %v2256 = vlaneseq
        %v2257 = vshrl.u32 %v2256, 7
        %v2258 = vsub.s32 %v2255, %v2257
        %v2259 = vrot.slane %v2245, %v2258
        %v2260 = vcombine.low %v2252, %v2259
        %v2261 = vcombine.low %v1309, %v1292
        %v2262 = vcombine.low %v1306, %v1308
        %v2263 = vcombine.low %v1310, %v1324
        %v2264 = vcombine.low %v1348, %v1362
        %v2266 = vunpack.c.l.s4 1966171168
        %v2267 = vunpack.c.0.s8 %v2266
        %v2268 = vlaneseq
        %v2269 = vshrl.u32 %v2268, 7
        %v2270 = vsub.s32 %v2267, %v2269
        %v2271 = vrot.slane %v2261, %v2270
        %v2273 = vunpack.c.l.s4 1966171168
        %v2274 = vunpack.c.0.s8 %v2273
        %v2275 = vlaneseq
        %v2276 = vshrl.u32 %v2275, 7
        %v2277 = vsub.s32 %v2274, %v2276
        %v2278 = vrot.slane %v2262, %v2277
        %v2280 = vunpack.c.l.s4 1966171168
        %v2281 = vunpack.c.0.s8 %v2280
        %v2282 = vlaneseq
        %v2283 = vshrl.u32 %v2282, 7
        %v2284 = vsub.s32 %v2281, %v2283
        %v2285 = vrot.slane %v2263, %v2284
        %v2287 = vunpack.c.l.s4 1966171168
        %v2288 = vunpack.c.0.s8 %v2287
        %v2289 = vlaneseq
        %v2290 = vshrl.u32 %v2289, 7
        %v2291 = vsub.s32 %v2288, %v2290
        %v2292 = vrot.slane %v2264, %v2291
        %v2293 = vcombine.low %v2271, %v2278
        %v2294 = vcombine.low %v2285, %v2292
        %v2296 = vunpack.c.l.s4 1966171168
        %v2297 = vunpack.c.0.s8 %v2296
        %v2298 = vlaneseq
        %v2299 = vshrl.u32 %v2298, 7
        %v2300 = vsub.s32 %v2297, %v2299
        %v2301 = vrot.slane %v2293, %v2300
        %v2303 = vunpack.c.l.s4 1966171168
        %v2304 = vunpack.c.0.s8 %v2303
        %v2305 = vlaneseq
        %v2306 = vshrl.u32 %v2305, 7
        %v2307 = vsub.s32 %v2304, %v2306
        %v2308 = vrot.slane %v2294, %v2307
        %v2309 = vcombine.low %v2301, %v2308
        %v2310 = vcombine.low %v1370, %v1372
        %v2311 = vcombine.low %v1355, %v1369
        %v2312 = vcombine.low %v1371, %v1373
        %v2313 = vcombine.low %v1397, %v1411
        %v2315 = vunpack.c.l.s4 1966171168
        %v2316 = vunpack.c.0.s8 %v2315
        %v2317 = vlaneseq
        %v2318 = vshrl.u32 %v2317, 7
        %v2319 = vsub.s32 %v2316, %v2318
        %v2320 = vrot.slane %v2310, %v2319
        %v2322 = vunpack.c.l.s4 1966171168
        %v2323 = vunpack.c.0.s8 %v2322
        %v2324 = vlaneseq
        %v2325 = vshrl.u32 %v2324, 7
        %v2326 = vsub.s32 %v2323, %v2325
        %v2327 = vrot.slane %v2311, %v2326
        %v2329 = vunpack.c.l.s4 1966171168
        %v2330 = vunpack.c.0.s8 %v2329
        %v2331 = vlaneseq
        %v2332 = vshrl.u32 %v2331, 7
        %v2333 = vsub.s32 %v2330, %v2332
        %v2334 = vrot.slane %v2312, %v2333
        %v2336 = vunpack.c.l.s4 1966171168
        %v2337 = vunpack.c.0.s8 %v2336
        %v2338 = vlaneseq
        %v2339 = vshrl.u32 %v2338, 7
        %v2340 = vsub.s32 %v2337, %v2339
        %v2341 = vrot.slane %v2313, %v2340
        %v2342 = vcombine.low %v2320, %v2327
        %v2343 = vcombine.low %v2334, %v2341
        %v2345 = vunpack.c.l.s4 1966171168
        %v2346 = vunpack.c.0.s8 %v2345
        %v2347 = vlaneseq
        %v2348 = vshrl.u32 %v2347, 7
        %v2349 = vsub.s32 %v2346, %v2348
        %v2350 = vrot.slane %v2342, %v2349
        %v2352 = vunpack.c.l.s4 1966171168
        %v2353 = vunpack.c.0.s8 %v2352
        %v2354 = vlaneseq
        %v2355 = vshrl.u32 %v2354, 7
        %v2356 = vsub.s32 %v2353, %v2355
        %v2357 = vrot.slane %v2343, %v2356
        %v2358 = vcombine.low %v2350, %v2357
        %v2359 = vcombine.low %v1419, %v1421
        %v2360 = vcombine.low %v1404, %v1418
        %v2361 = vcombine.low %v1420, %v1422
        %v2362 = vcombine.low %v1436, %v1460
        %v2364 = vunpack.c.l.s4 1966171168
        %v2365 = vunpack.c.0.s8 %v2364
        %v2366 = vlaneseq
        %v2367 = vshrl.u32 %v2366, 7
        %v2368 = vsub.s32 %v2365, %v2367
        %v2369 = vrot.slane %v2359, %v2368
        %v2371 = vunpack.c.l.s4 1966171168
        %v2372 = vunpack.c.0.s8 %v2371
        %v2373 = vlaneseq
        %v2374 = vshrl.u32 %v2373, 7
        %v2375 = vsub.s32 %v2372, %v2374
        %v2376 = vrot.slane %v2360, %v2375
        %v2378 = vunpack.c.l.s4 1966171168
        %v2379 = vunpack.c.0.s8 %v2378
        %v2380 = vlaneseq
        %v2381 = vshrl.u32 %v2380, 7
        %v2382 = vsub.s32 %v2379, %v2381
        %v2383 = vrot.slane %v2361, %v2382
        %v2385 = vunpack.c.l.s4 1966171168
        %v2386 = vunpack.c.0.s8 %v2385
        %v2387 = vlaneseq
        %v2388 = vshrl.u32 %v2387, 7
        %v2389 = vsub.s32 %v2386, %v2388
        %v2390 = vrot.slane %v2362, %v2389
        %v2391 = vcombine.low %v2369, %v2376
        %v2392 = vcombine.low %v2383, %v2390
        %v2394 = vunpack.c.l.s4 1966171168
        %v2395 = vunpack.c.0.s8 %v2394
        %v2396 = vlaneseq
        %v2397 = vshrl.u32 %v2396, 7
        %v2398 = vsub.s32 %v2395, %v2397
        %v2399 = vrot.slane %v2391, %v2398
        %v2401 = vunpack.c.l.s4 1966171168
        %v2402 = vunpack.c.0.s8 %v2401
        %v2403 = vlaneseq
        %v2404 = vshrl.u32 %v2403, 7
        %v2405 = vsub.s32 %v2402, %v2404
        %v2406 = vrot.slane %v2392, %v2405
        %v2407 = vcombine.low %v2399, %v2406
        %v2408 = vcombine.low %v1474, %v1482
        %v2409 = vcombine.low %v1484, %v1467
        %v2410 = vcombine.low %v1481, %v1483
        %v2411 = vcombine.low %v1485, %v1509
        %v2413 = vunpack.c.l.s4 1966171168
        %v2414 = vunpack.c.0.s8 %v2413
        %v2415 = vlaneseq
        %v2416 = vshrl.u32 %v2415, 7
        %v2417 = vsub.s32 %v2414, %v2416
        %v2418 = vrot.slane %v2408, %v2417
        %v2420 = vunpack.c.l.s4 1966171168
        %v2421 = vunpack.c.0.s8 %v2420
        %v2422 = vlaneseq
        %v2423 = vshrl.u32 %v2422, 7
        %v2424 = vsub.s32 %v2421, %v2423
        %v2425 = vrot.slane %v2409, %v2424
        %v2427 = vunpack.c.l.s4 1966171168
        %v2428 = vunpack.c.0.s8 %v2427
        %v2429 = vlaneseq
        %v2430 = vshrl.u32 %v2429, 7
        %v2431 = vsub.s32 %v2428, %v2430
        %v2432 = vrot.slane %v2410, %v2431
        %v2434 = vunpack.c.l.s4 1966171168
        %v2435 = vunpack.c.0.s8 %v2434
        %v2436 = vlaneseq
        %v2437 = vshrl.u32 %v2436, 7
        %v2438 = vsub.s32 %v2435, %v2437
        %v2439 = vrot.slane %v2411, %v2438
        %v2440 = vcombine.low %v2418, %v2425
        %v2441 = vcombine.low %v2432, %v2439
        %v2443 = vunpack.c.l.s4 1966171168
        %v2444 = vunpack.c.0.s8 %v2443
        %v2445 = vlaneseq
        %v2446 = vshrl.u32 %v2445, 7
        %v2447 = vsub.s32 %v2444, %v2446
        %v2448 = vrot.slane %v2440, %v2447
        %v2450 = vunpack.c.l.s4 1966171168
        %v2451 = vunpack.c.0.s8 %v2450
        %v2452 = vlaneseq
        %v2453 = vshrl.u32 %v2452, 7
        %v2454 = vsub.s32 %v2451, %v2453
        %v2455 = vrot.slane %v2441, %v2454
        %v2456 = vcombine.low %v2448, %v2455
        %v2457 = vcombine.low %v1523, %v1531
        %v2458 = vcombine.low %v1533, %v1516
        %v2459 = vcombine.low %v1530, %v1532
        %v2460 = vcombine.low %v1534, %v1548
        %v2462 = vunpack.c.l.s4 1966171168
        %v2463 = vunpack.c.0.s8 %v2462
        %v2464 = vlaneseq
        %v2465 = vshrl.u32 %v2464, 7
        %v2466 = vsub.s32 %v2463, %v2465
        %v2467 = vrot.slane %v2457, %v2466
        %v2469 = vunpack.c.l.s4 1966171168
        %v2470 = vunpack.c.0.s8 %v2469
        %v2471 = vlaneseq
        %v2472 = vshrl.u32 %v2471, 7
        %v2473 = vsub.s32 %v2470, %v2472
        %v2474 = vrot.slane %v2458, %v2473
        %v2476 = vunpack.c.l.s4 1966171168
        %v2477 = vunpack.c.0.s8 %v2476
        %v2478 = vlaneseq
        %v2479 = vshrl.u32 %v2478, 7
        %v2480 = vsub.s32 %v2477, %v2479
        %v2481 = vrot.slane %v2459, %v2480
        %v2483 = vunpack.c.l.s4 1966171168
        %v2484 = vunpack.c.0.s8 %v2483
        %v2485 = vlaneseq
        %v2486 = vshrl.u32 %v2485, 7
        %v2487 = vsub.s32 %v2484, %v2486
        %v2488 = vrot.slane %v2460, %v2487
        %v2489 = vcombine.low %v2467, %v2474
        %v2490 = vcombine.low %v2481, %v2488
        %v2492 = vunpack.c.l.s4 1966171168
        %v2493 = vunpack.c.0.s8 %v2492
        %v2494 = vlaneseq
        %v2495 = vshrl.u32 %v2494, 7
        %v2496 = vsub.s32 %v2493, %v2495
        %v2497 = vrot.slane %v2489, %v2496
        %v2499 = vunpack.c.l.s4 1966171168
        %v2500 = vunpack.c.0.s8 %v2499
        %v2501 = vlaneseq
        %v2502 = vshrl.u32 %v2501, 7
        %v2503 = vsub.s32 %v2500, %v2502
        %v2504 = vrot.slane %v2490, %v2503
        %v2505 = vcombine.low %v2497, %v2504
        %v2523 = vpack.c.bf16 %v1770, %v1721
        %v2524 = vpack.c.bf16 %v1868, %v1819
        %v2525 = vpack.c.bf16 %v1966, %v1917
        %v2526 = vpack.c.bf16 %v2064, %v2015
        %v2527 = vpack.c.bf16 %v2162, %v2113
        %v2528 = vpack.c.bf16 %v2260, %v2211
        %v2529 = vpack.c.bf16 %v2358, %v2309
        %v2530 = vpack.c.bf16 %v2456, %v2407
        %v2531 = vpack.c.bf16 %v2505, %v2505
        %v2532 = vld [vmem:[%s3] sm:$0xf]
        %v2533 = vld [vmem:[%s3 + $0x4] sm:$0xf]
        %v2534 = vld [vmem:[%s3 + $0x8] sm:$0xf]
        %v2535 = vld [vmem:[%s3 + $0xc] sm:$0xf]
        %v2536 = vld [vmem:[#allocation8] sm:$0x1]
        %v2538 = vlaneseq
        %v2539 = vshrl.u32 %v2538, 7
        %v2540 = vsub.s32 0, %v2539
        %v2541 = vrot.slane %v2536, %v2540
        %v2547 = vunpack.c.l.b16 %v2532
        %v2548 = vunpack.c.l.b16 %v2533
        %v2549 = vunpack.c.l.b16 %v2534
        %v2550 = vunpack.c.l.b16 %v2535
        %v2551 = vpack.c.b16 %v2548, %v2547
        %v2552 = vpack.c.b16 %v2550, %v2549
        %v2556 = vsel %vm450, %v2523, 0
        %v2559 = vsel %vm450, %v2524, 0
        %v2562 = vsel %vm450, %v2525, 0
        %v2565 = vsel %vm450, %v2526, 0
        %v2568 = vsel %vm450, %v2527, 0
        %v2571 = vsel %vm450, %v2528, 0
        %v2574 = vsel %vm450, %v2529, 0
        %v2577 = vsel %vm450, %v2530, 0
        %v2580 = vsel %vm450, %v2531, 0
        %2582 = vmatprep.subr.bf16.mxu0 0
        %2583 = vmatpush1.bf16.msra.mxu0 0
        %2584 = vmatprep.subr.bf16.mxu0 0
        %2585 = vmatpush1.bf16.msra.mxu0 0
        %2586 = vmatprep.subr.bf16.mxu0 0
        %2587 = vmatpush1.bf16.msra.mxu0 0
        %2588 = vmatprep.subr.bf16.mxu0 0
        %2589 = vmatpush1.bf16.msra.mxu0 0
        %2590 = vmatprep.subr.bf16.mxu0 0
        %2591 = vmatpush1.bf16.msra.mxu0 0
        %2592 = vmatprep.subr.bf16.mxu0 0
        %2593 = vmatpush1.bf16.msra.mxu0 0
        %2594 = vmatprep.subr.bf16.mxu0 0
        %2595 = vmatpush1.bf16.msra.mxu0 %v2552
        %2596 = vmatprep.subr.bf16.mxu0 0
        %2597 = vmatpush1.bf16.msra.mxu0 %v2551
        %2598 = vmatprep.subr.bf16.mxu0 0
        %2599 = vmatpush2.bf16.msra.mxu0 0
        %2600 = vmatprep.subr.bf16.mxu0 0
        %2601 = vmatpush2.bf16.msra.mxu0 0
        %2602 = vmatprep.subr.bf16.mxu0 0
        %2603 = vmatpush2.bf16.msra.mxu0 0
        %2604 = vmatprep.subr.bf16.mxu0 0
        %2605 = vmatpush2.bf16.msra.mxu0 0
        %2606 = vmatprep.subr.bf16.mxu0 0
        %2607 = vmatpush2.bf16.msra.mxu0 0
        %2608 = vmatprep.subr.bf16.mxu0 0
        %2609 = vmatpush2.bf16.msra.mxu0 0
        %2610 = vmatprep.subr.bf16.mxu0 0
        %2611 = vmatpush2.bf16.msra.mxu0 0
        %2612 = vmatprep.subr.bf16.mxu0 0
        %2613 = vmatpush2.bf16.msra.mxu0 0
        %2614 = vmatprep.mubr.bf16.mxu0 0
        %2615 = vmatmul.mubr.bf16.gmra.mxu0 %v2556
        %v2616 = vpop.f32.mrf.mxu0
        %v2617 = vadd.f32 %v2541, %v2616
        %v2618 = vpop.f32.mrf.mxu0
        %v2619 = vpop.f32.mrf.mxu0
        %v2620 = vadd.f32 %v2541, %v2619
        %v2621 = vpop.f32.mrf.mxu0
        %2622 = vmatprep.mubr.bf16.mxu0 0
        %2623 = vmatmul.mubr.bf16.gmra.mxu0 %v2559
        %v2624 = vpop.f32.mrf.mxu0
        %v2625 = vadd.f32 %v2541, %v2624
        %v2626 = vpop.f32.mrf.mxu0
        %v2627 = vpop.f32.mrf.mxu0
        %v2628 = vadd.f32 %v2541, %v2627
        %v2629 = vpop.f32.mrf.mxu0
        %2630 = vmatprep.mubr.bf16.mxu0 0
        %2631 = vmatmul.mubr.bf16.gmra.mxu0 %v2562
        %v2632 = vpop.f32.mrf.mxu0
        %v2633 = vadd.f32 %v2541, %v2632
        %v2634 = vpop.f32.mrf.mxu0
        %v2635 = vpop.f32.mrf.mxu0
        %v2636 = vadd.f32 %v2541, %v2635
        %v2637 = vpop.f32.mrf.mxu0
        %2638 = vmatprep.mubr.bf16.mxu0 0
        %2639 = vmatmul.mubr.bf16.gmra.mxu0 %v2565
        %v2640 = vpop.f32.mrf.mxu0
        %v2641 = vadd.f32 %v2541, %v2640
        %v2642 = vpop.f32.mrf.mxu0
        %v2643 = vpop.f32.mrf.mxu0
        %v2644 = vadd.f32 %v2541, %v2643
        %v2645 = vpop.f32.mrf.mxu0
        %2646 = vmatprep.mubr.bf16.mxu0 0
        %2647 = vmatmul.mubr.bf16.gmra.mxu0 %v2568
        %v2648 = vpop.f32.mrf.mxu0
        %v2649 = vadd.f32 %v2541, %v2648
        %v2650 = vpop.f32.mrf.mxu0
        %v2651 = vpop.f32.mrf.mxu0
        %v2652 = vadd.f32 %v2541, %v2651
        %v2653 = vpop.f32.mrf.mxu0
        %2654 = vmatprep.mubr.bf16.mxu0 0
        %2655 = vmatmul.mubr.bf16.gmra.mxu0 %v2571
        %v2656 = vpop.f32.mrf.mxu0
        %v2657 = vadd.f32 %v2541, %v2656
        %v2658 = vpop.f32.mrf.mxu0
        %v2659 = vpop.f32.mrf.mxu0
        %v2660 = vadd.f32 %v2541, %v2659
        %v2661 = vpop.f32.mrf.mxu0
        %2662 = vmatprep.mubr.bf16.mxu0 0
        %2663 = vmatmul.mubr.bf16.gmra.mxu0 %v2574
        %v2664 = vpop.f32.mrf.mxu0
        %v2665 = vadd.f32 %v2541, %v2664
        %v2666 = vpop.f32.mrf.mxu0
        %v2667 = vpop.f32.mrf.mxu0
        %v2668 = vadd.f32 %v2541, %v2667
        %v2669 = vpop.f32.mrf.mxu0
        %2670 = vmatprep.mubr.bf16.mxu0 0
        %2671 = vmatmul.mubr.bf16.gmra.mxu0 %v2577
        %v2672 = vpop.f32.mrf.mxu0
        %v2673 = vadd.f32 %v2541, %v2672
        %v2674 = vpop.f32.mrf.mxu0
        %v2675 = vpop.f32.mrf.mxu0
        %v2676 = vadd.f32 %v2541, %v2675
        %v2677 = vpop.f32.mrf.mxu0
        %2678 = vmatprep.mubr.bf16.mxu0 0
        %2679 = vmatmul.mubr.bf16.gmra.mxu0 %v2580
        %v2680 = vpop.f32.mrf.mxu0
        %v2681 = vadd.f32 %v2541, %v2680
        %v2682 = vpop.f32.mrf.mxu0
        %v2683 = vpop.f32.mrf.mxu0
        %v2684 = vpop.f32.mrf.mxu0
        %2685 = vdwg.mxu0
        %v2703 = vcombine.high %v2617, %v2617
        %v2705 = vunpack.c.l.s4 1966171168
        %v2706 = vunpack.c.0.s8 %v2705
        %v2707 = vlaneseq
        %v2708 = vshrl.u32 %v2707, 7
        %v2709 = vsub.s32 %v2706, %v2708
        %v2710 = vrot.slane %v2617, %v2709
        %v2712 = vunpack.c.l.s4 1966171168
        %v2713 = vunpack.c.0.s8 %v2712
        %v2714 = vlaneseq
        %v2715 = vshrl.u32 %v2714, 7
        %v2716 = vsub.s32 %v2713, %v2715
        %v2717 = vrot.slane %v2703, %v2716
        %v2718 = vcombine.high %v2710, %v2710
        %v2719 = vcombine.high %v2717, %v2717
        %v2721 = vunpack.c.l.s4 1966171168
        %v2722 = vunpack.c.0.s8 %v2721
        %v2723 = vlaneseq
        %v2724 = vshrl.u32 %v2723, 7
        %v2725 = vsub.s32 %v2722, %v2724
        %v2726 = vrot.slane %v2710, %v2725
        %v2728 = vunpack.c.l.s4 1966171168
        %v2729 = vunpack.c.0.s8 %v2728
        %v2730 = vlaneseq
        %v2731 = vshrl.u32 %v2730, 7
        %v2732 = vsub.s32 %v2729, %v2731
        %v2733 = vrot.slane %v2717, %v2732
        %v2735 = vunpack.c.l.s4 1966171168
        %v2736 = vunpack.c.0.s8 %v2735
        %v2737 = vlaneseq
        %v2738 = vshrl.u32 %v2737, 7
        %v2739 = vsub.s32 %v2736, %v2738
        %v2740 = vrot.slane %v2718, %v2739
        %v2742 = vunpack.c.l.s4 1966171168
        %v2743 = vunpack.c.0.s8 %v2742
        %v2744 = vlaneseq
        %v2745 = vshrl.u32 %v2744, 7
        %v2746 = vsub.s32 %v2743, %v2745
        %v2747 = vrot.slane %v2719, %v2746
        %v2748 = vcombine.high %v2726, %v2726
        %v2749 = vcombine.high %v2733, %v2733
        %v2750 = vcombine.high %v2740, %v2740
        %v2751 = vcombine.high %v2747, %v2747
        %v2752 = vcombine.high %v2620, %v2620
        %v2754 = vunpack.c.l.s4 1966171168
        %v2755 = vunpack.c.0.s8 %v2754
        %v2756 = vlaneseq
        %v2757 = vshrl.u32 %v2756, 7
        %v2758 = vsub.s32 %v2755, %v2757
        %v2759 = vrot.slane %v2620, %v2758
        %v2761 = vunpack.c.l.s4 1966171168
        %v2762 = vunpack.c.0.s8 %v2761
        %v2763 = vlaneseq
        %v2764 = vshrl.u32 %v2763, 7
        %v2765 = vsub.s32 %v2762, %v2764
        %v2766 = vrot.slane %v2752, %v2765
        %v2767 = vcombine.high %v2759, %v2759
        %v2768 = vcombine.high %v2766, %v2766
        %v2770 = vunpack.c.l.s4 1966171168
        %v2771 = vunpack.c.0.s8 %v2770
        %v2772 = vlaneseq
        %v2773 = vshrl.u32 %v2772, 7
        %v2774 = vsub.s32 %v2771, %v2773
        %v2775 = vrot.slane %v2759, %v2774
        %v2777 = vunpack.c.l.s4 1966171168
        %v2778 = vunpack.c.0.s8 %v2777
        %v2779 = vlaneseq
        %v2780 = vshrl.u32 %v2779, 7
        %v2781 = vsub.s32 %v2778, %v2780
        %v2782 = vrot.slane %v2766, %v2781
        %v2784 = vunpack.c.l.s4 1966171168
        %v2785 = vunpack.c.0.s8 %v2784
        %v2786 = vlaneseq
        %v2787 = vshrl.u32 %v2786, 7
        %v2788 = vsub.s32 %v2785, %v2787
        %v2789 = vrot.slane %v2767, %v2788
        %v2791 = vunpack.c.l.s4 1966171168
        %v2792 = vunpack.c.0.s8 %v2791
        %v2793 = vlaneseq
        %v2794 = vshrl.u32 %v2793, 7
        %v2795 = vsub.s32 %v2792, %v2794
        %v2796 = vrot.slane %v2768, %v2795
        %v2797 = vcombine.high %v2775, %v2775
        %v2798 = vcombine.high %v2782, %v2782
        %v2799 = vcombine.high %v2789, %v2789
        %v2800 = vcombine.high %v2796, %v2796
        %v2801 = vcombine.high %v2625, %v2625
        %v2803 = vunpack.c.l.s4 1966171168
        %v2804 = vunpack.c.0.s8 %v2803
        %v2805 = vlaneseq
        %v2806 = vshrl.u32 %v2805, 7
        %v2807 = vsub.s32 %v2804, %v2806
        %v2808 = vrot.slane %v2625, %v2807
        %v2810 = vunpack.c.l.s4 1966171168
        %v2811 = vunpack.c.0.s8 %v2810
        %v2812 = vlaneseq
        %v2813 = vshrl.u32 %v2812, 7
        %v2814 = vsub.s32 %v2811, %v2813
        %v2815 = vrot.slane %v2801, %v2814
        %v2816 = vcombine.high %v2808, %v2808
        %v2817 = vcombine.high %v2815, %v2815
        %v2819 = vunpack.c.l.s4 1966171168
        %v2820 = vunpack.c.0.s8 %v2819
        %v2821 = vlaneseq
        %v2822 = vshrl.u32 %v2821, 7
        %v2823 = vsub.s32 %v2820, %v2822
        %v2824 = vrot.slane %v2808, %v2823
        %v2826 = vunpack.c.l.s4 1966171168
        %v2827 = vunpack.c.0.s8 %v2826
        %v2828 = vlaneseq
        %v2829 = vshrl.u32 %v2828, 7
        %v2830 = vsub.s32 %v2827, %v2829
        %v2831 = vrot.slane %v2815, %v2830
        %v2833 = vunpack.c.l.s4 1966171168
        %v2834 = vunpack.c.0.s8 %v2833
        %v2835 = vlaneseq
        %v2836 = vshrl.u32 %v2835, 7
        %v2837 = vsub.s32 %v2834, %v2836
        %v2838 = vrot.slane %v2816, %v2837
        %v2840 = vunpack.c.l.s4 1966171168
        %v2841 = vunpack.c.0.s8 %v2840
        %v2842 = vlaneseq
        %v2843 = vshrl.u32 %v2842, 7
        %v2844 = vsub.s32 %v2841, %v2843
        %v2845 = vrot.slane %v2817, %v2844
        %v2846 = vcombine.high %v2824, %v2824
        %v2847 = vcombine.high %v2831, %v2831
        %v2848 = vcombine.high %v2838, %v2838
        %v2849 = vcombine.high %v2845, %v2845
        %v2850 = vcombine.high %v2628, %v2628
        %v2852 = vunpack.c.l.s4 1966171168
        %v2853 = vunpack.c.0.s8 %v2852
        %v2854 = vlaneseq
        %v2855 = vshrl.u32 %v2854, 7
        %v2856 = vsub.s32 %v2853, %v2855
        %v2857 = vrot.slane %v2628, %v2856
        %v2859 = vunpack.c.l.s4 1966171168
        %v2860 = vunpack.c.0.s8 %v2859
        %v2861 = vlaneseq
        %v2862 = vshrl.u32 %v2861, 7
        %v2863 = vsub.s32 %v2860, %v2862
        %v2864 = vrot.slane %v2850, %v2863
        %v2865 = vcombine.high %v2857, %v2857
        %v2866 = vcombine.high %v2864, %v2864
        %v2868 = vunpack.c.l.s4 1966171168
        %v2869 = vunpack.c.0.s8 %v2868
        %v2870 = vlaneseq
        %v2871 = vshrl.u32 %v2870, 7
        %v2872 = vsub.s32 %v2869, %v2871
        %v2873 = vrot.slane %v2857, %v2872
        %v2875 = vunpack.c.l.s4 1966171168
        %v2876 = vunpack.c.0.s8 %v2875
        %v2877 = vlaneseq
        %v2878 = vshrl.u32 %v2877, 7
        %v2879 = vsub.s32 %v2876, %v2878
        %v2880 = vrot.slane %v2864, %v2879
        %v2882 = vunpack.c.l.s4 1966171168
        %v2883 = vunpack.c.0.s8 %v2882
        %v2884 = vlaneseq
        %v2885 = vshrl.u32 %v2884, 7
        %v2886 = vsub.s32 %v2883, %v2885
        %v2887 = vrot.slane %v2865, %v2886
        %v2889 = vunpack.c.l.s4 1966171168
        %v2890 = vunpack.c.0.s8 %v2889
        %v2891 = vlaneseq
        %v2892 = vshrl.u32 %v2891, 7
        %v2893 = vsub.s32 %v2890, %v2892
        %v2894 = vrot.slane %v2866, %v2893
        %v2895 = vcombine.high %v2873, %v2873
        %v2896 = vcombine.high %v2880, %v2880
        %v2897 = vcombine.high %v2887, %v2887
        %v2898 = vcombine.high %v2894, %v2894
        %v2899 = vcombine.high %v2633, %v2633
        %v2901 = vunpack.c.l.s4 1966171168
        %v2902 = vunpack.c.0.s8 %v2901
        %v2903 = vlaneseq
        %v2904 = vshrl.u32 %v2903, 7
        %v2905 = vsub.s32 %v2902, %v2904
        %v2906 = vrot.slane %v2633, %v2905
        %v2908 = vunpack.c.l.s4 1966171168
        %v2909 = vunpack.c.0.s8 %v2908
        %v2910 = vlaneseq
        %v2911 = vshrl.u32 %v2910, 7
        %v2912 = vsub.s32 %v2909, %v2911
        %v2913 = vrot.slane %v2899, %v2912
        %v2914 = vcombine.high %v2906, %v2906
        %v2915 = vcombine.high %v2913, %v2913
        %v2917 = vunpack.c.l.s4 1966171168
        %v2918 = vunpack.c.0.s8 %v2917
        %v2919 = vlaneseq
        %v2920 = vshrl.u32 %v2919, 7
        %v2921 = vsub.s32 %v2918, %v2920
        %v2922 = vrot.slane %v2906, %v2921
        %v2924 = vunpack.c.l.s4 1966171168
        %v2925 = vunpack.c.0.s8 %v2924
        %v2926 = vlaneseq
        %v2927 = vshrl.u32 %v2926, 7
        %v2928 = vsub.s32 %v2925, %v2927
        %v2929 = vrot.slane %v2913, %v2928
        %v2931 = vunpack.c.l.s4 1966171168
        %v2932 = vunpack.c.0.s8 %v2931
        %v2933 = vlaneseq
        %v2934 = vshrl.u32 %v2933, 7
        %v2935 = vsub.s32 %v2932, %v2934
        %v2936 = vrot.slane %v2914, %v2935
        %v2938 = vunpack.c.l.s4 1966171168
        %v2939 = vunpack.c.0.s8 %v2938
        %v2940 = vlaneseq
        %v2941 = vshrl.u32 %v2940, 7
        %v2942 = vsub.s32 %v2939, %v2941
        %v2943 = vrot.slane %v2915, %v2942
        %v2944 = vcombine.high %v2922, %v2922
        %v2945 = vcombine.high %v2929, %v2929
        %v2946 = vcombine.high %v2936, %v2936
        %v2947 = vcombine.high %v2943, %v2943
        %v2948 = vcombine.high %v2636, %v2636
        %v2950 = vunpack.c.l.s4 1966171168
        %v2951 = vunpack.c.0.s8 %v2950
        %v2952 = vlaneseq
        %v2953 = vshrl.u32 %v2952, 7
        %v2954 = vsub.s32 %v2951, %v2953
        %v2955 = vrot.slane %v2636, %v2954
        %v2957 = vunpack.c.l.s4 1966171168
        %v2958 = vunpack.c.0.s8 %v2957
        %v2959 = vlaneseq
        %v2960 = vshrl.u32 %v2959, 7
        %v2961 = vsub.s32 %v2958, %v2960
        %v2962 = vrot.slane %v2948, %v2961
        %v2963 = vcombine.high %v2955, %v2955
        %v2964 = vcombine.high %v2962, %v2962
        %v2966 = vunpack.c.l.s4 1966171168
        %v2967 = vunpack.c.0.s8 %v2966
        %v2968 = vlaneseq
        %v2969 = vshrl.u32 %v2968, 7
        %v2970 = vsub.s32 %v2967, %v2969
        %v2971 = vrot.slane %v2955, %v2970
        %v2973 = vunpack.c.l.s4 1966171168
        %v2974 = vunpack.c.0.s8 %v2973
        %v2975 = vlaneseq
        %v2976 = vshrl.u32 %v2975, 7
        %v2977 = vsub.s32 %v2974, %v2976
        %v2978 = vrot.slane %v2962, %v2977
        %v2980 = vunpack.c.l.s4 1966171168
        %v2981 = vunpack.c.0.s8 %v2980
        %v2982 = vlaneseq
        %v2983 = vshrl.u32 %v2982, 7
        %v2984 = vsub.s32 %v2981, %v2983
        %v2985 = vrot.slane %v2963, %v2984
        %v2987 = vunpack.c.l.s4 1966171168
        %v2988 = vunpack.c.0.s8 %v2987
        %v2989 = vlaneseq
        %v2990 = vshrl.u32 %v2989, 7
        %v2991 = vsub.s32 %v2988, %v2990
        %v2992 = vrot.slane %v2964, %v2991
        %v2993 = vcombine.high %v2971, %v2971
        %v2994 = vcombine.high %v2978, %v2978
        %v2995 = vcombine.high %v2985, %v2985
        %v2996 = vcombine.high %v2992, %v2992
        %v2997 = vcombine.high %v2641, %v2641
        %v2999 = vunpack.c.l.s4 1966171168
        %v3000 = vunpack.c.0.s8 %v2999
        %v3001 = vlaneseq
        %v3002 = vshrl.u32 %v3001, 7
        %v3003 = vsub.s32 %v3000, %v3002
        %v3004 = vrot.slane %v2641, %v3003
        %v3006 = vunpack.c.l.s4 1966171168
        %v3007 = vunpack.c.0.s8 %v3006
        %v3008 = vlaneseq
        %v3009 = vshrl.u32 %v3008, 7
        %v3010 = vsub.s32 %v3007, %v3009
        %v3011 = vrot.slane %v2997, %v3010
        %v3012 = vcombine.high %v3004, %v3004
        %v3013 = vcombine.high %v3011, %v3011
        %v3015 = vunpack.c.l.s4 1966171168
        %v3016 = vunpack.c.0.s8 %v3015
        %v3017 = vlaneseq
        %v3018 = vshrl.u32 %v3017, 7
        %v3019 = vsub.s32 %v3016, %v3018
        %v3020 = vrot.slane %v3004, %v3019
        %v3022 = vunpack.c.l.s4 1966171168
        %v3023 = vunpack.c.0.s8 %v3022
        %v3024 = vlaneseq
        %v3025 = vshrl.u32 %v3024, 7
        %v3026 = vsub.s32 %v3023, %v3025
        %v3027 = vrot.slane %v3011, %v3026
        %v3029 = vunpack.c.l.s4 1966171168
        %v3030 = vunpack.c.0.s8 %v3029
        %v3031 = vlaneseq
        %v3032 = vshrl.u32 %v3031, 7
        %v3033 = vsub.s32 %v3030, %v3032
        %v3034 = vrot.slane %v3012, %v3033
        %v3036 = vunpack.c.l.s4 1966171168
        %v3037 = vunpack.c.0.s8 %v3036
        %v3038 = vlaneseq
        %v3039 = vshrl.u32 %v3038, 7
        %v3040 = vsub.s32 %v3037, %v3039
        %v3041 = vrot.slane %v3013, %v3040
        %v3042 = vcombine.high %v3020, %v3020
        %v3043 = vcombine.high %v3027, %v3027
        %v3044 = vcombine.high %v3034, %v3034
        %v3045 = vcombine.high %v3041, %v3041
        %v3046 = vcombine.high %v2644, %v2644
        %v3048 = vunpack.c.l.s4 1966171168
        %v3049 = vunpack.c.0.s8 %v3048
        %v3050 = vlaneseq
        %v3051 = vshrl.u32 %v3050, 7
        %v3052 = vsub.s32 %v3049, %v3051
        %v3053 = vrot.slane %v2644, %v3052
        %v3055 = vunpack.c.l.s4 1966171168
        %v3056 = vunpack.c.0.s8 %v3055
        %v3057 = vlaneseq
        %v3058 = vshrl.u32 %v3057, 7
        %v3059 = vsub.s32 %v3056, %v3058
        %v3060 = vrot.slane %v3046, %v3059
        %v3061 = vcombine.high %v3053, %v3053
        %v3062 = vcombine.high %v3060, %v3060
        %v3064 = vunpack.c.l.s4 1966171168
        %v3065 = vunpack.c.0.s8 %v3064
        %v3066 = vlaneseq
        %v3067 = vshrl.u32 %v3066, 7
        %v3068 = vsub.s32 %v3065, %v3067
        %v3069 = vrot.slane %v3053, %v3068
        %v3071 = vunpack.c.l.s4 1966171168
        %v3072 = vunpack.c.0.s8 %v3071
        %v3073 = vlaneseq
        %v3074 = vshrl.u32 %v3073, 7
        %v3075 = vsub.s32 %v3072, %v3074
        %v3076 = vrot.slane %v3060, %v3075
        %v3078 = vunpack.c.l.s4 1966171168
        %v3079 = vunpack.c.0.s8 %v3078
        %v3080 = vlaneseq
        %v3081 = vshrl.u32 %v3080, 7
        %v3082 = vsub.s32 %v3079, %v3081
        %v3083 = vrot.slane %v3061, %v3082
        %v3085 = vunpack.c.l.s4 1966171168
        %v3086 = vunpack.c.0.s8 %v3085
        %v3087 = vlaneseq
        %v3088 = vshrl.u32 %v3087, 7
        %v3089 = vsub.s32 %v3086, %v3088
        %v3090 = vrot.slane %v3062, %v3089
        %v3091 = vcombine.high %v3069, %v3069
        %v3092 = vcombine.high %v3076, %v3076
        %v3093 = vcombine.high %v3083, %v3083
        %v3094 = vcombine.high %v3090, %v3090
        %v3095 = vcombine.high %v2649, %v2649
        %v3097 = vunpack.c.l.s4 1966171168
        %v3098 = vunpack.c.0.s8 %v3097
        %v3099 = vlaneseq
        %v3100 = vshrl.u32 %v3099, 7
        %v3101 = vsub.s32 %v3098, %v3100
        %v3102 = vrot.slane %v2649, %v3101
        %v3104 = vunpack.c.l.s4 1966171168
        %v3105 = vunpack.c.0.s8 %v3104
        %v3106 = vlaneseq
        %v3107 = vshrl.u32 %v3106, 7
        %v3108 = vsub.s32 %v3105, %v3107
        %v3109 = vrot.slane %v3095, %v3108
        %v3110 = vcombine.high %v3102, %v3102
        %v3111 = vcombine.high %v3109, %v3109
        %v3113 = vunpack.c.l.s4 1966171168
        %v3114 = vunpack.c.0.s8 %v3113
        %v3115 = vlaneseq
        %v3116 = vshrl.u32 %v3115, 7
        %v3117 = vsub.s32 %v3114, %v3116
        %v3118 = vrot.slane %v3102, %v3117
        %v3120 = vunpack.c.l.s4 1966171168
        %v3121 = vunpack.c.0.s8 %v3120
        %v3122 = vlaneseq
        %v3123 = vshrl.u32 %v3122, 7
        %v3124 = vsub.s32 %v3121, %v3123
        %v3125 = vrot.slane %v3109, %v3124
        %v3127 = vunpack.c.l.s4 1966171168
        %v3128 = vunpack.c.0.s8 %v3127
        %v3129 = vlaneseq
        %v3130 = vshrl.u32 %v3129, 7
        %v3131 = vsub.s32 %v3128, %v3130
        %v3132 = vrot.slane %v3110, %v3131
        %v3134 = vunpack.c.l.s4 1966171168
        %v3135 = vunpack.c.0.s8 %v3134
        %v3136 = vlaneseq
        %v3137 = vshrl.u32 %v3136, 7
        %v3138 = vsub.s32 %v3135, %v3137
        %v3139 = vrot.slane %v3111, %v3138
        %v3140 = vcombine.high %v3118, %v3118
        %v3141 = vcombine.high %v3125, %v3125
        %v3142 = vcombine.high %v3132, %v3132
        %v3143 = vcombine.high %v3139, %v3139
        %v3144 = vcombine.high %v2652, %v2652
        %v3146 = vunpack.c.l.s4 1966171168
        %v3147 = vunpack.c.0.s8 %v3146
        %v3148 = vlaneseq
        %v3149 = vshrl.u32 %v3148, 7
        %v3150 = vsub.s32 %v3147, %v3149
        %v3151 = vrot.slane %v2652, %v3150
        %v3153 = vunpack.c.l.s4 1966171168
        %v3154 = vunpack.c.0.s8 %v3153
        %v3155 = vlaneseq
        %v3156 = vshrl.u32 %v3155, 7
        %v3157 = vsub.s32 %v3154, %v3156
        %v3158 = vrot.slane %v3144, %v3157
        %v3159 = vcombine.high %v3151, %v3151
        %v3160 = vcombine.high %v3158, %v3158
        %v3162 = vunpack.c.l.s4 1966171168
        %v3163 = vunpack.c.0.s8 %v3162
        %v3164 = vlaneseq
        %v3165 = vshrl.u32 %v3164, 7
        %v3166 = vsub.s32 %v3163, %v3165
        %v3167 = vrot.slane %v3151, %v3166
        %v3169 = vunpack.c.l.s4 1966171168
        %v3170 = vunpack.c.0.s8 %v3169
        %v3171 = vlaneseq
        %v3172 = vshrl.u32 %v3171, 7
        %v3173 = vsub.s32 %v3170, %v3172
        %v3174 = vrot.slane %v3158, %v3173
        %v3176 = vunpack.c.l.s4 1966171168
        %v3177 = vunpack.c.0.s8 %v3176
        %v3178 = vlaneseq
        %v3179 = vshrl.u32 %v3178, 7
        %v3180 = vsub.s32 %v3177, %v3179
        %v3181 = vrot.slane %v3159, %v3180
        %v3183 = vunpack.c.l.s4 1966171168
        %v3184 = vunpack.c.0.s8 %v3183
        %v3185 = vlaneseq
        %v3186 = vshrl.u32 %v3185, 7
        %v3187 = vsub.s32 %v3184, %v3186
        %v3188 = vrot.slane %v3160, %v3187
        %v3189 = vcombine.high %v3167, %v3167
        %v3190 = vcombine.high %v3174, %v3174
        %v3191 = vcombine.high %v3181, %v3181
        %v3192 = vcombine.high %v3188, %v3188
        %v3193 = vcombine.high %v2657, %v2657
        %v3195 = vunpack.c.l.s4 1966171168
        %v3196 = vunpack.c.0.s8 %v3195
        %v3197 = vlaneseq
        %v3198 = vshrl.u32 %v3197, 7
        %v3199 = vsub.s32 %v3196, %v3198
        %v3200 = vrot.slane %v2657, %v3199
        %v3202 = vunpack.c.l.s4 1966171168
        %v3203 = vunpack.c.0.s8 %v3202
        %v3204 = vlaneseq
        %v3205 = vshrl.u32 %v3204, 7
        %v3206 = vsub.s32 %v3203, %v3205
        %v3207 = vrot.slane %v3193, %v3206
        %v3208 = vcombine.high %v3200, %v3200
        %v3209 = vcombine.high %v3207, %v3207
        %v3211 = vunpack.c.l.s4 1966171168
        %v3212 = vunpack.c.0.s8 %v3211
        %v3213 = vlaneseq
        %v3214 = vshrl.u32 %v3213, 7
        %v3215 = vsub.s32 %v3212, %v3214
        %v3216 = vrot.slane %v3200, %v3215
        %v3218 = vunpack.c.l.s4 1966171168
        %v3219 = vunpack.c.0.s8 %v3218
        %v3220 = vlaneseq
        %v3221 = vshrl.u32 %v3220, 7
        %v3222 = vsub.s32 %v3219, %v3221
        %v3223 = vrot.slane %v3207, %v3222
        %v3225 = vunpack.c.l.s4 1966171168
        %v3226 = vunpack.c.0.s8 %v3225
        %v3227 = vlaneseq
        %v3228 = vshrl.u32 %v3227, 7
        %v3229 = vsub.s32 %v3226, %v3228
        %v3230 = vrot.slane %v3208, %v3229
        %v3232 = vunpack.c.l.s4 1966171168
        %v3233 = vunpack.c.0.s8 %v3232
        %v3234 = vlaneseq
        %v3235 = vshrl.u32 %v3234, 7
        %v3236 = vsub.s32 %v3233, %v3235
        %v3237 = vrot.slane %v3209, %v3236
        %v3238 = vcombine.high %v3216, %v3216
        %v3239 = vcombine.high %v3223, %v3223
        %v3240 = vcombine.high %v3230, %v3230
        %v3241 = vcombine.high %v3237, %v3237
        %v3242 = vcombine.high %v2660, %v2660
        %v3244 = vunpack.c.l.s4 1966171168
        %v3245 = vunpack.c.0.s8 %v3244
        %v3246 = vlaneseq
        %v3247 = vshrl.u32 %v3246, 7
        %v3248 = vsub.s32 %v3245, %v3247
        %v3249 = vrot.slane %v2660, %v3248
        %v3251 = vunpack.c.l.s4 1966171168
        %v3252 = vunpack.c.0.s8 %v3251
        %v3253 = vlaneseq
        %v3254 = vshrl.u32 %v3253, 7
        %v3255 = vsub.s32 %v3252, %v3254
        %v3256 = vrot.slane %v3242, %v3255
        %v3257 = vcombine.high %v3249, %v3249
        %v3258 = vcombine.high %v3256, %v3256
        %v3260 = vunpack.c.l.s4 1966171168
        %v3261 = vunpack.c.0.s8 %v3260
        %v3262 = vlaneseq
        %v3263 = vshrl.u32 %v3262, 7
        %v3264 = vsub.s32 %v3261, %v3263
        %v3265 = vrot.slane %v3249, %v3264
        %v3267 = vunpack.c.l.s4 1966171168
        %v3268 = vunpack.c.0.s8 %v3267
        %v3269 = vlaneseq
        %v3270 = vshrl.u32 %v3269, 7
        %v3271 = vsub.s32 %v3268, %v3270
        %v3272 = vrot.slane %v3256, %v3271
        %v3274 = vunpack.c.l.s4 1966171168
        %v3275 = vunpack.c.0.s8 %v3274
        %v3276 = vlaneseq
        %v3277 = vshrl.u32 %v3276, 7
        %v3278 = vsub.s32 %v3275, %v3277
        %v3279 = vrot.slane %v3257, %v3278
        %v3281 = vunpack.c.l.s4 1966171168
        %v3282 = vunpack.c.0.s8 %v3281
        %v3283 = vlaneseq
        %v3284 = vshrl.u32 %v3283, 7
        %v3285 = vsub.s32 %v3282, %v3284
        %v3286 = vrot.slane %v3258, %v3285
        %v3287 = vcombine.high %v3265, %v3265
        %v3288 = vcombine.high %v3272, %v3272
        %v3289 = vcombine.high %v3279, %v3279
        %v3290 = vcombine.high %v3286, %v3286
        %v3291 = vcombine.high %v2665, %v2665
        %v3293 = vunpack.c.l.s4 1966171168
        %v3294 = vunpack.c.0.s8 %v3293
        %v3295 = vlaneseq
        %v3296 = vshrl.u32 %v3295, 7
        %v3297 = vsub.s32 %v3294, %v3296
        %v3298 = vrot.slane %v2665, %v3297
        %v3300 = vunpack.c.l.s4 1966171168
        %v3301 = vunpack.c.0.s8 %v3300
        %v3302 = vlaneseq
        %v3303 = vshrl.u32 %v3302, 7
        %v3304 = vsub.s32 %v3301, %v3303
        %v3305 = vrot.slane %v3291, %v3304
        %v3306 = vcombine.high %v3298, %v3298
        %v3307 = vcombine.high %v3305, %v3305
        %v3309 = vunpack.c.l.s4 1966171168
        %v3310 = vunpack.c.0.s8 %v3309
        %v3311 = vlaneseq
        %v3312 = vshrl.u32 %v3311, 7
        %v3313 = vsub.s32 %v3310, %v3312
        %v3314 = vrot.slane %v3298, %v3313
        %v3316 = vunpack.c.l.s4 1966171168
        %v3317 = vunpack.c.0.s8 %v3316
        %v3318 = vlaneseq
        %v3319 = vshrl.u32 %v3318, 7
        %v3320 = vsub.s32 %v3317, %v3319
        %v3321 = vrot.slane %v3305, %v3320
        %v3323 = vunpack.c.l.s4 1966171168
        %v3324 = vunpack.c.0.s8 %v3323
        %v3325 = vlaneseq
        %v3326 = vshrl.u32 %v3325, 7
        %v3327 = vsub.s32 %v3324, %v3326
        %v3328 = vrot.slane %v3306, %v3327
        %v3330 = vunpack.c.l.s4 1966171168
        %v3331 = vunpack.c.0.s8 %v3330
        %v3332 = vlaneseq
        %v3333 = vshrl.u32 %v3332, 7
        %v3334 = vsub.s32 %v3331, %v3333
        %v3335 = vrot.slane %v3307, %v3334
        %v3336 = vcombine.high %v3314, %v3314
        %v3337 = vcombine.high %v3321, %v3321
        %v3338 = vcombine.high %v3328, %v3328
        %v3339 = vcombine.high %v3335, %v3335
        %v3340 = vcombine.high %v2668, %v2668
        %v3342 = vunpack.c.l.s4 1966171168
        %v3343 = vunpack.c.0.s8 %v3342
        %v3344 = vlaneseq
        %v3345 = vshrl.u32 %v3344, 7
        %v3346 = vsub.s32 %v3343, %v3345
        %v3347 = vrot.slane %v2668, %v3346
        %v3349 = vunpack.c.l.s4 1966171168
        %v3350 = vunpack.c.0.s8 %v3349
        %v3351 = vlaneseq
        %v3352 = vshrl.u32 %v3351, 7
        %v3353 = vsub.s32 %v3350, %v3352
        %v3354 = vrot.slane %v3340, %v3353
        %v3355 = vcombine.high %v3347, %v3347
        %v3356 = vcombine.high %v3354, %v3354
        %v3358 = vunpack.c.l.s4 1966171168
        %v3359 = vunpack.c.0.s8 %v3358
        %v3360 = vlaneseq
        %v3361 = vshrl.u32 %v3360, 7
        %v3362 = vsub.s32 %v3359, %v3361
        %v3363 = vrot.slane %v3347, %v3362
        %v3365 = vunpack.c.l.s4 1966171168
        %v3366 = vunpack.c.0.s8 %v3365
        %v3367 = vlaneseq
        %v3368 = vshrl.u32 %v3367, 7
        %v3369 = vsub.s32 %v3366, %v3368
        %v3370 = vrot.slane %v3354, %v3369
        %v3372 = vunpack.c.l.s4 1966171168
        %v3373 = vunpack.c.0.s8 %v3372
        %v3374 = vlaneseq
        %v3375 = vshrl.u32 %v3374, 7
        %v3376 = vsub.s32 %v3373, %v3375
        %v3377 = vrot.slane %v3355, %v3376
        %v3379 = vunpack.c.l.s4 1966171168
        %v3380 = vunpack.c.0.s8 %v3379
        %v3381 = vlaneseq
        %v3382 = vshrl.u32 %v3381, 7
        %v3383 = vsub.s32 %v3380, %v3382
        %v3384 = vrot.slane %v3356, %v3383
        %v3385 = vcombine.high %v3363, %v3363
        %v3386 = vcombine.high %v3370, %v3370
        %v3387 = vcombine.high %v3377, %v3377
        %v3388 = vcombine.high %v3384, %v3384
        %v3389 = vcombine.high %v2673, %v2673
        %v3391 = vunpack.c.l.s4 1966171168
        %v3392 = vunpack.c.0.s8 %v3391
        %v3393 = vlaneseq
        %v3394 = vshrl.u32 %v3393, 7
        %v3395 = vsub.s32 %v3392, %v3394
        %v3396 = vrot.slane %v2673, %v3395
        %v3398 = vunpack.c.l.s4 1966171168
        %v3399 = vunpack.c.0.s8 %v3398
        %v3400 = vlaneseq
        %v3401 = vshrl.u32 %v3400, 7
        %v3402 = vsub.s32 %v3399, %v3401
        %v3403 = vrot.slane %v3389, %v3402
        %v3404 = vcombine.high %v3396, %v3396
        %v3405 = vcombine.high %v3403, %v3403
        %v3407 = vunpack.c.l.s4 1966171168
        %v3408 = vunpack.c.0.s8 %v3407
        %v3409 = vlaneseq
        %v3410 = vshrl.u32 %v3409, 7
        %v3411 = vsub.s32 %v3408, %v3410
        %v3412 = vrot.slane %v3396, %v3411
        %v3414 = vunpack.c.l.s4 1966171168
        %v3415 = vunpack.c.0.s8 %v3414
        %v3416 = vlaneseq
        %v3417 = vshrl.u32 %v3416, 7
        %v3418 = vsub.s32 %v3415, %v3417
        %v3419 = vrot.slane %v3403, %v3418
        %v3421 = vunpack.c.l.s4 1966171168
        %v3422 = vunpack.c.0.s8 %v3421
        %v3423 = vlaneseq
        %v3424 = vshrl.u32 %v3423, 7
        %v3425 = vsub.s32 %v3422, %v3424
        %v3426 = vrot.slane %v3404, %v3425
        %v3428 = vunpack.c.l.s4 1966171168
        %v3429 = vunpack.c.0.s8 %v3428
        %v3430 = vlaneseq
        %v3431 = vshrl.u32 %v3430, 7
        %v3432 = vsub.s32 %v3429, %v3431
        %v3433 = vrot.slane %v3405, %v3432
        %v3434 = vcombine.high %v3412, %v3412
        %v3435 = vcombine.high %v3419, %v3419
        %v3436 = vcombine.high %v3426, %v3426
        %v3437 = vcombine.high %v3433, %v3433
        %v3438 = vcombine.high %v2676, %v2676
        %v3440 = vunpack.c.l.s4 1966171168
        %v3441 = vunpack.c.0.s8 %v3440
        %v3442 = vlaneseq
        %v3443 = vshrl.u32 %v3442, 7
        %v3444 = vsub.s32 %v3441, %v3443
        %v3445 = vrot.slane %v2676, %v3444
        %v3447 = vunpack.c.l.s4 1966171168
        %v3448 = vunpack.c.0.s8 %v3447
        %v3449 = vlaneseq
        %v3450 = vshrl.u32 %v3449, 7
        %v3451 = vsub.s32 %v3448, %v3450
        %v3452 = vrot.slane %v3438, %v3451
        %v3453 = vcombine.high %v3445, %v3445
        %v3454 = vcombine.high %v3452, %v3452
        %v3456 = vunpack.c.l.s4 1966171168
        %v3457 = vunpack.c.0.s8 %v3456
        %v3458 = vlaneseq
        %v3459 = vshrl.u32 %v3458, 7
        %v3460 = vsub.s32 %v3457, %v3459
        %v3461 = vrot.slane %v3445, %v3460
        %v3463 = vunpack.c.l.s4 1966171168
        %v3464 = vunpack.c.0.s8 %v3463
        %v3465 = vlaneseq
        %v3466 = vshrl.u32 %v3465, 7
        %v3467 = vsub.s32 %v3464, %v3466
        %v3468 = vrot.slane %v3452, %v3467
        %v3470 = vunpack.c.l.s4 1966171168
        %v3471 = vunpack.c.0.s8 %v3470
        %v3472 = vlaneseq
        %v3473 = vshrl.u32 %v3472, 7
        %v3474 = vsub.s32 %v3471, %v3473
        %v3475 = vrot.slane %v3453, %v3474
        %v3477 = vunpack.c.l.s4 1966171168
        %v3478 = vunpack.c.0.s8 %v3477
        %v3479 = vlaneseq
        %v3480 = vshrl.u32 %v3479, 7
        %v3481 = vsub.s32 %v3478, %v3480
        %v3482 = vrot.slane %v3454, %v3481
        %v3483 = vcombine.high %v3461, %v3461
        %v3484 = vcombine.high %v3468, %v3468
        %v3485 = vcombine.high %v3475, %v3475
        %v3486 = vcombine.high %v3482, %v3482
        %v3487 = vcombine.high %v2681, %v2681
        %v3489 = vunpack.c.l.s4 1966171168
        %v3490 = vunpack.c.0.s8 %v3489
        %v3491 = vlaneseq
        %v3492 = vshrl.u32 %v3491, 7
        %v3493 = vsub.s32 %v3490, %v3492
        %v3494 = vrot.slane %v2681, %v3493
        %v3496 = vunpack.c.l.s4 1966171168
        %v3497 = vunpack.c.0.s8 %v3496
        %v3498 = vlaneseq
        %v3499 = vshrl.u32 %v3498, 7
        %v3500 = vsub.s32 %v3497, %v3499
        %v3501 = vrot.slane %v3487, %v3500
        %v3502 = vcombine.high %v3494, %v3494
        %v3503 = vcombine.high %v3501, %v3501
        %v3505 = vunpack.c.l.s4 1966171168
        %v3506 = vunpack.c.0.s8 %v3505
        %v3507 = vlaneseq
        %v3508 = vshrl.u32 %v3507, 7
        %v3509 = vsub.s32 %v3506, %v3508
        %v3510 = vrot.slane %v3494, %v3509
        %v3512 = vunpack.c.l.s4 1966171168
        %v3513 = vunpack.c.0.s8 %v3512
        %v3514 = vlaneseq
        %v3515 = vshrl.u32 %v3514, 7
        %v3516 = vsub.s32 %v3513, %v3515
        %v3517 = vrot.slane %v3501, %v3516
        %v3519 = vunpack.c.l.s4 1966171168
        %v3520 = vunpack.c.0.s8 %v3519
        %v3521 = vlaneseq
        %v3522 = vshrl.u32 %v3521, 7
        %v3523 = vsub.s32 %v3520, %v3522
        %v3524 = vrot.slane %v3502, %v3523
        %v3526 = vunpack.c.l.s4 1966171168
        %v3527 = vunpack.c.0.s8 %v3526
        %v3528 = vlaneseq
        %v3529 = vshrl.u32 %v3528, 7
        %v3530 = vsub.s32 %v3527, %v3529
        %v3531 = vrot.slane %v3503, %v3530
        %v3532 = vcombine.high %v3510, %v3510
        %v3533 = vcombine.high %v3517, %v3517
        %v3534 = vcombine.high %v3524, %v3524
        %v3535 = vcombine.high %v3531, %v3531
        %v3673 = vcombine.high %v1668, %v1668
        %v3675 = vunpack.c.l.s4 1966171168
        %v3676 = vunpack.c.0.s8 %v3675
        %v3677 = vlaneseq
        %v3678 = vshrl.u32 %v3677, 7
        %v3679 = vsub.s32 %v3676, %v3678
        %v3680 = vrot.slane %v1668, %v3679
        %v3682 = vunpack.c.l.s4 1966171168
        %v3683 = vunpack.c.0.s8 %v3682
        %v3684 = vlaneseq
        %v3685 = vshrl.u32 %v3684, 7
        %v3686 = vsub.s32 %v3683, %v3685
        %v3687 = vrot.slane %v3673, %v3686
        %v3688 = vcombine.high %v3680, %v3680
        %v3689 = vcombine.high %v3687, %v3687
        %v3691 = vunpack.c.l.s4 1966171168
        %v3692 = vunpack.c.0.s8 %v3691
        %v3693 = vlaneseq
        %v3694 = vshrl.u32 %v3693, 7
        %v3695 = vsub.s32 %v3692, %v3694
        %v3696 = vrot.slane %v3680, %v3695
        %v3698 = vunpack.c.l.s4 1966171168
        %v3699 = vunpack.c.0.s8 %v3698
        %v3700 = vlaneseq
        %v3701 = vshrl.u32 %v3700, 7
        %v3702 = vsub.s32 %v3699, %v3701
        %v3703 = vrot.slane %v3687, %v3702
        %v3705 = vunpack.c.l.s4 1966171168
        %v3706 = vunpack.c.0.s8 %v3705
        %v3707 = vlaneseq
        %v3708 = vshrl.u32 %v3707, 7
        %v3709 = vsub.s32 %v3706, %v3708
        %v3710 = vrot.slane %v3688, %v3709
        %v3712 = vunpack.c.l.s4 1966171168
        %v3713 = vunpack.c.0.s8 %v3712
        %v3714 = vlaneseq
        %v3715 = vshrl.u32 %v3714, 7
        %v3716 = vsub.s32 %v3713, %v3715
        %v3717 = vrot.slane %v3689, %v3716
        %v3718 = vcombine.high %v3696, %v3696
        %v3719 = vcombine.high %v3703, %v3703
        %v3720 = vcombine.high %v3710, %v3710
        %v3721 = vcombine.high %v3717, %v3717
        %v3722 = vlaneseq
        %v3723 = vshrl.u32 %v3722, 7
        %v3724 = vsub.s32 0, %v3723
        %v3725 = vrot.slane %v3696, %v3724
        %v3726 = vlaneseq
        %v3727 = vshrl.u32 %v3726, 7
        %v3728 = vsub.s32 0, %v3727
        %v3729 = vrot.slane %v3710, %v3728
        %v3730 = vlaneseq
        %v3731 = vshrl.u32 %v3730, 7
        %v3732 = vsub.s32 0, %v3731
        %v3733 = vrot.slane %v3718, %v3732
        %v3734 = vlaneseq
        %v3735 = vshrl.u32 %v3734, 7
        %v3736 = vsub.s32 0, %v3735
        %v3737 = vrot.slane %v3720, %v3736
        %v3738 = vlaneseq
        %v3739 = vshrl.u32 %v3738, 7
        %v3740 = vsub.s32 0, %v3739
        %v3741 = vrot.slane %v3703, %v3740
        %v3742 = vlaneseq
        %v3743 = vshrl.u32 %v3742, 7
        %v3744 = vsub.s32 0, %v3743
        %v3745 = vrot.slane %v3717, %v3744
        %v3746 = vlaneseq
        %v3747 = vshrl.u32 %v3746, 7
        %v3748 = vsub.s32 0, %v3747
        %v3749 = vrot.slane %v3719, %v3748
        %v3750 = vlaneseq
        %v3751 = vshrl.u32 %v3750, 7
        %v3752 = vsub.s32 0, %v3751
        %v3753 = vrot.slane %v3721, %v3752
        %v3754 = vcombine.high %v3725, %v3725
        %v3756 = vunpack.c.l.s4 1966171168
        %v3757 = vunpack.c.0.s8 %v3756
        %v3758 = vlaneseq
        %v3759 = vshrl.u32 %v3758, 7
        %v3760 = vsub.s32 %v3757, %v3759
        %v3761 = vrot.slane %v3725, %v3760
        %v3763 = vunpack.c.l.s4 1966171168
        %v3764 = vunpack.c.0.s8 %v3763
        %v3765 = vlaneseq
        %v3766 = vshrl.u32 %v3765, 7
        %v3767 = vsub.s32 %v3764, %v3766
        %v3768 = vrot.slane %v3754, %v3767
        %v3769 = vcombine.high %v3761, %v3761
        %v3770 = vcombine.high %v3768, %v3768
        %v3772 = vunpack.c.l.s4 1966171168
        %v3773 = vunpack.c.0.s8 %v3772
        %v3774 = vlaneseq
        %v3775 = vshrl.u32 %v3774, 7
        %v3776 = vsub.s32 %v3773, %v3775
        %v3777 = vrot.slane %v3761, %v3776
        %v3779 = vunpack.c.l.s4 1966171168
        %v3780 = vunpack.c.0.s8 %v3779
        %v3781 = vlaneseq
        %v3782 = vshrl.u32 %v3781, 7
        %v3783 = vsub.s32 %v3780, %v3782
        %v3784 = vrot.slane %v3768, %v3783
        %v3786 = vunpack.c.l.s4 1966171168
        %v3787 = vunpack.c.0.s8 %v3786
        %v3788 = vlaneseq
        %v3789 = vshrl.u32 %v3788, 7
        %v3790 = vsub.s32 %v3787, %v3789
        %v3791 = vrot.slane %v3769, %v3790
        %v3793 = vunpack.c.l.s4 1966171168
        %v3794 = vunpack.c.0.s8 %v3793
        %v3795 = vlaneseq
        %v3796 = vshrl.u32 %v3795, 7
        %v3797 = vsub.s32 %v3794, %v3796
        %v3798 = vrot.slane %v3770, %v3797
        %v3799 = vcombine.high %v3777, %v3777
        %v3800 = vcombine.high %v3784, %v3784
        %v3801 = vcombine.high %v3791, %v3791
        %v3802 = vcombine.high %v3798, %v3798
        %v3803 = vcombine.high %v3729, %v3729
        %v3805 = vunpack.c.l.s4 1966171168
        %v3806 = vunpack.c.0.s8 %v3805
        %v3807 = vlaneseq
        %v3808 = vshrl.u32 %v3807, 7
        %v3809 = vsub.s32 %v3806, %v3808
        %v3810 = vrot.slane %v3729, %v3809
        %v3812 = vunpack.c.l.s4 1966171168
        %v3813 = vunpack.c.0.s8 %v3812
        %v3814 = vlaneseq
        %v3815 = vshrl.u32 %v3814, 7
        %v3816 = vsub.s32 %v3813, %v3815
        %v3817 = vrot.slane %v3803, %v3816
        %v3818 = vcombine.high %v3810, %v3810
        %v3819 = vcombine.high %v3817, %v3817
        %v3821 = vunpack.c.l.s4 1966171168
        %v3822 = vunpack.c.0.s8 %v3821
        %v3823 = vlaneseq
        %v3824 = vshrl.u32 %v3823, 7
        %v3825 = vsub.s32 %v3822, %v3824
        %v3826 = vrot.slane %v3810, %v3825
        %v3828 = vunpack.c.l.s4 1966171168
        %v3829 = vunpack.c.0.s8 %v3828
        %v3830 = vlaneseq
        %v3831 = vshrl.u32 %v3830, 7
        %v3832 = vsub.s32 %v3829, %v3831
        %v3833 = vrot.slane %v3817, %v3832
        %v3835 = vunpack.c.l.s4 1966171168
        %v3836 = vunpack.c.0.s8 %v3835
        %v3837 = vlaneseq
        %v3838 = vshrl.u32 %v3837, 7
        %v3839 = vsub.s32 %v3836, %v3838
        %v3840 = vrot.slane %v3818, %v3839
        %v3842 = vunpack.c.l.s4 1966171168
        %v3843 = vunpack.c.0.s8 %v3842
        %v3844 = vlaneseq
        %v3845 = vshrl.u32 %v3844, 7
        %v3846 = vsub.s32 %v3843, %v3845
        %v3847 = vrot.slane %v3819, %v3846
        %v3848 = vcombine.high %v3826, %v3826
        %v3849 = vcombine.high %v3833, %v3833
        %v3850 = vcombine.high %v3840, %v3840
        %v3851 = vcombine.high %v3847, %v3847
        %v3852 = vcombine.high %v3733, %v3733
        %v3854 = vunpack.c.l.s4 1966171168
        %v3855 = vunpack.c.0.s8 %v3854
        %v3856 = vlaneseq
        %v3857 = vshrl.u32 %v3856, 7
        %v3858 = vsub.s32 %v3855, %v3857
        %v3859 = vrot.slane %v3733, %v3858
        %v3861 = vunpack.c.l.s4 1966171168
        %v3862 = vunpack.c.0.s8 %v3861
        %v3863 = vlaneseq
        %v3864 = vshrl.u32 %v3863, 7
        %v3865 = vsub.s32 %v3862, %v3864
        %v3866 = vrot.slane %v3852, %v3865
        %v3867 = vcombine.high %v3859, %v3859
        %v3868 = vcombine.high %v3866, %v3866
        %v3870 = vunpack.c.l.s4 1966171168
        %v3871 = vunpack.c.0.s8 %v3870
        %v3872 = vlaneseq
        %v3873 = vshrl.u32 %v3872, 7
        %v3874 = vsub.s32 %v3871, %v3873
        %v3875 = vrot.slane %v3859, %v3874
        %v3877 = vunpack.c.l.s4 1966171168
        %v3878 = vunpack.c.0.s8 %v3877
        %v3879 = vlaneseq
        %v3880 = vshrl.u32 %v3879, 7
        %v3881 = vsub.s32 %v3878, %v3880
        %v3882 = vrot.slane %v3866, %v3881
        %v3884 = vunpack.c.l.s4 1966171168
        %v3885 = vunpack.c.0.s8 %v3884
        %v3886 = vlaneseq
        %v3887 = vshrl.u32 %v3886, 7
        %v3888 = vsub.s32 %v3885, %v3887
        %v3889 = vrot.slane %v3867, %v3888
        %v3891 = vunpack.c.l.s4 1966171168
        %v3892 = vunpack.c.0.s8 %v3891
        %v3893 = vlaneseq
        %v3894 = vshrl.u32 %v3893, 7
        %v3895 = vsub.s32 %v3892, %v3894
        %v3896 = vrot.slane %v3868, %v3895
        %v3897 = vcombine.high %v3875, %v3875
        %v3898 = vcombine.high %v3882, %v3882
        %v3899 = vcombine.high %v3889, %v3889
        %v3900 = vcombine.high %v3896, %v3896
        %v3901 = vcombine.high %v3737, %v3737
        %v3903 = vunpack.c.l.s4 1966171168
        %v3904 = vunpack.c.0.s8 %v3903
        %v3905 = vlaneseq
        %v3906 = vshrl.u32 %v3905, 7
        %v3907 = vsub.s32 %v3904, %v3906
        %v3908 = vrot.slane %v3737, %v3907
        %v3910 = vunpack.c.l.s4 1966171168
        %v3911 = vunpack.c.0.s8 %v3910
        %v3912 = vlaneseq
        %v3913 = vshrl.u32 %v3912, 7
        %v3914 = vsub.s32 %v3911, %v3913
        %v3915 = vrot.slane %v3901, %v3914
        %v3916 = vcombine.high %v3908, %v3908
        %v3917 = vcombine.high %v3915, %v3915
        %v3919 = vunpack.c.l.s4 1966171168
        %v3920 = vunpack.c.0.s8 %v3919
        %v3921 = vlaneseq
        %v3922 = vshrl.u32 %v3921, 7
        %v3923 = vsub.s32 %v3920, %v3922
        %v3924 = vrot.slane %v3908, %v3923
        %v3926 = vunpack.c.l.s4 1966171168
        %v3927 = vunpack.c.0.s8 %v3926
        %v3928 = vlaneseq
        %v3929 = vshrl.u32 %v3928, 7
        %v3930 = vsub.s32 %v3927, %v3929
        %v3931 = vrot.slane %v3915, %v3930
        %v3933 = vunpack.c.l.s4 1966171168
        %v3934 = vunpack.c.0.s8 %v3933
        %v3935 = vlaneseq
        %v3936 = vshrl.u32 %v3935, 7
        %v3937 = vsub.s32 %v3934, %v3936
        %v3938 = vrot.slane %v3916, %v3937
        %v3940 = vunpack.c.l.s4 1966171168
        %v3941 = vunpack.c.0.s8 %v3940
        %v3942 = vlaneseq
        %v3943 = vshrl.u32 %v3942, 7
        %v3944 = vsub.s32 %v3941, %v3943
        %v3945 = vrot.slane %v3917, %v3944
        %v3946 = vcombine.high %v3924, %v3924
        %v3947 = vcombine.high %v3931, %v3931
        %v3948 = vcombine.high %v3938, %v3938
        %v3949 = vcombine.high %v3945, %v3945
        %v3950 = vcombine.high %v3741, %v3741
        %v3952 = vunpack.c.l.s4 1966171168
        %v3953 = vunpack.c.0.s8 %v3952
        %v3954 = vlaneseq
        %v3955 = vshrl.u32 %v3954, 7
        %v3956 = vsub.s32 %v3953, %v3955
        %v3957 = vrot.slane %v3741, %v3956
        %v3959 = vunpack.c.l.s4 1966171168
        %v3960 = vunpack.c.0.s8 %v3959
        %v3961 = vlaneseq
        %v3962 = vshrl.u32 %v3961, 7
        %v3963 = vsub.s32 %v3960, %v3962
        %v3964 = vrot.slane %v3950, %v3963
        %v3965 = vcombine.high %v3957, %v3957
        %v3966 = vcombine.high %v3964, %v3964
        %v3968 = vunpack.c.l.s4 1966171168
        %v3969 = vunpack.c.0.s8 %v3968
        %v3970 = vlaneseq
        %v3971 = vshrl.u32 %v3970, 7
        %v3972 = vsub.s32 %v3969, %v3971
        %v3973 = vrot.slane %v3957, %v3972
        %v3975 = vunpack.c.l.s4 1966171168
        %v3976 = vunpack.c.0.s8 %v3975
        %v3977 = vlaneseq
        %v3978 = vshrl.u32 %v3977, 7
        %v3979 = vsub.s32 %v3976, %v3978
        %v3980 = vrot.slane %v3964, %v3979
        %v3982 = vunpack.c.l.s4 1966171168
        %v3983 = vunpack.c.0.s8 %v3982
        %v3984 = vlaneseq
        %v3985 = vshrl.u32 %v3984, 7
        %v3986 = vsub.s32 %v3983, %v3985
        %v3987 = vrot.slane %v3965, %v3986
        %v3989 = vunpack.c.l.s4 1966171168
        %v3990 = vunpack.c.0.s8 %v3989
        %v3991 = vlaneseq
        %v3992 = vshrl.u32 %v3991, 7
        %v3993 = vsub.s32 %v3990, %v3992
        %v3994 = vrot.slane %v3966, %v3993
        %v3995 = vcombine.high %v3973, %v3973
        %v3996 = vcombine.high %v3980, %v3980
        %v3997 = vcombine.high %v3987, %v3987
        %v3998 = vcombine.high %v3994, %v3994
        %v3999 = vcombine.high %v3745, %v3745
        %v4001 = vunpack.c.l.s4 1966171168
        %v4002 = vunpack.c.0.s8 %v4001
        %v4003 = vlaneseq
        %v4004 = vshrl.u32 %v4003, 7
        %v4005 = vsub.s32 %v4002, %v4004
        %v4006 = vrot.slane %v3745, %v4005
        %v4008 = vunpack.c.l.s4 1966171168
        %v4009 = vunpack.c.0.s8 %v4008
        %v4010 = vlaneseq
        %v4011 = vshrl.u32 %v4010, 7
        %v4012 = vsub.s32 %v4009, %v4011
        %v4013 = vrot.slane %v3999, %v4012
        %v4014 = vcombine.high %v4006, %v4006
        %v4015 = vcombine.high %v4013, %v4013
        %v4017 = vunpack.c.l.s4 1966171168
        %v4018 = vunpack.c.0.s8 %v4017
        %v4019 = vlaneseq
        %v4020 = vshrl.u32 %v4019, 7
        %v4021 = vsub.s32 %v4018, %v4020
        %v4022 = vrot.slane %v4006, %v4021
        %v4024 = vunpack.c.l.s4 1966171168
        %v4025 = vunpack.c.0.s8 %v4024
        %v4026 = vlaneseq
        %v4027 = vshrl.u32 %v4026, 7
        %v4028 = vsub.s32 %v4025, %v4027
        %v4029 = vrot.slane %v4013, %v4028
        %v4031 = vunpack.c.l.s4 1966171168
        %v4032 = vunpack.c.0.s8 %v4031
        %v4033 = vlaneseq
        %v4034 = vshrl.u32 %v4033, 7
        %v4035 = vsub.s32 %v4032, %v4034
        %v4036 = vrot.slane %v4014, %v4035
        %v4038 = vunpack.c.l.s4 1966171168
        %v4039 = vunpack.c.0.s8 %v4038
        %v4040 = vlaneseq
        %v4041 = vshrl.u32 %v4040, 7
        %v4042 = vsub.s32 %v4039, %v4041
        %v4043 = vrot.slane %v4015, %v4042
        %v4044 = vcombine.high %v4022, %v4022
        %v4045 = vcombine.high %v4029, %v4029
        %v4046 = vcombine.high %v4036, %v4036
        %v4047 = vcombine.high %v4043, %v4043
        %v4048 = vcombine.high %v3749, %v3749
        %v4050 = vunpack.c.l.s4 1966171168
        %v4051 = vunpack.c.0.s8 %v4050
        %v4052 = vlaneseq
        %v4053 = vshrl.u32 %v4052, 7
        %v4054 = vsub.s32 %v4051, %v4053
        %v4055 = vrot.slane %v3749, %v4054
        %v4057 = vunpack.c.l.s4 1966171168
        %v4058 = vunpack.c.0.s8 %v4057
        %v4059 = vlaneseq
        %v4060 = vshrl.u32 %v4059, 7
        %v4061 = vsub.s32 %v4058, %v4060
        %v4062 = vrot.slane %v4048, %v4061
        %v4063 = vcombine.high %v4055, %v4055
        %v4064 = vcombine.high %v4062, %v4062
        %v4066 = vunpack.c.l.s4 1966171168
        %v4067 = vunpack.c.0.s8 %v4066
        %v4068 = vlaneseq
        %v4069 = vshrl.u32 %v4068, 7
        %v4070 = vsub.s32 %v4067, %v4069
        %v4071 = vrot.slane %v4055, %v4070
        %v4073 = vunpack.c.l.s4 1966171168
        %v4074 = vunpack.c.0.s8 %v4073
        %v4075 = vlaneseq
        %v4076 = vshrl.u32 %v4075, 7
        %v4077 = vsub.s32 %v4074, %v4076
        %v4078 = vrot.slane %v4062, %v4077
        %v4080 = vunpack.c.l.s4 1966171168
        %v4081 = vunpack.c.0.s8 %v4080
        %v4082 = vlaneseq
        %v4083 = vshrl.u32 %v4082, 7
        %v4084 = vsub.s32 %v4081, %v4083
        %v4085 = vrot.slane %v4063, %v4084
        %v4087 = vunpack.c.l.s4 1966171168
        %v4088 = vunpack.c.0.s8 %v4087
        %v4089 = vlaneseq
        %v4090 = vshrl.u32 %v4089, 7
        %v4091 = vsub.s32 %v4088, %v4090
        %v4092 = vrot.slane %v4064, %v4091
        %v4093 = vcombine.high %v4071, %v4071
        %v4094 = vcombine.high %v4078, %v4078
        %v4095 = vcombine.high %v4085, %v4085
        %v4096 = vcombine.high %v4092, %v4092
        %v4097 = vcombine.high %v3753, %v3753
        %v4099 = vunpack.c.l.s4 1966171168
        %v4100 = vunpack.c.0.s8 %v4099
        %v4101 = vlaneseq
        %v4102 = vshrl.u32 %v4101, 7
        %v4103 = vsub.s32 %v4100, %v4102
        %v4104 = vrot.slane %v3753, %v4103
        %v4106 = vunpack.c.l.s4 1966171168
        %v4107 = vunpack.c.0.s8 %v4106
        %v4108 = vlaneseq
        %v4109 = vshrl.u32 %v4108, 7
        %v4110 = vsub.s32 %v4107, %v4109
        %v4111 = vrot.slane %v4097, %v4110
        %v4112 = vcombine.high %v4104, %v4104
        %v4113 = vcombine.high %v4111, %v4111
        %v4115 = vunpack.c.l.s4 1966171168
        %v4116 = vunpack.c.0.s8 %v4115
        %v4117 = vlaneseq
        %v4118 = vshrl.u32 %v4117, 7
        %v4119 = vsub.s32 %v4116, %v4118
        %v4120 = vrot.slane %v4104, %v4119
        %v4122 = vunpack.c.l.s4 1966171168
        %v4123 = vunpack.c.0.s8 %v4122
        %v4124 = vlaneseq
        %v4125 = vshrl.u32 %v4124, 7
        %v4126 = vsub.s32 %v4123, %v4125
        %v4127 = vrot.slane %v4111, %v4126
        %v4129 = vunpack.c.l.s4 1966171168
        %v4130 = vunpack.c.0.s8 %v4129
        %v4131 = vlaneseq
        %v4132 = vshrl.u32 %v4131, 7
        %v4133 = vsub.s32 %v4130, %v4132
        %v4134 = vrot.slane %v4112, %v4133
        %v4136 = vunpack.c.l.s4 1966171168
        %v4137 = vunpack.c.0.s8 %v4136
        %v4138 = vlaneseq
        %v4139 = vshrl.u32 %v4138, 7
        %v4140 = vsub.s32 %v4137, %v4139
        %v4141 = vrot.slane %v4113, %v4140
        %v4142 = vcombine.high %v4120, %v4120
        %v4143 = vcombine.high %v4127, %v4127
        %v4144 = vcombine.high %v4134, %v4134
        %v4145 = vcombine.high %v4141, %v4141
        %v4210 = vmul.f32 %v2726, %v3777
        %v4211 = vmul.f32 %v2740, %v3791
        %v4212 = vmul.f32 %v2748, %v3799
        %v4213 = vmul.f32 %v2750, %v3801
        %v4214 = vmul.f32 %v2733, %v3784
        %v4215 = vmul.f32 %v2747, %v3798
        %v4216 = vmul.f32 %v2749, %v3800
        %v4217 = vmul.f32 %v2751, %v3802
        %v4218 = vmul.f32 %v2775, %v3777
        %v4219 = vmul.f32 %v2789, %v3791
        %v4220 = vmul.f32 %v2797, %v3799
        %v4221 = vmul.f32 %v2799, %v3801
        %v4222 = vmul.f32 %v2782, %v3784
        %v4223 = vmul.f32 %v2796, %v3798
        %v4224 = vmul.f32 %v2798, %v3800
        %v4225 = vmul.f32 %v2800, %v3802
        %v4226 = vmul.f32 %v2824, %v3777
        %v4227 = vmul.f32 %v2838, %v3826
        %v4228 = vmul.f32 %v2846, %v3840
        %v4229 = vmul.f32 %v2848, %v3848
        %v4230 = vmul.f32 %v2831, %v3850
        %v4231 = vmul.f32 %v2845, %v3833
        %v4232 = vmul.f32 %v2847, %v3847
        %v4233 = vmul.f32 %v2849, %v3849
        %v4234 = vmul.f32 %v2873, %v3851
        %v4235 = vmul.f32 %v2887, %v3826
        %v4236 = vmul.f32 %v2895, %v3840
        %v4237 = vmul.f32 %v2897, %v3848
        %v4238 = vmul.f32 %v2880, %v3850
        %v4239 = vmul.f32 %v2894, %v3833
        %v4240 = vmul.f32 %v2896, %v3847
        %v4241 = vmul.f32 %v2898, %v3849
        %v4242 = vmul.f32 %v2922, %v3851
        %v4243 = vmul.f32 %v2936, %v3826
        %v4244 = vmul.f32 %v2944, %v3875
        %v4245 = vmul.f32 %v2946, %v3889
        %v4246 = vmul.f32 %v2929, %v3897
        %v4247 = vmul.f32 %v2943, %v3899
        %v4248 = vmul.f32 %v2945, %v3882
        %v4249 = vmul.f32 %v2947, %v3896
        %v4250 = vmul.f32 %v2971, %v3898
        %v4251 = vmul.f32 %v2985, %v3900
        %v4252 = vmul.f32 %v2993, %v3875
        %v4253 = vmul.f32 %v2995, %v3889
        %v4254 = vmul.f32 %v2978, %v3897
        %v4255 = vmul.f32 %v2992, %v3899
        %v4256 = vmul.f32 %v2994, %v3882
        %v4257 = vmul.f32 %v2996, %v3896
        %v4258 = vmul.f32 %v3020, %v3898
        %v4259 = vmul.f32 %v3034, %v3900
        %v4260 = vmul.f32 %v3042, %v3875
        %v4261 = vmul.f32 %v3044, %v3924
        %v4262 = vmul.f32 %v3027, %v3938
        %v4263 = vmul.f32 %v3041, %v3946
        %v4264 = vmul.f32 %v3043, %v3948
        %v4265 = vmul.f32 %v3045, %v3931
        %v4266 = vmul.f32 %v3069, %v3945
        %v4267 = vmul.f32 %v3083, %v3947
        %v4268 = vmul.f32 %v3091, %v3949
        %v4269 = vmul.f32 %v3093, %v3924
        %v4270 = vmul.f32 %v3076, %v3938
        %v4271 = vmul.f32 %v3090, %v3946
        %v4272 = vmul.f32 %v3092, %v3948
        %v4273 = vmul.f32 %v3094, %v3931
        %v4274 = vmul.f32 %v3118, %v3945
        %v4275 = vmul.f32 %v3132, %v3947
        %v4276 = vmul.f32 %v3140, %v3949
        %v4277 = vmul.f32 %v3142, %v3924
        %v4278 = vmul.f32 %v3125, %v3973
        %v4279 = vmul.f32 %v3139, %v3987
        %v4280 = vmul.f32 %v3141, %v3995
        %v4281 = vmul.f32 %v3143, %v3997
        %v4282 = vmul.f32 %v3167, %v3980
        %v4283 = vmul.f32 %v3181, %v3994
        %v4284 = vmul.f32 %v3189, %v3996
        %v4285 = vmul.f32 %v3191, %v3998
        %v4286 = vmul.f32 %v3174, %v3973
        %v4287 = vmul.f32 %v3188, %v3987
        %v4288 = vmul.f32 %v3190, %v3995
        %v4289 = vmul.f32 %v3192, %v3997
        %v4290 = vmul.f32 %v3216, %v3980
        %v4291 = vmul.f32 %v3230, %v3994
        %v4292 = vmul.f32 %v3238, %v3996
        %v4293 = vmul.f32 %v3240, %v3998
        %v4294 = vmul.f32 %v3223, %v3973
        %v4295 = vmul.f32 %v3237, %v4022
        %v4296 = vmul.f32 %v3239, %v4036
        %v4297 = vmul.f32 %v3241, %v4044
        %v4298 = vmul.f32 %v3265, %v4046
        %v4299 = vmul.f32 %v3279, %v4029
        %v4300 = vmul.f32 %v3287, %v4043
        %v4301 = vmul.f32 %v3289, %v4045
        %v4302 = vmul.f32 %v3272, %v4047
        %v4303 = vmul.f32 %v3286, %v4022
        %v4304 = vmul.f32 %v3288, %v4036
        %v4305 = vmul.f32 %v3290, %v4044
        %v4306 = vmul.f32 %v3314, %v4046
        %v4307 = vmul.f32 %v3328, %v4029
        %v4308 = vmul.f32 %v3336, %v4043
        %v4309 = vmul.f32 %v3338, %v4045
        %v4310 = vmul.f32 %v3321, %v4047
        %v4311 = vmul.f32 %v3335, %v4022
        %v4312 = vmul.f32 %v3337, %v4071
        %v4313 = vmul.f32 %v3339, %v4085
        %v4314 = vmul.f32 %v3363, %v4093
        %v4315 = vmul.f32 %v3377, %v4095
        %v4316 = vmul.f32 %v3385, %v4078
        %v4317 = vmul.f32 %v3387, %v4092
        %v4318 = vmul.f32 %v3370, %v4094
        %v4319 = vmul.f32 %v3384, %v4096
        %v4320 = vmul.f32 %v3386, %v4071
        %v4321 = vmul.f32 %v3388, %v4085
        %v4322 = vmul.f32 %v3412, %v4093
        %v4323 = vmul.f32 %v3426, %v4095
        %v4324 = vmul.f32 %v3434, %v4078
        %v4325 = vmul.f32 %v3436, %v4092
        %v4326 = vmul.f32 %v3419, %v4094
        %v4327 = vmul.f32 %v3433, %v4096
        %v4328 = vmul.f32 %v3435, %v4071
        %v4329 = vmul.f32 %v3437, %v4120
        %v4330 = vmul.f32 %v3461, %v4134
        %v4331 = vmul.f32 %v3475, %v4142
        %v4332 = vmul.f32 %v3483, %v4144
        %v4333 = vmul.f32 %v3485, %v4127
        %v4334 = vmul.f32 %v3468, %v4141
        %v4335 = vmul.f32 %v3482, %v4143
        %v4336 = vmul.f32 %v3484, %v4145
        %v4337 = vmul.f32 %v3486, %v4120
        %v4338 = vmul.f32 %v3510, %v4134
        %v4339 = vmul.f32 %v3524, %v4142
        %v4340 = vmul.f32 %v3532, %v4144
        %v4341 = vmul.f32 %v3534, %v4127
        %v4342 = vmul.f32 %v3517, %v4141
        %v4343 = vmul.f32 %v3531, %v4143
        %v4344 = vmul.f32 %v3533, %v4145
        %v4345 = vmul.f32 %v3535, %v4120
        %v4482 = vcombine.low %v4210, %v4211
        %v4483 = vcombine.low %v4212, %v4213
        %v4484 = vcombine.low %v4214, %v4215
        %v4485 = vcombine.low %v4216, %v4217
        %v4487 = vunpack.c.l.s4 1966171168
        %v4488 = vunpack.c.0.s8 %v4487
        %v4489 = vlaneseq
        %v4490 = vshrl.u32 %v4489, 7
        %v4491 = vsub.s32 %v4488, %v4490
        %v4492 = vrot.slane %v4482, %v4491
        %v4494 = vunpack.c.l.s4 1966171168
        %v4495 = vunpack.c.0.s8 %v4494
        %v4496 = vlaneseq
        %v4497 = vshrl.u32 %v4496, 7
        %v4498 = vsub.s32 %v4495, %v4497
        %v4499 = vrot.slane %v4483, %v4498
        %v4501 = vunpack.c.l.s4 1966171168
        %v4502 = vunpack.c.0.s8 %v4501
        %v4503 = vlaneseq
        %v4504 = vshrl.u32 %v4503, 7
        %v4505 = vsub.s32 %v4502, %v4504
        %v4506 = vrot.slane %v4484, %v4505
        %v4508 = vunpack.c.l.s4 1966171168
        %v4509 = vunpack.c.0.s8 %v4508
        %v4510 = vlaneseq
        %v4511 = vshrl.u32 %v4510, 7
        %v4512 = vsub.s32 %v4509, %v4511
        %v4513 = vrot.slane %v4485, %v4512
        %v4514 = vcombine.low %v4492, %v4499
        %v4515 = vcombine.low %v4506, %v4513
        %v4517 = vunpack.c.l.s4 1966171168
        %v4518 = vunpack.c.0.s8 %v4517
        %v4519 = vlaneseq
        %v4520 = vshrl.u32 %v4519, 7
        %v4521 = vsub.s32 %v4518, %v4520
        %v4522 = vrot.slane %v4514, %v4521
        %v4524 = vunpack.c.l.s4 1966171168
        %v4525 = vunpack.c.0.s8 %v4524
        %v4526 = vlaneseq
        %v4527 = vshrl.u32 %v4526, 7
        %v4528 = vsub.s32 %v4525, %v4527
        %v4529 = vrot.slane %v4515, %v4528
        %v4530 = vcombine.low %v4522, %v4529
        %v4531 = vcombine.low %v4218, %v4219
        %v4532 = vcombine.low %v4220, %v4221
        %v4533 = vcombine.low %v4222, %v4223
        %v4534 = vcombine.low %v4224, %v4225
        %v4536 = vunpack.c.l.s4 1966171168
        %v4537 = vunpack.c.0.s8 %v4536
        %v4538 = vlaneseq
        %v4539 = vshrl.u32 %v4538, 7
        %v4540 = vsub.s32 %v4537, %v4539
        %v4541 = vrot.slane %v4531, %v4540
        %v4543 = vunpack.c.l.s4 1966171168
        %v4544 = vunpack.c.0.s8 %v4543
        %v4545 = vlaneseq
        %v4546 = vshrl.u32 %v4545, 7
        %v4547 = vsub.s32 %v4544, %v4546
        %v4548 = vrot.slane %v4532, %v4547
        %v4550 = vunpack.c.l.s4 1966171168
        %v4551 = vunpack.c.0.s8 %v4550
        %v4552 = vlaneseq
        %v4553 = vshrl.u32 %v4552, 7
        %v4554 = vsub.s32 %v4551, %v4553
        %v4555 = vrot.slane %v4533, %v4554
        %v4557 = vunpack.c.l.s4 1966171168
        %v4558 = vunpack.c.0.s8 %v4557
        %v4559 = vlaneseq
        %v4560 = vshrl.u32 %v4559, 7
        %v4561 = vsub.s32 %v4558, %v4560
        %v4562 = vrot.slane %v4534, %v4561
        %v4563 = vcombine.low %v4541, %v4548
        %v4564 = vcombine.low %v4555, %v4562
        %v4566 = vunpack.c.l.s4 1966171168
        %v4567 = vunpack.c.0.s8 %v4566
        %v4568 = vlaneseq
        %v4569 = vshrl.u32 %v4568, 7
        %v4570 = vsub.s32 %v4567, %v4569
        %v4571 = vrot.slane %v4563, %v4570
        %v4573 = vunpack.c.l.s4 1966171168
        %v4574 = vunpack.c.0.s8 %v4573
        %v4575 = vlaneseq
        %v4576 = vshrl.u32 %v4575, 7
        %v4577 = vsub.s32 %v4574, %v4576
        %v4578 = vrot.slane %v4564, %v4577
        %v4579 = vcombine.low %v4571, %v4578
        %v4580 = vcombine.low %v4226, %v4227
        %v4581 = vcombine.low %v4228, %v4229
        %v4582 = vcombine.low %v4230, %v4231
        %v4583 = vcombine.low %v4232, %v4233
        %v4585 = vunpack.c.l.s4 1966171168
        %v4586 = vunpack.c.0.s8 %v4585
        %v4587 = vlaneseq
        %v4588 = vshrl.u32 %v4587, 7
        %v4589 = vsub.s32 %v4586, %v4588
        %v4590 = vrot.slane %v4580, %v4589
        %v4592 = vunpack.c.l.s4 1966171168
        %v4593 = vunpack.c.0.s8 %v4592
        %v4594 = vlaneseq
        %v4595 = vshrl.u32 %v4594, 7
        %v4596 = vsub.s32 %v4593, %v4595
        %v4597 = vrot.slane %v4581, %v4596
        %v4599 = vunpack.c.l.s4 1966171168
        %v4600 = vunpack.c.0.s8 %v4599
        %v4601 = vlaneseq
        %v4602 = vshrl.u32 %v4601, 7
        %v4603 = vsub.s32 %v4600, %v4602
        %v4604 = vrot.slane %v4582, %v4603
        %v4606 = vunpack.c.l.s4 1966171168
        %v4607 = vunpack.c.0.s8 %v4606
        %v4608 = vlaneseq
        %v4609 = vshrl.u32 %v4608, 7
        %v4610 = vsub.s32 %v4607, %v4609
        %v4611 = vrot.slane %v4583, %v4610
        %v4612 = vcombine.low %v4590, %v4597
        %v4613 = vcombine.low %v4604, %v4611
        %v4615 = vunpack.c.l.s4 1966171168
        %v4616 = vunpack.c.0.s8 %v4615
        %v4617 = vlaneseq
        %v4618 = vshrl.u32 %v4617, 7
        %v4619 = vsub.s32 %v4616, %v4618
        %v4620 = vrot.slane %v4612, %v4619
        %v4622 = vunpack.c.l.s4 1966171168
        %v4623 = vunpack.c.0.s8 %v4622
        %v4624 = vlaneseq
        %v4625 = vshrl.u32 %v4624, 7
        %v4626 = vsub.s32 %v4623, %v4625
        %v4627 = vrot.slane %v4613, %v4626
        %v4628 = vcombine.low %v4620, %v4627
        %v4629 = vcombine.low %v4234, %v4235
        %v4630 = vcombine.low %v4236, %v4237
        %v4631 = vcombine.low %v4238, %v4239
        %v4632 = vcombine.low %v4240, %v4241
        %v4634 = vunpack.c.l.s4 1966171168
        %v4635 = vunpack.c.0.s8 %v4634
        %v4636 = vlaneseq
        %v4637 = vshrl.u32 %v4636, 7
        %v4638 = vsub.s32 %v4635, %v4637
        %v4639 = vrot.slane %v4629, %v4638
        %v4641 = vunpack.c.l.s4 1966171168
        %v4642 = vunpack.c.0.s8 %v4641
        %v4643 = vlaneseq
        %v4644 = vshrl.u32 %v4643, 7
        %v4645 = vsub.s32 %v4642, %v4644
        %v4646 = vrot.slane %v4630, %v4645
        %v4648 = vunpack.c.l.s4 1966171168
        %v4649 = vunpack.c.0.s8 %v4648
        %v4650 = vlaneseq
        %v4651 = vshrl.u32 %v4650, 7
        %v4652 = vsub.s32 %v4649, %v4651
        %v4653 = vrot.slane %v4631, %v4652
        %v4655 = vunpack.c.l.s4 1966171168
        %v4656 = vunpack.c.0.s8 %v4655
        %v4657 = vlaneseq
        %v4658 = vshrl.u32 %v4657, 7
        %v4659 = vsub.s32 %v4656, %v4658
        %v4660 = vrot.slane %v4632, %v4659
        %v4661 = vcombine.low %v4639, %v4646
        %v4662 = vcombine.low %v4653, %v4660
        %v4664 = vunpack.c.l.s4 1966171168
        %v4665 = vunpack.c.0.s8 %v4664
        %v4666 = vlaneseq
        %v4667 = vshrl.u32 %v4666, 7
        %v4668 = vsub.s32 %v4665, %v4667
        %v4669 = vrot.slane %v4661, %v4668
        %v4671 = vunpack.c.l.s4 1966171168
        %v4672 = vunpack.c.0.s8 %v4671
        %v4673 = vlaneseq
        %v4674 = vshrl.u32 %v4673, 7
        %v4675 = vsub.s32 %v4672, %v4674
        %v4676 = vrot.slane %v4662, %v4675
        %v4677 = vcombine.low %v4669, %v4676
        %v4678 = vcombine.low %v4242, %v4243
        %v4679 = vcombine.low %v4244, %v4245
        %v4680 = vcombine.low %v4246, %v4247
        %v4681 = vcombine.low %v4248, %v4249
        %v4683 = vunpack.c.l.s4 1966171168
        %v4684 = vunpack.c.0.s8 %v4683
        %v4685 = vlaneseq
        %v4686 = vshrl.u32 %v4685, 7
        %v4687 = vsub.s32 %v4684, %v4686
        %v4688 = vrot.slane %v4678, %v4687
        %v4690 = vunpack.c.l.s4 1966171168
        %v4691 = vunpack.c.0.s8 %v4690
        %v4692 = vlaneseq
        %v4693 = vshrl.u32 %v4692, 7
        %v4694 = vsub.s32 %v4691, %v4693
        %v4695 = vrot.slane %v4679, %v4694
        %v4697 = vunpack.c.l.s4 1966171168
        %v4698 = vunpack.c.0.s8 %v4697
        %v4699 = vlaneseq
        %v4700 = vshrl.u32 %v4699, 7
        %v4701 = vsub.s32 %v4698, %v4700
        %v4702 = vrot.slane %v4680, %v4701
        %v4704 = vunpack.c.l.s4 1966171168
        %v4705 = vunpack.c.0.s8 %v4704
        %v4706 = vlaneseq
        %v4707 = vshrl.u32 %v4706, 7
        %v4708 = vsub.s32 %v4705, %v4707
        %v4709 = vrot.slane %v4681, %v4708
        %v4710 = vcombine.low %v4688, %v4695
        %v4711 = vcombine.low %v4702, %v4709
        %v4713 = vunpack.c.l.s4 1966171168
        %v4714 = vunpack.c.0.s8 %v4713
        %v4715 = vlaneseq
        %v4716 = vshrl.u32 %v4715, 7
        %v4717 = vsub.s32 %v4714, %v4716
        %v4718 = vrot.slane %v4710, %v4717
        %v4720 = vunpack.c.l.s4 1966171168
        %v4721 = vunpack.c.0.s8 %v4720
        %v4722 = vlaneseq
        %v4723 = vshrl.u32 %v4722, 7
        %v4724 = vsub.s32 %v4721, %v4723
        %v4725 = vrot.slane %v4711, %v4724
        %v4726 = vcombine.low %v4718, %v4725
        %v4727 = vcombine.low %v4250, %v4251
        %v4728 = vcombine.low %v4252, %v4253
        %v4729 = vcombine.low %v4254, %v4255
        %v4730 = vcombine.low %v4256, %v4257
        %v4732 = vunpack.c.l.s4 1966171168
        %v4733 = vunpack.c.0.s8 %v4732
        %v4734 = vlaneseq
        %v4735 = vshrl.u32 %v4734, 7
        %v4736 = vsub.s32 %v4733, %v4735
        %v4737 = vrot.slane %v4727, %v4736
        %v4739 = vunpack.c.l.s4 1966171168
        %v4740 = vunpack.c.0.s8 %v4739
        %v4741 = vlaneseq
        %v4742 = vshrl.u32 %v4741, 7
        %v4743 = vsub.s32 %v4740, %v4742
        %v4744 = vrot.slane %v4728, %v4743
        %v4746 = vunpack.c.l.s4 1966171168
        %v4747 = vunpack.c.0.s8 %v4746
        %v4748 = vlaneseq
        %v4749 = vshrl.u32 %v4748, 7
        %v4750 = vsub.s32 %v4747, %v4749
        %v4751 = vrot.slane %v4729, %v4750
        %v4753 = vunpack.c.l.s4 1966171168
        %v4754 = vunpack.c.0.s8 %v4753
        %v4755 = vlaneseq
        %v4756 = vshrl.u32 %v4755, 7
        %v4757 = vsub.s32 %v4754, %v4756
        %v4758 = vrot.slane %v4730, %v4757
        %v4759 = vcombine.low %v4737, %v4744
        %v4760 = vcombine.low %v4751, %v4758
        %v4762 = vunpack.c.l.s4 1966171168
        %v4763 = vunpack.c.0.s8 %v4762
        %v4764 = vlaneseq
        %v4765 = vshrl.u32 %v4764, 7
        %v4766 = vsub.s32 %v4763, %v4765
        %v4767 = vrot.slane %v4759, %v4766
        %v4769 = vunpack.c.l.s4 1966171168
        %v4770 = vunpack.c.0.s8 %v4769
        %v4771 = vlaneseq
        %v4772 = vshrl.u32 %v4771, 7
        %v4773 = vsub.s32 %v4770, %v4772
        %v4774 = vrot.slane %v4760, %v4773
        %v4775 = vcombine.low %v4767, %v4774
        %v4776 = vcombine.low %v4258, %v4259
        %v4777 = vcombine.low %v4260, %v4261
        %v4778 = vcombine.low %v4262, %v4263
        %v4779 = vcombine.low %v4264, %v4265
        %v4781 = vunpack.c.l.s4 1966171168
        %v4782 = vunpack.c.0.s8 %v4781
        %v4783 = vlaneseq
        %v4784 = vshrl.u32 %v4783, 7
        %v4785 = vsub.s32 %v4782, %v4784
        %v4786 = vrot.slane %v4776, %v4785
        %v4788 = vunpack.c.l.s4 1966171168
        %v4789 = vunpack.c.0.s8 %v4788
        %v4790 = vlaneseq
        %v4791 = vshrl.u32 %v4790, 7
        %v4792 = vsub.s32 %v4789, %v4791
        %v4793 = vrot.slane %v4777, %v4792
        %v4795 = vunpack.c.l.s4 1966171168
        %v4796 = vunpack.c.0.s8 %v4795
        %v4797 = vlaneseq
        %v4798 = vshrl.u32 %v4797, 7
        %v4799 = vsub.s32 %v4796, %v4798
        %v4800 = vrot.slane %v4778, %v4799
        %v4802 = vunpack.c.l.s4 1966171168
        %v4803 = vunpack.c.0.s8 %v4802
        %v4804 = vlaneseq
        %v4805 = vshrl.u32 %v4804, 7
        %v4806 = vsub.s32 %v4803, %v4805
        %v4807 = vrot.slane %v4779, %v4806
        %v4808 = vcombine.low %v4786, %v4793
        %v4809 = vcombine.low %v4800, %v4807
        %v4811 = vunpack.c.l.s4 1966171168
        %v4812 = vunpack.c.0.s8 %v4811
        %v4813 = vlaneseq
        %v4814 = vshrl.u32 %v4813, 7
        %v4815 = vsub.s32 %v4812, %v4814
        %v4816 = vrot.slane %v4808, %v4815
        %v4818 = vunpack.c.l.s4 1966171168
        %v4819 = vunpack.c.0.s8 %v4818
        %v4820 = vlaneseq
        %v4821 = vshrl.u32 %v4820, 7
        %v4822 = vsub.s32 %v4819, %v4821
        %v4823 = vrot.slane %v4809, %v4822
        %v4824 = vcombine.low %v4816, %v4823
        %v4825 = vcombine.low %v4266, %v4267
        %v4826 = vcombine.low %v4268, %v4269
        %v4827 = vcombine.low %v4270, %v4271
        %v4828 = vcombine.low %v4272, %v4273
        %v4830 = vunpack.c.l.s4 1966171168
        %v4831 = vunpack.c.0.s8 %v4830
        %v4832 = vlaneseq
        %v4833 = vshrl.u32 %v4832, 7
        %v4834 = vsub.s32 %v4831, %v4833
        %v4835 = vrot.slane %v4825, %v4834
        %v4837 = vunpack.c.l.s4 1966171168
        %v4838 = vunpack.c.0.s8 %v4837
        %v4839 = vlaneseq
        %v4840 = vshrl.u32 %v4839, 7
        %v4841 = vsub.s32 %v4838, %v4840
        %v4842 = vrot.slane %v4826, %v4841
        %v4844 = vunpack.c.l.s4 1966171168
        %v4845 = vunpack.c.0.s8 %v4844
        %v4846 = vlaneseq
        %v4847 = vshrl.u32 %v4846, 7
        %v4848 = vsub.s32 %v4845, %v4847
        %v4849 = vrot.slane %v4827, %v4848
        %v4851 = vunpack.c.l.s4 1966171168
        %v4852 = vunpack.c.0.s8 %v4851
        %v4853 = vlaneseq
        %v4854 = vshrl.u32 %v4853, 7
        %v4855 = vsub.s32 %v4852, %v4854
        %v4856 = vrot.slane %v4828, %v4855
        %v4857 = vcombine.low %v4835, %v4842
        %v4858 = vcombine.low %v4849, %v4856
        %v4860 = vunpack.c.l.s4 1966171168
        %v4861 = vunpack.c.0.s8 %v4860
        %v4862 = vlaneseq
        %v4863 = vshrl.u32 %v4862, 7
        %v4864 = vsub.s32 %v4861, %v4863
        %v4865 = vrot.slane %v4857, %v4864
        %v4867 = vunpack.c.l.s4 1966171168
        %v4868 = vunpack.c.0.s8 %v4867
        %v4869 = vlaneseq
        %v4870 = vshrl.u32 %v4869, 7
        %v4871 = vsub.s32 %v4868, %v4870
        %v4872 = vrot.slane %v4858, %v4871
        %v4873 = vcombine.low %v4865, %v4872
        %v4874 = vcombine.low %v4274, %v4275
        %v4875 = vcombine.low %v4276, %v4277
        %v4876 = vcombine.low %v4278, %v4279
        %v4877 = vcombine.low %v4280, %v4281
        %v4879 = vunpack.c.l.s4 1966171168
        %v4880 = vunpack.c.0.s8 %v4879
        %v4881 = vlaneseq
        %v4882 = vshrl.u32 %v4881, 7
        %v4883 = vsub.s32 %v4880, %v4882
        %v4884 = vrot.slane %v4874, %v4883
        %v4886 = vunpack.c.l.s4 1966171168
        %v4887 = vunpack.c.0.s8 %v4886
        %v4888 = vlaneseq
        %v4889 = vshrl.u32 %v4888, 7
        %v4890 = vsub.s32 %v4887, %v4889
        %v4891 = vrot.slane %v4875, %v4890
        %v4893 = vunpack.c.l.s4 1966171168
        %v4894 = vunpack.c.0.s8 %v4893
        %v4895 = vlaneseq
        %v4896 = vshrl.u32 %v4895, 7
        %v4897 = vsub.s32 %v4894, %v4896
        %v4898 = vrot.slane %v4876, %v4897
        %v4900 = vunpack.c.l.s4 1966171168
        %v4901 = vunpack.c.0.s8 %v4900
        %v4902 = vlaneseq
        %v4903 = vshrl.u32 %v4902, 7
        %v4904 = vsub.s32 %v4901, %v4903
        %v4905 = vrot.slane %v4877, %v4904
        %v4906 = vcombine.low %v4884, %v4891
        %v4907 = vcombine.low %v4898, %v4905
        %v4909 = vunpack.c.l.s4 1966171168
        %v4910 = vunpack.c.0.s8 %v4909
        %v4911 = vlaneseq
        %v4912 = vshrl.u32 %v4911, 7
        %v4913 = vsub.s32 %v4910, %v4912
        %v4914 = vrot.slane %v4906, %v4913
        %v4916 = vunpack.c.l.s4 1966171168
        %v4917 = vunpack.c.0.s8 %v4916
        %v4918 = vlaneseq
        %v4919 = vshrl.u32 %v4918, 7
        %v4920 = vsub.s32 %v4917, %v4919
        %v4921 = vrot.slane %v4907, %v4920
        %v4922 = vcombine.low %v4914, %v4921
        %v4923 = vcombine.low %v4282, %v4283
        %v4924 = vcombine.low %v4284, %v4285
        %v4925 = vcombine.low %v4286, %v4287
        %v4926 = vcombine.low %v4288, %v4289
        %v4928 = vunpack.c.l.s4 1966171168
        %v4929 = vunpack.c.0.s8 %v4928
        %v4930 = vlaneseq
        %v4931 = vshrl.u32 %v4930, 7
        %v4932 = vsub.s32 %v4929, %v4931
        %v4933 = vrot.slane %v4923, %v4932
        %v4935 = vunpack.c.l.s4 1966171168
        %v4936 = vunpack.c.0.s8 %v4935
        %v4937 = vlaneseq
        %v4938 = vshrl.u32 %v4937, 7
        %v4939 = vsub.s32 %v4936, %v4938
        %v4940 = vrot.slane %v4924, %v4939
        %v4942 = vunpack.c.l.s4 1966171168
        %v4943 = vunpack.c.0.s8 %v4942
        %v4944 = vlaneseq
        %v4945 = vshrl.u32 %v4944, 7
        %v4946 = vsub.s32 %v4943, %v4945
        %v4947 = vrot.slane %v4925, %v4946
        %v4949 = vunpack.c.l.s4 1966171168
        %v4950 = vunpack.c.0.s8 %v4949
        %v4951 = vlaneseq
        %v4952 = vshrl.u32 %v4951, 7
        %v4953 = vsub.s32 %v4950, %v4952
        %v4954 = vrot.slane %v4926, %v4953
        %v4955 = vcombine.low %v4933, %v4940
        %v4956 = vcombine.low %v4947, %v4954
        %v4958 = vunpack.c.l.s4 1966171168
        %v4959 = vunpack.c.0.s8 %v4958
        %v4960 = vlaneseq
        %v4961 = vshrl.u32 %v4960, 7
        %v4962 = vsub.s32 %v4959, %v4961
        %v4963 = vrot.slane %v4955, %v4962
        %v4965 = vunpack.c.l.s4 1966171168
        %v4966 = vunpack.c.0.s8 %v4965
        %v4967 = vlaneseq
        %v4968 = vshrl.u32 %v4967, 7
        %v4969 = vsub.s32 %v4966, %v4968
        %v4970 = vrot.slane %v4956, %v4969
        %v4971 = vcombine.low %v4963, %v4970
        %v4972 = vcombine.low %v4290, %v4291
        %v4973 = vcombine.low %v4292, %v4293
        %v4974 = vcombine.low %v4294, %v4295
        %v4975 = vcombine.low %v4296, %v4297
        %v4977 = vunpack.c.l.s4 1966171168
        %v4978 = vunpack.c.0.s8 %v4977
        %v4979 = vlaneseq
        %v4980 = vshrl.u32 %v4979, 7
        %v4981 = vsub.s32 %v4978, %v4980
        %v4982 = vrot.slane %v4972, %v4981
        %v4984 = vunpack.c.l.s4 1966171168
        %v4985 = vunpack.c.0.s8 %v4984
        %v4986 = vlaneseq
        %v4987 = vshrl.u32 %v4986, 7
        %v4988 = vsub.s32 %v4985, %v4987
        %v4989 = vrot.slane %v4973, %v4988
        %v4991 = vunpack.c.l.s4 1966171168
        %v4992 = vunpack.c.0.s8 %v4991
        %v4993 = vlaneseq
        %v4994 = vshrl.u32 %v4993, 7
        %v4995 = vsub.s32 %v4992, %v4994
        %v4996 = vrot.slane %v4974, %v4995
        %v4998 = vunpack.c.l.s4 1966171168
        %v4999 = vunpack.c.0.s8 %v4998
        %v5000 = vlaneseq
        %v5001 = vshrl.u32 %v5000, 7
        %v5002 = vsub.s32 %v4999, %v5001
        %v5003 = vrot.slane %v4975, %v5002
        %v5004 = vcombine.low %v4982, %v4989
        %v5005 = vcombine.low %v4996, %v5003
        %v5007 = vunpack.c.l.s4 1966171168
        %v5008 = vunpack.c.0.s8 %v5007
        %v5009 = vlaneseq
        %v5010 = vshrl.u32 %v5009, 7
        %v5011 = vsub.s32 %v5008, %v5010
        %v5012 = vrot.slane %v5004, %v5011
        %v5014 = vunpack.c.l.s4 1966171168
        %v5015 = vunpack.c.0.s8 %v5014
        %v5016 = vlaneseq
        %v5017 = vshrl.u32 %v5016, 7
        %v5018 = vsub.s32 %v5015, %v5017
        %v5019 = vrot.slane %v5005, %v5018
        %v5020 = vcombine.low %v5012, %v5019
        %v5021 = vcombine.low %v4298, %v4299
        %v5022 = vcombine.low %v4300, %v4301
        %v5023 = vcombine.low %v4302, %v4303
        %v5024 = vcombine.low %v4304, %v4305
        %v5026 = vunpack.c.l.s4 1966171168
        %v5027 = vunpack.c.0.s8 %v5026
        %v5028 = vlaneseq
        %v5029 = vshrl.u32 %v5028, 7
        %v5030 = vsub.s32 %v5027, %v5029
        %v5031 = vrot.slane %v5021, %v5030
        %v5033 = vunpack.c.l.s4 1966171168
        %v5034 = vunpack.c.0.s8 %v5033
        %v5035 = vlaneseq
        %v5036 = vshrl.u32 %v5035, 7
        %v5037 = vsub.s32 %v5034, %v5036
        %v5038 = vrot.slane %v5022, %v5037
        %v5040 = vunpack.c.l.s4 1966171168
        %v5041 = vunpack.c.0.s8 %v5040
        %v5042 = vlaneseq
        %v5043 = vshrl.u32 %v5042, 7
        %v5044 = vsub.s32 %v5041, %v5043
        %v5045 = vrot.slane %v5023, %v5044
        %v5047 = vunpack.c.l.s4 1966171168
        %v5048 = vunpack.c.0.s8 %v5047
        %v5049 = vlaneseq
        %v5050 = vshrl.u32 %v5049, 7
        %v5051 = vsub.s32 %v5048, %v5050
        %v5052 = vrot.slane %v5024, %v5051
        %v5053 = vcombine.low %v5031, %v5038
        %v5054 = vcombine.low %v5045, %v5052
        %v5056 = vunpack.c.l.s4 1966171168
        %v5057 = vunpack.c.0.s8 %v5056
        %v5058 = vlaneseq
        %v5059 = vshrl.u32 %v5058, 7
        %v5060 = vsub.s32 %v5057, %v5059
        %v5061 = vrot.slane %v5053, %v5060
        %v5063 = vunpack.c.l.s4 1966171168
        %v5064 = vunpack.c.0.s8 %v5063
        %v5065 = vlaneseq
        %v5066 = vshrl.u32 %v5065, 7
        %v5067 = vsub.s32 %v5064, %v5066
        %v5068 = vrot.slane %v5054, %v5067
        %v5069 = vcombine.low %v5061, %v5068
        %v5070 = vcombine.low %v4306, %v4307
        %v5071 = vcombine.low %v4308, %v4309
        %v5072 = vcombine.low %v4310, %v4311
        %v5073 = vcombine.low %v4312, %v4313
        %v5075 = vunpack.c.l.s4 1966171168
        %v5076 = vunpack.c.0.s8 %v5075
        %v5077 = vlaneseq
        %v5078 = vshrl.u32 %v5077, 7
        %v5079 = vsub.s32 %v5076, %v5078
        %v5080 = vrot.slane %v5070, %v5079
        %v5082 = vunpack.c.l.s4 1966171168
        %v5083 = vunpack.c.0.s8 %v5082
        %v5084 = vlaneseq
        %v5085 = vshrl.u32 %v5084, 7
        %v5086 = vsub.s32 %v5083, %v5085
        %v5087 = vrot.slane %v5071, %v5086
        %v5089 = vunpack.c.l.s4 1966171168
        %v5090 = vunpack.c.0.s8 %v5089
        %v5091 = vlaneseq
        %v5092 = vshrl.u32 %v5091, 7
        %v5093 = vsub.s32 %v5090, %v5092
        %v5094 = vrot.slane %v5072, %v5093
        %v5096 = vunpack.c.l.s4 1966171168
        %v5097 = vunpack.c.0.s8 %v5096
        %v5098 = vlaneseq
        %v5099 = vshrl.u32 %v5098, 7
        %v5100 = vsub.s32 %v5097, %v5099
        %v5101 = vrot.slane %v5073, %v5100
        %v5102 = vcombine.low %v5080, %v5087
        %v5103 = vcombine.low %v5094, %v5101
        %v5105 = vunpack.c.l.s4 1966171168
        %v5106 = vunpack.c.0.s8 %v5105
        %v5107 = vlaneseq
        %v5108 = vshrl.u32 %v5107, 7
        %v5109 = vsub.s32 %v5106, %v5108
        %v5110 = vrot.slane %v5102, %v5109
        %v5112 = vunpack.c.l.s4 1966171168
        %v5113 = vunpack.c.0.s8 %v5112
        %v5114 = vlaneseq
        %v5115 = vshrl.u32 %v5114, 7
        %v5116 = vsub.s32 %v5113, %v5115
        %v5117 = vrot.slane %v5103, %v5116
        %v5118 = vcombine.low %v5110, %v5117
        %v5119 = vcombine.low %v4314, %v4315
        %v5120 = vcombine.low %v4316, %v4317
        %v5121 = vcombine.low %v4318, %v4319
        %v5122 = vcombine.low %v4320, %v4321
        %v5124 = vunpack.c.l.s4 1966171168
        %v5125 = vunpack.c.0.s8 %v5124
        %v5126 = vlaneseq
        %v5127 = vshrl.u32 %v5126, 7
        %v5128 = vsub.s32 %v5125, %v5127
        %v5129 = vrot.slane %v5119, %v5128
        %v5131 = vunpack.c.l.s4 1966171168
        %v5132 = vunpack.c.0.s8 %v5131
        %v5133 = vlaneseq
        %v5134 = vshrl.u32 %v5133, 7
        %v5135 = vsub.s32 %v5132, %v5134
        %v5136 = vrot.slane %v5120, %v5135
        %v5138 = vunpack.c.l.s4 1966171168
        %v5139 = vunpack.c.0.s8 %v5138
        %v5140 = vlaneseq
        %v5141 = vshrl.u32 %v5140, 7
        %v5142 = vsub.s32 %v5139, %v5141
        %v5143 = vrot.slane %v5121, %v5142
        %v5145 = vunpack.c.l.s4 1966171168
        %v5146 = vunpack.c.0.s8 %v5145
        %v5147 = vlaneseq
        %v5148 = vshrl.u32 %v5147, 7
        %v5149 = vsub.s32 %v5146, %v5148
        %v5150 = vrot.slane %v5122, %v5149
        %v5151 = vcombine.low %v5129, %v5136
        %v5152 = vcombine.low %v5143, %v5150
        %v5154 = vunpack.c.l.s4 1966171168
        %v5155 = vunpack.c.0.s8 %v5154
        %v5156 = vlaneseq
        %v5157 = vshrl.u32 %v5156, 7
        %v5158 = vsub.s32 %v5155, %v5157
        %v5159 = vrot.slane %v5151, %v5158
        %v5161 = vunpack.c.l.s4 1966171168
        %v5162 = vunpack.c.0.s8 %v5161
        %v5163 = vlaneseq
        %v5164 = vshrl.u32 %v5163, 7
        %v5165 = vsub.s32 %v5162, %v5164
        %v5166 = vrot.slane %v5152, %v5165
        %v5167 = vcombine.low %v5159, %v5166
        %v5168 = vcombine.low %v4322, %v4323
        %v5169 = vcombine.low %v4324, %v4325
        %v5170 = vcombine.low %v4326, %v4327
        %v5171 = vcombine.low %v4328, %v4329
        %v5173 = vunpack.c.l.s4 1966171168
        %v5174 = vunpack.c.0.s8 %v5173
        %v5175 = vlaneseq
        %v5176 = vshrl.u32 %v5175, 7
        %v5177 = vsub.s32 %v5174, %v5176
        %v5178 = vrot.slane %v5168, %v5177
        %v5180 = vunpack.c.l.s4 1966171168
        %v5181 = vunpack.c.0.s8 %v5180
        %v5182 = vlaneseq
        %v5183 = vshrl.u32 %v5182, 7
        %v5184 = vsub.s32 %v5181, %v5183
        %v5185 = vrot.slane %v5169, %v5184
        %v5187 = vunpack.c.l.s4 1966171168
        %v5188 = vunpack.c.0.s8 %v5187
        %v5189 = vlaneseq
        %v5190 = vshrl.u32 %v5189, 7
        %v5191 = vsub.s32 %v5188, %v5190
        %v5192 = vrot.slane %v5170, %v5191
        %v5194 = vunpack.c.l.s4 1966171168
        %v5195 = vunpack.c.0.s8 %v5194
        %v5196 = vlaneseq
        %v5197 = vshrl.u32 %v5196, 7
        %v5198 = vsub.s32 %v5195, %v5197
        %v5199 = vrot.slane %v5171, %v5198
        %v5200 = vcombine.low %v5178, %v5185
        %v5201 = vcombine.low %v5192, %v5199
        %v5203 = vunpack.c.l.s4 1966171168
        %v5204 = vunpack.c.0.s8 %v5203
        %v5205 = vlaneseq
        %v5206 = vshrl.u32 %v5205, 7
        %v5207 = vsub.s32 %v5204, %v5206
        %v5208 = vrot.slane %v5200, %v5207
        %v5210 = vunpack.c.l.s4 1966171168
        %v5211 = vunpack.c.0.s8 %v5210
        %v5212 = vlaneseq
        %v5213 = vshrl.u32 %v5212, 7
        %v5214 = vsub.s32 %v5211, %v5213
        %v5215 = vrot.slane %v5201, %v5214
        %v5216 = vcombine.low %v5208, %v5215
        %v5217 = vcombine.low %v4330, %v4331
        %v5218 = vcombine.low %v4332, %v4333
        %v5219 = vcombine.low %v4334, %v4335
        %v5220 = vcombine.low %v4336, %v4337
        %v5222 = vunpack.c.l.s4 1966171168
        %v5223 = vunpack.c.0.s8 %v5222
        %v5224 = vlaneseq
        %v5225 = vshrl.u32 %v5224, 7
        %v5226 = vsub.s32 %v5223, %v5225
        %v5227 = vrot.slane %v5217, %v5226
        %v5229 = vunpack.c.l.s4 1966171168
        %v5230 = vunpack.c.0.s8 %v5229
        %v5231 = vlaneseq
        %v5232 = vshrl.u32 %v5231, 7
        %v5233 = vsub.s32 %v5230, %v5232
        %v5234 = vrot.slane %v5218, %v5233
        %v5236 = vunpack.c.l.s4 1966171168
        %v5237 = vunpack.c.0.s8 %v5236
        %v5238 = vlaneseq
        %v5239 = vshrl.u32 %v5238, 7
        %v5240 = vsub.s32 %v5237, %v5239
        %v5241 = vrot.slane %v5219, %v5240
        %v5243 = vunpack.c.l.s4 1966171168
        %v5244 = vunpack.c.0.s8 %v5243
        %v5245 = vlaneseq
        %v5246 = vshrl.u32 %v5245, 7
        %v5247 = vsub.s32 %v5244, %v5246
        %v5248 = vrot.slane %v5220, %v5247
        %v5249 = vcombine.low %v5227, %v5234
        %v5250 = vcombine.low %v5241, %v5248
        %v5252 = vunpack.c.l.s4 1966171168
        %v5253 = vunpack.c.0.s8 %v5252
        %v5254 = vlaneseq
        %v5255 = vshrl.u32 %v5254, 7
        %v5256 = vsub.s32 %v5253, %v5255
        %v5257 = vrot.slane %v5249, %v5256
        %v5259 = vunpack.c.l.s4 1966171168
        %v5260 = vunpack.c.0.s8 %v5259
        %v5261 = vlaneseq
        %v5262 = vshrl.u32 %v5261, 7
        %v5263 = vsub.s32 %v5260, %v5262
        %v5264 = vrot.slane %v5250, %v5263
        %v5265 = vcombine.low %v5257, %v5264
        %v5266 = vcombine.low %v4338, %v4339
        %v5267 = vcombine.low %v4340, %v4341
        %v5268 = vcombine.low %v4342, %v4343
        %v5269 = vcombine.low %v4344, %v4345
        %v5271 = vunpack.c.l.s4 1966171168
        %v5272 = vunpack.c.0.s8 %v5271
        %v5273 = vlaneseq
        %v5274 = vshrl.u32 %v5273, 7
        %v5275 = vsub.s32 %v5272, %v5274
        %v5276 = vrot.slane %v5266, %v5275
        %v5278 = vunpack.c.l.s4 1966171168
        %v5279 = vunpack.c.0.s8 %v5278
        %v5280 = vlaneseq
        %v5281 = vshrl.u32 %v5280, 7
        %v5282 = vsub.s32 %v5279, %v5281
        %v5283 = vrot.slane %v5267, %v5282
        %v5285 = vunpack.c.l.s4 1966171168
        %v5286 = vunpack.c.0.s8 %v5285
        %v5287 = vlaneseq
        %v5288 = vshrl.u32 %v5287, 7
        %v5289 = vsub.s32 %v5286, %v5288
        %v5290 = vrot.slane %v5268, %v5289
        %v5292 = vunpack.c.l.s4 1966171168
        %v5293 = vunpack.c.0.s8 %v5292
        %v5294 = vlaneseq
        %v5295 = vshrl.u32 %v5294, 7
        %v5296 = vsub.s32 %v5293, %v5295
        %v5297 = vrot.slane %v5269, %v5296
        %v5298 = vcombine.low %v5276, %v5283
        %v5299 = vcombine.low %v5290, %v5297
        %v5301 = vunpack.c.l.s4 1966171168
        %v5302 = vunpack.c.0.s8 %v5301
        %v5303 = vlaneseq
        %v5304 = vshrl.u32 %v5303, 7
        %v5305 = vsub.s32 %v5302, %v5304
        %v5306 = vrot.slane %v5298, %v5305
        %v5308 = vunpack.c.l.s4 1966171168
        %v5309 = vunpack.c.0.s8 %v5308
        %v5310 = vlaneseq
        %v5311 = vshrl.u32 %v5310, 7
        %v5312 = vsub.s32 %v5309, %v5311
        %v5313 = vrot.slane %v5299, %v5312
        %v5314 = vcombine.low %v5306, %v5313
        %v5332 = vpack.c.bf16 %v4579, %v4530
        %v5333 = vpack.c.bf16 %v4677, %v4628
        %v5334 = vpack.c.bf16 %v4775, %v4726
        %v5335 = vpack.c.bf16 %v4873, %v4824
        %v5336 = vpack.c.bf16 %v4971, %v4922
        %v5337 = vpack.c.bf16 %v5069, %v5020
        %v5338 = vpack.c.bf16 %v5167, %v5118
        %v5339 = vpack.c.bf16 %v5265, %v5216
        %v5340 = vpack.c.bf16 %v5314, %v5314
        %v5341 = vld [vmem:[%s5] sm:$0xf]
        %v5342 = vld [vmem:[%s5 + $0x4] sm:$0xf]
        %v5343 = vld [vmem:[%s5 + $0x8] sm:$0xf]
        %v5344 = vld [vmem:[%s5 + $0xc] sm:$0xf]
        %v5349 = vunpack.c.l.b16 %v5341
        %v5350 = vunpack.c.l.b16 %v5342
        %v5351 = vunpack.c.l.b16 %v5343
        %v5352 = vunpack.c.l.b16 %v5344
        %v5353 = vpack.c.b16 %v5350, %v5349
        %v5354 = vpack.c.b16 %v5352, %v5351
        %v5358 = vsel %vm450, %v5332, 0
        %v5361 = vsel %vm450, %v5333, 0
        %v5364 = vsel %vm450, %v5334, 0
        %v5367 = vsel %vm450, %v5335, 0
        %v5370 = vsel %vm450, %v5336, 0
        %v5373 = vsel %vm450, %v5337, 0
        %v5376 = vsel %vm450, %v5338, 0
        %v5379 = vsel %vm450, %v5339, 0
        %v5382 = vsel %vm450, %v5340, 0
        %5384 = vmatprep.subr.bf16.mxu0 0
        %5385 = vmatpush1.bf16.msra.mxu0 0
        %5386 = vmatprep.subr.bf16.mxu0 0
        %5387 = vmatpush1.bf16.msra.mxu0 0
        %5388 = vmatprep.subr.bf16.mxu0 0
        %5389 = vmatpush1.bf16.msra.mxu0 0
        %5390 = vmatprep.subr.bf16.mxu0 0
        %5391 = vmatpush1.bf16.msra.mxu0 0
        %5392 = vmatprep.subr.bf16.mxu0 0
        %5393 = vmatpush1.bf16.msra.mxu0 0
        %5394 = vmatprep.subr.bf16.mxu0 0
        %5395 = vmatpush1.bf16.msra.mxu0 0
        %5396 = vmatprep.subr.bf16.mxu0 0
        %5397 = vmatpush1.bf16.msra.mxu0 %v5354
        %5398 = vmatprep.subr.bf16.mxu0 0
        %5399 = vmatpush1.bf16.msra.mxu0 %v5353
        %5400 = vmatprep.subr.bf16.mxu0 0
        %5401 = vmatpush2.bf16.msra.mxu0 0
        %5402 = vmatprep.subr.bf16.mxu0 0
        %5403 = vmatpush2.bf16.msra.mxu0 0
        %5404 = vmatprep.subr.bf16.mxu0 0
        %5405 = vmatpush2.bf16.msra.mxu0 0
        %5406 = vmatprep.subr.bf16.mxu0 0
        %5407 = vmatpush2.bf16.msra.mxu0 0
        %5408 = vmatprep.subr.bf16.mxu0 0
        %5409 = vmatpush2.bf16.msra.mxu0 0
        %5410 = vmatprep.subr.bf16.mxu0 0
        %5411 = vmatpush2.bf16.msra.mxu0 0
        %5412 = vmatprep.subr.bf16.mxu0 0
        %5413 = vmatpush2.bf16.msra.mxu0 0
        %5414 = vmatprep.subr.bf16.mxu0 0
        %5415 = vmatpush2.bf16.msra.mxu0 0
        %5416 = vmatprep.mubr.bf16.mxu0 0
        %5417 = vmatmul.mubr.bf16.gmra.mxu0 %v5358
        %v5418 = vpop.f32.mrf.mxu0
        %v5419 = vadd.f32 0.0, %v5418
        %v5420 = vpop.f32.mrf.mxu0
        %v5421 = vpop.f32.mrf.mxu0
        %v5422 = vadd.f32 0.0, %v5421
        %v5423 = vpop.f32.mrf.mxu0
        %5424 = vmatprep.mubr.bf16.mxu0 0
        %5425 = vmatmul.mubr.bf16.gmra.mxu0 %v5361
        %v5426 = vpop.f32.mrf.mxu0
        %v5427 = vadd.f32 0.0, %v5426
        %v5428 = vpop.f32.mrf.mxu0
        %v5429 = vpop.f32.mrf.mxu0
        %v5430 = vadd.f32 0.0, %v5429
        %v5431 = vpop.f32.mrf.mxu0
        %5432 = vmatprep.mubr.bf16.mxu0 0
        %5433 = vmatmul.mubr.bf16.gmra.mxu0 %v5364
        %v5434 = vpop.f32.mrf.mxu0
        %v5435 = vadd.f32 0.0, %v5434
        %v5436 = vpop.f32.mrf.mxu0
        %v5437 = vpop.f32.mrf.mxu0
        %v5438 = vadd.f32 0.0, %v5437
        %v5439 = vpop.f32.mrf.mxu0
        %5440 = vmatprep.mubr.bf16.mxu0 0
        %5441 = vmatmul.mubr.bf16.gmra.mxu0 %v5367
        %v5442 = vpop.f32.mrf.mxu0
        %v5443 = vadd.f32 0.0, %v5442
        %v5444 = vpop.f32.mrf.mxu0
        %v5445 = vpop.f32.mrf.mxu0
        %v5446 = vadd.f32 0.0, %v5445
        %v5447 = vpop.f32.mrf.mxu0
        %5448 = vmatprep.mubr.bf16.mxu0 0
        %5449 = vmatmul.mubr.bf16.gmra.mxu0 %v5370
        %v5450 = vpop.f32.mrf.mxu0
        %v5451 = vadd.f32 0.0, %v5450
        %v5452 = vpop.f32.mrf.mxu0
        %v5453 = vpop.f32.mrf.mxu0
        %v5454 = vadd.f32 0.0, %v5453
        %v5455 = vpop.f32.mrf.mxu0
        %5456 = vmatprep.mubr.bf16.mxu0 0
        %5457 = vmatmul.mubr.bf16.gmra.mxu0 %v5373
        %v5458 = vpop.f32.mrf.mxu0
        %v5459 = vadd.f32 0.0, %v5458
        %v5460 = vpop.f32.mrf.mxu0
        %v5461 = vpop.f32.mrf.mxu0
        %v5462 = vadd.f32 0.0, %v5461
        %v5463 = vpop.f32.mrf.mxu0
        %5464 = vmatprep.mubr.bf16.mxu0 0
        %5465 = vmatmul.mubr.bf16.gmra.mxu0 %v5376
        %v5466 = vpop.f32.mrf.mxu0
        %v5467 = vadd.f32 0.0, %v5466
        %v5468 = vpop.f32.mrf.mxu0
        %v5469 = vpop.f32.mrf.mxu0
        %v5470 = vadd.f32 0.0, %v5469
        %v5471 = vpop.f32.mrf.mxu0
        %5472 = vmatprep.mubr.bf16.mxu0 0
        %5473 = vmatmul.mubr.bf16.gmra.mxu0 %v5379
        %v5474 = vpop.f32.mrf.mxu0
        %v5475 = vadd.f32 0.0, %v5474
        %v5476 = vpop.f32.mrf.mxu0
        %v5477 = vpop.f32.mrf.mxu0
        %v5478 = vadd.f32 0.0, %v5477
        %v5479 = vpop.f32.mrf.mxu0
        %5480 = vmatprep.mubr.bf16.mxu0 0
        %5481 = vmatmul.mubr.bf16.gmra.mxu0 %v5382
        %v5482 = vpop.f32.mrf.mxu0
        %v5483 = vadd.f32 0.0, %v5482
        %v5484 = vpop.f32.mrf.mxu0
        %v5485 = vpop.f32.mrf.mxu0
        %v5486 = vpop.f32.mrf.mxu0
        %5487 = vdwg.mxu0
        %v5505 = vcombine.high %v5419, %v5419
        %v5507 = vunpack.c.l.s4 1966171168
        %v5508 = vunpack.c.0.s8 %v5507
        %v5509 = vlaneseq
        %v5510 = vshrl.u32 %v5509, 7
        %v5511 = vsub.s32 %v5508, %v5510
        %v5512 = vrot.slane %v5419, %v5511
        %v5514 = vunpack.c.l.s4 1966171168
        %v5515 = vunpack.c.0.s8 %v5514
        %v5516 = vlaneseq
        %v5517 = vshrl.u32 %v5516, 7
        %v5518 = vsub.s32 %v5515, %v5517
        %v5519 = vrot.slane %v5505, %v5518
        %v5520 = vcombine.high %v5512, %v5512
        %v5521 = vcombine.high %v5519, %v5519
        %v5523 = vunpack.c.l.s4 1966171168
        %v5524 = vunpack.c.0.s8 %v5523
        %v5525 = vlaneseq
        %v5526 = vshrl.u32 %v5525, 7
        %v5527 = vsub.s32 %v5524, %v5526
        %v5528 = vrot.slane %v5512, %v5527
        %v5530 = vunpack.c.l.s4 1966171168
        %v5531 = vunpack.c.0.s8 %v5530
        %v5532 = vlaneseq
        %v5533 = vshrl.u32 %v5532, 7
        %v5534 = vsub.s32 %v5531, %v5533
        %v5535 = vrot.slane %v5519, %v5534
        %v5537 = vunpack.c.l.s4 1966171168
        %v5538 = vunpack.c.0.s8 %v5537
        %v5539 = vlaneseq
        %v5540 = vshrl.u32 %v5539, 7
        %v5541 = vsub.s32 %v5538, %v5540
        %v5542 = vrot.slane %v5520, %v5541
        %v5544 = vunpack.c.l.s4 1966171168
        %v5545 = vunpack.c.0.s8 %v5544
        %v5546 = vlaneseq
        %v5547 = vshrl.u32 %v5546, 7
        %v5548 = vsub.s32 %v5545, %v5547
        %v5549 = vrot.slane %v5521, %v5548
        %v5550 = vcombine.high %v5528, %v5528
        %v5551 = vcombine.high %v5535, %v5535
        %v5552 = vcombine.high %v5542, %v5542
        %v5553 = vcombine.high %v5549, %v5549
        %v5554 = vcombine.high %v5422, %v5422
        %v5556 = vunpack.c.l.s4 1966171168
        %v5557 = vunpack.c.0.s8 %v5556
        %v5558 = vlaneseq
        %v5559 = vshrl.u32 %v5558, 7
        %v5560 = vsub.s32 %v5557, %v5559
        %v5561 = vrot.slane %v5422, %v5560
        %v5563 = vunpack.c.l.s4 1966171168
        %v5564 = vunpack.c.0.s8 %v5563
        %v5565 = vlaneseq
        %v5566 = vshrl.u32 %v5565, 7
        %v5567 = vsub.s32 %v5564, %v5566
        %v5568 = vrot.slane %v5554, %v5567
        %v5569 = vcombine.high %v5561, %v5561
        %v5570 = vcombine.high %v5568, %v5568
        %v5572 = vunpack.c.l.s4 1966171168
        %v5573 = vunpack.c.0.s8 %v5572
        %v5574 = vlaneseq
        %v5575 = vshrl.u32 %v5574, 7
        %v5576 = vsub.s32 %v5573, %v5575
        %v5577 = vrot.slane %v5561, %v5576
        %v5579 = vunpack.c.l.s4 1966171168
        %v5580 = vunpack.c.0.s8 %v5579
        %v5581 = vlaneseq
        %v5582 = vshrl.u32 %v5581, 7
        %v5583 = vsub.s32 %v5580, %v5582
        %v5584 = vrot.slane %v5568, %v5583
        %v5586 = vunpack.c.l.s4 1966171168
        %v5587 = vunpack.c.0.s8 %v5586
        %v5588 = vlaneseq
        %v5589 = vshrl.u32 %v5588, 7
        %v5590 = vsub.s32 %v5587, %v5589
        %v5591 = vrot.slane %v5569, %v5590
        %v5593 = vunpack.c.l.s4 1966171168
        %v5594 = vunpack.c.0.s8 %v5593
        %v5595 = vlaneseq
        %v5596 = vshrl.u32 %v5595, 7
        %v5597 = vsub.s32 %v5594, %v5596
        %v5598 = vrot.slane %v5570, %v5597
        %v5599 = vcombine.high %v5577, %v5577
        %v5600 = vcombine.high %v5584, %v5584
        %v5601 = vcombine.high %v5591, %v5591
        %v5602 = vcombine.high %v5598, %v5598
        %v5603 = vcombine.high %v5427, %v5427
        %v5605 = vunpack.c.l.s4 1966171168
        %v5606 = vunpack.c.0.s8 %v5605
        %v5607 = vlaneseq
        %v5608 = vshrl.u32 %v5607, 7
        %v5609 = vsub.s32 %v5606, %v5608
        %v5610 = vrot.slane %v5427, %v5609
        %v5612 = vunpack.c.l.s4 1966171168
        %v5613 = vunpack.c.0.s8 %v5612
        %v5614 = vlaneseq
        %v5615 = vshrl.u32 %v5614, 7
        %v5616 = vsub.s32 %v5613, %v5615
        %v5617 = vrot.slane %v5603, %v5616
        %v5618 = vcombine.high %v5610, %v5610
        %v5619 = vcombine.high %v5617, %v5617
        %v5621 = vunpack.c.l.s4 1966171168
        %v5622 = vunpack.c.0.s8 %v5621
        %v5623 = vlaneseq
        %v5624 = vshrl.u32 %v5623, 7
        %v5625 = vsub.s32 %v5622, %v5624
        %v5626 = vrot.slane %v5610, %v5625
        %v5628 = vunpack.c.l.s4 1966171168
        %v5629 = vunpack.c.0.s8 %v5628
        %v5630 = vlaneseq
        %v5631 = vshrl.u32 %v5630, 7
        %v5632 = vsub.s32 %v5629, %v5631
        %v5633 = vrot.slane %v5617, %v5632
        %v5635 = vunpack.c.l.s4 1966171168
        %v5636 = vunpack.c.0.s8 %v5635
        %v5637 = vlaneseq
        %v5638 = vshrl.u32 %v5637, 7
        %v5639 = vsub.s32 %v5636, %v5638
        %v5640 = vrot.slane %v5618, %v5639
        %v5642 = vunpack.c.l.s4 1966171168
        %v5643 = vunpack.c.0.s8 %v5642
        %v5644 = vlaneseq
        %v5645 = vshrl.u32 %v5644, 7
        %v5646 = vsub.s32 %v5643, %v5645
        %v5647 = vrot.slane %v5619, %v5646
        %v5648 = vcombine.high %v5626, %v5626
        %v5649 = vcombine.high %v5633, %v5633
        %v5650 = vcombine.high %v5640, %v5640
        %v5651 = vcombine.high %v5647, %v5647
        %v5652 = vcombine.high %v5430, %v5430
        %v5654 = vunpack.c.l.s4 1966171168
        %v5655 = vunpack.c.0.s8 %v5654
        %v5656 = vlaneseq
        %v5657 = vshrl.u32 %v5656, 7
        %v5658 = vsub.s32 %v5655, %v5657
        %v5659 = vrot.slane %v5430, %v5658
        %v5661 = vunpack.c.l.s4 1966171168
        %v5662 = vunpack.c.0.s8 %v5661
        %v5663 = vlaneseq
        %v5664 = vshrl.u32 %v5663, 7
        %v5665 = vsub.s32 %v5662, %v5664
        %v5666 = vrot.slane %v5652, %v5665
        %v5667 = vcombine.high %v5659, %v5659
        %v5668 = vcombine.high %v5666, %v5666
        %v5670 = vunpack.c.l.s4 1966171168
        %v5671 = vunpack.c.0.s8 %v5670
        %v5672 = vlaneseq
        %v5673 = vshrl.u32 %v5672, 7
        %v5674 = vsub.s32 %v5671, %v5673
        %v5675 = vrot.slane %v5659, %v5674
        %v5677 = vunpack.c.l.s4 1966171168
        %v5678 = vunpack.c.0.s8 %v5677
        %v5679 = vlaneseq
        %v5680 = vshrl.u32 %v5679, 7
        %v5681 = vsub.s32 %v5678, %v5680
        %v5682 = vrot.slane %v5666, %v5681
        %v5684 = vunpack.c.l.s4 1966171168
        %v5685 = vunpack.c.0.s8 %v5684
        %v5686 = vlaneseq
        %v5687 = vshrl.u32 %v5686, 7
        %v5688 = vsub.s32 %v5685, %v5687
        %v5689 = vrot.slane %v5667, %v5688
        %v5691 = vunpack.c.l.s4 1966171168
        %v5692 = vunpack.c.0.s8 %v5691
        %v5693 = vlaneseq
        %v5694 = vshrl.u32 %v5693, 7
        %v5695 = vsub.s32 %v5692, %v5694
        %v5696 = vrot.slane %v5668, %v5695
        %v5697 = vcombine.high %v5675, %v5675
        %v5698 = vcombine.high %v5682, %v5682
        %v5699 = vcombine.high %v5689, %v5689
        %v5700 = vcombine.high %v5696, %v5696
        %v5701 = vcombine.high %v5435, %v5435
        %v5703 = vunpack.c.l.s4 1966171168
        %v5704 = vunpack.c.0.s8 %v5703
        %v5705 = vlaneseq
        %v5706 = vshrl.u32 %v5705, 7
        %v5707 = vsub.s32 %v5704, %v5706
        %v5708 = vrot.slane %v5435, %v5707
        %v5710 = vunpack.c.l.s4 1966171168
        %v5711 = vunpack.c.0.s8 %v5710
        %v5712 = vlaneseq
        %v5713 = vshrl.u32 %v5712, 7
        %v5714 = vsub.s32 %v5711, %v5713
        %v5715 = vrot.slane %v5701, %v5714
        %v5716 = vcombine.high %v5708, %v5708
        %v5717 = vcombine.high %v5715, %v5715
        %v5719 = vunpack.c.l.s4 1966171168
        %v5720 = vunpack.c.0.s8 %v5719
        %v5721 = vlaneseq
        %v5722 = vshrl.u32 %v5721, 7
        %v5723 = vsub.s32 %v5720, %v5722
        %v5724 = vrot.slane %v5708, %v5723
        %v5726 = vunpack.c.l.s4 1966171168
        %v5727 = vunpack.c.0.s8 %v5726
        %v5728 = vlaneseq
        %v5729 = vshrl.u32 %v5728, 7
        %v5730 = vsub.s32 %v5727, %v5729
        %v5731 = vrot.slane %v5715, %v5730
        %v5733 = vunpack.c.l.s4 1966171168
        %v5734 = vunpack.c.0.s8 %v5733
        %v5735 = vlaneseq
        %v5736 = vshrl.u32 %v5735, 7
        %v5737 = vsub.s32 %v5734, %v5736
        %v5738 = vrot.slane %v5716, %v5737
        %v5740 = vunpack.c.l.s4 1966171168
        %v5741 = vunpack.c.0.s8 %v5740
        %v5742 = vlaneseq
        %v5743 = vshrl.u32 %v5742, 7
        %v5744 = vsub.s32 %v5741, %v5743
        %v5745 = vrot.slane %v5717, %v5744
        %v5746 = vcombine.high %v5724, %v5724
        %v5747 = vcombine.high %v5731, %v5731
        %v5748 = vcombine.high %v5738, %v5738
        %v5749 = vcombine.high %v5745, %v5745
        %v5750 = vcombine.high %v5438, %v5438
        %v5752 = vunpack.c.l.s4 1966171168
        %v5753 = vunpack.c.0.s8 %v5752
        %v5754 = vlaneseq
        %v5755 = vshrl.u32 %v5754, 7
        %v5756 = vsub.s32 %v5753, %v5755
        %v5757 = vrot.slane %v5438, %v5756
        %v5759 = vunpack.c.l.s4 1966171168
        %v5760 = vunpack.c.0.s8 %v5759
        %v5761 = vlaneseq
        %v5762 = vshrl.u32 %v5761, 7
        %v5763 = vsub.s32 %v5760, %v5762
        %v5764 = vrot.slane %v5750, %v5763
        %v5765 = vcombine.high %v5757, %v5757
        %v5766 = vcombine.high %v5764, %v5764
        %v5768 = vunpack.c.l.s4 1966171168
        %v5769 = vunpack.c.0.s8 %v5768
        %v5770 = vlaneseq
        %v5771 = vshrl.u32 %v5770, 7
        %v5772 = vsub.s32 %v5769, %v5771
        %v5773 = vrot.slane %v5757, %v5772
        %v5775 = vunpack.c.l.s4 1966171168
        %v5776 = vunpack.c.0.s8 %v5775
        %v5777 = vlaneseq
        %v5778 = vshrl.u32 %v5777, 7
        %v5779 = vsub.s32 %v5776, %v5778
        %v5780 = vrot.slane %v5764, %v5779
        %v5782 = vunpack.c.l.s4 1966171168
        %v5783 = vunpack.c.0.s8 %v5782
        %v5784 = vlaneseq
        %v5785 = vshrl.u32 %v5784, 7
        %v5786 = vsub.s32 %v5783, %v5785
        %v5787 = vrot.slane %v5765, %v5786
        %v5789 = vunpack.c.l.s4 1966171168
        %v5790 = vunpack.c.0.s8 %v5789
        %v5791 = vlaneseq
        %v5792 = vshrl.u32 %v5791, 7
        %v5793 = vsub.s32 %v5790, %v5792
        %v5794 = vrot.slane %v5766, %v5793
        %v5795 = vcombine.high %v5773, %v5773
        %v5796 = vcombine.high %v5780, %v5780
        %v5797 = vcombine.high %v5787, %v5787
        %v5798 = vcombine.high %v5794, %v5794
        %v5799 = vcombine.high %v5443, %v5443
        %v5801 = vunpack.c.l.s4 1966171168
        %v5802 = vunpack.c.0.s8 %v5801
        %v5803 = vlaneseq
        %v5804 = vshrl.u32 %v5803, 7
        %v5805 = vsub.s32 %v5802, %v5804
        %v5806 = vrot.slane %v5443, %v5805
        %v5808 = vunpack.c.l.s4 1966171168
        %v5809 = vunpack.c.0.s8 %v5808
        %v5810 = vlaneseq
        %v5811 = vshrl.u32 %v5810, 7
        %v5812 = vsub.s32 %v5809, %v5811
        %v5813 = vrot.slane %v5799, %v5812
        %v5814 = vcombine.high %v5806, %v5806
        %v5815 = vcombine.high %v5813, %v5813
        %v5817 = vunpack.c.l.s4 1966171168
        %v5818 = vunpack.c.0.s8 %v5817
        %v5819 = vlaneseq
        %v5820 = vshrl.u32 %v5819, 7
        %v5821 = vsub.s32 %v5818, %v5820
        %v5822 = vrot.slane %v5806, %v5821
        %v5824 = vunpack.c.l.s4 1966171168
        %v5825 = vunpack.c.0.s8 %v5824
        %v5826 = vlaneseq
        %v5827 = vshrl.u32 %v5826, 7
        %v5828 = vsub.s32 %v5825, %v5827
        %v5829 = vrot.slane %v5813, %v5828
        %v5831 = vunpack.c.l.s4 1966171168
        %v5832 = vunpack.c.0.s8 %v5831
        %v5833 = vlaneseq
        %v5834 = vshrl.u32 %v5833, 7
        %v5835 = vsub.s32 %v5832, %v5834
        %v5836 = vrot.slane %v5814, %v5835
        %v5838 = vunpack.c.l.s4 1966171168
        %v5839 = vunpack.c.0.s8 %v5838
        %v5840 = vlaneseq
        %v5841 = vshrl.u32 %v5840, 7
        %v5842 = vsub.s32 %v5839, %v5841
        %v5843 = vrot.slane %v5815, %v5842
        %v5844 = vcombine.high %v5822, %v5822
        %v5845 = vcombine.high %v5829, %v5829
        %v5846 = vcombine.high %v5836, %v5836
        %v5847 = vcombine.high %v5843, %v5843
        %v5848 = vcombine.high %v5446, %v5446
        %v5850 = vunpack.c.l.s4 1966171168
        %v5851 = vunpack.c.0.s8 %v5850
        %v5852 = vlaneseq
        %v5853 = vshrl.u32 %v5852, 7
        %v5854 = vsub.s32 %v5851, %v5853
        %v5855 = vrot.slane %v5446, %v5854
        %v5857 = vunpack.c.l.s4 1966171168
        %v5858 = vunpack.c.0.s8 %v5857
        %v5859 = vlaneseq
        %v5860 = vshrl.u32 %v5859, 7
        %v5861 = vsub.s32 %v5858, %v5860
        %v5862 = vrot.slane %v5848, %v5861
        %v5863 = vcombine.high %v5855, %v5855
        %v5864 = vcombine.high %v5862, %v5862
        %v5866 = vunpack.c.l.s4 1966171168
        %v5867 = vunpack.c.0.s8 %v5866
        %v5868 = vlaneseq
        %v5869 = vshrl.u32 %v5868, 7
        %v5870 = vsub.s32 %v5867, %v5869
        %v5871 = vrot.slane %v5855, %v5870
        %v5873 = vunpack.c.l.s4 1966171168
        %v5874 = vunpack.c.0.s8 %v5873
        %v5875 = vlaneseq
        %v5876 = vshrl.u32 %v5875, 7
        %v5877 = vsub.s32 %v5874, %v5876
        %v5878 = vrot.slane %v5862, %v5877
        %v5880 = vunpack.c.l.s4 1966171168
        %v5881 = vunpack.c.0.s8 %v5880
        %v5882 = vlaneseq
        %v5883 = vshrl.u32 %v5882, 7
        %v5884 = vsub.s32 %v5881, %v5883
        %v5885 = vrot.slane %v5863, %v5884
        %v5887 = vunpack.c.l.s4 1966171168
        %v5888 = vunpack.c.0.s8 %v5887
        %v5889 = vlaneseq
        %v5890 = vshrl.u32 %v5889, 7
        %v5891 = vsub.s32 %v5888, %v5890
        %v5892 = vrot.slane %v5864, %v5891
        %v5893 = vcombine.high %v5871, %v5871
        %v5894 = vcombine.high %v5878, %v5878
        %v5895 = vcombine.high %v5885, %v5885
        %v5896 = vcombine.high %v5892, %v5892
        %v5897 = vcombine.high %v5451, %v5451
        %v5899 = vunpack.c.l.s4 1966171168
        %v5900 = vunpack.c.0.s8 %v5899
        %v5901 = vlaneseq
        %v5902 = vshrl.u32 %v5901, 7
        %v5903 = vsub.s32 %v5900, %v5902
        %v5904 = vrot.slane %v5451, %v5903
        %v5906 = vunpack.c.l.s4 1966171168
        %v5907 = vunpack.c.0.s8 %v5906
        %v5908 = vlaneseq
        %v5909 = vshrl.u32 %v5908, 7
        %v5910 = vsub.s32 %v5907, %v5909
        %v5911 = vrot.slane %v5897, %v5910
        %v5912 = vcombine.high %v5904, %v5904
        %v5913 = vcombine.high %v5911, %v5911
        %v5915 = vunpack.c.l.s4 1966171168
        %v5916 = vunpack.c.0.s8 %v5915
        %v5917 = vlaneseq
        %v5918 = vshrl.u32 %v5917, 7
        %v5919 = vsub.s32 %v5916, %v5918
        %v5920 = vrot.slane %v5904, %v5919
        %v5922 = vunpack.c.l.s4 1966171168
        %v5923 = vunpack.c.0.s8 %v5922
        %v5924 = vlaneseq
        %v5925 = vshrl.u32 %v5924, 7
        %v5926 = vsub.s32 %v5923, %v5925
        %v5927 = vrot.slane %v5911, %v5926
        %v5929 = vunpack.c.l.s4 1966171168
        %v5930 = vunpack.c.0.s8 %v5929
        %v5931 = vlaneseq
        %v5932 = vshrl.u32 %v5931, 7
        %v5933 = vsub.s32 %v5930, %v5932
        %v5934 = vrot.slane %v5912, %v5933
        %v5936 = vunpack.c.l.s4 1966171168
        %v5937 = vunpack.c.0.s8 %v5936
        %v5938 = vlaneseq
        %v5939 = vshrl.u32 %v5938, 7
        %v5940 = vsub.s32 %v5937, %v5939
        %v5941 = vrot.slane %v5913, %v5940
        %v5942 = vcombine.high %v5920, %v5920
        %v5943 = vcombine.high %v5927, %v5927
        %v5944 = vcombine.high %v5934, %v5934
        %v5945 = vcombine.high %v5941, %v5941
        %v5946 = vcombine.high %v5454, %v5454
        %v5948 = vunpack.c.l.s4 1966171168
        %v5949 = vunpack.c.0.s8 %v5948
        %v5950 = vlaneseq
        %v5951 = vshrl.u32 %v5950, 7
        %v5952 = vsub.s32 %v5949, %v5951
        %v5953 = vrot.slane %v5454, %v5952
        %v5955 = vunpack.c.l.s4 1966171168
        %v5956 = vunpack.c.0.s8 %v5955
        %v5957 = vlaneseq
        %v5958 = vshrl.u32 %v5957, 7
        %v5959 = vsub.s32 %v5956, %v5958
        %v5960 = vrot.slane %v5946, %v5959
        %v5961 = vcombine.high %v5953, %v5953
        %v5962 = vcombine.high %v5960, %v5960
        %v5964 = vunpack.c.l.s4 1966171168
        %v5965 = vunpack.c.0.s8 %v5964
        %v5966 = vlaneseq
        %v5967 = vshrl.u32 %v5966, 7
        %v5968 = vsub.s32 %v5965, %v5967
        %v5969 = vrot.slane %v5953, %v5968
        %v5971 = vunpack.c.l.s4 1966171168
        %v5972 = vunpack.c.0.s8 %v5971
        %v5973 = vlaneseq
        %v5974 = vshrl.u32 %v5973, 7
        %v5975 = vsub.s32 %v5972, %v5974
        %v5976 = vrot.slane %v5960, %v5975
        %v5978 = vunpack.c.l.s4 1966171168
        %v5979 = vunpack.c.0.s8 %v5978
        %v5980 = vlaneseq
        %v5981 = vshrl.u32 %v5980, 7
        %v5982 = vsub.s32 %v5979, %v5981
        %v5983 = vrot.slane %v5961, %v5982
        %v5985 = vunpack.c.l.s4 1966171168
        %v5986 = vunpack.c.0.s8 %v5985
        %v5987 = vlaneseq
        %v5988 = vshrl.u32 %v5987, 7
        %v5989 = vsub.s32 %v5986, %v5988
        %v5990 = vrot.slane %v5962, %v5989
        %v5991 = vcombine.high %v5969, %v5969
        %v5992 = vcombine.high %v5976, %v5976
        %v5993 = vcombine.high %v5983, %v5983
        %v5994 = vcombine.high %v5990, %v5990
        %v5995 = vcombine.high %v5459, %v5459
        %v5997 = vunpack.c.l.s4 1966171168
        %v5998 = vunpack.c.0.s8 %v5997
        %v5999 = vlaneseq
        %v6000 = vshrl.u32 %v5999, 7
        %v6001 = vsub.s32 %v5998, %v6000
        %v6002 = vrot.slane %v5459, %v6001
        %v6004 = vunpack.c.l.s4 1966171168
        %v6005 = vunpack.c.0.s8 %v6004
        %v6006 = vlaneseq
        %v6007 = vshrl.u32 %v6006, 7
        %v6008 = vsub.s32 %v6005, %v6007
        %v6009 = vrot.slane %v5995, %v6008
        %v6010 = vcombine.high %v6002, %v6002
        %v6011 = vcombine.high %v6009, %v6009
        %v6013 = vunpack.c.l.s4 1966171168
        %v6014 = vunpack.c.0.s8 %v6013
        %v6015 = vlaneseq
        %v6016 = vshrl.u32 %v6015, 7
        %v6017 = vsub.s32 %v6014, %v6016
        %v6018 = vrot.slane %v6002, %v6017
        %v6020 = vunpack.c.l.s4 1966171168
        %v6021 = vunpack.c.0.s8 %v6020
        %v6022 = vlaneseq
        %v6023 = vshrl.u32 %v6022, 7
        %v6024 = vsub.s32 %v6021, %v6023
        %v6025 = vrot.slane %v6009, %v6024
        %v6027 = vunpack.c.l.s4 1966171168
        %v6028 = vunpack.c.0.s8 %v6027
        %v6029 = vlaneseq
        %v6030 = vshrl.u32 %v6029, 7
        %v6031 = vsub.s32 %v6028, %v6030
        %v6032 = vrot.slane %v6010, %v6031
        %v6034 = vunpack.c.l.s4 1966171168
        %v6035 = vunpack.c.0.s8 %v6034
        %v6036 = vlaneseq
        %v6037 = vshrl.u32 %v6036, 7
        %v6038 = vsub.s32 %v6035, %v6037
        %v6039 = vrot.slane %v6011, %v6038
        %v6040 = vcombine.high %v6018, %v6018
        %v6041 = vcombine.high %v6025, %v6025
        %v6042 = vcombine.high %v6032, %v6032
        %v6043 = vcombine.high %v6039, %v6039
        %v6044 = vcombine.high %v5462, %v5462
        %v6046 = vunpack.c.l.s4 1966171168
        %v6047 = vunpack.c.0.s8 %v6046
        %v6048 = vlaneseq
        %v6049 = vshrl.u32 %v6048, 7
        %v6050 = vsub.s32 %v6047, %v6049
        %v6051 = vrot.slane %v5462, %v6050
        %v6053 = vunpack.c.l.s4 1966171168
        %v6054 = vunpack.c.0.s8 %v6053
        %v6055 = vlaneseq
        %v6056 = vshrl.u32 %v6055, 7
        %v6057 = vsub.s32 %v6054, %v6056
        %v6058 = vrot.slane %v6044, %v6057
        %v6059 = vcombine.high %v6051, %v6051
        %v6060 = vcombine.high %v6058, %v6058
        %v6062 = vunpack.c.l.s4 1966171168
        %v6063 = vunpack.c.0.s8 %v6062
        %v6064 = vlaneseq
        %v6065 = vshrl.u32 %v6064, 7
        %v6066 = vsub.s32 %v6063, %v6065
        %v6067 = vrot.slane %v6051, %v6066
        %v6069 = vunpack.c.l.s4 1966171168
        %v6070 = vunpack.c.0.s8 %v6069
        %v6071 = vlaneseq
        %v6072 = vshrl.u32 %v6071, 7
        %v6073 = vsub.s32 %v6070, %v6072
        %v6074 = vrot.slane %v6058, %v6073
        %v6076 = vunpack.c.l.s4 1966171168
        %v6077 = vunpack.c.0.s8 %v6076
        %v6078 = vlaneseq
        %v6079 = vshrl.u32 %v6078, 7
        %v6080 = vsub.s32 %v6077, %v6079
        %v6081 = vrot.slane %v6059, %v6080
        %v6083 = vunpack.c.l.s4 1966171168
        %v6084 = vunpack.c.0.s8 %v6083
        %v6085 = vlaneseq
        %v6086 = vshrl.u32 %v6085, 7
        %v6087 = vsub.s32 %v6084, %v6086
        %v6088 = vrot.slane %v6060, %v6087
        %v6089 = vcombine.high %v6067, %v6067
        %v6090 = vcombine.high %v6074, %v6074
        %v6091 = vcombine.high %v6081, %v6081
        %v6092 = vcombine.high %v6088, %v6088
        %v6093 = vcombine.high %v5467, %v5467
        %v6095 = vunpack.c.l.s4 1966171168
        %v6096 = vunpack.c.0.s8 %v6095
        %v6097 = vlaneseq
        %v6098 = vshrl.u32 %v6097, 7
        %v6099 = vsub.s32 %v6096, %v6098
        %v6100 = vrot.slane %v5467, %v6099
        %v6102 = vunpack.c.l.s4 1966171168
        %v6103 = vunpack.c.0.s8 %v6102
        %v6104 = vlaneseq
        %v6105 = vshrl.u32 %v6104, 7
        %v6106 = vsub.s32 %v6103, %v6105
        %v6107 = vrot.slane %v6093, %v6106
        %v6108 = vcombine.high %v6100, %v6100
        %v6109 = vcombine.high %v6107, %v6107
        %v6111 = vunpack.c.l.s4 1966171168
        %v6112 = vunpack.c.0.s8 %v6111
        %v6113 = vlaneseq
        %v6114 = vshrl.u32 %v6113, 7
        %v6115 = vsub.s32 %v6112, %v6114
        %v6116 = vrot.slane %v6100, %v6115
        %v6118 = vunpack.c.l.s4 1966171168
        %v6119 = vunpack.c.0.s8 %v6118
        %v6120 = vlaneseq
        %v6121 = vshrl.u32 %v6120, 7
        %v6122 = vsub.s32 %v6119, %v6121
        %v6123 = vrot.slane %v6107, %v6122
        %v6125 = vunpack.c.l.s4 1966171168
        %v6126 = vunpack.c.0.s8 %v6125
        %v6127 = vlaneseq
        %v6128 = vshrl.u32 %v6127, 7
        %v6129 = vsub.s32 %v6126, %v6128
        %v6130 = vrot.slane %v6108, %v6129
        %v6132 = vunpack.c.l.s4 1966171168
        %v6133 = vunpack.c.0.s8 %v6132
        %v6134 = vlaneseq
        %v6135 = vshrl.u32 %v6134, 7
        %v6136 = vsub.s32 %v6133, %v6135
        %v6137 = vrot.slane %v6109, %v6136
        %v6138 = vcombine.high %v6116, %v6116
        %v6139 = vcombine.high %v6123, %v6123
        %v6140 = vcombine.high %v6130, %v6130
        %v6141 = vcombine.high %v6137, %v6137
        %v6142 = vcombine.high %v5470, %v5470
        %v6144 = vunpack.c.l.s4 1966171168
        %v6145 = vunpack.c.0.s8 %v6144
        %v6146 = vlaneseq
        %v6147 = vshrl.u32 %v6146, 7
        %v6148 = vsub.s32 %v6145, %v6147
        %v6149 = vrot.slane %v5470, %v6148
        %v6151 = vunpack.c.l.s4 1966171168
        %v6152 = vunpack.c.0.s8 %v6151
        %v6153 = vlaneseq
        %v6154 = vshrl.u32 %v6153, 7
        %v6155 = vsub.s32 %v6152, %v6154
        %v6156 = vrot.slane %v6142, %v6155
        %v6157 = vcombine.high %v6149, %v6149
        %v6158 = vcombine.high %v6156, %v6156
        %v6160 = vunpack.c.l.s4 1966171168
        %v6161 = vunpack.c.0.s8 %v6160
        %v6162 = vlaneseq
        %v6163 = vshrl.u32 %v6162, 7
        %v6164 = vsub.s32 %v6161, %v6163
        %v6165 = vrot.slane %v6149, %v6164
        %v6167 = vunpack.c.l.s4 1966171168
        %v6168 = vunpack.c.0.s8 %v6167
        %v6169 = vlaneseq
        %v6170 = vshrl.u32 %v6169, 7
        %v6171 = vsub.s32 %v6168, %v6170
        %v6172 = vrot.slane %v6156, %v6171
        %v6174 = vunpack.c.l.s4 1966171168
        %v6175 = vunpack.c.0.s8 %v6174
        %v6176 = vlaneseq
        %v6177 = vshrl.u32 %v6176, 7
        %v6178 = vsub.s32 %v6175, %v6177
        %v6179 = vrot.slane %v6157, %v6178
        %v6181 = vunpack.c.l.s4 1966171168
        %v6182 = vunpack.c.0.s8 %v6181
        %v6183 = vlaneseq
        %v6184 = vshrl.u32 %v6183, 7
        %v6185 = vsub.s32 %v6182, %v6184
        %v6186 = vrot.slane %v6158, %v6185
        %v6187 = vcombine.high %v6165, %v6165
        %v6188 = vcombine.high %v6172, %v6172
        %v6189 = vcombine.high %v6179, %v6179
        %v6190 = vcombine.high %v6186, %v6186
        %v6191 = vcombine.high %v5475, %v5475
        %v6193 = vunpack.c.l.s4 1966171168
        %v6194 = vunpack.c.0.s8 %v6193
        %v6195 = vlaneseq
        %v6196 = vshrl.u32 %v6195, 7
        %v6197 = vsub.s32 %v6194, %v6196
        %v6198 = vrot.slane %v5475, %v6197
        %v6200 = vunpack.c.l.s4 1966171168
        %v6201 = vunpack.c.0.s8 %v6200
        %v6202 = vlaneseq
        %v6203 = vshrl.u32 %v6202, 7
        %v6204 = vsub.s32 %v6201, %v6203
        %v6205 = vrot.slane %v6191, %v6204
        %v6206 = vcombine.high %v6198, %v6198
        %v6207 = vcombine.high %v6205, %v6205
        %v6209 = vunpack.c.l.s4 1966171168
        %v6210 = vunpack.c.0.s8 %v6209
        %v6211 = vlaneseq
        %v6212 = vshrl.u32 %v6211, 7
        %v6213 = vsub.s32 %v6210, %v6212
        %v6214 = vrot.slane %v6198, %v6213
        %v6216 = vunpack.c.l.s4 1966171168
        %v6217 = vunpack.c.0.s8 %v6216
        %v6218 = vlaneseq
        %v6219 = vshrl.u32 %v6218, 7
        %v6220 = vsub.s32 %v6217, %v6219
        %v6221 = vrot.slane %v6205, %v6220
        %v6223 = vunpack.c.l.s4 1966171168
        %v6224 = vunpack.c.0.s8 %v6223
        %v6225 = vlaneseq
        %v6226 = vshrl.u32 %v6225, 7
        %v6227 = vsub.s32 %v6224, %v6226
        %v6228 = vrot.slane %v6206, %v6227
        %v6230 = vunpack.c.l.s4 1966171168
        %v6231 = vunpack.c.0.s8 %v6230
        %v6232 = vlaneseq
        %v6233 = vshrl.u32 %v6232, 7
        %v6234 = vsub.s32 %v6231, %v6233
        %v6235 = vrot.slane %v6207, %v6234
        %v6236 = vcombine.high %v6214, %v6214
        %v6237 = vcombine.high %v6221, %v6221
        %v6238 = vcombine.high %v6228, %v6228
        %v6239 = vcombine.high %v6235, %v6235
        %v6240 = vcombine.high %v5478, %v5478
        %v6242 = vunpack.c.l.s4 1966171168
        %v6243 = vunpack.c.0.s8 %v6242
        %v6244 = vlaneseq
        %v6245 = vshrl.u32 %v6244, 7
        %v6246 = vsub.s32 %v6243, %v6245
        %v6247 = vrot.slane %v5478, %v6246
        %v6249 = vunpack.c.l.s4 1966171168
        %v6250 = vunpack.c.0.s8 %v6249
        %v6251 = vlaneseq
        %v6252 = vshrl.u32 %v6251, 7
        %v6253 = vsub.s32 %v6250, %v6252
        %v6254 = vrot.slane %v6240, %v6253
        %v6255 = vcombine.high %v6247, %v6247
        %v6256 = vcombine.high %v6254, %v6254
        %v6258 = vunpack.c.l.s4 1966171168
        %v6259 = vunpack.c.0.s8 %v6258
        %v6260 = vlaneseq
        %v6261 = vshrl.u32 %v6260, 7
        %v6262 = vsub.s32 %v6259, %v6261
        %v6263 = vrot.slane %v6247, %v6262
        %v6265 = vunpack.c.l.s4 1966171168
        %v6266 = vunpack.c.0.s8 %v6265
        %v6267 = vlaneseq
        %v6268 = vshrl.u32 %v6267, 7
        %v6269 = vsub.s32 %v6266, %v6268
        %v6270 = vrot.slane %v6254, %v6269
        %v6272 = vunpack.c.l.s4 1966171168
        %v6273 = vunpack.c.0.s8 %v6272
        %v6274 = vlaneseq
        %v6275 = vshrl.u32 %v6274, 7
        %v6276 = vsub.s32 %v6273, %v6275
        %v6277 = vrot.slane %v6255, %v6276
        %v6279 = vunpack.c.l.s4 1966171168
        %v6280 = vunpack.c.0.s8 %v6279
        %v6281 = vlaneseq
        %v6282 = vshrl.u32 %v6281, 7
        %v6283 = vsub.s32 %v6280, %v6282
        %v6284 = vrot.slane %v6256, %v6283
        %v6285 = vcombine.high %v6263, %v6263
        %v6286 = vcombine.high %v6270, %v6270
        %v6287 = vcombine.high %v6277, %v6277
        %v6288 = vcombine.high %v6284, %v6284
        %v6289 = vcombine.high %v5483, %v5483
        %v6291 = vunpack.c.l.s4 1966171168
        %v6292 = vunpack.c.0.s8 %v6291
        %v6293 = vlaneseq
        %v6294 = vshrl.u32 %v6293, 7
        %v6295 = vsub.s32 %v6292, %v6294
        %v6296 = vrot.slane %v5483, %v6295
        %v6298 = vunpack.c.l.s4 1966171168
        %v6299 = vunpack.c.0.s8 %v6298
        %v6300 = vlaneseq
        %v6301 = vshrl.u32 %v6300, 7
        %v6302 = vsub.s32 %v6299, %v6301
        %v6303 = vrot.slane %v6289, %v6302
        %v6304 = vcombine.high %v6296, %v6296
        %v6305 = vcombine.high %v6303, %v6303
        %v6307 = vunpack.c.l.s4 1966171168
        %v6308 = vunpack.c.0.s8 %v6307
        %v6309 = vlaneseq
        %v6310 = vshrl.u32 %v6309, 7
        %v6311 = vsub.s32 %v6308, %v6310
        %v6312 = vrot.slane %v6296, %v6311
        %v6314 = vunpack.c.l.s4 1966171168
        %v6315 = vunpack.c.0.s8 %v6314
        %v6316 = vlaneseq
        %v6317 = vshrl.u32 %v6316, 7
        %v6318 = vsub.s32 %v6315, %v6317
        %v6319 = vrot.slane %v6303, %v6318
        %v6321 = vunpack.c.l.s4 1966171168
        %v6322 = vunpack.c.0.s8 %v6321
        %v6323 = vlaneseq
        %v6324 = vshrl.u32 %v6323, 7
        %v6325 = vsub.s32 %v6322, %v6324
        %v6326 = vrot.slane %v6304, %v6325
        %v6328 = vunpack.c.l.s4 1966171168
        %v6329 = vunpack.c.0.s8 %v6328
        %v6330 = vlaneseq
        %v6331 = vshrl.u32 %v6330, 7
        %v6332 = vsub.s32 %v6329, %v6331
        %v6333 = vrot.slane %v6305, %v6332
        %v6334 = vcombine.high %v6312, %v6312
        %v6335 = vcombine.high %v6319, %v6319
        %v6336 = vcombine.high %v6326, %v6326
        %v6337 = vcombine.high %v6333, %v6333
        %v6474 = vcombine.low %v5528, %v5542
        %v6475 = vcombine.low %v5550, %v5552
        %v6476 = vcombine.low %v5535, %v5549
        %v6477 = vcombine.low %v5551, %v5553
        %v6479 = vunpack.c.l.s4 1966171168
        %v6480 = vunpack.c.0.s8 %v6479
        %v6481 = vlaneseq
        %v6482 = vshrl.u32 %v6481, 7
        %v6483 = vsub.s32 %v6480, %v6482
        %v6484 = vrot.slane %v6474, %v6483
        %v6486 = vunpack.c.l.s4 1966171168
        %v6487 = vunpack.c.0.s8 %v6486
        %v6488 = vlaneseq
        %v6489 = vshrl.u32 %v6488, 7
        %v6490 = vsub.s32 %v6487, %v6489
        %v6491 = vrot.slane %v6475, %v6490
        %v6493 = vunpack.c.l.s4 1966171168
        %v6494 = vunpack.c.0.s8 %v6493
        %v6495 = vlaneseq
        %v6496 = vshrl.u32 %v6495, 7
        %v6497 = vsub.s32 %v6494, %v6496
        %v6498 = vrot.slane %v6476, %v6497
        %v6500 = vunpack.c.l.s4 1966171168
        %v6501 = vunpack.c.0.s8 %v6500
        %v6502 = vlaneseq
        %v6503 = vshrl.u32 %v6502, 7
        %v6504 = vsub.s32 %v6501, %v6503
        %v6505 = vrot.slane %v6477, %v6504
        %v6506 = vcombine.low %v6484, %v6491
        %v6507 = vcombine.low %v6498, %v6505
        %v6509 = vunpack.c.l.s4 1966171168
        %v6510 = vunpack.c.0.s8 %v6509
        %v6511 = vlaneseq
        %v6512 = vshrl.u32 %v6511, 7
        %v6513 = vsub.s32 %v6510, %v6512
        %v6514 = vrot.slane %v6506, %v6513
        %v6516 = vunpack.c.l.s4 1966171168
        %v6517 = vunpack.c.0.s8 %v6516
        %v6518 = vlaneseq
        %v6519 = vshrl.u32 %v6518, 7
        %v6520 = vsub.s32 %v6517, %v6519
        %v6521 = vrot.slane %v6507, %v6520
        %v6522 = vcombine.low %v6514, %v6521
        %v6523 = vcombine.low %v5577, %v5591
        %v6524 = vcombine.low %v5599, %v5601
        %v6525 = vcombine.low %v5584, %v5598
        %v6526 = vcombine.low %v5600, %v5602
        %v6528 = vunpack.c.l.s4 1966171168
        %v6529 = vunpack.c.0.s8 %v6528
        %v6530 = vlaneseq
        %v6531 = vshrl.u32 %v6530, 7
        %v6532 = vsub.s32 %v6529, %v6531
        %v6533 = vrot.slane %v6523, %v6532
        %v6535 = vunpack.c.l.s4 1966171168
        %v6536 = vunpack.c.0.s8 %v6535
        %v6537 = vlaneseq
        %v6538 = vshrl.u32 %v6537, 7
        %v6539 = vsub.s32 %v6536, %v6538
        %v6540 = vrot.slane %v6524, %v6539
        %v6542 = vunpack.c.l.s4 1966171168
        %v6543 = vunpack.c.0.s8 %v6542
        %v6544 = vlaneseq
        %v6545 = vshrl.u32 %v6544, 7
        %v6546 = vsub.s32 %v6543, %v6545
        %v6547 = vrot.slane %v6525, %v6546
        %v6549 = vunpack.c.l.s4 1966171168
        %v6550 = vunpack.c.0.s8 %v6549
        %v6551 = vlaneseq
        %v6552 = vshrl.u32 %v6551, 7
        %v6553 = vsub.s32 %v6550, %v6552
        %v6554 = vrot.slane %v6526, %v6553
        %v6555 = vcombine.low %v6533, %v6540
        %v6556 = vcombine.low %v6547, %v6554
        %v6558 = vunpack.c.l.s4 1966171168
        %v6559 = vunpack.c.0.s8 %v6558
        %v6560 = vlaneseq
        %v6561 = vshrl.u32 %v6560, 7
        %v6562 = vsub.s32 %v6559, %v6561
        %v6563 = vrot.slane %v6555, %v6562
        %v6565 = vunpack.c.l.s4 1966171168
        %v6566 = vunpack.c.0.s8 %v6565
        %v6567 = vlaneseq
        %v6568 = vshrl.u32 %v6567, 7
        %v6569 = vsub.s32 %v6566, %v6568
        %v6570 = vrot.slane %v6556, %v6569
        %v6571 = vcombine.low %v6563, %v6570
        %v6573 = vunpack.c.l.s4 1966171168
        %v6574 = vunpack.c.0.s8 %v6573
        %v6575 = vlaneseq
        %v6576 = vshrl.u32 %v6575, 7
        %v6577 = vsub.s32 %v6574, %v6576
        %v6578 = vrot.slane %v5626, %v6577
        %v6580 = vunpack.c.l.s4 1966171168
        %v6581 = vunpack.c.0.s8 %v6580
        %v6582 = vlaneseq
        %v6583 = vshrl.u32 %v6582, 7
        %v6584 = vsub.s32 %v6581, %v6583
        %v6585 = vrot.slane %v6578, %v6584
        %v6586 = vcombine.low %v5640, %v5648
        %v6587 = vcombine.low %v5650, %v5633
        %v6588 = vcombine.low %v5647, %v5649
        %v6589 = vcombine.low %v5651, %v5675
        %v6591 = vunpack.c.l.s4 1966171168
        %v6592 = vunpack.c.0.s8 %v6591
        %v6593 = vlaneseq
        %v6594 = vshrl.u32 %v6593, 7
        %v6595 = vsub.s32 %v6592, %v6594
        %v6596 = vrot.slane %v6586, %v6595
        %v6598 = vunpack.c.l.s4 1966171168
        %v6599 = vunpack.c.0.s8 %v6598
        %v6600 = vlaneseq
        %v6601 = vshrl.u32 %v6600, 7
        %v6602 = vsub.s32 %v6599, %v6601
        %v6603 = vrot.slane %v6587, %v6602
        %v6605 = vunpack.c.l.s4 1966171168
        %v6606 = vunpack.c.0.s8 %v6605
        %v6607 = vlaneseq
        %v6608 = vshrl.u32 %v6607, 7
        %v6609 = vsub.s32 %v6606, %v6608
        %v6610 = vrot.slane %v6588, %v6609
        %v6612 = vunpack.c.l.s4 1966171168
        %v6613 = vunpack.c.0.s8 %v6612
        %v6614 = vlaneseq
        %v6615 = vshrl.u32 %v6614, 7
        %v6616 = vsub.s32 %v6613, %v6615
        %v6617 = vrot.slane %v6589, %v6616
        %v6618 = vcombine.low %v6596, %v6603
        %v6619 = vcombine.low %v6610, %v6617
        %v6621 = vunpack.c.l.s4 1966171168
        %v6622 = vunpack.c.0.s8 %v6621
        %v6623 = vlaneseq
        %v6624 = vshrl.u32 %v6623, 7
        %v6625 = vsub.s32 %v6622, %v6624
        %v6626 = vrot.slane %v6618, %v6625
        %v6628 = vunpack.c.l.s4 1966171168
        %v6629 = vunpack.c.0.s8 %v6628
        %v6630 = vlaneseq
        %v6631 = vshrl.u32 %v6630, 7
        %v6632 = vsub.s32 %v6629, %v6631
        %v6633 = vrot.slane %v6619, %v6632
        %v6634 = vcombine.low %v6626, %v6633
        %v6635 = vcombine.low %v5689, %v5697
        %v6636 = vcombine.low %v5699, %v5682
        %v6637 = vcombine.low %v5696, %v5698
        %v6638 = vcombine.low %v5700, %v5724
        %v6640 = vunpack.c.l.s4 1966171168
        %v6641 = vunpack.c.0.s8 %v6640
        %v6642 = vlaneseq
        %v6643 = vshrl.u32 %v6642, 7
        %v6644 = vsub.s32 %v6641, %v6643
        %v6645 = vrot.slane %v6635, %v6644
        %v6647 = vunpack.c.l.s4 1966171168
        %v6648 = vunpack.c.0.s8 %v6647
        %v6649 = vlaneseq
        %v6650 = vshrl.u32 %v6649, 7
        %v6651 = vsub.s32 %v6648, %v6650
        %v6652 = vrot.slane %v6636, %v6651
        %v6654 = vunpack.c.l.s4 1966171168
        %v6655 = vunpack.c.0.s8 %v6654
        %v6656 = vlaneseq
        %v6657 = vshrl.u32 %v6656, 7
        %v6658 = vsub.s32 %v6655, %v6657
        %v6659 = vrot.slane %v6637, %v6658
        %v6661 = vunpack.c.l.s4 1966171168
        %v6662 = vunpack.c.0.s8 %v6661
        %v6663 = vlaneseq
        %v6664 = vshrl.u32 %v6663, 7
        %v6665 = vsub.s32 %v6662, %v6664
        %v6666 = vrot.slane %v6638, %v6665
        %v6667 = vcombine.low %v6645, %v6652
        %v6668 = vcombine.low %v6659, %v6666
        %v6670 = vunpack.c.l.s4 1966171168
        %v6671 = vunpack.c.0.s8 %v6670
        %v6672 = vlaneseq
        %v6673 = vshrl.u32 %v6672, 7
        %v6674 = vsub.s32 %v6671, %v6673
        %v6675 = vrot.slane %v6667, %v6674
        %v6677 = vunpack.c.l.s4 1966171168
        %v6678 = vunpack.c.0.s8 %v6677
        %v6679 = vlaneseq
        %v6680 = vshrl.u32 %v6679, 7
        %v6681 = vsub.s32 %v6678, %v6680
        %v6682 = vrot.slane %v6668, %v6681
        %v6683 = vcombine.low %v6675, %v6682
        %v6685 = vunpack.c.l.s4 1966171168
        %v6686 = vunpack.c.0.s8 %v6685
        %v6687 = vlaneseq
        %v6688 = vshrl.u32 %v6687, 7
        %v6689 = vsub.s32 %v6686, %v6688
        %v6690 = vrot.slane %v5738, %v6689
        %v6692 = vunpack.c.l.s4 1966171168
        %v6693 = vunpack.c.0.s8 %v6692
        %v6694 = vlaneseq
        %v6695 = vshrl.u32 %v6694, 7
        %v6696 = vsub.s32 %v6693, %v6695
        %v6697 = vrot.slane %v6690, %v6696
        %v6698 = vcombine.low %v5746, %v5748
        %v6699 = vcombine.low %v5731, %v5745
        %v6700 = vcombine.low %v5747, %v5749
        %v6701 = vcombine.low %v5773, %v5787
        %v6703 = vunpack.c.l.s4 1966171168
        %v6704 = vunpack.c.0.s8 %v6703
        %v6705 = vlaneseq
        %v6706 = vshrl.u32 %v6705, 7
        %v6707 = vsub.s32 %v6704, %v6706
        %v6708 = vrot.slane %v6698, %v6707
        %v6710 = vunpack.c.l.s4 1966171168
        %v6711 = vunpack.c.0.s8 %v6710
        %v6712 = vlaneseq
        %v6713 = vshrl.u32 %v6712, 7
        %v6714 = vsub.s32 %v6711, %v6713
        %v6715 = vrot.slane %v6699, %v6714
        %v6717 = vunpack.c.l.s4 1966171168
        %v6718 = vunpack.c.0.s8 %v6717
        %v6719 = vlaneseq
        %v6720 = vshrl.u32 %v6719, 7
        %v6721 = vsub.s32 %v6718, %v6720
        %v6722 = vrot.slane %v6700, %v6721
        %v6724 = vunpack.c.l.s4 1966171168
        %v6725 = vunpack.c.0.s8 %v6724
        %v6726 = vlaneseq
        %v6727 = vshrl.u32 %v6726, 7
        %v6728 = vsub.s32 %v6725, %v6727
        %v6729 = vrot.slane %v6701, %v6728
        %v6730 = vcombine.low %v6708, %v6715
        %v6731 = vcombine.low %v6722, %v6729
        %v6733 = vunpack.c.l.s4 1966171168
        %v6734 = vunpack.c.0.s8 %v6733
        %v6735 = vlaneseq
        %v6736 = vshrl.u32 %v6735, 7
        %v6737 = vsub.s32 %v6734, %v6736
        %v6738 = vrot.slane %v6730, %v6737
        %v6740 = vunpack.c.l.s4 1966171168
        %v6741 = vunpack.c.0.s8 %v6740
        %v6742 = vlaneseq
        %v6743 = vshrl.u32 %v6742, 7
        %v6744 = vsub.s32 %v6741, %v6743
        %v6745 = vrot.slane %v6731, %v6744
        %v6746 = vcombine.low %v6738, %v6745
        %v6747 = vcombine.low %v5795, %v5797
        %v6748 = vcombine.low %v5780, %v5794
        %v6749 = vcombine.low %v5796, %v5798
        %v6750 = vcombine.low %v5822, %v5836
        %v6752 = vunpack.c.l.s4 1966171168
        %v6753 = vunpack.c.0.s8 %v6752
        %v6754 = vlaneseq
        %v6755 = vshrl.u32 %v6754, 7
        %v6756 = vsub.s32 %v6753, %v6755
        %v6757 = vrot.slane %v6747, %v6756
        %v6759 = vunpack.c.l.s4 1966171168
        %v6760 = vunpack.c.0.s8 %v6759
        %v6761 = vlaneseq
        %v6762 = vshrl.u32 %v6761, 7
        %v6763 = vsub.s32 %v6760, %v6762
        %v6764 = vrot.slane %v6748, %v6763
        %v6766 = vunpack.c.l.s4 1966171168
        %v6767 = vunpack.c.0.s8 %v6766
        %v6768 = vlaneseq
        %v6769 = vshrl.u32 %v6768, 7
        %v6770 = vsub.s32 %v6767, %v6769
        %v6771 = vrot.slane %v6749, %v6770
        %v6773 = vunpack.c.l.s4 1966171168
        %v6774 = vunpack.c.0.s8 %v6773
        %v6775 = vlaneseq
        %v6776 = vshrl.u32 %v6775, 7
        %v6777 = vsub.s32 %v6774, %v6776
        %v6778 = vrot.slane %v6750, %v6777
        %v6779 = vcombine.low %v6757, %v6764
        %v6780 = vcombine.low %v6771, %v6778
        %v6782 = vunpack.c.l.s4 1966171168
        %v6783 = vunpack.c.0.s8 %v6782
        %v6784 = vlaneseq
        %v6785 = vshrl.u32 %v6784, 7
        %v6786 = vsub.s32 %v6783, %v6785
        %v6787 = vrot.slane %v6779, %v6786
        %v6789 = vunpack.c.l.s4 1966171168
        %v6790 = vunpack.c.0.s8 %v6789
        %v6791 = vlaneseq
        %v6792 = vshrl.u32 %v6791, 7
        %v6793 = vsub.s32 %v6790, %v6792
        %v6794 = vrot.slane %v6780, %v6793
        %v6795 = vcombine.low %v6787, %v6794
        %v6797 = vunpack.c.l.s4 1966171168
        %v6798 = vunpack.c.0.s8 %v6797
        %v6799 = vlaneseq
        %v6800 = vshrl.u32 %v6799, 7
        %v6801 = vsub.s32 %v6798, %v6800
        %v6802 = vrot.slane %v5844, %v6801
        %v6804 = vunpack.c.l.s4 1966171168
        %v6805 = vunpack.c.0.s8 %v6804
        %v6806 = vlaneseq
        %v6807 = vshrl.u32 %v6806, 7
        %v6808 = vsub.s32 %v6805, %v6807
        %v6809 = vrot.slane %v6802, %v6808
        %v6810 = vcombine.low %v5846, %v5829
        %v6811 = vcombine.low %v5843, %v5845
        %v6812 = vcombine.low %v5847, %v5871
        %v6813 = vcombine.low %v5885, %v5893
        %v6815 = vunpack.c.l.s4 1966171168
        %v6816 = vunpack.c.0.s8 %v6815
        %v6817 = vlaneseq
        %v6818 = vshrl.u32 %v6817, 7
        %v6819 = vsub.s32 %v6816, %v6818
        %v6820 = vrot.slane %v6810, %v6819
        %v6822 = vunpack.c.l.s4 1966171168
        %v6823 = vunpack.c.0.s8 %v6822
        %v6824 = vlaneseq
        %v6825 = vshrl.u32 %v6824, 7
        %v6826 = vsub.s32 %v6823, %v6825
        %v6827 = vrot.slane %v6811, %v6826
        %v6829 = vunpack.c.l.s4 1966171168
        %v6830 = vunpack.c.0.s8 %v6829
        %v6831 = vlaneseq
        %v6832 = vshrl.u32 %v6831, 7
        %v6833 = vsub.s32 %v6830, %v6832
        %v6834 = vrot.slane %v6812, %v6833
        %v6836 = vunpack.c.l.s4 1966171168
        %v6837 = vunpack.c.0.s8 %v6836
        %v6838 = vlaneseq
        %v6839 = vshrl.u32 %v6838, 7
        %v6840 = vsub.s32 %v6837, %v6839
        %v6841 = vrot.slane %v6813, %v6840
        %v6842 = vcombine.low %v6820, %v6827
        %v6843 = vcombine.low %v6834, %v6841
        %v6845 = vunpack.c.l.s4 1966171168
        %v6846 = vunpack.c.0.s8 %v6845
        %v6847 = vlaneseq
        %v6848 = vshrl.u32 %v6847, 7
        %v6849 = vsub.s32 %v6846, %v6848
        %v6850 = vrot.slane %v6842, %v6849
        %v6852 = vunpack.c.l.s4 1966171168
        %v6853 = vunpack.c.0.s8 %v6852
        %v6854 = vlaneseq
        %v6855 = vshrl.u32 %v6854, 7
        %v6856 = vsub.s32 %v6853, %v6855
        %v6857 = vrot.slane %v6843, %v6856
        %v6858 = vcombine.low %v6850, %v6857
        %v6859 = vcombine.low %v5895, %v5878
        %v6860 = vcombine.low %v5892, %v5894
        %v6861 = vcombine.low %v5896, %v5920
        %v6862 = vcombine.low %v5934, %v5942
        %v6864 = vunpack.c.l.s4 1966171168
        %v6865 = vunpack.c.0.s8 %v6864
        %v6866 = vlaneseq
        %v6867 = vshrl.u32 %v6866, 7
        %v6868 = vsub.s32 %v6865, %v6867
        %v6869 = vrot.slane %v6859, %v6868
        %v6871 = vunpack.c.l.s4 1966171168
        %v6872 = vunpack.c.0.s8 %v6871
        %v6873 = vlaneseq
        %v6874 = vshrl.u32 %v6873, 7
        %v6875 = vsub.s32 %v6872, %v6874
        %v6876 = vrot.slane %v6860, %v6875
        %v6878 = vunpack.c.l.s4 1966171168
        %v6879 = vunpack.c.0.s8 %v6878
        %v6880 = vlaneseq
        %v6881 = vshrl.u32 %v6880, 7
        %v6882 = vsub.s32 %v6879, %v6881
        %v6883 = vrot.slane %v6861, %v6882
        %v6885 = vunpack.c.l.s4 1966171168
        %v6886 = vunpack.c.0.s8 %v6885
        %v6887 = vlaneseq
        %v6888 = vshrl.u32 %v6887, 7
        %v6889 = vsub.s32 %v6886, %v6888
        %v6890 = vrot.slane %v6862, %v6889
        %v6891 = vcombine.low %v6869, %v6876
        %v6892 = vcombine.low %v6883, %v6890
        %v6894 = vunpack.c.l.s4 1966171168
        %v6895 = vunpack.c.0.s8 %v6894
        %v6896 = vlaneseq
        %v6897 = vshrl.u32 %v6896, 7
        %v6898 = vsub.s32 %v6895, %v6897
        %v6899 = vrot.slane %v6891, %v6898
        %v6901 = vunpack.c.l.s4 1966171168
        %v6902 = vunpack.c.0.s8 %v6901
        %v6903 = vlaneseq
        %v6904 = vshrl.u32 %v6903, 7
        %v6905 = vsub.s32 %v6902, %v6904
        %v6906 = vrot.slane %v6892, %v6905
        %v6907 = vcombine.low %v6899, %v6906
        %v6909 = vunpack.c.l.s4 1966171168
        %v6910 = vunpack.c.0.s8 %v6909
        %v6911 = vlaneseq
        %v6912 = vshrl.u32 %v6911, 7
        %v6913 = vsub.s32 %v6910, %v6912
        %v6914 = vrot.slane %v5944, %v6913
        %v6916 = vunpack.c.l.s4 1966171168
        %v6917 = vunpack.c.0.s8 %v6916
        %v6918 = vlaneseq
        %v6919 = vshrl.u32 %v6918, 7
        %v6920 = vsub.s32 %v6917, %v6919
        %v6921 = vrot.slane %v6914, %v6920
        %v6922 = vcombine.low %v5927, %v5941
        %v6923 = vcombine.low %v5943, %v5945
        %v6924 = vcombine.low %v5969, %v5983
        %v6925 = vcombine.low %v5991, %v5993
        %v6927 = vunpack.c.l.s4 1966171168
        %v6928 = vunpack.c.0.s8 %v6927
        %v6929 = vlaneseq
        %v6930 = vshrl.u32 %v6929, 7
        %v6931 = vsub.s32 %v6928, %v6930
        %v6932 = vrot.slane %v6922, %v6931
        %v6934 = vunpack.c.l.s4 1966171168
        %v6935 = vunpack.c.0.s8 %v6934
        %v6936 = vlaneseq
        %v6937 = vshrl.u32 %v6936, 7
        %v6938 = vsub.s32 %v6935, %v6937
        %v6939 = vrot.slane %v6923, %v6938
        %v6941 = vunpack.c.l.s4 1966171168
        %v6942 = vunpack.c.0.s8 %v6941
        %v6943 = vlaneseq
        %v6944 = vshrl.u32 %v6943, 7
        %v6945 = vsub.s32 %v6942, %v6944
        %v6946 = vrot.slane %v6924, %v6945
        %v6948 = vunpack.c.l.s4 1966171168
        %v6949 = vunpack.c.0.s8 %v6948
        %v6950 = vlaneseq
        %v6951 = vshrl.u32 %v6950, 7
        %v6952 = vsub.s32 %v6949, %v6951
        %v6953 = vrot.slane %v6925, %v6952
        %v6954 = vcombine.low %v6932, %v6939
        %v6955 = vcombine.low %v6946, %v6953
        %v6957 = vunpack.c.l.s4 1966171168
        %v6958 = vunpack.c.0.s8 %v6957
        %v6959 = vlaneseq
        %v6960 = vshrl.u32 %v6959, 7
        %v6961 = vsub.s32 %v6958, %v6960
        %v6962 = vrot.slane %v6954, %v6961
        %v6964 = vunpack.c.l.s4 1966171168
        %v6965 = vunpack.c.0.s8 %v6964
        %v6966 = vlaneseq
        %v6967 = vshrl.u32 %v6966, 7
        %v6968 = vsub.s32 %v6965, %v6967
        %v6969 = vrot.slane %v6955, %v6968
        %v6970 = vcombine.low %v6962, %v6969
        %v6971 = vcombine.low %v5976, %v5990
        %v6972 = vcombine.low %v5992, %v5994
        %v6973 = vcombine.low %v6018, %v6032
        %v6974 = vcombine.low %v6040, %v6042
        %v6976 = vunpack.c.l.s4 1966171168
        %v6977 = vunpack.c.0.s8 %v6976
        %v6978 = vlaneseq
        %v6979 = vshrl.u32 %v6978, 7
        %v6980 = vsub.s32 %v6977, %v6979
        %v6981 = vrot.slane %v6971, %v6980
        %v6983 = vunpack.c.l.s4 1966171168
        %v6984 = vunpack.c.0.s8 %v6983
        %v6985 = vlaneseq
        %v6986 = vshrl.u32 %v6985, 7
        %v6987 = vsub.s32 %v6984, %v6986
        %v6988 = vrot.slane %v6972, %v6987
        %v6990 = vunpack.c.l.s4 1966171168
        %v6991 = vunpack.c.0.s8 %v6990
        %v6992 = vlaneseq
        %v6993 = vshrl.u32 %v6992, 7
        %v6994 = vsub.s32 %v6991, %v6993
        %v6995 = vrot.slane %v6973, %v6994
        %v6997 = vunpack.c.l.s4 1966171168
        %v6998 = vunpack.c.0.s8 %v6997
        %v6999 = vlaneseq
        %v7000 = vshrl.u32 %v6999, 7
        %v7001 = vsub.s32 %v6998, %v7000
        %v7002 = vrot.slane %v6974, %v7001
        %v7003 = vcombine.low %v6981, %v6988
        %v7004 = vcombine.low %v6995, %v7002
        %v7006 = vunpack.c.l.s4 1966171168
        %v7007 = vunpack.c.0.s8 %v7006
        %v7008 = vlaneseq
        %v7009 = vshrl.u32 %v7008, 7
        %v7010 = vsub.s32 %v7007, %v7009
        %v7011 = vrot.slane %v7003, %v7010
        %v7013 = vunpack.c.l.s4 1966171168
        %v7014 = vunpack.c.0.s8 %v7013
        %v7015 = vlaneseq
        %v7016 = vshrl.u32 %v7015, 7
        %v7017 = vsub.s32 %v7014, %v7016
        %v7018 = vrot.slane %v7004, %v7017
        %v7019 = vcombine.low %v7011, %v7018
        %v7021 = vunpack.c.l.s4 1966171168
        %v7022 = vunpack.c.0.s8 %v7021
        %v7023 = vlaneseq
        %v7024 = vshrl.u32 %v7023, 7
        %v7025 = vsub.s32 %v7022, %v7024
        %v7026 = vrot.slane %v6025, %v7025
        %v7028 = vunpack.c.l.s4 1966171168
        %v7029 = vunpack.c.0.s8 %v7028
        %v7030 = vlaneseq
        %v7031 = vshrl.u32 %v7030, 7
        %v7032 = vsub.s32 %v7029, %v7031
        %v7033 = vrot.slane %v7026, %v7032
        %v7034 = vcombine.low %v6039, %v6041
        %v7035 = vcombine.low %v6043, %v6067
        %v7036 = vcombine.low %v6081, %v6089
        %v7037 = vcombine.low %v6091, %v6074
        %v7039 = vunpack.c.l.s4 1966171168
        %v7040 = vunpack.c.0.s8 %v7039
        %v7041 = vlaneseq
        %v7042 = vshrl.u32 %v7041, 7
        %v7043 = vsub.s32 %v7040, %v7042
        %v7044 = vrot.slane %v7034, %v7043
        %v7046 = vunpack.c.l.s4 1966171168
        %v7047 = vunpack.c.0.s8 %v7046
        %v7048 = vlaneseq
        %v7049 = vshrl.u32 %v7048, 7
        %v7050 = vsub.s32 %v7047, %v7049
        %v7051 = vrot.slane %v7035, %v7050
        %v7053 = vunpack.c.l.s4 1966171168
        %v7054 = vunpack.c.0.s8 %v7053
        %v7055 = vlaneseq
        %v7056 = vshrl.u32 %v7055, 7
        %v7057 = vsub.s32 %v7054, %v7056
        %v7058 = vrot.slane %v7036, %v7057
        %v7060 = vunpack.c.l.s4 1966171168
        %v7061 = vunpack.c.0.s8 %v7060
        %v7062 = vlaneseq
        %v7063 = vshrl.u32 %v7062, 7
        %v7064 = vsub.s32 %v7061, %v7063
        %v7065 = vrot.slane %v7037, %v7064
        %v7066 = vcombine.low %v7044, %v7051
        %v7067 = vcombine.low %v7058, %v7065
        %v7069 = vunpack.c.l.s4 1966171168
        %v7070 = vunpack.c.0.s8 %v7069
        %v7071 = vlaneseq
        %v7072 = vshrl.u32 %v7071, 7
        %v7073 = vsub.s32 %v7070, %v7072
        %v7074 = vrot.slane %v7066, %v7073
        %v7076 = vunpack.c.l.s4 1966171168
        %v7077 = vunpack.c.0.s8 %v7076
        %v7078 = vlaneseq
        %v7079 = vshrl.u32 %v7078, 7
        %v7080 = vsub.s32 %v7077, %v7079
        %v7081 = vrot.slane %v7067, %v7080
        %v7082 = vcombine.low %v7074, %v7081
        %v7083 = vcombine.low %v6088, %v6090
        %v7084 = vcombine.low %v6092, %v6116
        %v7085 = vcombine.low %v6130, %v6138
        %v7086 = vcombine.low %v6140, %v6123
        %v7088 = vunpack.c.l.s4 1966171168
        %v7089 = vunpack.c.0.s8 %v7088
        %v7090 = vlaneseq
        %v7091 = vshrl.u32 %v7090, 7
        %v7092 = vsub.s32 %v7089, %v7091
        %v7093 = vrot.slane %v7083, %v7092
        %v7095 = vunpack.c.l.s4 1966171168
        %v7096 = vunpack.c.0.s8 %v7095
        %v7097 = vlaneseq
        %v7098 = vshrl.u32 %v7097, 7
        %v7099 = vsub.s32 %v7096, %v7098
        %v7100 = vrot.slane %v7084, %v7099
        %v7102 = vunpack.c.l.s4 1966171168
        %v7103 = vunpack.c.0.s8 %v7102
        %v7104 = vlaneseq
        %v7105 = vshrl.u32 %v7104, 7
        %v7106 = vsub.s32 %v7103, %v7105
        %v7107 = vrot.slane %v7085, %v7106
        %v7109 = vunpack.c.l.s4 1966171168
        %v7110 = vunpack.c.0.s8 %v7109
        %v7111 = vlaneseq
        %v7112 = vshrl.u32 %v7111, 7
        %v7113 = vsub.s32 %v7110, %v7112
        %v7114 = vrot.slane %v7086, %v7113
        %v7115 = vcombine.low %v7093, %v7100
        %v7116 = vcombine.low %v7107, %v7114
        %v7118 = vunpack.c.l.s4 1966171168
        %v7119 = vunpack.c.0.s8 %v7118
        %v7120 = vlaneseq
        %v7121 = vshrl.u32 %v7120, 7
        %v7122 = vsub.s32 %v7119, %v7121
        %v7123 = vrot.slane %v7115, %v7122
        %v7125 = vunpack.c.l.s4 1966171168
        %v7126 = vunpack.c.0.s8 %v7125
        %v7127 = vlaneseq
        %v7128 = vshrl.u32 %v7127, 7
        %v7129 = vsub.s32 %v7126, %v7128
        %v7130 = vrot.slane %v7116, %v7129
        %v7131 = vcombine.low %v7123, %v7130
        %v7133 = vunpack.c.l.s4 1966171168
        %v7134 = vunpack.c.0.s8 %v7133
        %v7135 = vlaneseq
        %v7136 = vshrl.u32 %v7135, 7
        %v7137 = vsub.s32 %v7134, %v7136
        %v7138 = vrot.slane %v6137, %v7137
        %v7140 = vunpack.c.l.s4 1966171168
        %v7141 = vunpack.c.0.s8 %v7140
        %v7142 = vlaneseq
        %v7143 = vshrl.u32 %v7142, 7
        %v7144 = vsub.s32 %v7141, %v7143
        %v7145 = vrot.slane %v7138, %v7144
        %v7146 = vcombine.low %v6139, %v6141
        %v7147 = vcombine.low %v6165, %v6179
        %v7148 = vcombine.low %v6187, %v6189
        %v7149 = vcombine.low %v6172, %v6186
        %v7151 = vunpack.c.l.s4 1966171168
        %v7152 = vunpack.c.0.s8 %v7151
        %v7153 = vlaneseq
        %v7154 = vshrl.u32 %v7153, 7
        %v7155 = vsub.s32 %v7152, %v7154
        %v7156 = vrot.slane %v7146, %v7155
        %v7158 = vunpack.c.l.s4 1966171168
        %v7159 = vunpack.c.0.s8 %v7158
        %v7160 = vlaneseq
        %v7161 = vshrl.u32 %v7160, 7
        %v7162 = vsub.s32 %v7159, %v7161
        %v7163 = vrot.slane %v7147, %v7162
        %v7165 = vunpack.c.l.s4 1966171168
        %v7166 = vunpack.c.0.s8 %v7165
        %v7167 = vlaneseq
        %v7168 = vshrl.u32 %v7167, 7
        %v7169 = vsub.s32 %v7166, %v7168
        %v7170 = vrot.slane %v7148, %v7169
        %v7172 = vunpack.c.l.s4 1966171168
        %v7173 = vunpack.c.0.s8 %v7172
        %v7174 = vlaneseq
        %v7175 = vshrl.u32 %v7174, 7
        %v7176 = vsub.s32 %v7173, %v7175
        %v7177 = vrot.slane %v7149, %v7176
        %v7178 = vcombine.low %v7156, %v7163
        %v7179 = vcombine.low %v7170, %v7177
        %v7181 = vunpack.c.l.s4 1966171168
        %v7182 = vunpack.c.0.s8 %v7181
        %v7183 = vlaneseq
        %v7184 = vshrl.u32 %v7183, 7
        %v7185 = vsub.s32 %v7182, %v7184
        %v7186 = vrot.slane %v7178, %v7185
        %v7188 = vunpack.c.l.s4 1966171168
        %v7189 = vunpack.c.0.s8 %v7188
        %v7190 = vlaneseq
        %v7191 = vshrl.u32 %v7190, 7
        %v7192 = vsub.s32 %v7189, %v7191
        %v7193 = vrot.slane %v7179, %v7192
        %v7194 = vcombine.low %v7186, %v7193
        %v7195 = vcombine.low %v6188, %v6190
        %v7196 = vcombine.low %v6214, %v6228
        %v7197 = vcombine.low %v6236, %v6238
        %v7198 = vcombine.low %v6221, %v6235
        %v7200 = vunpack.c.l.s4 1966171168
        %v7201 = vunpack.c.0.s8 %v7200
        %v7202 = vlaneseq
        %v7203 = vshrl.u32 %v7202, 7
        %v7204 = vsub.s32 %v7201, %v7203
        %v7205 = vrot.slane %v7195, %v7204
        %v7207 = vunpack.c.l.s4 1966171168
        %v7208 = vunpack.c.0.s8 %v7207
        %v7209 = vlaneseq
        %v7210 = vshrl.u32 %v7209, 7
        %v7211 = vsub.s32 %v7208, %v7210
        %v7212 = vrot.slane %v7196, %v7211
        %v7214 = vunpack.c.l.s4 1966171168
        %v7215 = vunpack.c.0.s8 %v7214
        %v7216 = vlaneseq
        %v7217 = vshrl.u32 %v7216, 7
        %v7218 = vsub.s32 %v7215, %v7217
        %v7219 = vrot.slane %v7197, %v7218
        %v7221 = vunpack.c.l.s4 1966171168
        %v7222 = vunpack.c.0.s8 %v7221
        %v7223 = vlaneseq
        %v7224 = vshrl.u32 %v7223, 7
        %v7225 = vsub.s32 %v7222, %v7224
        %v7226 = vrot.slane %v7198, %v7225
        %v7227 = vcombine.low %v7205, %v7212
        %v7228 = vcombine.low %v7219, %v7226
        %v7230 = vunpack.c.l.s4 1966171168
        %v7231 = vunpack.c.0.s8 %v7230
        %v7232 = vlaneseq
        %v7233 = vshrl.u32 %v7232, 7
        %v7234 = vsub.s32 %v7231, %v7233
        %v7235 = vrot.slane %v7227, %v7234
        %v7237 = vunpack.c.l.s4 1966171168
        %v7238 = vunpack.c.0.s8 %v7237
        %v7239 = vlaneseq
        %v7240 = vshrl.u32 %v7239, 7
        %v7241 = vsub.s32 %v7238, %v7240
        %v7242 = vrot.slane %v7228, %v7241
        %v7243 = vcombine.low %v7235, %v7242
        %v7245 = vunpack.c.l.s4 1966171168
        %v7246 = vunpack.c.0.s8 %v7245
        %v7247 = vlaneseq
        %v7248 = vshrl.u32 %v7247, 7
        %v7249 = vsub.s32 %v7246, %v7248
        %v7250 = vrot.slane %v6237, %v7249
        %v7252 = vunpack.c.l.s4 1966171168
        %v7253 = vunpack.c.0.s8 %v7252
        %v7254 = vlaneseq
        %v7255 = vshrl.u32 %v7254, 7
        %v7256 = vsub.s32 %v7253, %v7255
        %v7257 = vrot.slane %v7250, %v7256
        %v7258 = vcombine.low %v6239, %v6263
        %v7259 = vcombine.low %v6277, %v6285
        %v7260 = vcombine.low %v6287, %v6270
        %v7261 = vcombine.low %v6284, %v6286
        %v7263 = vunpack.c.l.s4 1966171168
        %v7264 = vunpack.c.0.s8 %v7263
        %v7265 = vlaneseq
        %v7266 = vshrl.u32 %v7265, 7
        %v7267 = vsub.s32 %v7264, %v7266
        %v7268 = vrot.slane %v7258, %v7267
        %v7270 = vunpack.c.l.s4 1966171168
        %v7271 = vunpack.c.0.s8 %v7270
        %v7272 = vlaneseq
        %v7273 = vshrl.u32 %v7272, 7
        %v7274 = vsub.s32 %v7271, %v7273
        %v7275 = vrot.slane %v7259, %v7274
        %v7277 = vunpack.c.l.s4 1966171168
        %v7278 = vunpack.c.0.s8 %v7277
        %v7279 = vlaneseq
        %v7280 = vshrl.u32 %v7279, 7
        %v7281 = vsub.s32 %v7278, %v7280
        %v7282 = vrot.slane %v7260, %v7281
        %v7284 = vunpack.c.l.s4 1966171168
        %v7285 = vunpack.c.0.s8 %v7284
        %v7286 = vlaneseq
        %v7287 = vshrl.u32 %v7286, 7
        %v7288 = vsub.s32 %v7285, %v7287
        %v7289 = vrot.slane %v7261, %v7288
        %v7290 = vcombine.low %v7268, %v7275
        %v7291 = vcombine.low %v7282, %v7289
        %v7293 = vunpack.c.l.s4 1966171168
        %v7294 = vunpack.c.0.s8 %v7293
        %v7295 = vlaneseq
        %v7296 = vshrl.u32 %v7295, 7
        %v7297 = vsub.s32 %v7294, %v7296
        %v7298 = vrot.slane %v7290, %v7297
        %v7300 = vunpack.c.l.s4 1966171168
        %v7301 = vunpack.c.0.s8 %v7300
        %v7302 = vlaneseq
        %v7303 = vshrl.u32 %v7302, 7
        %v7304 = vsub.s32 %v7301, %v7303
        %v7305 = vrot.slane %v7291, %v7304
        %v7306 = vcombine.low %v7298, %v7305
        %v7307 = vcombine.low %v6288, %v6312
        %v7308 = vcombine.low %v6326, %v6334
        %v7309 = vcombine.low %v6336, %v6319
        %v7310 = vcombine.low %v6333, %v6335
        %v7312 = vunpack.c.l.s4 1966171168
        %v7313 = vunpack.c.0.s8 %v7312
        %v7314 = vlaneseq
        %v7315 = vshrl.u32 %v7314, 7
        %v7316 = vsub.s32 %v7313, %v7315
        %v7317 = vrot.slane %v7307, %v7316
        %v7319 = vunpack.c.l.s4 1966171168
        %v7320 = vunpack.c.0.s8 %v7319
        %v7321 = vlaneseq
        %v7322 = vshrl.u32 %v7321, 7
        %v7323 = vsub.s32 %v7320, %v7322
        %v7324 = vrot.slane %v7308, %v7323
        %v7326 = vunpack.c.l.s4 1966171168
        %v7327 = vunpack.c.0.s8 %v7326
        %v7328 = vlaneseq
        %v7329 = vshrl.u32 %v7328, 7
        %v7330 = vsub.s32 %v7327, %v7329
        %v7331 = vrot.slane %v7309, %v7330
        %v7333 = vunpack.c.l.s4 1966171168
        %v7334 = vunpack.c.0.s8 %v7333
        %v7335 = vlaneseq
        %v7336 = vshrl.u32 %v7335, 7
        %v7337 = vsub.s32 %v7334, %v7336
        %v7338 = vrot.slane %v7310, %v7337
        %v7339 = vcombine.low %v7317, %v7324
        %v7340 = vcombine.low %v7331, %v7338
        %v7342 = vunpack.c.l.s4 1966171168
        %v7343 = vunpack.c.0.s8 %v7342
        %v7344 = vlaneseq
        %v7345 = vshrl.u32 %v7344, 7
        %v7346 = vsub.s32 %v7343, %v7345
        %v7347 = vrot.slane %v7339, %v7346
        %v7349 = vunpack.c.l.s4 1966171168
        %v7350 = vunpack.c.0.s8 %v7349
        %v7351 = vlaneseq
        %v7352 = vshrl.u32 %v7351, 7
        %v7353 = vsub.s32 %v7350, %v7352
        %v7354 = vrot.slane %v7340, %v7353
        %v7355 = vcombine.low %v7347, %v7354
        %v7357 = vunpack.c.l.s4 1966171168
        %v7358 = vunpack.c.0.s8 %v7357
        %v7359 = vlaneseq
        %v7360 = vshrl.u32 %v7359, 7
        %v7361 = vsub.s32 %v7358, %v7360
        %v7362 = vrot.slane %v6337, %v7361
        %v7364 = vunpack.c.l.s4 1966171168
        %v7365 = vunpack.c.0.s8 %v7364
        %v7366 = vlaneseq
        %v7367 = vshrl.u32 %v7366, 7
        %v7368 = vsub.s32 %v7365, %v7367
        %v7369 = vrot.slane %v7362, %v7368
        %vm7394 = vcmask 31744
        %v7395 = vsel %vm7394, %v6522, -inf
        %v7396 = vsel %vm7394, %v6571, -inf
        %v7397 = vmax.f32 %v7395, %v7396
        %vm7398 = vcmask 24576
        %v7399 = vsel %vm7398, %v6585, -inf
        %v7400 = vmax.f32 %v7397, %v7399
        %v7401 = vrot.slane %v7400, 4
        %v7402 = vmax.f32 %v7400, %v7401
        %v7403 = vrot.slane %v7402, 2
        %v7404 = vmax.f32 %v7402, %v7403
        %v7405 = vrot.slane %v7404, 1
        %v7406 = vmax.f32 %v7404, %v7405
        %v7407 = vsel %vm7394, %v6634, -inf
        %v7408 = vsel %vm7394, %v6683, -inf
        %v7409 = vmax.f32 %v7407, %v7408
        %v7410 = vsel %vm7398, %v6697, -inf
        %v7411 = vmax.f32 %v7409, %v7410
        %v7412 = vrot.slane %v7411, 4
        %v7413 = vmax.f32 %v7411, %v7412
        %v7414 = vrot.slane %v7413, 2
        %v7415 = vmax.f32 %v7413, %v7414
        %v7416 = vrot.slane %v7415, 1
        %v7417 = vmax.f32 %v7415, %v7416
        %v7418 = vsel %vm7394, %v6746, -inf
        %v7419 = vsel %vm7394, %v6795, -inf
        %v7420 = vmax.f32 %v7418, %v7419
        %v7421 = vsel %vm7398, %v6809, -inf
        %v7422 = vmax.f32 %v7420, %v7421
        %v7423 = vrot.slane %v7422, 4
        %v7424 = vmax.f32 %v7422, %v7423
        %v7425 = vrot.slane %v7424, 2
        %v7426 = vmax.f32 %v7424, %v7425
        %v7427 = vrot.slane %v7426, 1
        %v7428 = vmax.f32 %v7426, %v7427
        %v7429 = vsel %vm7394, %v6858, -inf
        %v7430 = vsel %vm7394, %v6907, -inf
        %v7431 = vmax.f32 %v7429, %v7430
        %v7432 = vsel %vm7398, %v6921, -inf
        %v7433 = vmax.f32 %v7431, %v7432
        %v7434 = vrot.slane %v7433, 4
        %v7435 = vmax.f32 %v7433, %v7434
        %v7436 = vrot.slane %v7435, 2
        %v7437 = vmax.f32 %v7435, %v7436
        %v7438 = vrot.slane %v7437, 1
        %v7439 = vmax.f32 %v7437, %v7438
        %v7440 = vsel %vm7394, %v6970, -inf
        %v7441 = vsel %vm7394, %v7019, -inf
        %v7442 = vmax.f32 %v7440, %v7441
        %v7443 = vsel %vm7398, %v7033, -inf
        %v7444 = vmax.f32 %v7442, %v7443
        %v7445 = vrot.slane %v7444, 4
        %v7446 = vmax.f32 %v7444, %v7445
        %v7447 = vrot.slane %v7446, 2
        %v7448 = vmax.f32 %v7446, %v7447
        %v7449 = vrot.slane %v7448, 1
        %v7450 = vmax.f32 %v7448, %v7449
        %v7451 = vsel %vm7394, %v7082, -inf
        %v7452 = vsel %vm7394, %v7131, -inf
        %v7453 = vmax.f32 %v7451, %v7452
        %v7454 = vsel %vm7398, %v7145, -inf
        %v7455 = vmax.f32 %v7453, %v7454
        %v7456 = vrot.slane %v7455, 4
        %v7457 = vmax.f32 %v7455, %v7456
        %v7458 = vrot.slane %v7457, 2
        %v7459 = vmax.f32 %v7457, %v7458
        %v7460 = vrot.slane %v7459, 1
        %v7461 = vmax.f32 %v7459, %v7460
        %v7462 = vsel %vm7394, %v7194, -inf
        %v7463 = vsel %vm7394, %v7243, -inf
        %v7464 = vmax.f32 %v7462, %v7463
        %v7465 = vsel %vm7398, %v7257, -inf
        %v7466 = vmax.f32 %v7464, %v7465
        %v7467 = vrot.slane %v7466, 4
        %v7468 = vmax.f32 %v7466, %v7467
        %v7469 = vrot.slane %v7468, 2
        %v7470 = vmax.f32 %v7468, %v7469
        %v7471 = vrot.slane %v7470, 1
        %v7472 = vmax.f32 %v7470, %v7471
        %v7473 = vsel %vm7394, %v7306, -inf
        %v7474 = vsel %vm7394, %v7355, -inf
        %v7475 = vmax.f32 %v7473, %v7474
        %v7476 = vsel %vm7398, %v7369, -inf
        %v7477 = vmax.f32 %v7475, %v7476
        %v7478 = vrot.slane %v7477, 4
        %v7479 = vmax.f32 %v7477, %v7478
        %v7480 = vrot.slane %v7479, 2
        %v7481 = vmax.f32 %v7479, %v7480
        %v7482 = vrot.slane %v7481, 1
        %v7483 = vmax.f32 %v7481, %v7482
        %v7492 = vcombine.high %v7406, %v7406
        %v7494 = vunpack.c.l.s4 1966171168
        %v7495 = vunpack.c.0.s8 %v7494
        %v7496 = vlaneseq
        %v7497 = vshrl.u32 %v7496, 7
        %v7498 = vsub.s32 %v7495, %v7497
        %v7499 = vrot.slane %v7406, %v7498
        %v7501 = vunpack.c.l.s4 1966171168
        %v7502 = vunpack.c.0.s8 %v7501
        %v7503 = vlaneseq
        %v7504 = vshrl.u32 %v7503, 7
        %v7505 = vsub.s32 %v7502, %v7504
        %v7506 = vrot.slane %v7492, %v7505
        %v7507 = vcombine.high %v7499, %v7499
        %v7508 = vcombine.high %v7506, %v7506
        %v7510 = vunpack.c.l.s4 1966171168
        %v7511 = vunpack.c.0.s8 %v7510
        %v7512 = vlaneseq
        %v7513 = vshrl.u32 %v7512, 7
        %v7514 = vsub.s32 %v7511, %v7513
        %v7515 = vrot.slane %v7499, %v7514
        %v7517 = vunpack.c.l.s4 1966171168
        %v7518 = vunpack.c.0.s8 %v7517
        %v7519 = vlaneseq
        %v7520 = vshrl.u32 %v7519, 7
        %v7521 = vsub.s32 %v7518, %v7520
        %v7522 = vrot.slane %v7506, %v7521
        %v7524 = vunpack.c.l.s4 1966171168
        %v7525 = vunpack.c.0.s8 %v7524
        %v7526 = vlaneseq
        %v7527 = vshrl.u32 %v7526, 7
        %v7528 = vsub.s32 %v7525, %v7527
        %v7529 = vrot.slane %v7507, %v7528
        %v7531 = vunpack.c.l.s4 1966171168
        %v7532 = vunpack.c.0.s8 %v7531
        %v7533 = vlaneseq
        %v7534 = vshrl.u32 %v7533, 7
        %v7535 = vsub.s32 %v7532, %v7534
        %v7536 = vrot.slane %v7508, %v7535
        %v7537 = vcombine.high %v7515, %v7515
        %v7538 = vcombine.high %v7522, %v7522
        %v7539 = vcombine.high %v7529, %v7529
        %v7540 = vcombine.high %v7536, %v7536
        %v7541 = vcombine.high %v7417, %v7417
        %v7543 = vunpack.c.l.s4 1966171168
        %v7544 = vunpack.c.0.s8 %v7543
        %v7545 = vlaneseq
        %v7546 = vshrl.u32 %v7545, 7
        %v7547 = vsub.s32 %v7544, %v7546
        %v7548 = vrot.slane %v7417, %v7547
        %v7550 = vunpack.c.l.s4 1966171168
        %v7551 = vunpack.c.0.s8 %v7550
        %v7552 = vlaneseq
        %v7553 = vshrl.u32 %v7552, 7
        %v7554 = vsub.s32 %v7551, %v7553
        %v7555 = vrot.slane %v7541, %v7554
        %v7556 = vcombine.high %v7548, %v7548
        %v7557 = vcombine.high %v7555, %v7555
        %v7559 = vunpack.c.l.s4 1966171168
        %v7560 = vunpack.c.0.s8 %v7559
        %v7561 = vlaneseq
        %v7562 = vshrl.u32 %v7561, 7
        %v7563 = vsub.s32 %v7560, %v7562
        %v7564 = vrot.slane %v7548, %v7563
        %v7566 = vunpack.c.l.s4 1966171168
        %v7567 = vunpack.c.0.s8 %v7566
        %v7568 = vlaneseq
        %v7569 = vshrl.u32 %v7568, 7
        %v7570 = vsub.s32 %v7567, %v7569
        %v7571 = vrot.slane %v7555, %v7570
        %v7573 = vunpack.c.l.s4 1966171168
        %v7574 = vunpack.c.0.s8 %v7573
        %v7575 = vlaneseq
        %v7576 = vshrl.u32 %v7575, 7
        %v7577 = vsub.s32 %v7574, %v7576
        %v7578 = vrot.slane %v7556, %v7577
        %v7580 = vunpack.c.l.s4 1966171168
        %v7581 = vunpack.c.0.s8 %v7580
        %v7582 = vlaneseq
        %v7583 = vshrl.u32 %v7582, 7
        %v7584 = vsub.s32 %v7581, %v7583
        %v7585 = vrot.slane %v7557, %v7584
        %v7586 = vcombine.high %v7564, %v7564
        %v7587 = vcombine.high %v7571, %v7571
        %v7588 = vcombine.high %v7578, %v7578
        %v7589 = vcombine.high %v7585, %v7585
        %v7590 = vcombine.high %v7428, %v7428
        %v7592 = vunpack.c.l.s4 1966171168
        %v7593 = vunpack.c.0.s8 %v7592
        %v7594 = vlaneseq
        %v7595 = vshrl.u32 %v7594, 7
        %v7596 = vsub.s32 %v7593, %v7595
        %v7597 = vrot.slane %v7428, %v7596
        %v7599 = vunpack.c.l.s4 1966171168
        %v7600 = vunpack.c.0.s8 %v7599
        %v7601 = vlaneseq
        %v7602 = vshrl.u32 %v7601, 7
        %v7603 = vsub.s32 %v7600, %v7602
        %v7604 = vrot.slane %v7590, %v7603
        %v7605 = vcombine.high %v7597, %v7597
        %v7606 = vcombine.high %v7604, %v7604
        %v7608 = vunpack.c.l.s4 1966171168
        %v7609 = vunpack.c.0.s8 %v7608
        %v7610 = vlaneseq
        %v7611 = vshrl.u32 %v7610, 7
        %v7612 = vsub.s32 %v7609, %v7611
        %v7613 = vrot.slane %v7597, %v7612
        %v7615 = vunpack.c.l.s4 1966171168
        %v7616 = vunpack.c.0.s8 %v7615
        %v7617 = vlaneseq
        %v7618 = vshrl.u32 %v7617, 7
        %v7619 = vsub.s32 %v7616, %v7618
        %v7620 = vrot.slane %v7604, %v7619
        %v7622 = vunpack.c.l.s4 1966171168
        %v7623 = vunpack.c.0.s8 %v7622
        %v7624 = vlaneseq
        %v7625 = vshrl.u32 %v7624, 7
        %v7626 = vsub.s32 %v7623, %v7625
        %v7627 = vrot.slane %v7605, %v7626
        %v7629 = vunpack.c.l.s4 1966171168
        %v7630 = vunpack.c.0.s8 %v7629
        %v7631 = vlaneseq
        %v7632 = vshrl.u32 %v7631, 7
        %v7633 = vsub.s32 %v7630, %v7632
        %v7634 = vrot.slane %v7606, %v7633
        %v7635 = vcombine.high %v7613, %v7613
        %v7636 = vcombine.high %v7620, %v7620
        %v7637 = vcombine.high %v7627, %v7627
        %v7638 = vcombine.high %v7634, %v7634
        %v7639 = vcombine.high %v7439, %v7439
        %v7641 = vunpack.c.l.s4 1966171168
        %v7642 = vunpack.c.0.s8 %v7641
        %v7643 = vlaneseq
        %v7644 = vshrl.u32 %v7643, 7
        %v7645 = vsub.s32 %v7642, %v7644
        %v7646 = vrot.slane %v7439, %v7645
        %v7648 = vunpack.c.l.s4 1966171168
        %v7649 = vunpack.c.0.s8 %v7648
        %v7650 = vlaneseq
        %v7651 = vshrl.u32 %v7650, 7
        %v7652 = vsub.s32 %v7649, %v7651
        %v7653 = vrot.slane %v7639, %v7652
        %v7654 = vcombine.high %v7646, %v7646
        %v7655 = vcombine.high %v7653, %v7653
        %v7657 = vunpack.c.l.s4 1966171168
        %v7658 = vunpack.c.0.s8 %v7657
        %v7659 = vlaneseq
        %v7660 = vshrl.u32 %v7659, 7
        %v7661 = vsub.s32 %v7658, %v7660
        %v7662 = vrot.slane %v7646, %v7661
        %v7664 = vunpack.c.l.s4 1966171168
        %v7665 = vunpack.c.0.s8 %v7664
        %v7666 = vlaneseq
        %v7667 = vshrl.u32 %v7666, 7
        %v7668 = vsub.s32 %v7665, %v7667
        %v7669 = vrot.slane %v7653, %v7668
        %v7671 = vunpack.c.l.s4 1966171168
        %v7672 = vunpack.c.0.s8 %v7671
        %v7673 = vlaneseq
        %v7674 = vshrl.u32 %v7673, 7
        %v7675 = vsub.s32 %v7672, %v7674
        %v7676 = vrot.slane %v7654, %v7675
        %v7678 = vunpack.c.l.s4 1966171168
        %v7679 = vunpack.c.0.s8 %v7678
        %v7680 = vlaneseq
        %v7681 = vshrl.u32 %v7680, 7
        %v7682 = vsub.s32 %v7679, %v7681
        %v7683 = vrot.slane %v7655, %v7682
        %v7684 = vcombine.high %v7662, %v7662
        %v7685 = vcombine.high %v7669, %v7669
        %v7686 = vcombine.high %v7676, %v7676
        %v7687 = vcombine.high %v7683, %v7683
        %v7688 = vcombine.high %v7450, %v7450
        %v7690 = vunpack.c.l.s4 1966171168
        %v7691 = vunpack.c.0.s8 %v7690
        %v7692 = vlaneseq
        %v7693 = vshrl.u32 %v7692, 7
        %v7694 = vsub.s32 %v7691, %v7693
        %v7695 = vrot.slane %v7450, %v7694
        %v7697 = vunpack.c.l.s4 1966171168
        %v7698 = vunpack.c.0.s8 %v7697
        %v7699 = vlaneseq
        %v7700 = vshrl.u32 %v7699, 7
        %v7701 = vsub.s32 %v7698, %v7700
        %v7702 = vrot.slane %v7688, %v7701
        %v7703 = vcombine.high %v7695, %v7695
        %v7704 = vcombine.high %v7702, %v7702
        %v7706 = vunpack.c.l.s4 1966171168
        %v7707 = vunpack.c.0.s8 %v7706
        %v7708 = vlaneseq
        %v7709 = vshrl.u32 %v7708, 7
        %v7710 = vsub.s32 %v7707, %v7709
        %v7711 = vrot.slane %v7695, %v7710
        %v7713 = vunpack.c.l.s4 1966171168
        %v7714 = vunpack.c.0.s8 %v7713
        %v7715 = vlaneseq
        %v7716 = vshrl.u32 %v7715, 7
        %v7717 = vsub.s32 %v7714, %v7716
        %v7718 = vrot.slane %v7702, %v7717
        %v7720 = vunpack.c.l.s4 1966171168
        %v7721 = vunpack.c.0.s8 %v7720
        %v7722 = vlaneseq
        %v7723 = vshrl.u32 %v7722, 7
        %v7724 = vsub.s32 %v7721, %v7723
        %v7725 = vrot.slane %v7703, %v7724
        %v7727 = vunpack.c.l.s4 1966171168
        %v7728 = vunpack.c.0.s8 %v7727
        %v7729 = vlaneseq
        %v7730 = vshrl.u32 %v7729, 7
        %v7731 = vsub.s32 %v7728, %v7730
        %v7732 = vrot.slane %v7704, %v7731
        %v7733 = vcombine.high %v7711, %v7711
        %v7734 = vcombine.high %v7718, %v7718
        %v7735 = vcombine.high %v7725, %v7725
        %v7736 = vcombine.high %v7732, %v7732
        %v7737 = vcombine.high %v7461, %v7461
        %v7739 = vunpack.c.l.s4 1966171168
        %v7740 = vunpack.c.0.s8 %v7739
        %v7741 = vlaneseq
        %v7742 = vshrl.u32 %v7741, 7
        %v7743 = vsub.s32 %v7740, %v7742
        %v7744 = vrot.slane %v7461, %v7743
        %v7746 = vunpack.c.l.s4 1966171168
        %v7747 = vunpack.c.0.s8 %v7746
        %v7748 = vlaneseq
        %v7749 = vshrl.u32 %v7748, 7
        %v7750 = vsub.s32 %v7747, %v7749
        %v7751 = vrot.slane %v7737, %v7750
        %v7752 = vcombine.high %v7744, %v7744
        %v7753 = vcombine.high %v7751, %v7751
        %v7755 = vunpack.c.l.s4 1966171168
        %v7756 = vunpack.c.0.s8 %v7755
        %v7757 = vlaneseq
        %v7758 = vshrl.u32 %v7757, 7
        %v7759 = vsub.s32 %v7756, %v7758
        %v7760 = vrot.slane %v7744, %v7759
        %v7762 = vunpack.c.l.s4 1966171168
        %v7763 = vunpack.c.0.s8 %v7762
        %v7764 = vlaneseq
        %v7765 = vshrl.u32 %v7764, 7
        %v7766 = vsub.s32 %v7763, %v7765
        %v7767 = vrot.slane %v7751, %v7766
        %v7769 = vunpack.c.l.s4 1966171168
        %v7770 = vunpack.c.0.s8 %v7769
        %v7771 = vlaneseq
        %v7772 = vshrl.u32 %v7771, 7
        %v7773 = vsub.s32 %v7770, %v7772
        %v7774 = vrot.slane %v7752, %v7773
        %v7776 = vunpack.c.l.s4 1966171168
        %v7777 = vunpack.c.0.s8 %v7776
        %v7778 = vlaneseq
        %v7779 = vshrl.u32 %v7778, 7
        %v7780 = vsub.s32 %v7777, %v7779
        %v7781 = vrot.slane %v7753, %v7780
        %v7782 = vcombine.high %v7760, %v7760
        %v7783 = vcombine.high %v7767, %v7767
        %v7784 = vcombine.high %v7774, %v7774
        %v7785 = vcombine.high %v7781, %v7781
        %v7786 = vcombine.high %v7472, %v7472
        %v7788 = vunpack.c.l.s4 1966171168
        %v7789 = vunpack.c.0.s8 %v7788
        %v7790 = vlaneseq
        %v7791 = vshrl.u32 %v7790, 7
        %v7792 = vsub.s32 %v7789, %v7791
        %v7793 = vrot.slane %v7472, %v7792
        %v7795 = vunpack.c.l.s4 1966171168
        %v7796 = vunpack.c.0.s8 %v7795
        %v7797 = vlaneseq
        %v7798 = vshrl.u32 %v7797, 7
        %v7799 = vsub.s32 %v7796, %v7798
        %v7800 = vrot.slane %v7786, %v7799
        %v7801 = vcombine.high %v7793, %v7793
        %v7802 = vcombine.high %v7800, %v7800
        %v7804 = vunpack.c.l.s4 1966171168
        %v7805 = vunpack.c.0.s8 %v7804
        %v7806 = vlaneseq
        %v7807 = vshrl.u32 %v7806, 7
        %v7808 = vsub.s32 %v7805, %v7807
        %v7809 = vrot.slane %v7793, %v7808
        %v7811 = vunpack.c.l.s4 1966171168
        %v7812 = vunpack.c.0.s8 %v7811
        %v7813 = vlaneseq
        %v7814 = vshrl.u32 %v7813, 7
        %v7815 = vsub.s32 %v7812, %v7814
        %v7816 = vrot.slane %v7800, %v7815
        %v7818 = vunpack.c.l.s4 1966171168
        %v7819 = vunpack.c.0.s8 %v7818
        %v7820 = vlaneseq
        %v7821 = vshrl.u32 %v7820, 7
        %v7822 = vsub.s32 %v7819, %v7821
        %v7823 = vrot.slane %v7801, %v7822
        %v7825 = vunpack.c.l.s4 1966171168
        %v7826 = vunpack.c.0.s8 %v7825
        %v7827 = vlaneseq
        %v7828 = vshrl.u32 %v7827, 7
        %v7829 = vsub.s32 %v7826, %v7828
        %v7830 = vrot.slane %v7802, %v7829
        %v7831 = vcombine.high %v7809, %v7809
        %v7832 = vcombine.high %v7816, %v7816
        %v7833 = vcombine.high %v7823, %v7823
        %v7834 = vcombine.high %v7830, %v7830
        %v7835 = vcombine.high %v7483, %v7483
        %v7837 = vunpack.c.l.s4 1966171168
        %v7838 = vunpack.c.0.s8 %v7837
        %v7839 = vlaneseq
        %v7840 = vshrl.u32 %v7839, 7
        %v7841 = vsub.s32 %v7838, %v7840
        %v7842 = vrot.slane %v7483, %v7841
        %v7844 = vunpack.c.l.s4 1966171168
        %v7845 = vunpack.c.0.s8 %v7844
        %v7846 = vlaneseq
        %v7847 = vshrl.u32 %v7846, 7
        %v7848 = vsub.s32 %v7845, %v7847
        %v7849 = vrot.slane %v7835, %v7848
        %v7850 = vcombine.high %v7842, %v7842
        %v7851 = vcombine.high %v7849, %v7849
        %v7853 = vunpack.c.l.s4 1966171168
        %v7854 = vunpack.c.0.s8 %v7853
        %v7855 = vlaneseq
        %v7856 = vshrl.u32 %v7855, 7
        %v7857 = vsub.s32 %v7854, %v7856
        %v7858 = vrot.slane %v7842, %v7857
        %v7860 = vunpack.c.l.s4 1966171168
        %v7861 = vunpack.c.0.s8 %v7860
        %v7862 = vlaneseq
        %v7863 = vshrl.u32 %v7862, 7
        %v7864 = vsub.s32 %v7861, %v7863
        %v7865 = vrot.slane %v7849, %v7864
        %v7867 = vunpack.c.l.s4 1966171168
        %v7868 = vunpack.c.0.s8 %v7867
        %v7869 = vlaneseq
        %v7870 = vshrl.u32 %v7869, 7
        %v7871 = vsub.s32 %v7868, %v7870
        %v7872 = vrot.slane %v7850, %v7871
        %v7874 = vunpack.c.l.s4 1966171168
        %v7875 = vunpack.c.0.s8 %v7874
        %v7876 = vlaneseq
        %v7877 = vshrl.u32 %v7876, 7
        %v7878 = vsub.s32 %v7875, %v7877
        %v7879 = vrot.slane %v7851, %v7878
        %v7880 = vcombine.high %v7858, %v7858
        %v7881 = vcombine.high %v7865, %v7865
        %v7882 = vcombine.high %v7872, %v7872
        %v7883 = vcombine.high %v7879, %v7879
        %v7948 = vsub.f32 %v5528, %v7515
        %v7949 = vsub.f32 %v5542, %v7529
        %v7950 = vsub.f32 %v5550, %v7537
        %v7951 = vsub.f32 %v5552, %v7539
        %v7952 = vsub.f32 %v5535, %v7522
        %v7953 = vsub.f32 %v5549, %v7536
        %v7954 = vsub.f32 %v5551, %v7538
        %v7955 = vsub.f32 %v5553, %v7540
        %v7956 = vsub.f32 %v5577, %v7515
        %v7957 = vsub.f32 %v5591, %v7529
        %v7958 = vsub.f32 %v5599, %v7537
        %v7959 = vsub.f32 %v5601, %v7539
        %v7960 = vsub.f32 %v5584, %v7522
        %v7961 = vsub.f32 %v5598, %v7536
        %v7962 = vsub.f32 %v5600, %v7538
        %v7963 = vsub.f32 %v5602, %v7540
        %v7964 = vsub.f32 %v5626, %v7515
        %v7965 = vsub.f32 %v5640, %v7564
        %v7966 = vsub.f32 %v5648, %v7578
        %v7967 = vsub.f32 %v5650, %v7586
        %v7968 = vsub.f32 %v5633, %v7588
        %v7969 = vsub.f32 %v5647, %v7571
        %v7970 = vsub.f32 %v5649, %v7585
        %v7971 = vsub.f32 %v5651, %v7587
        %v7972 = vsub.f32 %v5675, %v7589
        %v7973 = vsub.f32 %v5689, %v7564
        %v7974 = vsub.f32 %v5697, %v7578
        %v7975 = vsub.f32 %v5699, %v7586
        %v7976 = vsub.f32 %v5682, %v7588
        %v7977 = vsub.f32 %v5696, %v7571
        %v7978 = vsub.f32 %v5698, %v7585
        %v7979 = vsub.f32 %v5700, %v7587
        %v7980 = vsub.f32 %v5724, %v7589
        %v7981 = vsub.f32 %v5738, %v7564
        %v7982 = vsub.f32 %v5746, %v7613
        %v7983 = vsub.f32 %v5748, %v7627
        %v7984 = vsub.f32 %v5731, %v7635
        %v7985 = vsub.f32 %v5745, %v7637
        %v7986 = vsub.f32 %v5747, %v7620
        %v7987 = vsub.f32 %v5749, %v7634
        %v7988 = vsub.f32 %v5773, %v7636
        %v7989 = vsub.f32 %v5787, %v7638
        %v7990 = vsub.f32 %v5795, %v7613
        %v7991 = vsub.f32 %v5797, %v7627
        %v7992 = vsub.f32 %v5780, %v7635
        %v7993 = vsub.f32 %v5794, %v7637
        %v7994 = vsub.f32 %v5796, %v7620
        %v7995 = vsub.f32 %v5798, %v7634
        %v7996 = vsub.f32 %v5822, %v7636
        %v7997 = vsub.f32 %v5836, %v7638
        %v7998 = vsub.f32 %v5844, %v7613
        %v7999 = vsub.f32 %v5846, %v7662
        %v8000 = vsub.f32 %v5829, %v7676
        %v8001 = vsub.f32 %v5843, %v7684
        %v8002 = vsub.f32 %v5845, %v7686
        %v8003 = vsub.f32 %v5847, %v7669
        %v8004 = vsub.f32 %v5871, %v7683
        %v8005 = vsub.f32 %v5885, %v7685
        %v8006 = vsub.f32 %v5893, %v7687
        %v8007 = vsub.f32 %v5895, %v7662
        %v8008 = vsub.f32 %v5878, %v7676
        %v8009 = vsub.f32 %v5892, %v7684
        %v8010 = vsub.f32 %v5894, %v7686
        %v8011 = vsub.f32 %v5896, %v7669
        %v8012 = vsub.f32 %v5920, %v7683
        %v8013 = vsub.f32 %v5934, %v7685
        %v8014 = vsub.f32 %v5942, %v7687
        %v8015 = vsub.f32 %v5944, %v7662
        %v8016 = vsub.f32 %v5927, %v7711
        %v8017 = vsub.f32 %v5941, %v7725
        %v8018 = vsub.f32 %v5943, %v7733
        %v8019 = vsub.f32 %v5945, %v7735
        %v8020 = vsub.f32 %v5969, %v7718
        %v8021 = vsub.f32 %v5983, %v7732
        %v8022 = vsub.f32 %v5991, %v7734
        %v8023 = vsub.f32 %v5993, %v7736
        %v8024 = vsub.f32 %v5976, %v7711
        %v8025 = vsub.f32 %v5990, %v7725
        %v8026 = vsub.f32 %v5992, %v7733
        %v8027 = vsub.f32 %v5994, %v7735
        %v8028 = vsub.f32 %v6018, %v7718
        %v8029 = vsub.f32 %v6032, %v7732
        %v8030 = vsub.f32 %v6040, %v7734
        %v8031 = vsub.f32 %v6042, %v7736
        %v8032 = vsub.f32 %v6025, %v7711
        %v8033 = vsub.f32 %v6039, %v7760
        %v8034 = vsub.f32 %v6041, %v7774
        %v8035 = vsub.f32 %v6043, %v7782
        %v8036 = vsub.f32 %v6067, %v7784
        %v8037 = vsub.f32 %v6081, %v7767
        %v8038 = vsub.f32 %v6089, %v7781
        %v8039 = vsub.f32 %v6091, %v7783
        %v8040 = vsub.f32 %v6074, %v7785
        %v8041 = vsub.f32 %v6088, %v7760
        %v8042 = vsub.f32 %v6090, %v7774
        %v8043 = vsub.f32 %v6092, %v7782
        %v8044 = vsub.f32 %v6116, %v7784
        %v8045 = vsub.f32 %v6130, %v7767
        %v8046 = vsub.f32 %v6138, %v7781
        %v8047 = vsub.f32 %v6140, %v7783
        %v8048 = vsub.f32 %v6123, %v7785
        %v8049 = vsub.f32 %v6137, %v7760
        %v8050 = vsub.f32 %v6139, %v7809
        %v8051 = vsub.f32 %v6141, %v7823
        %v8052 = vsub.f32 %v6165, %v7831
        %v8053 = vsub.f32 %v6179, %v7833
        %v8054 = vsub.f32 %v6187, %v7816
        %v8055 = vsub.f32 %v6189, %v7830
        %v8056 = vsub.f32 %v6172, %v7832
        %v8057 = vsub.f32 %v6186, %v7834
        %v8058 = vsub.f32 %v6188, %v7809
        %v8059 = vsub.f32 %v6190, %v7823
        %v8060 = vsub.f32 %v6214, %v7831
        %v8061 = vsub.f32 %v6228, %v7833
        %v8062 = vsub.f32 %v6236, %v7816
        %v8063 = vsub.f32 %v6238, %v7830
        %v8064 = vsub.f32 %v6221, %v7832
        %v8065 = vsub.f32 %v6235, %v7834
        %v8066 = vsub.f32 %v6237, %v7809
        %v8067 = vsub.f32 %v6239, %v7858
        %v8068 = vsub.f32 %v6263, %v7872
        %v8069 = vsub.f32 %v6277, %v7880
        %v8070 = vsub.f32 %v6285, %v7882
        %v8071 = vsub.f32 %v6287, %v7865
        %v8072 = vsub.f32 %v6270, %v7879
        %v8073 = vsub.f32 %v6284, %v7881
        %v8074 = vsub.f32 %v6286, %v7883
        %v8075 = vsub.f32 %v6288, %v7858
        %v8076 = vsub.f32 %v6312, %v7872
        %v8077 = vsub.f32 %v6326, %v7880
        %v8078 = vsub.f32 %v6334, %v7882
        %v8079 = vsub.f32 %v6336, %v7865
        %v8080 = vsub.f32 %v6319, %v7879
        %v8081 = vsub.f32 %v6333, %v7881
        %v8082 = vsub.f32 %v6335, %v7883
        %v8083 = vsub.f32 %v6337, %v7858
        %v8084 = vmul.f32 %v7948, 1.442695
        %v8085 = vpow.pop %v8084
        %v8086 = vmul.f32 %v7949, 1.442695
        %v8087 = vpow.pop %v8086
        %v8088 = vmul.f32 %v7950, 1.442695
        %v8089 = vpow.pop %v8088
        %v8090 = vmul.f32 %v7951, 1.442695
        %v8091 = vpow.pop %v8090
        %v8092 = vmul.f32 %v7952, 1.442695
        %v8093 = vpow.pop %v8092
        %v8094 = vmul.f32 %v7953, 1.442695
        %v8095 = vpow.pop %v8094
        %v8096 = vmul.f32 %v7954, 1.442695
        %v8097 = vpow.pop %v8096
        %v8098 = vmul.f32 %v7955, 1.442695
        %v8099 = vpow.pop %v8098
        %v8100 = vmul.f32 %v7956, 1.442695
        %v8101 = vpow.pop %v8100
        %v8102 = vmul.f32 %v7957, 1.442695
        %v8103 = vpow.pop %v8102
        %v8104 = vmul.f32 %v7958, 1.442695
        %v8105 = vpow.pop %v8104
        %v8106 = vmul.f32 %v7959, 1.442695
        %v8107 = vpow.pop %v8106
        %v8108 = vmul.f32 %v7960, 1.442695
        %v8109 = vpow.pop %v8108
        %v8110 = vmul.f32 %v7961, 1.442695
        %v8111 = vpow.pop %v8110
        %v8112 = vmul.f32 %v7962, 1.442695
        %v8113 = vpow.pop %v8112
        %v8114 = vmul.f32 %v7963, 1.442695
        %v8115 = vpow.pop %v8114
        %v8116 = vmul.f32 %v7964, 1.442695
        %v8117 = vpow.pop %v8116
        %v8118 = vmul.f32 %v7965, 1.442695
        %v8119 = vpow.pop %v8118
        %v8120 = vmul.f32 %v7966, 1.442695
        %v8121 = vpow.pop %v8120
        %v8122 = vmul.f32 %v7967, 1.442695
        %v8123 = vpow.pop %v8122
        %v8124 = vmul.f32 %v7968, 1.442695
        %v8125 = vpow.pop %v8124
        %v8126 = vmul.f32 %v7969, 1.442695
        %v8127 = vpow.pop %v8126
        %v8128 = vmul.f32 %v7970, 1.442695
        %v8129 = vpow.pop %v8128
        %v8130 = vmul.f32 %v7971, 1.442695
        %v8131 = vpow.pop %v8130
        %v8132 = vmul.f32 %v7972, 1.442695
        %v8133 = vpow.pop %v8132
        %v8134 = vmul.f32 %v7973, 1.442695
        %v8135 = vpow.pop %v8134
        %v8136 = vmul.f32 %v7974, 1.442695
        %v8137 = vpow.pop %v8136
        %v8138 = vmul.f32 %v7975, 1.442695
        %v8139 = vpow.pop %v8138
        %v8140 = vmul.f32 %v7976, 1.442695
        %v8141 = vpow.pop %v8140
        %v8142 = vmul.f32 %v7977, 1.442695
        %v8143 = vpow.pop %v8142
        %v8144 = vmul.f32 %v7978, 1.442695
        %v8145 = vpow.pop %v8144
        %v8146 = vmul.f32 %v7979, 1.442695
        %v8147 = vpow.pop %v8146
        %v8148 = vmul.f32 %v7980, 1.442695
        %v8149 = vpow.pop %v8148
        %v8150 = vmul.f32 %v7981, 1.442695
        %v8151 = vpow.pop %v8150
        %v8152 = vmul.f32 %v7982, 1.442695
        %v8153 = vpow.pop %v8152
        %v8154 = vmul.f32 %v7983, 1.442695
        %v8155 = vpow.pop %v8154
        %v8156 = vmul.f32 %v7984, 1.442695
        %v8157 = vpow.pop %v8156
        %v8158 = vmul.f32 %v7985, 1.442695
        %v8159 = vpow.pop %v8158
        %v8160 = vmul.f32 %v7986, 1.442695
        %v8161 = vpow.pop %v8160
        %v8162 = vmul.f32 %v7987, 1.442695
        %v8163 = vpow.pop %v8162
        %v8164 = vmul.f32 %v7988, 1.442695
        %v8165 = vpow.pop %v8164
        %v8166 = vmul.f32 %v7989, 1.442695
        %v8167 = vpow.pop %v8166
        %v8168 = vmul.f32 %v7990, 1.442695
        %v8169 = vpow.pop %v8168
        %v8170 = vmul.f32 %v7991, 1.442695
        %v8171 = vpow.pop %v8170
        %v8172 = vmul.f32 %v7992, 1.442695
        %v8173 = vpow.pop %v8172
        %v8174 = vmul.f32 %v7993, 1.442695
        %v8175 = vpow.pop %v8174
        %v8176 = vmul.f32 %v7994, 1.442695
        %v8177 = vpow.pop %v8176
        %v8178 = vmul.f32 %v7995, 1.442695
        %v8179 = vpow.pop %v8178
        %v8180 = vmul.f32 %v7996, 1.442695
        %v8181 = vpow.pop %v8180
        %v8182 = vmul.f32 %v7997, 1.442695
        %v8183 = vpow.pop %v8182
        %v8184 = vmul.f32 %v7998, 1.442695
        %v8185 = vpow.pop %v8184
        %v8186 = vmul.f32 %v7999, 1.442695
        %v8187 = vpow.pop %v8186
        %v8188 = vmul.f32 %v8000, 1.442695
        %v8189 = vpow.pop %v8188
        %v8190 = vmul.f32 %v8001, 1.442695
        %v8191 = vpow.pop %v8190
        %v8192 = vmul.f32 %v8002, 1.442695
        %v8193 = vpow.pop %v8192
        %v8194 = vmul.f32 %v8003, 1.442695
        %v8195 = vpow.pop %v8194
        %v8196 = vmul.f32 %v8004, 1.442695
        %v8197 = vpow.pop %v8196
        %v8198 = vmul.f32 %v8005, 1.442695
        %v8199 = vpow.pop %v8198
        %v8200 = vmul.f32 %v8006, 1.442695
        %v8201 = vpow.pop %v8200
        %v8202 = vmul.f32 %v8007, 1.442695
        %v8203 = vpow.pop %v8202
        %v8204 = vmul.f32 %v8008, 1.442695
        %v8205 = vpow.pop %v8204
        %v8206 = vmul.f32 %v8009, 1.442695
        %v8207 = vpow.pop %v8206
        %v8208 = vmul.f32 %v8010, 1.442695
        %v8209 = vpow.pop %v8208
        %v8210 = vmul.f32 %v8011, 1.442695
        %v8211 = vpow.pop %v8210
        %v8212 = vmul.f32 %v8012, 1.442695
        %v8213 = vpow.pop %v8212
        %v8214 = vmul.f32 %v8013, 1.442695
        %v8215 = vpow.pop %v8214
        %v8216 = vmul.f32 %v8014, 1.442695
        %v8217 = vpow.pop %v8216
        %v8218 = vmul.f32 %v8015, 1.442695
        %v8219 = vpow.pop %v8218
        %v8220 = vmul.f32 %v8016, 1.442695
        %v8221 = vpow.pop %v8220
        %v8222 = vmul.f32 %v8017, 1.442695
        %v8223 = vpow.pop %v8222
        %v8224 = vmul.f32 %v8018, 1.442695
        %v8225 = vpow.pop %v8224
        %v8226 = vmul.f32 %v8019, 1.442695
        %v8227 = vpow.pop %v8226
        %v8228 = vmul.f32 %v8020, 1.442695
        %v8229 = vpow.pop %v8228
        %v8230 = vmul.f32 %v8021, 1.442695
        %v8231 = vpow.pop %v8230
        %v8232 = vmul.f32 %v8022, 1.442695
        %v8233 = vpow.pop %v8232
        %v8234 = vmul.f32 %v8023, 1.442695
        %v8235 = vpow.pop %v8234
        %v8236 = vmul.f32 %v8024, 1.442695
        %v8237 = vpow.pop %v8236
        %v8238 = vmul.f32 %v8025, 1.442695
        %v8239 = vpow.pop %v8238
        %v8240 = vmul.f32 %v8026, 1.442695
        %v8241 = vpow.pop %v8240
        %v8242 = vmul.f32 %v8027, 1.442695
        %v8243 = vpow.pop %v8242
        %v8244 = vmul.f32 %v8028, 1.442695
        %v8245 = vpow.pop %v8244
        %v8246 = vmul.f32 %v8029, 1.442695
        %v8247 = vpow.pop %v8246
        %v8248 = vmul.f32 %v8030, 1.442695
        %v8249 = vpow.pop %v8248
        %v8250 = vmul.f32 %v8031, 1.442695
        %v8251 = vpow.pop %v8250
        %v8252 = vmul.f32 %v8032, 1.442695
        %v8253 = vpow.pop %v8252
        %v8254 = vmul.f32 %v8033, 1.442695
        %v8255 = vpow.pop %v8254
        %v8256 = vmul.f32 %v8034, 1.442695
        %v8257 = vpow.pop %v8256
        %v8258 = vmul.f32 %v8035, 1.442695
        %v8259 = vpow.pop %v8258
        %v8260 = vmul.f32 %v8036, 1.442695
        %v8261 = vpow.pop %v8260
        %v8262 = vmul.f32 %v8037, 1.442695
        %v8263 = vpow.pop %v8262
        %v8264 = vmul.f32 %v8038, 1.442695
        %v8265 = vpow.pop %v8264
        %v8266 = vmul.f32 %v8039, 1.442695
        %v8267 = vpow.pop %v8266
        %v8268 = vmul.f32 %v8040, 1.442695
        %v8269 = vpow.pop %v8268
        %v8270 = vmul.f32 %v8041, 1.442695
        %v8271 = vpow.pop %v8270
        %v8272 = vmul.f32 %v8042, 1.442695
        %v8273 = vpow.pop %v8272
        %v8274 = vmul.f32 %v8043, 1.442695
        %v8275 = vpow.pop %v8274
        %v8276 = vmul.f32 %v8044, 1.442695
        %v8277 = vpow.pop %v8276
        %v8278 = vmul.f32 %v8045, 1.442695
        %v8279 = vpow.pop %v8278
        %v8280 = vmul.f32 %v8046, 1.442695
        %v8281 = vpow.pop %v8280
        %v8282 = vmul.f32 %v8047, 1.442695
        %v8283 = vpow.pop %v8282
        %v8284 = vmul.f32 %v8048, 1.442695
        %v8285 = vpow.pop %v8284
        %v8286 = vmul.f32 %v8049, 1.442695
        %v8287 = vpow.pop %v8286
        %v8288 = vmul.f32 %v8050, 1.442695
        %v8289 = vpow.pop %v8288
        %v8290 = vmul.f32 %v8051, 1.442695
        %v8291 = vpow.pop %v8290
        %v8292 = vmul.f32 %v8052, 1.442695
        %v8293 = vpow.pop %v8292
        %v8294 = vmul.f32 %v8053, 1.442695
        %v8295 = vpow.pop %v8294
        %v8296 = vmul.f32 %v8054, 1.442695
        %v8297 = vpow.pop %v8296
        %v8298 = vmul.f32 %v8055, 1.442695
        %v8299 = vpow.pop %v8298
        %v8300 = vmul.f32 %v8056, 1.442695
        %v8301 = vpow.pop %v8300
        %v8302 = vmul.f32 %v8057, 1.442695
        %v8303 = vpow.pop %v8302
        %v8304 = vmul.f32 %v8058, 1.442695
        %v8305 = vpow.pop %v8304
        %v8306 = vmul.f32 %v8059, 1.442695
        %v8307 = vpow.pop %v8306
        %v8308 = vmul.f32 %v8060, 1.442695
        %v8309 = vpow.pop %v8308
        %v8310 = vmul.f32 %v8061, 1.442695
        %v8311 = vpow.pop %v8310
        %v8312 = vmul.f32 %v8062, 1.442695
        %v8313 = vpow.pop %v8312
        %v8314 = vmul.f32 %v8063, 1.442695
        %v8315 = vpow.pop %v8314
        %v8316 = vmul.f32 %v8064, 1.442695
        %v8317 = vpow.pop %v8316
        %v8318 = vmul.f32 %v8065, 1.442695
        %v8319 = vpow.pop %v8318
        %v8320 = vmul.f32 %v8066, 1.442695
        %v8321 = vpow.pop %v8320
        %v8322 = vmul.f32 %v8067, 1.442695
        %v8323 = vpow.pop %v8322
        %v8324 = vmul.f32 %v8068, 1.442695
        %v8325 = vpow.pop %v8324
        %v8326 = vmul.f32 %v8069, 1.442695
        %v8327 = vpow.pop %v8326
        %v8328 = vmul.f32 %v8070, 1.442695
        %v8329 = vpow.pop %v8328
        %v8330 = vmul.f32 %v8071, 1.442695
        %v8331 = vpow.pop %v8330
        %v8332 = vmul.f32 %v8072, 1.442695
        %v8333 = vpow.pop %v8332
        %v8334 = vmul.f32 %v8073, 1.442695
        %v8335 = vpow.pop %v8334
        %v8336 = vmul.f32 %v8074, 1.442695
        %v8337 = vpow.pop %v8336
        %v8338 = vmul.f32 %v8075, 1.442695
        %v8339 = vpow.pop %v8338
        %v8340 = vmul.f32 %v8076, 1.442695
        %v8341 = vpow.pop %v8340
        %v8342 = vmul.f32 %v8077, 1.442695
        %v8343 = vpow.pop %v8342
        %v8344 = vmul.f32 %v8078, 1.442695
        %v8345 = vpow.pop %v8344
        %v8346 = vmul.f32 %v8079, 1.442695
        %v8347 = vpow.pop %v8346
        %v8348 = vmul.f32 %v8080, 1.442695
        %v8349 = vpow.pop %v8348
        %v8350 = vmul.f32 %v8081, 1.442695
        %v8351 = vpow.pop %v8350
        %v8352 = vmul.f32 %v8082, 1.442695
        %v8353 = vpow.pop %v8352
        %v8354 = vmul.f32 %v8083, 1.442695
        %v8355 = vpow.pop %v8354
        %v8492 = vcombine.low %v8085, %v8087
        %v8493 = vcombine.low %v8089, %v8091
        %v8494 = vcombine.low %v8093, %v8095
        %v8495 = vcombine.low %v8097, %v8099
        %v8497 = vunpack.c.l.s4 1966171168
        %v8498 = vunpack.c.0.s8 %v8497
        %v8499 = vlaneseq
        %v8500 = vshrl.u32 %v8499, 7
        %v8501 = vsub.s32 %v8498, %v8500
        %v8502 = vrot.slane %v8492, %v8501
        %v8504 = vunpack.c.l.s4 1966171168
        %v8505 = vunpack.c.0.s8 %v8504
        %v8506 = vlaneseq
        %v8507 = vshrl.u32 %v8506, 7
        %v8508 = vsub.s32 %v8505, %v8507
        %v8509 = vrot.slane %v8493, %v8508
        %v8511 = vunpack.c.l.s4 1966171168
        %v8512 = vunpack.c.0.s8 %v8511
        %v8513 = vlaneseq
        %v8514 = vshrl.u32 %v8513, 7
        %v8515 = vsub.s32 %v8512, %v8514
        %v8516 = vrot.slane %v8494, %v8515
        %v8518 = vunpack.c.l.s4 1966171168
        %v8519 = vunpack.c.0.s8 %v8518
        %v8520 = vlaneseq
        %v8521 = vshrl.u32 %v8520, 7
        %v8522 = vsub.s32 %v8519, %v8521
        %v8523 = vrot.slane %v8495, %v8522
        %v8524 = vcombine.low %v8502, %v8509
        %v8525 = vcombine.low %v8516, %v8523
        %v8527 = vunpack.c.l.s4 1966171168
        %v8528 = vunpack.c.0.s8 %v8527
        %v8529 = vlaneseq
        %v8530 = vshrl.u32 %v8529, 7
        %v8531 = vsub.s32 %v8528, %v8530
        %v8532 = vrot.slane %v8524, %v8531
        %v8534 = vunpack.c.l.s4 1966171168
        %v8535 = vunpack.c.0.s8 %v8534
        %v8536 = vlaneseq
        %v8537 = vshrl.u32 %v8536, 7
        %v8538 = vsub.s32 %v8535, %v8537
        %v8539 = vrot.slane %v8525, %v8538
        %v8540 = vcombine.low %v8532, %v8539
        %v8541 = vcombine.low %v8101, %v8103
        %v8542 = vcombine.low %v8105, %v8107
        %v8543 = vcombine.low %v8109, %v8111
        %v8544 = vcombine.low %v8113, %v8115
        %v8546 = vunpack.c.l.s4 1966171168
        %v8547 = vunpack.c.0.s8 %v8546
        %v8548 = vlaneseq
        %v8549 = vshrl.u32 %v8548, 7
        %v8550 = vsub.s32 %v8547, %v8549
        %v8551 = vrot.slane %v8541, %v8550
        %v8553 = vunpack.c.l.s4 1966171168
        %v8554 = vunpack.c.0.s8 %v8553
        %v8555 = vlaneseq
        %v8556 = vshrl.u32 %v8555, 7
        %v8557 = vsub.s32 %v8554, %v8556
        %v8558 = vrot.slane %v8542, %v8557
        %v8560 = vunpack.c.l.s4 1966171168
        %v8561 = vunpack.c.0.s8 %v8560
        %v8562 = vlaneseq
        %v8563 = vshrl.u32 %v8562, 7
        %v8564 = vsub.s32 %v8561, %v8563
        %v8565 = vrot.slane %v8543, %v8564
        %v8567 = vunpack.c.l.s4 1966171168
        %v8568 = vunpack.c.0.s8 %v8567
        %v8569 = vlaneseq
        %v8570 = vshrl.u32 %v8569, 7
        %v8571 = vsub.s32 %v8568, %v8570
        %v8572 = vrot.slane %v8544, %v8571
        %v8573 = vcombine.low %v8551, %v8558
        %v8574 = vcombine.low %v8565, %v8572
        %v8576 = vunpack.c.l.s4 1966171168
        %v8577 = vunpack.c.0.s8 %v8576
        %v8578 = vlaneseq
        %v8579 = vshrl.u32 %v8578, 7
        %v8580 = vsub.s32 %v8577, %v8579
        %v8581 = vrot.slane %v8573, %v8580
        %v8583 = vunpack.c.l.s4 1966171168
        %v8584 = vunpack.c.0.s8 %v8583
        %v8585 = vlaneseq
        %v8586 = vshrl.u32 %v8585, 7
        %v8587 = vsub.s32 %v8584, %v8586
        %v8588 = vrot.slane %v8574, %v8587
        %v8589 = vcombine.low %v8581, %v8588
        %v8591 = vunpack.c.l.s4 1966171168
        %v8592 = vunpack.c.0.s8 %v8591
        %v8593 = vlaneseq
        %v8594 = vshrl.u32 %v8593, 7
        %v8595 = vsub.s32 %v8592, %v8594
        %v8596 = vrot.slane %v8117, %v8595
        %v8598 = vunpack.c.l.s4 1966171168
        %v8599 = vunpack.c.0.s8 %v8598
        %v8600 = vlaneseq
        %v8601 = vshrl.u32 %v8600, 7
        %v8602 = vsub.s32 %v8599, %v8601
        %v8603 = vrot.slane %v8596, %v8602
        %v8604 = vcombine.low %v8119, %v8121
        %v8605 = vcombine.low %v8123, %v8125
        %v8606 = vcombine.low %v8127, %v8129
        %v8607 = vcombine.low %v8131, %v8133
        %v8609 = vunpack.c.l.s4 1966171168
        %v8610 = vunpack.c.0.s8 %v8609
        %v8611 = vlaneseq
        %v8612 = vshrl.u32 %v8611, 7
        %v8613 = vsub.s32 %v8610, %v8612
        %v8614 = vrot.slane %v8604, %v8613
        %v8616 = vunpack.c.l.s4 1966171168
        %v8617 = vunpack.c.0.s8 %v8616
        %v8618 = vlaneseq
        %v8619 = vshrl.u32 %v8618, 7
        %v8620 = vsub.s32 %v8617, %v8619
        %v8621 = vrot.slane %v8605, %v8620
        %v8623 = vunpack.c.l.s4 1966171168
        %v8624 = vunpack.c.0.s8 %v8623
        %v8625 = vlaneseq
        %v8626 = vshrl.u32 %v8625, 7
        %v8627 = vsub.s32 %v8624, %v8626
        %v8628 = vrot.slane %v8606, %v8627
        %v8630 = vunpack.c.l.s4 1966171168
        %v8631 = vunpack.c.0.s8 %v8630
        %v8632 = vlaneseq
        %v8633 = vshrl.u32 %v8632, 7
        %v8634 = vsub.s32 %v8631, %v8633
        %v8635 = vrot.slane %v8607, %v8634
        %v8636 = vcombine.low %v8614, %v8621
        %v8637 = vcombine.low %v8628, %v8635
        %v8639 = vunpack.c.l.s4 1966171168
        %v8640 = vunpack.c.0.s8 %v8639
        %v8641 = vlaneseq
        %v8642 = vshrl.u32 %v8641, 7
        %v8643 = vsub.s32 %v8640, %v8642
        %v8644 = vrot.slane %v8636, %v8643
        %v8646 = vunpack.c.l.s4 1966171168
        %v8647 = vunpack.c.0.s8 %v8646
        %v8648 = vlaneseq
        %v8649 = vshrl.u32 %v8648, 7
        %v8650 = vsub.s32 %v8647, %v8649
        %v8651 = vrot.slane %v8637, %v8650
        %v8652 = vcombine.low %v8644, %v8651
        %v8653 = vcombine.low %v8135, %v8137
        %v8654 = vcombine.low %v8139, %v8141
        %v8655 = vcombine.low %v8143, %v8145
        %v8656 = vcombine.low %v8147, %v8149
        %v8658 = vunpack.c.l.s4 1966171168
        %v8659 = vunpack.c.0.s8 %v8658
        %v8660 = vlaneseq
        %v8661 = vshrl.u32 %v8660, 7
        %v8662 = vsub.s32 %v8659, %v8661
        %v8663 = vrot.slane %v8653, %v8662
        %v8665 = vunpack.c.l.s4 1966171168
        %v8666 = vunpack.c.0.s8 %v8665
        %v8667 = vlaneseq
        %v8668 = vshrl.u32 %v8667, 7
        %v8669 = vsub.s32 %v8666, %v8668
        %v8670 = vrot.slane %v8654, %v8669
        %v8672 = vunpack.c.l.s4 1966171168
        %v8673 = vunpack.c.0.s8 %v8672
        %v8674 = vlaneseq
        %v8675 = vshrl.u32 %v8674, 7
        %v8676 = vsub.s32 %v8673, %v8675
        %v8677 = vrot.slane %v8655, %v8676
        %v8679 = vunpack.c.l.s4 1966171168
        %v8680 = vunpack.c.0.s8 %v8679
        %v8681 = vlaneseq
        %v8682 = vshrl.u32 %v8681, 7
        %v8683 = vsub.s32 %v8680, %v8682
        %v8684 = vrot.slane %v8656, %v8683
        %v8685 = vcombine.low %v8663, %v8670
        %v8686 = vcombine.low %v8677, %v8684
        %v8688 = vunpack.c.l.s4 1966171168
        %v8689 = vunpack.c.0.s8 %v8688
        %v8690 = vlaneseq
        %v8691 = vshrl.u32 %v8690, 7
        %v8692 = vsub.s32 %v8689, %v8691
        %v8693 = vrot.slane %v8685, %v8692
        %v8695 = vunpack.c.l.s4 1966171168
        %v8696 = vunpack.c.0.s8 %v8695
        %v8697 = vlaneseq
        %v8698 = vshrl.u32 %v8697, 7
        %v8699 = vsub.s32 %v8696, %v8698
        %v8700 = vrot.slane %v8686, %v8699
        %v8701 = vcombine.low %v8693, %v8700
        %v8703 = vunpack.c.l.s4 1966171168
        %v8704 = vunpack.c.0.s8 %v8703
        %v8705 = vlaneseq
        %v8706 = vshrl.u32 %v8705, 7
        %v8707 = vsub.s32 %v8704, %v8706
        %v8708 = vrot.slane %v8151, %v8707
        %v8710 = vunpack.c.l.s4 1966171168
        %v8711 = vunpack.c.0.s8 %v8710
        %v8712 = vlaneseq
        %v8713 = vshrl.u32 %v8712, 7
        %v8714 = vsub.s32 %v8711, %v8713
        %v8715 = vrot.slane %v8708, %v8714
        %v8716 = vcombine.low %v8153, %v8155
        %v8717 = vcombine.low %v8157, %v8159
        %v8718 = vcombine.low %v8161, %v8163
        %v8719 = vcombine.low %v8165, %v8167
        %v8721 = vunpack.c.l.s4 1966171168
        %v8722 = vunpack.c.0.s8 %v8721
        %v8723 = vlaneseq
        %v8724 = vshrl.u32 %v8723, 7
        %v8725 = vsub.s32 %v8722, %v8724
        %v8726 = vrot.slane %v8716, %v8725
        %v8728 = vunpack.c.l.s4 1966171168
        %v8729 = vunpack.c.0.s8 %v8728
        %v8730 = vlaneseq
        %v8731 = vshrl.u32 %v8730, 7
        %v8732 = vsub.s32 %v8729, %v8731
        %v8733 = vrot.slane %v8717, %v8732
        %v8735 = vunpack.c.l.s4 1966171168
        %v8736 = vunpack.c.0.s8 %v8735
        %v8737 = vlaneseq
        %v8738 = vshrl.u32 %v8737, 7
        %v8739 = vsub.s32 %v8736, %v8738
        %v8740 = vrot.slane %v8718, %v8739
        %v8742 = vunpack.c.l.s4 1966171168
        %v8743 = vunpack.c.0.s8 %v8742
        %v8744 = vlaneseq
        %v8745 = vshrl.u32 %v8744, 7
        %v8746 = vsub.s32 %v8743, %v8745
        %v8747 = vrot.slane %v8719, %v8746
        %v8748 = vcombine.low %v8726, %v8733
        %v8749 = vcombine.low %v8740, %v8747
        %v8751 = vunpack.c.l.s4 1966171168
        %v8752 = vunpack.c.0.s8 %v8751
        %v8753 = vlaneseq
        %v8754 = vshrl.u32 %v8753, 7
        %v8755 = vsub.s32 %v8752, %v8754
        %v8756 = vrot.slane %v8748, %v8755
        %v8758 = vunpack.c.l.s4 1966171168
        %v8759 = vunpack.c.0.s8 %v8758
        %v8760 = vlaneseq
        %v8761 = vshrl.u32 %v8760, 7
        %v8762 = vsub.s32 %v8759, %v8761
        %v8763 = vrot.slane %v8749, %v8762
        %v8764 = vcombine.low %v8756, %v8763
        %v8765 = vcombine.low %v8169, %v8171
        %v8766 = vcombine.low %v8173, %v8175
        %v8767 = vcombine.low %v8177, %v8179
        %v8768 = vcombine.low %v8181, %v8183
        %v8770 = vunpack.c.l.s4 1966171168
        %v8771 = vunpack.c.0.s8 %v8770
        %v8772 = vlaneseq
        %v8773 = vshrl.u32 %v8772, 7
        %v8774 = vsub.s32 %v8771, %v8773
        %v8775 = vrot.slane %v8765, %v8774
        %v8777 = vunpack.c.l.s4 1966171168
        %v8778 = vunpack.c.0.s8 %v8777
        %v8779 = vlaneseq
        %v8780 = vshrl.u32 %v8779, 7
        %v8781 = vsub.s32 %v8778, %v8780
        %v8782 = vrot.slane %v8766, %v8781
        %v8784 = vunpack.c.l.s4 1966171168
        %v8785 = vunpack.c.0.s8 %v8784
        %v8786 = vlaneseq
        %v8787 = vshrl.u32 %v8786, 7
        %v8788 = vsub.s32 %v8785, %v8787
        %v8789 = vrot.slane %v8767, %v8788
        %v8791 = vunpack.c.l.s4 1966171168
        %v8792 = vunpack.c.0.s8 %v8791
        %v8793 = vlaneseq
        %v8794 = vshrl.u32 %v8793, 7
        %v8795 = vsub.s32 %v8792, %v8794
        %v8796 = vrot.slane %v8768, %v8795
        %v8797 = vcombine.low %v8775, %v8782
        %v8798 = vcombine.low %v8789, %v8796
        %v8800 = vunpack.c.l.s4 1966171168
        %v8801 = vunpack.c.0.s8 %v8800
        %v8802 = vlaneseq
        %v8803 = vshrl.u32 %v8802, 7
        %v8804 = vsub.s32 %v8801, %v8803
        %v8805 = vrot.slane %v8797, %v8804
        %v8807 = vunpack.c.l.s4 1966171168
        %v8808 = vunpack.c.0.s8 %v8807
        %v8809 = vlaneseq
        %v8810 = vshrl.u32 %v8809, 7
        %v8811 = vsub.s32 %v8808, %v8810
        %v8812 = vrot.slane %v8798, %v8811
        %v8813 = vcombine.low %v8805, %v8812
        %v8815 = vunpack.c.l.s4 1966171168
        %v8816 = vunpack.c.0.s8 %v8815
        %v8817 = vlaneseq
        %v8818 = vshrl.u32 %v8817, 7
        %v8819 = vsub.s32 %v8816, %v8818
        %v8820 = vrot.slane %v8185, %v8819
        %v8822 = vunpack.c.l.s4 1966171168
        %v8823 = vunpack.c.0.s8 %v8822
        %v8824 = vlaneseq
        %v8825 = vshrl.u32 %v8824, 7
        %v8826 = vsub.s32 %v8823, %v8825
        %v8827 = vrot.slane %v8820, %v8826
        %v8828 = vcombine.low %v8187, %v8189
        %v8829 = vcombine.low %v8191, %v8193
        %v8830 = vcombine.low %v8195, %v8197
        %v8831 = vcombine.low %v8199, %v8201
        %v8833 = vunpack.c.l.s4 1966171168
        %v8834 = vunpack.c.0.s8 %v8833
        %v8835 = vlaneseq
        %v8836 = vshrl.u32 %v8835, 7
        %v8837 = vsub.s32 %v8834, %v8836
        %v8838 = vrot.slane %v8828, %v8837
        %v8840 = vunpack.c.l.s4 1966171168
        %v8841 = vunpack.c.0.s8 %v8840
        %v8842 = vlaneseq
        %v8843 = vshrl.u32 %v8842, 7
        %v8844 = vsub.s32 %v8841, %v8843
        %v8845 = vrot.slane %v8829, %v8844
        %v8847 = vunpack.c.l.s4 1966171168
        %v8848 = vunpack.c.0.s8 %v8847
        %v8849 = vlaneseq
        %v8850 = vshrl.u32 %v8849, 7
        %v8851 = vsub.s32 %v8848, %v8850
        %v8852 = vrot.slane %v8830, %v8851
        %v8854 = vunpack.c.l.s4 1966171168
        %v8855 = vunpack.c.0.s8 %v8854
        %v8856 = vlaneseq
        %v8857 = vshrl.u32 %v8856, 7
        %v8858 = vsub.s32 %v8855, %v8857
        %v8859 = vrot.slane %v8831, %v8858
        %v8860 = vcombine.low %v8838, %v8845
        %v8861 = vcombine.low %v8852, %v8859
        %v8863 = vunpack.c.l.s4 1966171168
        %v8864 = vunpack.c.0.s8 %v8863
        %v8865 = vlaneseq
        %v8866 = vshrl.u32 %v8865, 7
        %v8867 = vsub.s32 %v8864, %v8866
        %v8868 = vrot.slane %v8860, %v8867
        %v8870 = vunpack.c.l.s4 1966171168
        %v8871 = vunpack.c.0.s8 %v8870
        %v8872 = vlaneseq
        %v8873 = vshrl.u32 %v8872, 7
        %v8874 = vsub.s32 %v8871, %v8873
        %v8875 = vrot.slane %v8861, %v8874
        %v8876 = vcombine.low %v8868, %v8875
        %v8877 = vcombine.low %v8203, %v8205
        %v8878 = vcombine.low %v8207, %v8209
        %v8879 = vcombine.low %v8211, %v8213
        %v8880 = vcombine.low %v8215, %v8217
        %v8882 = vunpack.c.l.s4 1966171168
        %v8883 = vunpack.c.0.s8 %v8882
        %v8884 = vlaneseq
        %v8885 = vshrl.u32 %v8884, 7
        %v8886 = vsub.s32 %v8883, %v8885
        %v8887 = vrot.slane %v8877, %v8886
        %v8889 = vunpack.c.l.s4 1966171168
        %v8890 = vunpack.c.0.s8 %v8889
        %v8891 = vlaneseq
        %v8892 = vshrl.u32 %v8891, 7
        %v8893 = vsub.s32 %v8890, %v8892
        %v8894 = vrot.slane %v8878, %v8893
        %v8896 = vunpack.c.l.s4 1966171168
        %v8897 = vunpack.c.0.s8 %v8896
        %v8898 = vlaneseq
        %v8899 = vshrl.u32 %v8898, 7
        %v8900 = vsub.s32 %v8897, %v8899
        %v8901 = vrot.slane %v8879, %v8900
        %v8903 = vunpack.c.l.s4 1966171168
        %v8904 = vunpack.c.0.s8 %v8903
        %v8905 = vlaneseq
        %v8906 = vshrl.u32 %v8905, 7
        %v8907 = vsub.s32 %v8904, %v8906
        %v8908 = vrot.slane %v8880, %v8907
        %v8909 = vcombine.low %v8887, %v8894
        %v8910 = vcombine.low %v8901, %v8908
        %v8912 = vunpack.c.l.s4 1966171168
        %v8913 = vunpack.c.0.s8 %v8912
        %v8914 = vlaneseq
        %v8915 = vshrl.u32 %v8914, 7
        %v8916 = vsub.s32 %v8913, %v8915
        %v8917 = vrot.slane %v8909, %v8916
        %v8919 = vunpack.c.l.s4 1966171168
        %v8920 = vunpack.c.0.s8 %v8919
        %v8921 = vlaneseq
        %v8922 = vshrl.u32 %v8921, 7
        %v8923 = vsub.s32 %v8920, %v8922
        %v8924 = vrot.slane %v8910, %v8923
        %v8925 = vcombine.low %v8917, %v8924
        %v8927 = vunpack.c.l.s4 1966171168
        %v8928 = vunpack.c.0.s8 %v8927
        %v8929 = vlaneseq
        %v8930 = vshrl.u32 %v8929, 7
        %v8931 = vsub.s32 %v8928, %v8930
        %v8932 = vrot.slane %v8219, %v8931
        %v8934 = vunpack.c.l.s4 1966171168
        %v8935 = vunpack.c.0.s8 %v8934
        %v8936 = vlaneseq
        %v8937 = vshrl.u32 %v8936, 7
        %v8938 = vsub.s32 %v8935, %v8937
        %v8939 = vrot.slane %v8932, %v8938
        %v8940 = vcombine.low %v8221, %v8223
        %v8941 = vcombine.low %v8225, %v8227
        %v8942 = vcombine.low %v8229, %v8231
        %v8943 = vcombine.low %v8233, %v8235
        %v8945 = vunpack.c.l.s4 1966171168
        %v8946 = vunpack.c.0.s8 %v8945
        %v8947 = vlaneseq
        %v8948 = vshrl.u32 %v8947, 7
        %v8949 = vsub.s32 %v8946, %v8948
        %v8950 = vrot.slane %v8940, %v8949
        %v8952 = vunpack.c.l.s4 1966171168
        %v8953 = vunpack.c.0.s8 %v8952
        %v8954 = vlaneseq
        %v8955 = vshrl.u32 %v8954, 7
        %v8956 = vsub.s32 %v8953, %v8955
        %v8957 = vrot.slane %v8941, %v8956
        %v8959 = vunpack.c.l.s4 1966171168
        %v8960 = vunpack.c.0.s8 %v8959
        %v8961 = vlaneseq
        %v8962 = vshrl.u32 %v8961, 7
        %v8963 = vsub.s32 %v8960, %v8962
        %v8964 = vrot.slane %v8942, %v8963
        %v8966 = vunpack.c.l.s4 1966171168
        %v8967 = vunpack.c.0.s8 %v8966
        %v8968 = vlaneseq
        %v8969 = vshrl.u32 %v8968, 7
        %v8970 = vsub.s32 %v8967, %v8969
        %v8971 = vrot.slane %v8943, %v8970
        %v8972 = vcombine.low %v8950, %v8957
        %v8973 = vcombine.low %v8964, %v8971
        %v8975 = vunpack.c.l.s4 1966171168
        %v8976 = vunpack.c.0.s8 %v8975
        %v8977 = vlaneseq
        %v8978 = vshrl.u32 %v8977, 7
        %v8979 = vsub.s32 %v8976, %v8978
        %v8980 = vrot.slane %v8972, %v8979
        %v8982 = vunpack.c.l.s4 1966171168
        %v8983 = vunpack.c.0.s8 %v8982
        %v8984 = vlaneseq
        %v8985 = vshrl.u32 %v8984, 7
        %v8986 = vsub.s32 %v8983, %v8985
        %v8987 = vrot.slane %v8973, %v8986
        %v8988 = vcombine.low %v8980, %v8987
        %v8989 = vcombine.low %v8237, %v8239
        %v8990 = vcombine.low %v8241, %v8243
        %v8991 = vcombine.low %v8245, %v8247
        %v8992 = vcombine.low %v8249, %v8251
        %v8994 = vunpack.c.l.s4 1966171168
        %v8995 = vunpack.c.0.s8 %v8994
        %v8996 = vlaneseq
        %v8997 = vshrl.u32 %v8996, 7
        %v8998 = vsub.s32 %v8995, %v8997
        %v8999 = vrot.slane %v8989, %v8998
        %v9001 = vunpack.c.l.s4 1966171168
        %v9002 = vunpack.c.0.s8 %v9001
        %v9003 = vlaneseq
        %v9004 = vshrl.u32 %v9003, 7
        %v9005 = vsub.s32 %v9002, %v9004
        %v9006 = vrot.slane %v8990, %v9005
        %v9008 = vunpack.c.l.s4 1966171168
        %v9009 = vunpack.c.0.s8 %v9008
        %v9010 = vlaneseq
        %v9011 = vshrl.u32 %v9010, 7
        %v9012 = vsub.s32 %v9009, %v9011
        %v9013 = vrot.slane %v8991, %v9012
        %v9015 = vunpack.c.l.s4 1966171168
        %v9016 = vunpack.c.0.s8 %v9015
        %v9017 = vlaneseq
        %v9018 = vshrl.u32 %v9017, 7
        %v9019 = vsub.s32 %v9016, %v9018
        %v9020 = vrot.slane %v8992, %v9019
        %v9021 = vcombine.low %v8999, %v9006
        %v9022 = vcombine.low %v9013, %v9020
        %v9024 = vunpack.c.l.s4 1966171168
        %v9025 = vunpack.c.0.s8 %v9024
        %v9026 = vlaneseq
        %v9027 = vshrl.u32 %v9026, 7
        %v9028 = vsub.s32 %v9025, %v9027
        %v9029 = vrot.slane %v9021, %v9028
        %v9031 = vunpack.c.l.s4 1966171168
        %v9032 = vunpack.c.0.s8 %v9031
        %v9033 = vlaneseq
        %v9034 = vshrl.u32 %v9033, 7
        %v9035 = vsub.s32 %v9032, %v9034
        %v9036 = vrot.slane %v9022, %v9035
        %v9037 = vcombine.low %v9029, %v9036
        %v9039 = vunpack.c.l.s4 1966171168
        %v9040 = vunpack.c.0.s8 %v9039
        %v9041 = vlaneseq
        %v9042 = vshrl.u32 %v9041, 7
        %v9043 = vsub.s32 %v9040, %v9042
        %v9044 = vrot.slane %v8253, %v9043
        %v9046 = vunpack.c.l.s4 1966171168
        %v9047 = vunpack.c.0.s8 %v9046
        %v9048 = vlaneseq
        %v9049 = vshrl.u32 %v9048, 7
        %v9050 = vsub.s32 %v9047, %v9049
        %v9051 = vrot.slane %v9044, %v9050
        %v9052 = vcombine.low %v8255, %v8257
        %v9053 = vcombine.low %v8259, %v8261
        %v9054 = vcombine.low %v8263, %v8265
        %v9055 = vcombine.low %v8267, %v8269
        %v9057 = vunpack.c.l.s4 1966171168
        %v9058 = vunpack.c.0.s8 %v9057
        %v9059 = vlaneseq
        %v9060 = vshrl.u32 %v9059, 7
        %v9061 = vsub.s32 %v9058, %v9060
        %v9062 = vrot.slane %v9052, %v9061
        %v9064 = vunpack.c.l.s4 1966171168
        %v9065 = vunpack.c.0.s8 %v9064
        %v9066 = vlaneseq
        %v9067 = vshrl.u32 %v9066, 7
        %v9068 = vsub.s32 %v9065, %v9067
        %v9069 = vrot.slane %v9053, %v9068
        %v9071 = vunpack.c.l.s4 1966171168
        %v9072 = vunpack.c.0.s8 %v9071
        %v9073 = vlaneseq
        %v9074 = vshrl.u32 %v9073, 7
        %v9075 = vsub.s32 %v9072, %v9074
        %v9076 = vrot.slane %v9054, %v9075
        %v9078 = vunpack.c.l.s4 1966171168
        %v9079 = vunpack.c.0.s8 %v9078
        %v9080 = vlaneseq
        %v9081 = vshrl.u32 %v9080, 7
        %v9082 = vsub.s32 %v9079, %v9081
        %v9083 = vrot.slane %v9055, %v9082
        %v9084 = vcombine.low %v9062, %v9069
        %v9085 = vcombine.low %v9076, %v9083
        %v9087 = vunpack.c.l.s4 1966171168
        %v9088 = vunpack.c.0.s8 %v9087
        %v9089 = vlaneseq
        %v9090 = vshrl.u32 %v9089, 7
        %v9091 = vsub.s32 %v9088, %v9090
        %v9092 = vrot.slane %v9084, %v9091
        %v9094 = vunpack.c.l.s4 1966171168
        %v9095 = vunpack.c.0.s8 %v9094
        %v9096 = vlaneseq
        %v9097 = vshrl.u32 %v9096, 7
        %v9098 = vsub.s32 %v9095, %v9097
        %v9099 = vrot.slane %v9085, %v9098
        %v9100 = vcombine.low %v9092, %v9099
        %v9101 = vcombine.low %v8271, %v8273
        %v9102 = vcombine.low %v8275, %v8277
        %v9103 = vcombine.low %v8279, %v8281
        %v9104 = vcombine.low %v8283, %v8285
        %v9106 = vunpack.c.l.s4 1966171168
        %v9107 = vunpack.c.0.s8 %v9106
        %v9108 = vlaneseq
        %v9109 = vshrl.u32 %v9108, 7
        %v9110 = vsub.s32 %v9107, %v9109
        %v9111 = vrot.slane %v9101, %v9110
        %v9113 = vunpack.c.l.s4 1966171168
        %v9114 = vunpack.c.0.s8 %v9113
        %v9115 = vlaneseq
        %v9116 = vshrl.u32 %v9115, 7
        %v9117 = vsub.s32 %v9114, %v9116
        %v9118 = vrot.slane %v9102, %v9117
        %v9120 = vunpack.c.l.s4 1966171168
        %v9121 = vunpack.c.0.s8 %v9120
        %v9122 = vlaneseq
        %v9123 = vshrl.u32 %v9122, 7
        %v9124 = vsub.s32 %v9121, %v9123
        %v9125 = vrot.slane %v9103, %v9124
        %v9127 = vunpack.c.l.s4 1966171168
        %v9128 = vunpack.c.0.s8 %v9127
        %v9129 = vlaneseq
        %v9130 = vshrl.u32 %v9129, 7
        %v9131 = vsub.s32 %v9128, %v9130
        %v9132 = vrot.slane %v9104, %v9131
        %v9133 = vcombine.low %v9111, %v9118
        %v9134 = vcombine.low %v9125, %v9132
        %v9136 = vunpack.c.l.s4 1966171168
        %v9137 = vunpack.c.0.s8 %v9136
        %v9138 = vlaneseq
        %v9139 = vshrl.u32 %v9138, 7
        %v9140 = vsub.s32 %v9137, %v9139
        %v9141 = vrot.slane %v9133, %v9140
        %v9143 = vunpack.c.l.s4 1966171168
        %v9144 = vunpack.c.0.s8 %v9143
        %v9145 = vlaneseq
        %v9146 = vshrl.u32 %v9145, 7
        %v9147 = vsub.s32 %v9144, %v9146
        %v9148 = vrot.slane %v9134, %v9147
        %v9149 = vcombine.low %v9141, %v9148
        %v9151 = vunpack.c.l.s4 1966171168
        %v9152 = vunpack.c.0.s8 %v9151
        %v9153 = vlaneseq
        %v9154 = vshrl.u32 %v9153, 7
        %v9155 = vsub.s32 %v9152, %v9154
        %v9156 = vrot.slane %v8287, %v9155
        %v9158 = vunpack.c.l.s4 1966171168
        %v9159 = vunpack.c.0.s8 %v9158
        %v9160 = vlaneseq
        %v9161 = vshrl.u32 %v9160, 7
        %v9162 = vsub.s32 %v9159, %v9161
        %v9163 = vrot.slane %v9156, %v9162
        %v9164 = vcombine.low %v8289, %v8291
        %v9165 = vcombine.low %v8293, %v8295
        %v9166 = vcombine.low %v8297, %v8299
        %v9167 = vcombine.low %v8301, %v8303
        %v9169 = vunpack.c.l.s4 1966171168
        %v9170 = vunpack.c.0.s8 %v9169
        %v9171 = vlaneseq
        %v9172 = vshrl.u32 %v9171, 7
        %v9173 = vsub.s32 %v9170, %v9172
        %v9174 = vrot.slane %v9164, %v9173
        %v9176 = vunpack.c.l.s4 1966171168
        %v9177 = vunpack.c.0.s8 %v9176
        %v9178 = vlaneseq
        %v9179 = vshrl.u32 %v9178, 7
        %v9180 = vsub.s32 %v9177, %v9179
        %v9181 = vrot.slane %v9165, %v9180
        %v9183 = vunpack.c.l.s4 1966171168
        %v9184 = vunpack.c.0.s8 %v9183
        %v9185 = vlaneseq
        %v9186 = vshrl.u32 %v9185, 7
        %v9187 = vsub.s32 %v9184, %v9186
        %v9188 = vrot.slane %v9166, %v9187
        %v9190 = vunpack.c.l.s4 1966171168
        %v9191 = vunpack.c.0.s8 %v9190
        %v9192 = vlaneseq
        %v9193 = vshrl.u32 %v9192, 7
        %v9194 = vsub.s32 %v9191, %v9193
        %v9195 = vrot.slane %v9167, %v9194
        %v9196 = vcombine.low %v9174, %v9181
        %v9197 = vcombine.low %v9188, %v9195
        %v9199 = vunpack.c.l.s4 1966171168
        %v9200 = vunpack.c.0.s8 %v9199
        %v9201 = vlaneseq
        %v9202 = vshrl.u32 %v9201, 7
        %v9203 = vsub.s32 %v9200, %v9202
        %v9204 = vrot.slane %v9196, %v9203
        %v9206 = vunpack.c.l.s4 1966171168
        %v9207 = vunpack.c.0.s8 %v9206
        %v9208 = vlaneseq
        %v9209 = vshrl.u32 %v9208, 7
        %v9210 = vsub.s32 %v9207, %v9209
        %v9211 = vrot.slane %v9197, %v9210
        %v9212 = vcombine.low %v9204, %v9211
        %v9213 = vcombine.low %v8305, %v8307
        %v9214 = vcombine.low %v8309, %v8311
        %v9215 = vcombine.low %v8313, %v8315
        %v9216 = vcombine.low %v8317, %v8319
        %v9218 = vunpack.c.l.s4 1966171168
        %v9219 = vunpack.c.0.s8 %v9218
        %v9220 = vlaneseq
        %v9221 = vshrl.u32 %v9220, 7
        %v9222 = vsub.s32 %v9219, %v9221
        %v9223 = vrot.slane %v9213, %v9222
        %v9225 = vunpack.c.l.s4 1966171168
        %v9226 = vunpack.c.0.s8 %v9225
        %v9227 = vlaneseq
        %v9228 = vshrl.u32 %v9227, 7
        %v9229 = vsub.s32 %v9226, %v9228
        %v9230 = vrot.slane %v9214, %v9229
        %v9232 = vunpack.c.l.s4 1966171168
        %v9233 = vunpack.c.0.s8 %v9232
        %v9234 = vlaneseq
        %v9235 = vshrl.u32 %v9234, 7
        %v9236 = vsub.s32 %v9233, %v9235
        %v9237 = vrot.slane %v9215, %v9236
        %v9239 = vunpack.c.l.s4 1966171168
        %v9240 = vunpack.c.0.s8 %v9239
        %v9241 = vlaneseq
        %v9242 = vshrl.u32 %v9241, 7
        %v9243 = vsub.s32 %v9240, %v9242
        %v9244 = vrot.slane %v9216, %v9243
        %v9245 = vcombine.low %v9223, %v9230
        %v9246 = vcombine.low %v9237, %v9244
        %v9248 = vunpack.c.l.s4 1966171168
        %v9249 = vunpack.c.0.s8 %v9248
        %v9250 = vlaneseq
        %v9251 = vshrl.u32 %v9250, 7
        %v9252 = vsub.s32 %v9249, %v9251
        %v9253 = vrot.slane %v9245, %v9252
        %v9255 = vunpack.c.l.s4 1966171168
        %v9256 = vunpack.c.0.s8 %v9255
        %v9257 = vlaneseq
        %v9258 = vshrl.u32 %v9257, 7
        %v9259 = vsub.s32 %v9256, %v9258
        %v9260 = vrot.slane %v9246, %v9259
        %v9261 = vcombine.low %v9253, %v9260
        %v9263 = vunpack.c.l.s4 1966171168
        %v9264 = vunpack.c.0.s8 %v9263
        %v9265 = vlaneseq
        %v9266 = vshrl.u32 %v9265, 7
        %v9267 = vsub.s32 %v9264, %v9266
        %v9268 = vrot.slane %v8321, %v9267
        %v9270 = vunpack.c.l.s4 1966171168
        %v9271 = vunpack.c.0.s8 %v9270
        %v9272 = vlaneseq
        %v9273 = vshrl.u32 %v9272, 7
        %v9274 = vsub.s32 %v9271, %v9273
        %v9275 = vrot.slane %v9268, %v9274
        %v9276 = vcombine.low %v8323, %v8325
        %v9277 = vcombine.low %v8327, %v8329
        %v9278 = vcombine.low %v8331, %v8333
        %v9279 = vcombine.low %v8335, %v8337
        %v9281 = vunpack.c.l.s4 1966171168
        %v9282 = vunpack.c.0.s8 %v9281
        %v9283 = vlaneseq
        %v9284 = vshrl.u32 %v9283, 7
        %v9285 = vsub.s32 %v9282, %v9284
        %v9286 = vrot.slane %v9276, %v9285
        %v9288 = vunpack.c.l.s4 1966171168
        %v9289 = vunpack.c.0.s8 %v9288
        %v9290 = vlaneseq
        %v9291 = vshrl.u32 %v9290, 7
        %v9292 = vsub.s32 %v9289, %v9291
        %v9293 = vrot.slane %v9277, %v9292
        %v9295 = vunpack.c.l.s4 1966171168
        %v9296 = vunpack.c.0.s8 %v9295
        %v9297 = vlaneseq
        %v9298 = vshrl.u32 %v9297, 7
        %v9299 = vsub.s32 %v9296, %v9298
        %v9300 = vrot.slane %v9278, %v9299
        %v9302 = vunpack.c.l.s4 1966171168
        %v9303 = vunpack.c.0.s8 %v9302
        %v9304 = vlaneseq
        %v9305 = vshrl.u32 %v9304, 7
        %v9306 = vsub.s32 %v9303, %v9305
        %v9307 = vrot.slane %v9279, %v9306
        %v9308 = vcombine.low %v9286, %v9293
        %v9309 = vcombine.low %v9300, %v9307
        %v9311 = vunpack.c.l.s4 1966171168
        %v9312 = vunpack.c.0.s8 %v9311
        %v9313 = vlaneseq
        %v9314 = vshrl.u32 %v9313, 7
        %v9315 = vsub.s32 %v9312, %v9314
        %v9316 = vrot.slane %v9308, %v9315
        %v9318 = vunpack.c.l.s4 1966171168
        %v9319 = vunpack.c.0.s8 %v9318
        %v9320 = vlaneseq
        %v9321 = vshrl.u32 %v9320, 7
        %v9322 = vsub.s32 %v9319, %v9321
        %v9323 = vrot.slane %v9309, %v9322
        %v9324 = vcombine.low %v9316, %v9323
        %v9325 = vcombine.low %v8339, %v8341
        %v9326 = vcombine.low %v8343, %v8345
        %v9327 = vcombine.low %v8347, %v8349
        %v9328 = vcombine.low %v8351, %v8353
        %v9330 = vunpack.c.l.s4 1966171168
        %v9331 = vunpack.c.0.s8 %v9330
        %v9332 = vlaneseq
        %v9333 = vshrl.u32 %v9332, 7
        %v9334 = vsub.s32 %v9331, %v9333
        %v9335 = vrot.slane %v9325, %v9334
        %v9337 = vunpack.c.l.s4 1966171168
        %v9338 = vunpack.c.0.s8 %v9337
        %v9339 = vlaneseq
        %v9340 = vshrl.u32 %v9339, 7
        %v9341 = vsub.s32 %v9338, %v9340
        %v9342 = vrot.slane %v9326, %v9341
        %v9344 = vunpack.c.l.s4 1966171168
        %v9345 = vunpack.c.0.s8 %v9344
        %v9346 = vlaneseq
        %v9347 = vshrl.u32 %v9346, 7
        %v9348 = vsub.s32 %v9345, %v9347
        %v9349 = vrot.slane %v9327, %v9348
        %v9351 = vunpack.c.l.s4 1966171168
        %v9352 = vunpack.c.0.s8 %v9351
        %v9353 = vlaneseq
        %v9354 = vshrl.u32 %v9353, 7
        %v9355 = vsub.s32 %v9352, %v9354
        %v9356 = vrot.slane %v9328, %v9355
        %v9357 = vcombine.low %v9335, %v9342
        %v9358 = vcombine.low %v9349, %v9356
        %v9360 = vunpack.c.l.s4 1966171168
        %v9361 = vunpack.c.0.s8 %v9360
        %v9362 = vlaneseq
        %v9363 = vshrl.u32 %v9362, 7
        %v9364 = vsub.s32 %v9361, %v9363
        %v9365 = vrot.slane %v9357, %v9364
        %v9367 = vunpack.c.l.s4 1966171168
        %v9368 = vunpack.c.0.s8 %v9367
        %v9369 = vlaneseq
        %v9370 = vshrl.u32 %v9369, 7
        %v9371 = vsub.s32 %v9368, %v9370
        %v9372 = vrot.slane %v9358, %v9371
        %v9373 = vcombine.low %v9365, %v9372
        %v9375 = vunpack.c.l.s4 1966171168
        %v9376 = vunpack.c.0.s8 %v9375
        %v9377 = vlaneseq
        %v9378 = vshrl.u32 %v9377, 7
        %v9379 = vsub.s32 %v9376, %v9378
        %v9380 = vrot.slane %v8355, %v9379
        %v9382 = vunpack.c.l.s4 1966171168
        %v9383 = vunpack.c.0.s8 %v9382
        %v9384 = vlaneseq
        %v9385 = vshrl.u32 %v9384, 7
        %v9386 = vsub.s32 %v9383, %v9385
        %v9387 = vrot.slane %v9380, %v9386
        %v9412 = vsel %vm7394, %v8540, 0.0
        %v9413 = vsel %vm7394, %v8589, 0.0
        %v9414 = vadd.f32 %v9412, %v9413
        %v9415 = vsel %vm7398, %v8603, 0.0
        %v9416 = vadd.f32 %v9414, %v9415
        %v9417 = vrot.slane %v9416, 4
        %v9418 = vadd.f32 %v9416, %v9417
        %v9419 = vrot.slane %v9418, 2
        %v9420 = vadd.f32 %v9418, %v9419
        %v9421 = vrot.slane %v9420, 1
        %v9422 = vadd.f32 %v9420, %v9421
        %v9423 = vsel %vm7394, %v8652, 0.0
        %v9424 = vsel %vm7394, %v8701, 0.0
        %v9425 = vadd.f32 %v9423, %v9424
        %v9426 = vsel %vm7398, %v8715, 0.0
        %v9427 = vadd.f32 %v9425, %v9426
        %v9428 = vrot.slane %v9427, 4
        %v9429 = vadd.f32 %v9427, %v9428
        %v9430 = vrot.slane %v9429, 2
        %v9431 = vadd.f32 %v9429, %v9430
        %v9432 = vrot.slane %v9431, 1
        %v9433 = vadd.f32 %v9431, %v9432
        %v9434 = vsel %vm7394, %v8764, 0.0
        %v9435 = vsel %vm7394, %v8813, 0.0
        %v9436 = vadd.f32 %v9434, %v9435
        %v9437 = vsel %vm7398, %v8827, 0.0
        %v9438 = vadd.f32 %v9436, %v9437
        %v9439 = vrot.slane %v9438, 4
        %v9440 = vadd.f32 %v9438, %v9439
        %v9441 = vrot.slane %v9440, 2
        %v9442 = vadd.f32 %v9440, %v9441
        %v9443 = vrot.slane %v9442, 1
        %v9444 = vadd.f32 %v9442, %v9443
        %v9445 = vsel %vm7394, %v8876, 0.0
        %v9446 = vsel %vm7394, %v8925, 0.0
        %v9447 = vadd.f32 %v9445, %v9446
        %v9448 = vsel %vm7398, %v8939, 0.0
        %v9449 = vadd.f32 %v9447, %v9448
        %v9450 = vrot.slane %v9449, 4
        %v9451 = vadd.f32 %v9449, %v9450
        %v9452 = vrot.slane %v9451, 2
        %v9453 = vadd.f32 %v9451, %v9452
        %v9454 = vrot.slane %v9453, 1
        %v9455 = vadd.f32 %v9453, %v9454
        %v9456 = vsel %vm7394, %v8988, 0.0
        %v9457 = vsel %vm7394, %v9037, 0.0
        %v9458 = vadd.f32 %v9456, %v9457
        %v9459 = vsel %vm7398, %v9051, 0.0
        %v9460 = vadd.f32 %v9458, %v9459
        %v9461 = vrot.slane %v9460, 4
        %v9462 = vadd.f32 %v9460, %v9461
        %v9463 = vrot.slane %v9462, 2
        %v9464 = vadd.f32 %v9462, %v9463
        %v9465 = vrot.slane %v9464, 1
        %v9466 = vadd.f32 %v9464, %v9465
        %v9467 = vsel %vm7394, %v9100, 0.0
        %v9468 = vsel %vm7394, %v9149, 0.0
        %v9469 = vadd.f32 %v9467, %v9468
        %v9470 = vsel %vm7398, %v9163, 0.0
        %v9471 = vadd.f32 %v9469, %v9470
        %v9472 = vrot.slane %v9471, 4
        %v9473 = vadd.f32 %v9471, %v9472
        %v9474 = vrot.slane %v9473, 2
        %v9475 = vadd.f32 %v9473, %v9474
        %v9476 = vrot.slane %v9475, 1
        %v9477 = vadd.f32 %v9475, %v9476
        %v9478 = vsel %vm7394, %v9212, 0.0
        %v9479 = vsel %vm7394, %v9261, 0.0
        %v9480 = vadd.f32 %v9478, %v9479
        %v9481 = vsel %vm7398, %v9275, 0.0
        %v9482 = vadd.f32 %v9480, %v9481
        %v9483 = vrot.slane %v9482, 4
        %v9484 = vadd.f32 %v9482, %v9483
        %v9485 = vrot.slane %v9484, 2
        %v9486 = vadd.f32 %v9484, %v9485
        %v9487 = vrot.slane %v9486, 1
        %v9488 = vadd.f32 %v9486, %v9487
        %v9489 = vsel %vm7394, %v9324, 0.0
        %v9490 = vsel %vm7394, %v9373, 0.0
        %v9491 = vadd.f32 %v9489, %v9490
        %v9492 = vsel %vm7398, %v9387, 0.0
        %v9493 = vadd.f32 %v9491, %v9492
        %v9494 = vrot.slane %v9493, 4
        %v9495 = vadd.f32 %v9493, %v9494
        %v9496 = vrot.slane %v9495, 2
        %v9497 = vadd.f32 %v9495, %v9496
        %v9498 = vrot.slane %v9497, 1
        %v9499 = vadd.f32 %v9497, %v9498
        %v9500 = vrcp.pop %v9422
        %v9501 = vmul.f32 1.0, %v9500
        %v9502 = vrcp.pop %v9433
        %v9503 = vmul.f32 1.0, %v9502
        %v9504 = vrcp.pop %v9444
        %v9505 = vmul.f32 1.0, %v9504
        %v9506 = vrcp.pop %v9455
        %v9507 = vmul.f32 1.0, %v9506
        %v9508 = vrcp.pop %v9466
        %v9509 = vmul.f32 1.0, %v9508
        %v9510 = vrcp.pop %v9477
        %v9511 = vmul.f32 1.0, %v9510
        %v9512 = vrcp.pop %v9488
        %v9513 = vmul.f32 1.0, %v9512
        %v9514 = vrcp.pop %v9499
        %v9515 = vmul.f32 1.0, %v9514
        %v9524 = vcombine.high %v9501, %v9501
        %v9526 = vunpack.c.l.s4 1966171168
        %v9527 = vunpack.c.0.s8 %v9526
        %v9528 = vlaneseq
        %v9529 = vshrl.u32 %v9528, 7
        %v9530 = vsub.s32 %v9527, %v9529
        %v9531 = vrot.slane %v9501, %v9530
        %v9533 = vunpack.c.l.s4 1966171168
        %v9534 = vunpack.c.0.s8 %v9533
        %v9535 = vlaneseq
        %v9536 = vshrl.u32 %v9535, 7
        %v9537 = vsub.s32 %v9534, %v9536
        %v9538 = vrot.slane %v9524, %v9537
        %v9539 = vcombine.high %v9531, %v9531
        %v9540 = vcombine.high %v9538, %v9538
        %v9542 = vunpack.c.l.s4 1966171168
        %v9543 = vunpack.c.0.s8 %v9542
        %v9544 = vlaneseq
        %v9545 = vshrl.u32 %v9544, 7
        %v9546 = vsub.s32 %v9543, %v9545
        %v9547 = vrot.slane %v9531, %v9546
        %v9549 = vunpack.c.l.s4 1966171168
        %v9550 = vunpack.c.0.s8 %v9549
        %v9551 = vlaneseq
        %v9552 = vshrl.u32 %v9551, 7
        %v9553 = vsub.s32 %v9550, %v9552
        %v9554 = vrot.slane %v9538, %v9553
        %v9556 = vunpack.c.l.s4 1966171168
        %v9557 = vunpack.c.0.s8 %v9556
        %v9558 = vlaneseq
        %v9559 = vshrl.u32 %v9558, 7
        %v9560 = vsub.s32 %v9557, %v9559
        %v9561 = vrot.slane %v9539, %v9560
        %v9563 = vunpack.c.l.s4 1966171168
        %v9564 = vunpack.c.0.s8 %v9563
        %v9565 = vlaneseq
        %v9566 = vshrl.u32 %v9565, 7
        %v9567 = vsub.s32 %v9564, %v9566
        %v9568 = vrot.slane %v9540, %v9567
        %v9569 = vcombine.high %v9547, %v9547
        %v9570 = vcombine.high %v9554, %v9554
        %v9571 = vcombine.high %v9561, %v9561
        %v9572 = vcombine.high %v9568, %v9568
        %v9573 = vcombine.high %v9503, %v9503
        %v9575 = vunpack.c.l.s4 1966171168
        %v9576 = vunpack.c.0.s8 %v9575
        %v9577 = vlaneseq
        %v9578 = vshrl.u32 %v9577, 7
        %v9579 = vsub.s32 %v9576, %v9578
        %v9580 = vrot.slane %v9503, %v9579
        %v9582 = vunpack.c.l.s4 1966171168
        %v9583 = vunpack.c.0.s8 %v9582
        %v9584 = vlaneseq
        %v9585 = vshrl.u32 %v9584, 7
        %v9586 = vsub.s32 %v9583, %v9585
        %v9587 = vrot.slane %v9573, %v9586
        %v9588 = vcombine.high %v9580, %v9580
        %v9589 = vcombine.high %v9587, %v9587
        %v9591 = vunpack.c.l.s4 1966171168
        %v9592 = vunpack.c.0.s8 %v9591
        %v9593 = vlaneseq
        %v9594 = vshrl.u32 %v9593, 7
        %v9595 = vsub.s32 %v9592, %v9594
        %v9596 = vrot.slane %v9580, %v9595
        %v9598 = vunpack.c.l.s4 1966171168
        %v9599 = vunpack.c.0.s8 %v9598
        %v9600 = vlaneseq
        %v9601 = vshrl.u32 %v9600, 7
        %v9602 = vsub.s32 %v9599, %v9601
        %v9603 = vrot.slane %v9587, %v9602
        %v9605 = vunpack.c.l.s4 1966171168
        %v9606 = vunpack.c.0.s8 %v9605
        %v9607 = vlaneseq
        %v9608 = vshrl.u32 %v9607, 7
        %v9609 = vsub.s32 %v9606, %v9608
        %v9610 = vrot.slane %v9588, %v9609
        %v9612 = vunpack.c.l.s4 1966171168
        %v9613 = vunpack.c.0.s8 %v9612
        %v9614 = vlaneseq
        %v9615 = vshrl.u32 %v9614, 7
        %v9616 = vsub.s32 %v9613, %v9615
        %v9617 = vrot.slane %v9589, %v9616
        %v9618 = vcombine.high %v9596, %v9596
        %v9619 = vcombine.high %v9603, %v9603
        %v9620 = vcombine.high %v9610, %v9610
        %v9621 = vcombine.high %v9617, %v9617
        %v9622 = vcombine.high %v9505, %v9505
        %v9624 = vunpack.c.l.s4 1966171168
        %v9625 = vunpack.c.0.s8 %v9624
        %v9626 = vlaneseq
        %v9627 = vshrl.u32 %v9626, 7
        %v9628 = vsub.s32 %v9625, %v9627
        %v9629 = vrot.slane %v9505, %v9628
        %v9631 = vunpack.c.l.s4 1966171168
        %v9632 = vunpack.c.0.s8 %v9631
        %v9633 = vlaneseq
        %v9634 = vshrl.u32 %v9633, 7
        %v9635 = vsub.s32 %v9632, %v9634
        %v9636 = vrot.slane %v9622, %v9635
        %v9637 = vcombine.high %v9629, %v9629
        %v9638 = vcombine.high %v9636, %v9636
        %v9640 = vunpack.c.l.s4 1966171168
        %v9641 = vunpack.c.0.s8 %v9640
        %v9642 = vlaneseq
        %v9643 = vshrl.u32 %v9642, 7
        %v9644 = vsub.s32 %v9641, %v9643
        %v9645 = vrot.slane %v9629, %v9644
        %v9647 = vunpack.c.l.s4 1966171168
        %v9648 = vunpack.c.0.s8 %v9647
        %v9649 = vlaneseq
        %v9650 = vshrl.u32 %v9649, 7
        %v9651 = vsub.s32 %v9648, %v9650
        %v9652 = vrot.slane %v9636, %v9651
        %v9654 = vunpack.c.l.s4 1966171168
        %v9655 = vunpack.c.0.s8 %v9654
        %v9656 = vlaneseq
        %v9657 = vshrl.u32 %v9656, 7
        %v9658 = vsub.s32 %v9655, %v9657
        %v9659 = vrot.slane %v9637, %v9658
        %v9661 = vunpack.c.l.s4 1966171168
        %v9662 = vunpack.c.0.s8 %v9661
        %v9663 = vlaneseq
        %v9664 = vshrl.u32 %v9663, 7
        %v9665 = vsub.s32 %v9662, %v9664
        %v9666 = vrot.slane %v9638, %v9665
        %v9667 = vcombine.high %v9645, %v9645
        %v9668 = vcombine.high %v9652, %v9652
        %v9669 = vcombine.high %v9659, %v9659
        %v9670 = vcombine.high %v9666, %v9666
        %v9671 = vcombine.high %v9507, %v9507
        %v9673 = vunpack.c.l.s4 1966171168
        %v9674 = vunpack.c.0.s8 %v9673
        %v9675 = vlaneseq
        %v9676 = vshrl.u32 %v9675, 7
        %v9677 = vsub.s32 %v9674, %v9676
        %v9678 = vrot.slane %v9507, %v9677
        %v9680 = vunpack.c.l.s4 1966171168
        %v9681 = vunpack.c.0.s8 %v9680
        %v9682 = vlaneseq
        %v9683 = vshrl.u32 %v9682, 7
        %v9684 = vsub.s32 %v9681, %v9683
        %v9685 = vrot.slane %v9671, %v9684
        %v9686 = vcombine.high %v9678, %v9678
        %v9687 = vcombine.high %v9685, %v9685
        %v9689 = vunpack.c.l.s4 1966171168
        %v9690 = vunpack.c.0.s8 %v9689
        %v9691 = vlaneseq
        %v9692 = vshrl.u32 %v9691, 7
        %v9693 = vsub.s32 %v9690, %v9692
        %v9694 = vrot.slane %v9678, %v9693
        %v9696 = vunpack.c.l.s4 1966171168
        %v9697 = vunpack.c.0.s8 %v9696
        %v9698 = vlaneseq
        %v9699 = vshrl.u32 %v9698, 7
        %v9700 = vsub.s32 %v9697, %v9699
        %v9701 = vrot.slane %v9685, %v9700
        %v9703 = vunpack.c.l.s4 1966171168
        %v9704 = vunpack.c.0.s8 %v9703
        %v9705 = vlaneseq
        %v9706 = vshrl.u32 %v9705, 7
        %v9707 = vsub.s32 %v9704, %v9706
        %v9708 = vrot.slane %v9686, %v9707
        %v9710 = vunpack.c.l.s4 1966171168
        %v9711 = vunpack.c.0.s8 %v9710
        %v9712 = vlaneseq
        %v9713 = vshrl.u32 %v9712, 7
        %v9714 = vsub.s32 %v9711, %v9713
        %v9715 = vrot.slane %v9687, %v9714
        %v9716 = vcombine.high %v9694, %v9694
        %v9717 = vcombine.high %v9701, %v9701
        %v9718 = vcombine.high %v9708, %v9708
        %v9719 = vcombine.high %v9715, %v9715
        %v9720 = vcombine.high %v9509, %v9509
        %v9722 = vunpack.c.l.s4 1966171168
        %v9723 = vunpack.c.0.s8 %v9722
        %v9724 = vlaneseq
        %v9725 = vshrl.u32 %v9724, 7
        %v9726 = vsub.s32 %v9723, %v9725
        %v9727 = vrot.slane %v9509, %v9726
        %v9729 = vunpack.c.l.s4 1966171168
        %v9730 = vunpack.c.0.s8 %v9729
        %v9731 = vlaneseq
        %v9732 = vshrl.u32 %v9731, 7
        %v9733 = vsub.s32 %v9730, %v9732
        %v9734 = vrot.slane %v9720, %v9733
        %v9735 = vcombine.high %v9727, %v9727
        %v9736 = vcombine.high %v9734, %v9734
        %v9738 = vunpack.c.l.s4 1966171168
        %v9739 = vunpack.c.0.s8 %v9738
        %v9740 = vlaneseq
        %v9741 = vshrl.u32 %v9740, 7
        %v9742 = vsub.s32 %v9739, %v9741
        %v9743 = vrot.slane %v9727, %v9742
        %v9745 = vunpack.c.l.s4 1966171168
        %v9746 = vunpack.c.0.s8 %v9745
        %v9747 = vlaneseq
        %v9748 = vshrl.u32 %v9747, 7
        %v9749 = vsub.s32 %v9746, %v9748
        %v9750 = vrot.slane %v9734, %v9749
        %v9752 = vunpack.c.l.s4 1966171168
        %v9753 = vunpack.c.0.s8 %v9752
        %v9754 = vlaneseq
        %v9755 = vshrl.u32 %v9754, 7
        %v9756 = vsub.s32 %v9753, %v9755
        %v9757 = vrot.slane %v9735, %v9756
        %v9759 = vunpack.c.l.s4 1966171168
        %v9760 = vunpack.c.0.s8 %v9759
        %v9761 = vlaneseq
        %v9762 = vshrl.u32 %v9761, 7
        %v9763 = vsub.s32 %v9760, %v9762
        %v9764 = vrot.slane %v9736, %v9763
        %v9765 = vcombine.high %v9743, %v9743
        %v9766 = vcombine.high %v9750, %v9750
        %v9767 = vcombine.high %v9757, %v9757
        %v9768 = vcombine.high %v9764, %v9764
        %v9769 = vcombine.high %v9511, %v9511
        %v9771 = vunpack.c.l.s4 1966171168
        %v9772 = vunpack.c.0.s8 %v9771
        %v9773 = vlaneseq
        %v9774 = vshrl.u32 %v9773, 7
        %v9775 = vsub.s32 %v9772, %v9774
        %v9776 = vrot.slane %v9511, %v9775
        %v9778 = vunpack.c.l.s4 1966171168
        %v9779 = vunpack.c.0.s8 %v9778
        %v9780 = vlaneseq
        %v9781 = vshrl.u32 %v9780, 7
        %v9782 = vsub.s32 %v9779, %v9781
        %v9783 = vrot.slane %v9769, %v9782
        %v9784 = vcombine.high %v9776, %v9776
        %v9785 = vcombine.high %v9783, %v9783
        %v9787 = vunpack.c.l.s4 1966171168
        %v9788 = vunpack.c.0.s8 %v9787
        %v9789 = vlaneseq
        %v9790 = vshrl.u32 %v9789, 7
        %v9791 = vsub.s32 %v9788, %v9790
        %v9792 = vrot.slane %v9776, %v9791
        %v9794 = vunpack.c.l.s4 1966171168
        %v9795 = vunpack.c.0.s8 %v9794
        %v9796 = vlaneseq
        %v9797 = vshrl.u32 %v9796, 7
        %v9798 = vsub.s32 %v9795, %v9797
        %v9799 = vrot.slane %v9783, %v9798
        %v9801 = vunpack.c.l.s4 1966171168
        %v9802 = vunpack.c.0.s8 %v9801
        %v9803 = vlaneseq
        %v9804 = vshrl.u32 %v9803, 7
        %v9805 = vsub.s32 %v9802, %v9804
        %v9806 = vrot.slane %v9784, %v9805
        %v9808 = vunpack.c.l.s4 1966171168
        %v9809 = vunpack.c.0.s8 %v9808
        %v9810 = vlaneseq
        %v9811 = vshrl.u32 %v9810, 7
        %v9812 = vsub.s32 %v9809, %v9811
        %v9813 = vrot.slane %v9785, %v9812
        %v9814 = vcombine.high %v9792, %v9792
        %v9815 = vcombine.high %v9799, %v9799
        %v9816 = vcombine.high %v9806, %v9806
        %v9817 = vcombine.high %v9813, %v9813
        %v9818 = vcombine.high %v9513, %v9513
        %v9820 = vunpack.c.l.s4 1966171168
        %v9821 = vunpack.c.0.s8 %v9820
        %v9822 = vlaneseq
        %v9823 = vshrl.u32 %v9822, 7
        %v9824 = vsub.s32 %v9821, %v9823
        %v9825 = vrot.slane %v9513, %v9824
        %v9827 = vunpack.c.l.s4 1966171168
        %v9828 = vunpack.c.0.s8 %v9827
        %v9829 = vlaneseq
        %v9830 = vshrl.u32 %v9829, 7
        %v9831 = vsub.s32 %v9828, %v9830
        %v9832 = vrot.slane %v9818, %v9831
        %v9833 = vcombine.high %v9825, %v9825
        %v9834 = vcombine.high %v9832, %v9832
        %v9836 = vunpack.c.l.s4 1966171168
        %v9837 = vunpack.c.0.s8 %v9836
        %v9838 = vlaneseq
        %v9839 = vshrl.u32 %v9838, 7
        %v9840 = vsub.s32 %v9837, %v9839
        %v9841 = vrot.slane %v9825, %v9840
        %v9843 = vunpack.c.l.s4 1966171168
        %v9844 = vunpack.c.0.s8 %v9843
        %v9845 = vlaneseq
        %v9846 = vshrl.u32 %v9845, 7
        %v9847 = vsub.s32 %v9844, %v9846
        %v9848 = vrot.slane %v9832, %v9847
        %v9850 = vunpack.c.l.s4 1966171168
        %v9851 = vunpack.c.0.s8 %v9850
        %v9852 = vlaneseq
        %v9853 = vshrl.u32 %v9852, 7
        %v9854 = vsub.s32 %v9851, %v9853
        %v9855 = vrot.slane %v9833, %v9854
        %v9857 = vunpack.c.l.s4 1966171168
        %v9858 = vunpack.c.0.s8 %v9857
        %v9859 = vlaneseq
        %v9860 = vshrl.u32 %v9859, 7
        %v9861 = vsub.s32 %v9858, %v9860
        %v9862 = vrot.slane %v9834, %v9861
        %v9863 = vcombine.high %v9841, %v9841
        %v9864 = vcombine.high %v9848, %v9848
        %v9865 = vcombine.high %v9855, %v9855
        %v9866 = vcombine.high %v9862, %v9862
        %v9867 = vcombine.high %v9515, %v9515
        %v9869 = vunpack.c.l.s4 1966171168
        %v9870 = vunpack.c.0.s8 %v9869
        %v9871 = vlaneseq
        %v9872 = vshrl.u32 %v9871, 7
        %v9873 = vsub.s32 %v9870, %v9872
        %v9874 = vrot.slane %v9515, %v9873
        %v9876 = vunpack.c.l.s4 1966171168
        %v9877 = vunpack.c.0.s8 %v9876
        %v9878 = vlaneseq
        %v9879 = vshrl.u32 %v9878, 7
        %v9880 = vsub.s32 %v9877, %v9879
        %v9881 = vrot.slane %v9867, %v9880
        %v9882 = vcombine.high %v9874, %v9874
        %v9883 = vcombine.high %v9881, %v9881
        %v9885 = vunpack.c.l.s4 1966171168
        %v9886 = vunpack.c.0.s8 %v9885
        %v9887 = vlaneseq
        %v9888 = vshrl.u32 %v9887, 7
        %v9889 = vsub.s32 %v9886, %v9888
        %v9890 = vrot.slane %v9874, %v9889
        %v9892 = vunpack.c.l.s4 1966171168
        %v9893 = vunpack.c.0.s8 %v9892
        %v9894 = vlaneseq
        %v9895 = vshrl.u32 %v9894, 7
        %v9896 = vsub.s32 %v9893, %v9895
        %v9897 = vrot.slane %v9881, %v9896
        %v9899 = vunpack.c.l.s4 1966171168
        %v9900 = vunpack.c.0.s8 %v9899
        %v9901 = vlaneseq
        %v9902 = vshrl.u32 %v9901, 7
        %v9903 = vsub.s32 %v9900, %v9902
        %v9904 = vrot.slane %v9882, %v9903
        %v9906 = vunpack.c.l.s4 1966171168
        %v9907 = vunpack.c.0.s8 %v9906
        %v9908 = vlaneseq
        %v9909 = vshrl.u32 %v9908, 7
        %v9910 = vsub.s32 %v9907, %v9909
        %v9911 = vrot.slane %v9883, %v9910
        %v9912 = vcombine.high %v9890, %v9890
        %v9913 = vcombine.high %v9897, %v9897
        %v9914 = vcombine.high %v9904, %v9904
        %v9915 = vcombine.high %v9911, %v9911
        %v9980 = vmul.f32 %v8085, %v9547
        %v9981 = vmul.f32 %v8087, %v9561
        %v9982 = vmul.f32 %v8089, %v9569
        %v9983 = vmul.f32 %v8091, %v9571
        %v9984 = vmul.f32 %v8093, %v9554
        %v9985 = vmul.f32 %v8095, %v9568
        %v9986 = vmul.f32 %v8097, %v9570
        %v9987 = vmul.f32 %v8099, %v9572
        %v9988 = vmul.f32 %v8101, %v9547
        %v9989 = vmul.f32 %v8103, %v9561
        %v9990 = vmul.f32 %v8105, %v9569
        %v9991 = vmul.f32 %v8107, %v9571
        %v9992 = vmul.f32 %v8109, %v9554
        %v9993 = vmul.f32 %v8111, %v9568
        %v9994 = vmul.f32 %v8113, %v9570
        %v9995 = vmul.f32 %v8115, %v9572
        %v9996 = vmul.f32 %v8117, %v9547
        %v9997 = vmul.f32 %v8119, %v9596
        %v9998 = vmul.f32 %v8121, %v9610
        %v9999 = vmul.f32 %v8123, %v9618
        %v10000 = vmul.f32 %v8125, %v9620
        %v10001 = vmul.f32 %v8127, %v9603
        %v10002 = vmul.f32 %v8129, %v9617
        %v10003 = vmul.f32 %v8131, %v9619
        %v10004 = vmul.f32 %v8133, %v9621
        %v10005 = vmul.f32 %v8135, %v9596
        %v10006 = vmul.f32 %v8137, %v9610
        %v10007 = vmul.f32 %v8139, %v9618
        %v10008 = vmul.f32 %v8141, %v9620
        %v10009 = vmul.f32 %v8143, %v9603
        %v10010 = vmul.f32 %v8145, %v9617
        %v10011 = vmul.f32 %v8147, %v9619
        %v10012 = vmul.f32 %v8149, %v9621
        %v10013 = vmul.f32 %v8151, %v9596
        %v10014 = vmul.f32 %v8153, %v9645
        %v10015 = vmul.f32 %v8155, %v9659
        %v10016 = vmul.f32 %v8157, %v9667
        %v10017 = vmul.f32 %v8159, %v9669
        %v10018 = vmul.f32 %v8161, %v9652
        %v10019 = vmul.f32 %v8163, %v9666
        %v10020 = vmul.f32 %v8165, %v9668
        %v10021 = vmul.f32 %v8167, %v9670
        %v10022 = vmul.f32 %v8169, %v9645
        %v10023 = vmul.f32 %v8171, %v9659
        %v10024 = vmul.f32 %v8173, %v9667
        %v10025 = vmul.f32 %v8175, %v9669
        %v10026 = vmul.f32 %v8177, %v9652
        %v10027 = vmul.f32 %v8179, %v9666
        %v10028 = vmul.f32 %v8181, %v9668
        %v10029 = vmul.f32 %v8183, %v9670
        %v10030 = vmul.f32 %v8185, %v9645
        %v10031 = vmul.f32 %v8187, %v9694
        %v10032 = vmul.f32 %v8189, %v9708
        %v10033 = vmul.f32 %v8191, %v9716
        %v10034 = vmul.f32 %v8193, %v9718
        %v10035 = vmul.f32 %v8195, %v9701
        %v10036 = vmul.f32 %v8197, %v9715
        %v10037 = vmul.f32 %v8199, %v9717
        %v10038 = vmul.f32 %v8201, %v9719
        %v10039 = vmul.f32 %v8203, %v9694
        %v10040 = vmul.f32 %v8205, %v9708
        %v10041 = vmul.f32 %v8207, %v9716
        %v10042 = vmul.f32 %v8209, %v9718
        %v10043 = vmul.f32 %v8211, %v9701
        %v10044 = vmul.f32 %v8213, %v9715
        %v10045 = vmul.f32 %v8215, %v9717
        %v10046 = vmul.f32 %v8217, %v9719
        %v10047 = vmul.f32 %v8219, %v9694
        %v10048 = vmul.f32 %v8221, %v9743
        %v10049 = vmul.f32 %v8223, %v9757
        %v10050 = vmul.f32 %v8225, %v9765
        %v10051 = vmul.f32 %v8227, %v9767
        %v10052 = vmul.f32 %v8229, %v9750
        %v10053 = vmul.f32 %v8231, %v9764
        %v10054 = vmul.f32 %v8233, %v9766
        %v10055 = vmul.f32 %v8235, %v9768
        %v10056 = vmul.f32 %v8237, %v9743
        %v10057 = vmul.f32 %v8239, %v9757
        %v10058 = vmul.f32 %v8241, %v9765
        %v10059 = vmul.f32 %v8243, %v9767
        %v10060 = vmul.f32 %v8245, %v9750
        %v10061 = vmul.f32 %v8247, %v9764
        %v10062 = vmul.f32 %v8249, %v9766
        %v10063 = vmul.f32 %v8251, %v9768
        %v10064 = vmul.f32 %v8253, %v9743
        %v10065 = vmul.f32 %v8255, %v9792
        %v10066 = vmul.f32 %v8257, %v9806
        %v10067 = vmul.f32 %v8259, %v9814
        %v10068 = vmul.f32 %v8261, %v9816
        %v10069 = vmul.f32 %v8263, %v9799
        %v10070 = vmul.f32 %v8265, %v9813
        %v10071 = vmul.f32 %v8267, %v9815
        %v10072 = vmul.f32 %v8269, %v9817
        %v10073 = vmul.f32 %v8271, %v9792
        %v10074 = vmul.f32 %v8273, %v9806
        %v10075 = vmul.f32 %v8275, %v9814
        %v10076 = vmul.f32 %v8277, %v9816
        %v10077 = vmul.f32 %v8279, %v9799
        %v10078 = vmul.f32 %v8281, %v9813
        %v10079 = vmul.f32 %v8283, %v9815
        %v10080 = vmul.f32 %v8285, %v9817
        %v10081 = vmul.f32 %v8287, %v9792
        %v10082 = vmul.f32 %v8289, %v9841
        %v10083 = vmul.f32 %v8291, %v9855
        %v10084 = vmul.f32 %v8293, %v9863
        %v10085 = vmul.f32 %v8295, %v9865
        %v10086 = vmul.f32 %v8297, %v9848
        %v10087 = vmul.f32 %v8299, %v9862
        %v10088 = vmul.f32 %v8301, %v9864
        %v10089 = vmul.f32 %v8303, %v9866
        %v10090 = vmul.f32 %v8305, %v9841
        %v10091 = vmul.f32 %v8307, %v9855
        %v10092 = vmul.f32 %v8309, %v9863
        %v10093 = vmul.f32 %v8311, %v9865
        %v10094 = vmul.f32 %v8313, %v9848
        %v10095 = vmul.f32 %v8315, %v9862
        %v10096 = vmul.f32 %v8317, %v9864
        %v10097 = vmul.f32 %v8319, %v9866
        %v10098 = vmul.f32 %v8321, %v9841
        %v10099 = vmul.f32 %v8323, %v9890
        %v10100 = vmul.f32 %v8325, %v9904
        %v10101 = vmul.f32 %v8327, %v9912
        %v10102 = vmul.f32 %v8329, %v9914
        %v10103 = vmul.f32 %v8331, %v9897
        %v10104 = vmul.f32 %v8333, %v9911
        %v10105 = vmul.f32 %v8335, %v9913
        %v10106 = vmul.f32 %v8337, %v9915
        %v10107 = vmul.f32 %v8339, %v9890
        %v10108 = vmul.f32 %v8341, %v9904
        %v10109 = vmul.f32 %v8343, %v9912
        %v10110 = vmul.f32 %v8345, %v9914
        %v10111 = vmul.f32 %v8347, %v9897
        %v10112 = vmul.f32 %v8349, %v9911
        %v10113 = vmul.f32 %v8351, %v9913
        %v10114 = vmul.f32 %v8353, %v9915
        %v10115 = vmul.f32 %v8355, %v9890
        %v10252 = vcombine.low %v9980, %v9981
        %v10253 = vcombine.low %v9982, %v9983
        %v10254 = vcombine.low %v9984, %v9985
        %v10255 = vcombine.low %v9986, %v9987
        %v10257 = vunpack.c.l.s4 1966171168
        %v10258 = vunpack.c.0.s8 %v10257
        %v10259 = vlaneseq
        %v10260 = vshrl.u32 %v10259, 7
        %v10261 = vsub.s32 %v10258, %v10260
        %v10262 = vrot.slane %v10252, %v10261
        %v10264 = vunpack.c.l.s4 1966171168
        %v10265 = vunpack.c.0.s8 %v10264
        %v10266 = vlaneseq
        %v10267 = vshrl.u32 %v10266, 7
        %v10268 = vsub.s32 %v10265, %v10267
        %v10269 = vrot.slane %v10253, %v10268
        %v10271 = vunpack.c.l.s4 1966171168
        %v10272 = vunpack.c.0.s8 %v10271
        %v10273 = vlaneseq
        %v10274 = vshrl.u32 %v10273, 7
        %v10275 = vsub.s32 %v10272, %v10274
        %v10276 = vrot.slane %v10254, %v10275
        %v10278 = vunpack.c.l.s4 1966171168
        %v10279 = vunpack.c.0.s8 %v10278
        %v10280 = vlaneseq
        %v10281 = vshrl.u32 %v10280, 7
        %v10282 = vsub.s32 %v10279, %v10281
        %v10283 = vrot.slane %v10255, %v10282
        %v10284 = vcombine.low %v10262, %v10269
        %v10285 = vcombine.low %v10276, %v10283
        %v10287 = vunpack.c.l.s4 1966171168
        %v10288 = vunpack.c.0.s8 %v10287
        %v10289 = vlaneseq
        %v10290 = vshrl.u32 %v10289, 7
        %v10291 = vsub.s32 %v10288, %v10290
        %v10292 = vrot.slane %v10284, %v10291
        %v10294 = vunpack.c.l.s4 1966171168
        %v10295 = vunpack.c.0.s8 %v10294
        %v10296 = vlaneseq
        %v10297 = vshrl.u32 %v10296, 7
        %v10298 = vsub.s32 %v10295, %v10297
        %v10299 = vrot.slane %v10285, %v10298
        %v10300 = vcombine.low %v10292, %v10299
        %v10301 = vcombine.low %v9988, %v9989
        %v10302 = vcombine.low %v9990, %v9991
        %v10303 = vcombine.low %v9992, %v9993
        %v10304 = vcombine.low %v9994, %v9995
        %v10306 = vunpack.c.l.s4 1966171168
        %v10307 = vunpack.c.0.s8 %v10306
        %v10308 = vlaneseq
        %v10309 = vshrl.u32 %v10308, 7
        %v10310 = vsub.s32 %v10307, %v10309
        %v10311 = vrot.slane %v10301, %v10310
        %v10313 = vunpack.c.l.s4 1966171168
        %v10314 = vunpack.c.0.s8 %v10313
        %v10315 = vlaneseq
        %v10316 = vshrl.u32 %v10315, 7
        %v10317 = vsub.s32 %v10314, %v10316
        %v10318 = vrot.slane %v10302, %v10317
        %v10320 = vunpack.c.l.s4 1966171168
        %v10321 = vunpack.c.0.s8 %v10320
        %v10322 = vlaneseq
        %v10323 = vshrl.u32 %v10322, 7
        %v10324 = vsub.s32 %v10321, %v10323
        %v10325 = vrot.slane %v10303, %v10324
        %v10327 = vunpack.c.l.s4 1966171168
        %v10328 = vunpack.c.0.s8 %v10327
        %v10329 = vlaneseq
        %v10330 = vshrl.u32 %v10329, 7
        %v10331 = vsub.s32 %v10328, %v10330
        %v10332 = vrot.slane %v10304, %v10331
        %v10333 = vcombine.low %v10311, %v10318
        %v10334 = vcombine.low %v10325, %v10332
        %v10336 = vunpack.c.l.s4 1966171168
        %v10337 = vunpack.c.0.s8 %v10336
        %v10338 = vlaneseq
        %v10339 = vshrl.u32 %v10338, 7
        %v10340 = vsub.s32 %v10337, %v10339
        %v10341 = vrot.slane %v10333, %v10340
        %v10343 = vunpack.c.l.s4 1966171168
        %v10344 = vunpack.c.0.s8 %v10343
        %v10345 = vlaneseq
        %v10346 = vshrl.u32 %v10345, 7
        %v10347 = vsub.s32 %v10344, %v10346
        %v10348 = vrot.slane %v10334, %v10347
        %v10349 = vcombine.low %v10341, %v10348
        %v10350 = vcombine.low %v9996, %v9997
        %v10351 = vcombine.low %v9998, %v9999
        %v10352 = vcombine.low %v10000, %v10001
        %v10353 = vcombine.low %v10002, %v10003
        %v10355 = vunpack.c.l.s4 1966171168
        %v10356 = vunpack.c.0.s8 %v10355
        %v10357 = vlaneseq
        %v10358 = vshrl.u32 %v10357, 7
        %v10359 = vsub.s32 %v10356, %v10358
        %v10360 = vrot.slane %v10350, %v10359
        %v10362 = vunpack.c.l.s4 1966171168
        %v10363 = vunpack.c.0.s8 %v10362
        %v10364 = vlaneseq
        %v10365 = vshrl.u32 %v10364, 7
        %v10366 = vsub.s32 %v10363, %v10365
        %v10367 = vrot.slane %v10351, %v10366
        %v10369 = vunpack.c.l.s4 1966171168
        %v10370 = vunpack.c.0.s8 %v10369
        %v10371 = vlaneseq
        %v10372 = vshrl.u32 %v10371, 7
        %v10373 = vsub.s32 %v10370, %v10372
        %v10374 = vrot.slane %v10352, %v10373
        %v10376 = vunpack.c.l.s4 1966171168
        %v10377 = vunpack.c.0.s8 %v10376
        %v10378 = vlaneseq
        %v10379 = vshrl.u32 %v10378, 7
        %v10380 = vsub.s32 %v10377, %v10379
        %v10381 = vrot.slane %v10353, %v10380
        %v10382 = vcombine.low %v10360, %v10367
        %v10383 = vcombine.low %v10374, %v10381
        %v10385 = vunpack.c.l.s4 1966171168
        %v10386 = vunpack.c.0.s8 %v10385
        %v10387 = vlaneseq
        %v10388 = vshrl.u32 %v10387, 7
        %v10389 = vsub.s32 %v10386, %v10388
        %v10390 = vrot.slane %v10382, %v10389
        %v10392 = vunpack.c.l.s4 1966171168
        %v10393 = vunpack.c.0.s8 %v10392
        %v10394 = vlaneseq
        %v10395 = vshrl.u32 %v10394, 7
        %v10396 = vsub.s32 %v10393, %v10395
        %v10397 = vrot.slane %v10383, %v10396
        %v10398 = vcombine.low %v10390, %v10397
        %v10399 = vcombine.low %v10004, %v10005
        %v10400 = vcombine.low %v10006, %v10007
        %v10401 = vcombine.low %v10008, %v10009
        %v10402 = vcombine.low %v10010, %v10011
        %v10404 = vunpack.c.l.s4 1966171168
        %v10405 = vunpack.c.0.s8 %v10404
        %v10406 = vlaneseq
        %v10407 = vshrl.u32 %v10406, 7
        %v10408 = vsub.s32 %v10405, %v10407
        %v10409 = vrot.slane %v10399, %v10408
        %v10411 = vunpack.c.l.s4 1966171168
        %v10412 = vunpack.c.0.s8 %v10411
        %v10413 = vlaneseq
        %v10414 = vshrl.u32 %v10413, 7
        %v10415 = vsub.s32 %v10412, %v10414
        %v10416 = vrot.slane %v10400, %v10415
        %v10418 = vunpack.c.l.s4 1966171168
        %v10419 = vunpack.c.0.s8 %v10418
        %v10420 = vlaneseq
        %v10421 = vshrl.u32 %v10420, 7
        %v10422 = vsub.s32 %v10419, %v10421
        %v10423 = vrot.slane %v10401, %v10422
        %v10425 = vunpack.c.l.s4 1966171168
        %v10426 = vunpack.c.0.s8 %v10425
        %v10427 = vlaneseq
        %v10428 = vshrl.u32 %v10427, 7
        %v10429 = vsub.s32 %v10426, %v10428
        %v10430 = vrot.slane %v10402, %v10429
        %v10431 = vcombine.low %v10409, %v10416
        %v10432 = vcombine.low %v10423, %v10430
        %v10434 = vunpack.c.l.s4 1966171168
        %v10435 = vunpack.c.0.s8 %v10434
        %v10436 = vlaneseq
        %v10437 = vshrl.u32 %v10436, 7
        %v10438 = vsub.s32 %v10435, %v10437
        %v10439 = vrot.slane %v10431, %v10438
        %v10441 = vunpack.c.l.s4 1966171168
        %v10442 = vunpack.c.0.s8 %v10441
        %v10443 = vlaneseq
        %v10444 = vshrl.u32 %v10443, 7
        %v10445 = vsub.s32 %v10442, %v10444
        %v10446 = vrot.slane %v10432, %v10445
        %v10447 = vcombine.low %v10439, %v10446
        %v10448 = vcombine.low %v10012, %v10013
        %v10449 = vcombine.low %v10014, %v10015
        %v10450 = vcombine.low %v10016, %v10017
        %v10451 = vcombine.low %v10018, %v10019
        %v10453 = vunpack.c.l.s4 1966171168
        %v10454 = vunpack.c.0.s8 %v10453
        %v10455 = vlaneseq
        %v10456 = vshrl.u32 %v10455, 7
        %v10457 = vsub.s32 %v10454, %v10456
        %v10458 = vrot.slane %v10448, %v10457
        %v10460 = vunpack.c.l.s4 1966171168
        %v10461 = vunpack.c.0.s8 %v10460
        %v10462 = vlaneseq
        %v10463 = vshrl.u32 %v10462, 7
        %v10464 = vsub.s32 %v10461, %v10463
        %v10465 = vrot.slane %v10449, %v10464
        %v10467 = vunpack.c.l.s4 1966171168
        %v10468 = vunpack.c.0.s8 %v10467
        %v10469 = vlaneseq
        %v10470 = vshrl.u32 %v10469, 7
        %v10471 = vsub.s32 %v10468, %v10470
        %v10472 = vrot.slane %v10450, %v10471
        %v10474 = vunpack.c.l.s4 1966171168
        %v10475 = vunpack.c.0.s8 %v10474
        %v10476 = vlaneseq
        %v10477 = vshrl.u32 %v10476, 7
        %v10478 = vsub.s32 %v10475, %v10477
        %v10479 = vrot.slane %v10451, %v10478
        %v10480 = vcombine.low %v10458, %v10465
        %v10481 = vcombine.low %v10472, %v10479
        %v10483 = vunpack.c.l.s4 1966171168
        %v10484 = vunpack.c.0.s8 %v10483
        %v10485 = vlaneseq
        %v10486 = vshrl.u32 %v10485, 7
        %v10487 = vsub.s32 %v10484, %v10486
        %v10488 = vrot.slane %v10480, %v10487
        %v10490 = vunpack.c.l.s4 1966171168
        %v10491 = vunpack.c.0.s8 %v10490
        %v10492 = vlaneseq
        %v10493 = vshrl.u32 %v10492, 7
        %v10494 = vsub.s32 %v10491, %v10493
        %v10495 = vrot.slane %v10481, %v10494
        %v10496 = vcombine.low %v10488, %v10495
        %v10497 = vcombine.low %v10020, %v10021
        %v10498 = vcombine.low %v10022, %v10023
        %v10499 = vcombine.low %v10024, %v10025
        %v10500 = vcombine.low %v10026, %v10027
        %v10502 = vunpack.c.l.s4 1966171168
        %v10503 = vunpack.c.0.s8 %v10502
        %v10504 = vlaneseq
        %v10505 = vshrl.u32 %v10504, 7
        %v10506 = vsub.s32 %v10503, %v10505
        %v10507 = vrot.slane %v10497, %v10506
        %v10509 = vunpack.c.l.s4 1966171168
        %v10510 = vunpack.c.0.s8 %v10509
        %v10511 = vlaneseq
        %v10512 = vshrl.u32 %v10511, 7
        %v10513 = vsub.s32 %v10510, %v10512
        %v10514 = vrot.slane %v10498, %v10513
        %v10516 = vunpack.c.l.s4 1966171168
        %v10517 = vunpack.c.0.s8 %v10516
        %v10518 = vlaneseq
        %v10519 = vshrl.u32 %v10518, 7
        %v10520 = vsub.s32 %v10517, %v10519
        %v10521 = vrot.slane %v10499, %v10520
        %v10523 = vunpack.c.l.s4 1966171168
        %v10524 = vunpack.c.0.s8 %v10523
        %v10525 = vlaneseq
        %v10526 = vshrl.u32 %v10525, 7
        %v10527 = vsub.s32 %v10524, %v10526
        %v10528 = vrot.slane %v10500, %v10527
        %v10529 = vcombine.low %v10507, %v10514
        %v10530 = vcombine.low %v10521, %v10528
        %v10532 = vunpack.c.l.s4 1966171168
        %v10533 = vunpack.c.0.s8 %v10532
        %v10534 = vlaneseq
        %v10535 = vshrl.u32 %v10534, 7
        %v10536 = vsub.s32 %v10533, %v10535
        %v10537 = vrot.slane %v10529, %v10536
        %v10539 = vunpack.c.l.s4 1966171168
        %v10540 = vunpack.c.0.s8 %v10539
        %v10541 = vlaneseq
        %v10542 = vshrl.u32 %v10541, 7
        %v10543 = vsub.s32 %v10540, %v10542
        %v10544 = vrot.slane %v10530, %v10543
        %v10545 = vcombine.low %v10537, %v10544
        %v10546 = vcombine.low %v10028, %v10029
        %v10547 = vcombine.low %v10030, %v10031
        %v10548 = vcombine.low %v10032, %v10033
        %v10549 = vcombine.low %v10034, %v10035
        %v10551 = vunpack.c.l.s4 1966171168
        %v10552 = vunpack.c.0.s8 %v10551
        %v10553 = vlaneseq
        %v10554 = vshrl.u32 %v10553, 7
        %v10555 = vsub.s32 %v10552, %v10554
        %v10556 = vrot.slane %v10546, %v10555
        %v10558 = vunpack.c.l.s4 1966171168
        %v10559 = vunpack.c.0.s8 %v10558
        %v10560 = vlaneseq
        %v10561 = vshrl.u32 %v10560, 7
        %v10562 = vsub.s32 %v10559, %v10561
        %v10563 = vrot.slane %v10547, %v10562
        %v10565 = vunpack.c.l.s4 1966171168
        %v10566 = vunpack.c.0.s8 %v10565
        %v10567 = vlaneseq
        %v10568 = vshrl.u32 %v10567, 7
        %v10569 = vsub.s32 %v10566, %v10568
        %v10570 = vrot.slane %v10548, %v10569
        %v10572 = vunpack.c.l.s4 1966171168
        %v10573 = vunpack.c.0.s8 %v10572
        %v10574 = vlaneseq
        %v10575 = vshrl.u32 %v10574, 7
        %v10576 = vsub.s32 %v10573, %v10575
        %v10577 = vrot.slane %v10549, %v10576
        %v10578 = vcombine.low %v10556, %v10563
        %v10579 = vcombine.low %v10570, %v10577
        %v10581 = vunpack.c.l.s4 1966171168
        %v10582 = vunpack.c.0.s8 %v10581
        %v10583 = vlaneseq
        %v10584 = vshrl.u32 %v10583, 7
        %v10585 = vsub.s32 %v10582, %v10584
        %v10586 = vrot.slane %v10578, %v10585
        %v10588 = vunpack.c.l.s4 1966171168
        %v10589 = vunpack.c.0.s8 %v10588
        %v10590 = vlaneseq
        %v10591 = vshrl.u32 %v10590, 7
        %v10592 = vsub.s32 %v10589, %v10591
        %v10593 = vrot.slane %v10579, %v10592
        %v10594 = vcombine.low %v10586, %v10593
        %v10595 = vcombine.low %v10036, %v10037
        %v10596 = vcombine.low %v10038, %v10039
        %v10597 = vcombine.low %v10040, %v10041
        %v10598 = vcombine.low %v10042, %v10043
        %v10600 = vunpack.c.l.s4 1966171168
        %v10601 = vunpack.c.0.s8 %v10600
        %v10602 = vlaneseq
        %v10603 = vshrl.u32 %v10602, 7
        %v10604 = vsub.s32 %v10601, %v10603
        %v10605 = vrot.slane %v10595, %v10604
        %v10607 = vunpack.c.l.s4 1966171168
        %v10608 = vunpack.c.0.s8 %v10607
        %v10609 = vlaneseq
        %v10610 = vshrl.u32 %v10609, 7
        %v10611 = vsub.s32 %v10608, %v10610
        %v10612 = vrot.slane %v10596, %v10611
        %v10614 = vunpack.c.l.s4 1966171168
        %v10615 = vunpack.c.0.s8 %v10614
        %v10616 = vlaneseq
        %v10617 = vshrl.u32 %v10616, 7
        %v10618 = vsub.s32 %v10615, %v10617
        %v10619 = vrot.slane %v10597, %v10618
        %v10621 = vunpack.c.l.s4 1966171168
        %v10622 = vunpack.c.0.s8 %v10621
        %v10623 = vlaneseq
        %v10624 = vshrl.u32 %v10623, 7
        %v10625 = vsub.s32 %v10622, %v10624
        %v10626 = vrot.slane %v10598, %v10625
        %v10627 = vcombine.low %v10605, %v10612
        %v10628 = vcombine.low %v10619, %v10626
        %v10630 = vunpack.c.l.s4 1966171168
        %v10631 = vunpack.c.0.s8 %v10630
        %v10632 = vlaneseq
        %v10633 = vshrl.u32 %v10632, 7
        %v10634 = vsub.s32 %v10631, %v10633
        %v10635 = vrot.slane %v10627, %v10634
        %v10637 = vunpack.c.l.s4 1966171168
        %v10638 = vunpack.c.0.s8 %v10637
        %v10639 = vlaneseq
        %v10640 = vshrl.u32 %v10639, 7
        %v10641 = vsub.s32 %v10638, %v10640
        %v10642 = vrot.slane %v10628, %v10641
        %v10643 = vcombine.low %v10635, %v10642
        %v10644 = vcombine.low %v10044, %v10045
        %v10645 = vcombine.low %v10046, %v10047
        %v10646 = vcombine.low %v10048, %v10049
        %v10647 = vcombine.low %v10050, %v10051
        %v10649 = vunpack.c.l.s4 1966171168
        %v10650 = vunpack.c.0.s8 %v10649
        %v10651 = vlaneseq
        %v10652 = vshrl.u32 %v10651, 7
        %v10653 = vsub.s32 %v10650, %v10652
        %v10654 = vrot.slane %v10644, %v10653
        %v10656 = vunpack.c.l.s4 1966171168
        %v10657 = vunpack.c.0.s8 %v10656
        %v10658 = vlaneseq
        %v10659 = vshrl.u32 %v10658, 7
        %v10660 = vsub.s32 %v10657, %v10659
        %v10661 = vrot.slane %v10645, %v10660
        %v10663 = vunpack.c.l.s4 1966171168
        %v10664 = vunpack.c.0.s8 %v10663
        %v10665 = vlaneseq
        %v10666 = vshrl.u32 %v10665, 7
        %v10667 = vsub.s32 %v10664, %v10666
        %v10668 = vrot.slane %v10646, %v10667
        %v10670 = vunpack.c.l.s4 1966171168
        %v10671 = vunpack.c.0.s8 %v10670
        %v10672 = vlaneseq
        %v10673 = vshrl.u32 %v10672, 7
        %v10674 = vsub.s32 %v10671, %v10673
        %v10675 = vrot.slane %v10647, %v10674
        %v10676 = vcombine.low %v10654, %v10661
        %v10677 = vcombine.low %v10668, %v10675
        %v10679 = vunpack.c.l.s4 1966171168
        %v10680 = vunpack.c.0.s8 %v10679
        %v10681 = vlaneseq
        %v10682 = vshrl.u32 %v10681, 7
        %v10683 = vsub.s32 %v10680, %v10682
        %v10684 = vrot.slane %v10676, %v10683
        %v10686 = vunpack.c.l.s4 1966171168
        %v10687 = vunpack.c.0.s8 %v10686
        %v10688 = vlaneseq
        %v10689 = vshrl.u32 %v10688, 7
        %v10690 = vsub.s32 %v10687, %v10689
        %v10691 = vrot.slane %v10677, %v10690
        %v10692 = vcombine.low %v10684, %v10691
        %v10693 = vcombine.low %v10052, %v10053
        %v10694 = vcombine.low %v10054, %v10055
        %v10695 = vcombine.low %v10056, %v10057
        %v10696 = vcombine.low %v10058, %v10059
        %v10698 = vunpack.c.l.s4 1966171168
        %v10699 = vunpack.c.0.s8 %v10698
        %v10700 = vlaneseq
        %v10701 = vshrl.u32 %v10700, 7
        %v10702 = vsub.s32 %v10699, %v10701
        %v10703 = vrot.slane %v10693, %v10702
        %v10705 = vunpack.c.l.s4 1966171168
        %v10706 = vunpack.c.0.s8 %v10705
        %v10707 = vlaneseq
        %v10708 = vshrl.u32 %v10707, 7
        %v10709 = vsub.s32 %v10706, %v10708
        %v10710 = vrot.slane %v10694, %v10709
        %v10712 = vunpack.c.l.s4 1966171168
        %v10713 = vunpack.c.0.s8 %v10712
        %v10714 = vlaneseq
        %v10715 = vshrl.u32 %v10714, 7
        %v10716 = vsub.s32 %v10713, %v10715
        %v10717 = vrot.slane %v10695, %v10716
        %v10719 = vunpack.c.l.s4 1966171168
        %v10720 = vunpack.c.0.s8 %v10719
        %v10721 = vlaneseq
        %v10722 = vshrl.u32 %v10721, 7
        %v10723 = vsub.s32 %v10720, %v10722
        %v10724 = vrot.slane %v10696, %v10723
        %v10725 = vcombine.low %v10703, %v10710
        %v10726 = vcombine.low %v10717, %v10724
        %v10728 = vunpack.c.l.s4 1966171168
        %v10729 = vunpack.c.0.s8 %v10728
        %v10730 = vlaneseq
        %v10731 = vshrl.u32 %v10730, 7
        %v10732 = vsub.s32 %v10729, %v10731
        %v10733 = vrot.slane %v10725, %v10732
        %v10735 = vunpack.c.l.s4 1966171168
        %v10736 = vunpack.c.0.s8 %v10735
        %v10737 = vlaneseq
        %v10738 = vshrl.u32 %v10737, 7
        %v10739 = vsub.s32 %v10736, %v10738
        %v10740 = vrot.slane %v10726, %v10739
        %v10741 = vcombine.low %v10733, %v10740
        %v10742 = vcombine.low %v10060, %v10061
        %v10743 = vcombine.low %v10062, %v10063
        %v10744 = vcombine.low %v10064, %v10065
        %v10745 = vcombine.low %v10066, %v10067
        %v10747 = vunpack.c.l.s4 1966171168
        %v10748 = vunpack.c.0.s8 %v10747
        %v10749 = vlaneseq
        %v10750 = vshrl.u32 %v10749, 7
        %v10751 = vsub.s32 %v10748, %v10750
        %v10752 = vrot.slane %v10742, %v10751
        %v10754 = vunpack.c.l.s4 1966171168
        %v10755 = vunpack.c.0.s8 %v10754
        %v10756 = vlaneseq
        %v10757 = vshrl.u32 %v10756, 7
        %v10758 = vsub.s32 %v10755, %v10757
        %v10759 = vrot.slane %v10743, %v10758
        %v10761 = vunpack.c.l.s4 1966171168
        %v10762 = vunpack.c.0.s8 %v10761
        %v10763 = vlaneseq
        %v10764 = vshrl.u32 %v10763, 7
        %v10765 = vsub.s32 %v10762, %v10764
        %v10766 = vrot.slane %v10744, %v10765
        %v10768 = vunpack.c.l.s4 1966171168
        %v10769 = vunpack.c.0.s8 %v10768
        %v10770 = vlaneseq
        %v10771 = vshrl.u32 %v10770, 7
        %v10772 = vsub.s32 %v10769, %v10771
        %v10773 = vrot.slane %v10745, %v10772
        %v10774 = vcombine.low %v10752, %v10759
        %v10775 = vcombine.low %v10766, %v10773
        %v10777 = vunpack.c.l.s4 1966171168
        %v10778 = vunpack.c.0.s8 %v10777
        %v10779 = vlaneseq
        %v10780 = vshrl.u32 %v10779, 7
        %v10781 = vsub.s32 %v10778, %v10780
        %v10782 = vrot.slane %v10774, %v10781
        %v10784 = vunpack.c.l.s4 1966171168
        %v10785 = vunpack.c.0.s8 %v10784
        %v10786 = vlaneseq
        %v10787 = vshrl.u32 %v10786, 7
        %v10788 = vsub.s32 %v10785, %v10787
        %v10789 = vrot.slane %v10775, %v10788
        %v10790 = vcombine.low %v10782, %v10789
        %v10791 = vcombine.low %v10068, %v10069
        %v10792 = vcombine.low %v10070, %v10071
        %v10793 = vcombine.low %v10072, %v10073
        %v10794 = vcombine.low %v10074, %v10075
        %v10796 = vunpack.c.l.s4 1966171168
        %v10797 = vunpack.c.0.s8 %v10796
        %v10798 = vlaneseq
        %v10799 = vshrl.u32 %v10798, 7
        %v10800 = vsub.s32 %v10797, %v10799
        %v10801 = vrot.slane %v10791, %v10800
        %v10803 = vunpack.c.l.s4 1966171168
        %v10804 = vunpack.c.0.s8 %v10803
        %v10805 = vlaneseq
        %v10806 = vshrl.u32 %v10805, 7
        %v10807 = vsub.s32 %v10804, %v10806
        %v10808 = vrot.slane %v10792, %v10807
        %v10810 = vunpack.c.l.s4 1966171168
        %v10811 = vunpack.c.0.s8 %v10810
        %v10812 = vlaneseq
        %v10813 = vshrl.u32 %v10812, 7
        %v10814 = vsub.s32 %v10811, %v10813
        %v10815 = vrot.slane %v10793, %v10814
        %v10817 = vunpack.c.l.s4 1966171168
        %v10818 = vunpack.c.0.s8 %v10817
        %v10819 = vlaneseq
        %v10820 = vshrl.u32 %v10819, 7
        %v10821 = vsub.s32 %v10818, %v10820
        %v10822 = vrot.slane %v10794, %v10821
        %v10823 = vcombine.low %v10801, %v10808
        %v10824 = vcombine.low %v10815, %v10822
        %v10826 = vunpack.c.l.s4 1966171168
        %v10827 = vunpack.c.0.s8 %v10826
        %v10828 = vlaneseq
        %v10829 = vshrl.u32 %v10828, 7
        %v10830 = vsub.s32 %v10827, %v10829
        %v10831 = vrot.slane %v10823, %v10830
        %v10833 = vunpack.c.l.s4 1966171168
        %v10834 = vunpack.c.0.s8 %v10833
        %v10835 = vlaneseq
        %v10836 = vshrl.u32 %v10835, 7
        %v10837 = vsub.s32 %v10834, %v10836
        %v10838 = vrot.slane %v10824, %v10837
        %v10839 = vcombine.low %v10831, %v10838
        %v10840 = vcombine.low %v10076, %v10077
        %v10841 = vcombine.low %v10078, %v10079
        %v10842 = vcombine.low %v10080, %v10081
        %v10843 = vcombine.low %v10082, %v10083
        %v10845 = vunpack.c.l.s4 1966171168
        %v10846 = vunpack.c.0.s8 %v10845
        %v10847 = vlaneseq
        %v10848 = vshrl.u32 %v10847, 7
        %v10849 = vsub.s32 %v10846, %v10848
        %v10850 = vrot.slane %v10840, %v10849
        %v10852 = vunpack.c.l.s4 1966171168
        %v10853 = vunpack.c.0.s8 %v10852
        %v10854 = vlaneseq
        %v10855 = vshrl.u32 %v10854, 7
        %v10856 = vsub.s32 %v10853, %v10855
        %v10857 = vrot.slane %v10841, %v10856
        %v10859 = vunpack.c.l.s4 1966171168
        %v10860 = vunpack.c.0.s8 %v10859
        %v10861 = vlaneseq
        %v10862 = vshrl.u32 %v10861, 7
        %v10863 = vsub.s32 %v10860, %v10862
        %v10864 = vrot.slane %v10842, %v10863
        %v10866 = vunpack.c.l.s4 1966171168
        %v10867 = vunpack.c.0.s8 %v10866
        %v10868 = vlaneseq
        %v10869 = vshrl.u32 %v10868, 7
        %v10870 = vsub.s32 %v10867, %v10869
        %v10871 = vrot.slane %v10843, %v10870
        %v10872 = vcombine.low %v10850, %v10857
        %v10873 = vcombine.low %v10864, %v10871
        %v10875 = vunpack.c.l.s4 1966171168
        %v10876 = vunpack.c.0.s8 %v10875
        %v10877 = vlaneseq
        %v10878 = vshrl.u32 %v10877, 7
        %v10879 = vsub.s32 %v10876, %v10878
        %v10880 = vrot.slane %v10872, %v10879
        %v10882 = vunpack.c.l.s4 1966171168
        %v10883 = vunpack.c.0.s8 %v10882
        %v10884 = vlaneseq
        %v10885 = vshrl.u32 %v10884, 7
        %v10886 = vsub.s32 %v10883, %v10885
        %v10887 = vrot.slane %v10873, %v10886
        %v10888 = vcombine.low %v10880, %v10887
        %v10889 = vcombine.low %v10084, %v10085
        %v10890 = vcombine.low %v10086, %v10087
        %v10891 = vcombine.low %v10088, %v10089
        %v10892 = vcombine.low %v10090, %v10091
        %v10894 = vunpack.c.l.s4 1966171168
        %v10895 = vunpack.c.0.s8 %v10894
        %v10896 = vlaneseq
        %v10897 = vshrl.u32 %v10896, 7
        %v10898 = vsub.s32 %v10895, %v10897
        %v10899 = vrot.slane %v10889, %v10898
        %v10901 = vunpack.c.l.s4 1966171168
        %v10902 = vunpack.c.0.s8 %v10901
        %v10903 = vlaneseq
        %v10904 = vshrl.u32 %v10903, 7
        %v10905 = vsub.s32 %v10902, %v10904
        %v10906 = vrot.slane %v10890, %v10905
        %v10908 = vunpack.c.l.s4 1966171168
        %v10909 = vunpack.c.0.s8 %v10908
        %v10910 = vlaneseq
        %v10911 = vshrl.u32 %v10910, 7
        %v10912 = vsub.s32 %v10909, %v10911
        %v10913 = vrot.slane %v10891, %v10912
        %v10915 = vunpack.c.l.s4 1966171168
        %v10916 = vunpack.c.0.s8 %v10915
        %v10917 = vlaneseq
        %v10918 = vshrl.u32 %v10917, 7
        %v10919 = vsub.s32 %v10916, %v10918
        %v10920 = vrot.slane %v10892, %v10919
        %v10921 = vcombine.low %v10899, %v10906
        %v10922 = vcombine.low %v10913, %v10920
        %v10924 = vunpack.c.l.s4 1966171168
        %v10925 = vunpack.c.0.s8 %v10924
        %v10926 = vlaneseq
        %v10927 = vshrl.u32 %v10926, 7
        %v10928 = vsub.s32 %v10925, %v10927
        %v10929 = vrot.slane %v10921, %v10928
        %v10931 = vunpack.c.l.s4 1966171168
        %v10932 = vunpack.c.0.s8 %v10931
        %v10933 = vlaneseq
        %v10934 = vshrl.u32 %v10933, 7
        %v10935 = vsub.s32 %v10932, %v10934
        %v10936 = vrot.slane %v10922, %v10935
        %v10937 = vcombine.low %v10929, %v10936
        %v10938 = vcombine.low %v10092, %v10093
        %v10939 = vcombine.low %v10094, %v10095
        %v10940 = vcombine.low %v10096, %v10097
        %v10941 = vcombine.low %v10098, %v10099
        %v10943 = vunpack.c.l.s4 1966171168
        %v10944 = vunpack.c.0.s8 %v10943
        %v10945 = vlaneseq
        %v10946 = vshrl.u32 %v10945, 7
        %v10947 = vsub.s32 %v10944, %v10946
        %v10948 = vrot.slane %v10938, %v10947
        %v10950 = vunpack.c.l.s4 1966171168
        %v10951 = vunpack.c.0.s8 %v10950
        %v10952 = vlaneseq
        %v10953 = vshrl.u32 %v10952, 7
        %v10954 = vsub.s32 %v10951, %v10953
        %v10955 = vrot.slane %v10939, %v10954
        %v10957 = vunpack.c.l.s4 1966171168
        %v10958 = vunpack.c.0.s8 %v10957
        %v10959 = vlaneseq
        %v10960 = vshrl.u32 %v10959, 7
        %v10961 = vsub.s32 %v10958, %v10960
        %v10962 = vrot.slane %v10940, %v10961
        %v10964 = vunpack.c.l.s4 1966171168
        %v10965 = vunpack.c.0.s8 %v10964
        %v10966 = vlaneseq
        %v10967 = vshrl.u32 %v10966, 7
        %v10968 = vsub.s32 %v10965, %v10967
        %v10969 = vrot.slane %v10941, %v10968
        %v10970 = vcombine.low %v10948, %v10955
        %v10971 = vcombine.low %v10962, %v10969
        %v10973 = vunpack.c.l.s4 1966171168
        %v10974 = vunpack.c.0.s8 %v10973
        %v10975 = vlaneseq
        %v10976 = vshrl.u32 %v10975, 7
        %v10977 = vsub.s32 %v10974, %v10976
        %v10978 = vrot.slane %v10970, %v10977
        %v10980 = vunpack.c.l.s4 1966171168
        %v10981 = vunpack.c.0.s8 %v10980
        %v10982 = vlaneseq
        %v10983 = vshrl.u32 %v10982, 7
        %v10984 = vsub.s32 %v10981, %v10983
        %v10985 = vrot.slane %v10971, %v10984
        %v10986 = vcombine.low %v10978, %v10985
        %v10987 = vcombine.low %v10100, %v10101
        %v10988 = vcombine.low %v10102, %v10103
        %v10989 = vcombine.low %v10104, %v10105
        %v10990 = vcombine.low %v10106, %v10107
        %v10992 = vunpack.c.l.s4 1966171168
        %v10993 = vunpack.c.0.s8 %v10992
        %v10994 = vlaneseq
        %v10995 = vshrl.u32 %v10994, 7
        %v10996 = vsub.s32 %v10993, %v10995
        %v10997 = vrot.slane %v10987, %v10996
        %v10999 = vunpack.c.l.s4 1966171168
        %v11000 = vunpack.c.0.s8 %v10999
        %v11001 = vlaneseq
        %v11002 = vshrl.u32 %v11001, 7
        %v11003 = vsub.s32 %v11000, %v11002
        %v11004 = vrot.slane %v10988, %v11003
        %v11006 = vunpack.c.l.s4 1966171168
        %v11007 = vunpack.c.0.s8 %v11006
        %v11008 = vlaneseq
        %v11009 = vshrl.u32 %v11008, 7
        %v11010 = vsub.s32 %v11007, %v11009
        %v11011 = vrot.slane %v10989, %v11010
        %v11013 = vunpack.c.l.s4 1966171168
        %v11014 = vunpack.c.0.s8 %v11013
        %v11015 = vlaneseq
        %v11016 = vshrl.u32 %v11015, 7
        %v11017 = vsub.s32 %v11014, %v11016
        %v11018 = vrot.slane %v10990, %v11017
        %v11019 = vcombine.low %v10997, %v11004
        %v11020 = vcombine.low %v11011, %v11018
        %v11022 = vunpack.c.l.s4 1966171168
        %v11023 = vunpack.c.0.s8 %v11022
        %v11024 = vlaneseq
        %v11025 = vshrl.u32 %v11024, 7
        %v11026 = vsub.s32 %v11023, %v11025
        %v11027 = vrot.slane %v11019, %v11026
        %v11029 = vunpack.c.l.s4 1966171168
        %v11030 = vunpack.c.0.s8 %v11029
        %v11031 = vlaneseq
        %v11032 = vshrl.u32 %v11031, 7
        %v11033 = vsub.s32 %v11030, %v11032
        %v11034 = vrot.slane %v11020, %v11033
        %v11035 = vcombine.low %v11027, %v11034
        %v11036 = vcombine.low %v10108, %v10109
        %v11037 = vcombine.low %v10110, %v10111
        %v11038 = vcombine.low %v10112, %v10113
        %v11039 = vcombine.low %v10114, %v10115
        %v11041 = vunpack.c.l.s4 1966171168
        %v11042 = vunpack.c.0.s8 %v11041
        %v11043 = vlaneseq
        %v11044 = vshrl.u32 %v11043, 7
        %v11045 = vsub.s32 %v11042, %v11044
        %v11046 = vrot.slane %v11036, %v11045
        %v11048 = vunpack.c.l.s4 1966171168
        %v11049 = vunpack.c.0.s8 %v11048
        %v11050 = vlaneseq
        %v11051 = vshrl.u32 %v11050, 7
        %v11052 = vsub.s32 %v11049, %v11051
        %v11053 = vrot.slane %v11037, %v11052
        %v11055 = vunpack.c.l.s4 1966171168
        %v11056 = vunpack.c.0.s8 %v11055
        %v11057 = vlaneseq
        %v11058 = vshrl.u32 %v11057, 7
        %v11059 = vsub.s32 %v11056, %v11058
        %v11060 = vrot.slane %v11038, %v11059
        %v11062 = vunpack.c.l.s4 1966171168
        %v11063 = vunpack.c.0.s8 %v11062
        %v11064 = vlaneseq
        %v11065 = vshrl.u32 %v11064, 7
        %v11066 = vsub.s32 %v11063, %v11065
        %v11067 = vrot.slane %v11039, %v11066
        %v11068 = vcombine.low %v11046, %v11053
        %v11069 = vcombine.low %v11060, %v11067
        %v11071 = vunpack.c.l.s4 1966171168
        %v11072 = vunpack.c.0.s8 %v11071
        %v11073 = vlaneseq
        %v11074 = vshrl.u32 %v11073, 7
        %v11075 = vsub.s32 %v11072, %v11074
        %v11076 = vrot.slane %v11068, %v11075
        %v11078 = vunpack.c.l.s4 1966171168
        %v11079 = vunpack.c.0.s8 %v11078
        %v11080 = vlaneseq
        %v11081 = vshrl.u32 %v11080, 7
        %v11082 = vsub.s32 %v11079, %v11081
        %v11083 = vrot.slane %v11069, %v11082
        %v11084 = vcombine.low %v11076, %v11083
        %v11102 = vpack.c.bf16 %v10349, %v10300
        %v11103 = vpack.c.bf16 %v10447, %v10398
        %v11104 = vpack.c.bf16 %v10545, %v10496
        %v11105 = vpack.c.bf16 %v10643, %v10594
        %v11106 = vpack.c.bf16 %v10741, %v10692
        %v11107 = vpack.c.bf16 %v10839, %v10790
        %v11108 = vpack.c.bf16 %v10937, %v10888
        %v11109 = vpack.c.bf16 %v11035, %v10986
        %v11110 = vpack.c.bf16 %v11084, %v11084
        %v11111 = vld [vmem:[#allocation5] sm:$0x3]
        %v11113 = vsel %vm7394, %v11102, 0
        %v11116 = vsel %vm7394, %v11103, 0
        %v11119 = vsel %vm7394, %v11104, 0
        %v11122 = vsel %vm7394, %v11105, 0
        %v11125 = vsel %vm7394, %v11106, 0
        %v11128 = vsel %vm7394, %v11107, 0
        %v11131 = vsel %vm7394, %v11108, 0
        %v11134 = vsel %vm7394, %v11109, 0
        %v11137 = vsel %vm7394, %v11110, 0
        %vm11139 = vcmask 1041408
        %v11141 = vsel %vm11139, %v11111, 0
        %11143 = vmatprep.subr.bf16.mxu0 0
        %11144 = vmatpush1.bf16.msra.mxu0 0
        %11145 = vmatprep.subr.bf16.mxu0 0
        %11146 = vmatpush1.bf16.msra.mxu0 0
        %11147 = vmatprep.subr.bf16.mxu0 0
        %11148 = vmatpush1.bf16.msra.mxu0 0
        %11149 = vmatprep.subr.bf16.mxu0 0
        %11150 = vmatpush1.bf16.msra.mxu0 0
        %11151 = vmatprep.subr.bf16.mxu0 0
        %11152 = vmatpush1.bf16.msra.mxu0 0
        %11153 = vmatprep.subr.bf16.mxu0 0
        %11154 = vmatpush1.bf16.msra.mxu0 0
        %11155 = vmatprep.subr.bf16.mxu0 0
        %11156 = vmatpush1.bf16.msra.mxu0 0
        %11157 = vmatprep.subr.bf16.mxu0 0
        %11158 = vmatpush1.bf16.msra.mxu0 %v11141
        %11159 = vmatprep.subr.bf16.mxu0 0
        %11160 = vmatpush2.bf16.msra.mxu0 0
        %11161 = vmatprep.subr.bf16.mxu0 0
        %11162 = vmatpush2.bf16.msra.mxu0 0
        %11163 = vmatprep.subr.bf16.mxu0 0
        %11164 = vmatpush2.bf16.msra.mxu0 0
        %11165 = vmatprep.subr.bf16.mxu0 0
        %11166 = vmatpush2.bf16.msra.mxu0 0
        %11167 = vmatprep.subr.bf16.mxu0 0
        %11168 = vmatpush2.bf16.msra.mxu0 0
        %11169 = vmatprep.subr.bf16.mxu0 0
        %11170 = vmatpush2.bf16.msra.mxu0 0
        %11171 = vmatprep.subr.bf16.mxu0 0
        %11172 = vmatpush2.bf16.msra.mxu0 0
        %11173 = vmatprep.subr.bf16.mxu0 0
        %11174 = vmatpush2.bf16.msra.mxu0 0
        %11175 = vmatprep.mubr.bf16.mxu0 0
        %11176 = vmatmul.mubr.bf16.gmra.mxu0 %v11113
        %v11177 = vpop.f32.mrf.mxu0
        %v11178 = vadd.f32 0.0, %v11177
        %v11179 = vpop.f32.mrf.mxu0
        %v11180 = vpop.f32.mrf.mxu0
        %v11181 = vadd.f32 0.0, %v11180
        %v11182 = vpop.f32.mrf.mxu0
        %11183 = vmatprep.mubr.bf16.mxu0 0
        %11184 = vmatmul.mubr.bf16.gmra.mxu0 %v11116
        %v11185 = vpop.f32.mrf.mxu0
        %v11186 = vadd.f32 0.0, %v11185
        %v11187 = vpop.f32.mrf.mxu0
        %v11188 = vpop.f32.mrf.mxu0
        %v11189 = vadd.f32 0.0, %v11188
        %v11190 = vpop.f32.mrf.mxu0
        %11191 = vmatprep.mubr.bf16.mxu0 0
        %11192 = vmatmul.mubr.bf16.gmra.mxu0 %v11119
        %v11193 = vpop.f32.mrf.mxu0
        %v11194 = vadd.f32 0.0, %v11193
        %v11195 = vpop.f32.mrf.mxu0
        %v11196 = vpop.f32.mrf.mxu0
        %v11197 = vadd.f32 0.0, %v11196
        %v11198 = vpop.f32.mrf.mxu0
        %11199 = vmatprep.mubr.bf16.mxu0 0
        %11200 = vmatmul.mubr.bf16.gmra.mxu0 %v11122
        %v11201 = vpop.f32.mrf.mxu0
        %v11202 = vadd.f32 0.0, %v11201
        %v11203 = vpop.f32.mrf.mxu0
        %v11204 = vpop.f32.mrf.mxu0
        %v11205 = vadd.f32 0.0, %v11204
        %v11206 = vpop.f32.mrf.mxu0
        %11207 = vmatprep.mubr.bf16.mxu0 0
        %11208 = vmatmul.mubr.bf16.gmra.mxu0 %v11125
        %v11209 = vpop.f32.mrf.mxu0
        %v11210 = vadd.f32 0.0, %v11209
        %v11211 = vpop.f32.mrf.mxu0
        %v11212 = vpop.f32.mrf.mxu0
        %v11213 = vadd.f32 0.0, %v11212
        %v11214 = vpop.f32.mrf.mxu0
        %11215 = vmatprep.mubr.bf16.mxu0 0
        %11216 = vmatmul.mubr.bf16.gmra.mxu0 %v11128
        %v11217 = vpop.f32.mrf.mxu0
        %v11218 = vadd.f32 0.0, %v11217
        %v11219 = vpop.f32.mrf.mxu0
        %v11220 = vpop.f32.mrf.mxu0
        %v11221 = vadd.f32 0.0, %v11220
        %v11222 = vpop.f32.mrf.mxu0
        %11223 = vmatprep.mubr.bf16.mxu0 0
        %11224 = vmatmul.mubr.bf16.gmra.mxu0 %v11131
        %v11225 = vpop.f32.mrf.mxu0
        %v11226 = vadd.f32 0.0, %v11225
        %v11227 = vpop.f32.mrf.mxu0
        %v11228 = vpop.f32.mrf.mxu0
        %v11229 = vadd.f32 0.0, %v11228
        %v11230 = vpop.f32.mrf.mxu0
        %11231 = vmatprep.mubr.bf16.mxu0 0
        %11232 = vmatmul.mubr.bf16.gmra.mxu0 %v11134
        %v11233 = vpop.f32.mrf.mxu0
        %v11234 = vadd.f32 0.0, %v11233
        %v11235 = vpop.f32.mrf.mxu0
        %v11236 = vpop.f32.mrf.mxu0
        %v11237 = vadd.f32 0.0, %v11236
        %v11238 = vpop.f32.mrf.mxu0
        %11239 = vmatprep.mubr.bf16.mxu0 0
        %11240 = vmatmul.mubr.bf16.gmra.mxu0 %v11137
        %v11241 = vpop.f32.mrf.mxu0
        %v11242 = vadd.f32 0.0, %v11241
        %v11243 = vpop.f32.mrf.mxu0
        %v11244 = vpop.f32.mrf.mxu0
        %v11245 = vpop.f32.mrf.mxu0
        %11246 = vdwg.mxu0
        %v11264 = vcombine.high %v11178, %v11178
        %v11266 = vunpack.c.l.s4 1966171168
        %v11267 = vunpack.c.0.s8 %v11266
        %v11268 = vlaneseq
        %v11269 = vshrl.u32 %v11268, 7
        %v11270 = vsub.s32 %v11267, %v11269
        %v11271 = vrot.slane %v11178, %v11270
        %v11273 = vunpack.c.l.s4 1966171168
        %v11274 = vunpack.c.0.s8 %v11273
        %v11275 = vlaneseq
        %v11276 = vshrl.u32 %v11275, 7
        %v11277 = vsub.s32 %v11274, %v11276
        %v11278 = vrot.slane %v11264, %v11277
        %v11279 = vcombine.high %v11271, %v11271
        %v11280 = vcombine.high %v11278, %v11278
        %v11282 = vunpack.c.l.s4 1966171168
        %v11283 = vunpack.c.0.s8 %v11282
        %v11284 = vlaneseq
        %v11285 = vshrl.u32 %v11284, 7
        %v11286 = vsub.s32 %v11283, %v11285
        %v11287 = vrot.slane %v11271, %v11286
        %v11289 = vunpack.c.l.s4 1966171168
        %v11290 = vunpack.c.0.s8 %v11289
        %v11291 = vlaneseq
        %v11292 = vshrl.u32 %v11291, 7
        %v11293 = vsub.s32 %v11290, %v11292
        %v11294 = vrot.slane %v11278, %v11293
        %v11296 = vunpack.c.l.s4 1966171168
        %v11297 = vunpack.c.0.s8 %v11296
        %v11298 = vlaneseq
        %v11299 = vshrl.u32 %v11298, 7
        %v11300 = vsub.s32 %v11297, %v11299
        %v11301 = vrot.slane %v11279, %v11300
        %v11303 = vunpack.c.l.s4 1966171168
        %v11304 = vunpack.c.0.s8 %v11303
        %v11305 = vlaneseq
        %v11306 = vshrl.u32 %v11305, 7
        %v11307 = vsub.s32 %v11304, %v11306
        %v11308 = vrot.slane %v11280, %v11307
        %v11309 = vcombine.high %v11287, %v11287
        %v11310 = vcombine.high %v11294, %v11294
        %v11311 = vcombine.high %v11301, %v11301
        %v11312 = vcombine.high %v11308, %v11308
        %v11313 = vcombine.high %v11181, %v11181
        %v11315 = vunpack.c.l.s4 1966171168
        %v11316 = vunpack.c.0.s8 %v11315
        %v11317 = vlaneseq
        %v11318 = vshrl.u32 %v11317, 7
        %v11319 = vsub.s32 %v11316, %v11318
        %v11320 = vrot.slane %v11181, %v11319
        %v11322 = vunpack.c.l.s4 1966171168
        %v11323 = vunpack.c.0.s8 %v11322
        %v11324 = vlaneseq
        %v11325 = vshrl.u32 %v11324, 7
        %v11326 = vsub.s32 %v11323, %v11325
        %v11327 = vrot.slane %v11313, %v11326
        %v11328 = vcombine.high %v11320, %v11320
        %v11329 = vcombine.high %v11327, %v11327
        %v11331 = vunpack.c.l.s4 1966171168
        %v11332 = vunpack.c.0.s8 %v11331
        %v11333 = vlaneseq
        %v11334 = vshrl.u32 %v11333, 7
        %v11335 = vsub.s32 %v11332, %v11334
        %v11336 = vrot.slane %v11320, %v11335
        %v11338 = vunpack.c.l.s4 1966171168
        %v11339 = vunpack.c.0.s8 %v11338
        %v11340 = vlaneseq
        %v11341 = vshrl.u32 %v11340, 7
        %v11342 = vsub.s32 %v11339, %v11341
        %v11343 = vrot.slane %v11327, %v11342
        %v11345 = vunpack.c.l.s4 1966171168
        %v11346 = vunpack.c.0.s8 %v11345
        %v11347 = vlaneseq
        %v11348 = vshrl.u32 %v11347, 7
        %v11349 = vsub.s32 %v11346, %v11348
        %v11350 = vrot.slane %v11328, %v11349
        %v11352 = vunpack.c.l.s4 1966171168
        %v11353 = vunpack.c.0.s8 %v11352
        %v11354 = vlaneseq
        %v11355 = vshrl.u32 %v11354, 7
        %v11356 = vsub.s32 %v11353, %v11355
        %v11357 = vrot.slane %v11329, %v11356
        %v11358 = vcombine.high %v11336, %v11336
        %v11359 = vcombine.high %v11343, %v11343
        %v11360 = vcombine.high %v11350, %v11350
        %v11361 = vcombine.high %v11357, %v11357
        %v11362 = vcombine.high %v11186, %v11186
        %v11364 = vunpack.c.l.s4 1966171168
        %v11365 = vunpack.c.0.s8 %v11364
        %v11366 = vlaneseq
        %v11367 = vshrl.u32 %v11366, 7
        %v11368 = vsub.s32 %v11365, %v11367
        %v11369 = vrot.slane %v11186, %v11368
        %v11371 = vunpack.c.l.s4 1966171168
        %v11372 = vunpack.c.0.s8 %v11371
        %v11373 = vlaneseq
        %v11374 = vshrl.u32 %v11373, 7
        %v11375 = vsub.s32 %v11372, %v11374
        %v11376 = vrot.slane %v11362, %v11375
        %v11377 = vcombine.high %v11369, %v11369
        %v11378 = vcombine.high %v11376, %v11376
        %v11380 = vunpack.c.l.s4 1966171168
        %v11381 = vunpack.c.0.s8 %v11380
        %v11382 = vlaneseq
        %v11383 = vshrl.u32 %v11382, 7
        %v11384 = vsub.s32 %v11381, %v11383
        %v11385 = vrot.slane %v11369, %v11384
        %v11387 = vunpack.c.l.s4 1966171168
        %v11388 = vunpack.c.0.s8 %v11387
        %v11389 = vlaneseq
        %v11390 = vshrl.u32 %v11389, 7
        %v11391 = vsub.s32 %v11388, %v11390
        %v11392 = vrot.slane %v11376, %v11391
        %v11394 = vunpack.c.l.s4 1966171168
        %v11395 = vunpack.c.0.s8 %v11394
        %v11396 = vlaneseq
        %v11397 = vshrl.u32 %v11396, 7
        %v11398 = vsub.s32 %v11395, %v11397
        %v11399 = vrot.slane %v11377, %v11398
        %v11401 = vunpack.c.l.s4 1966171168
        %v11402 = vunpack.c.0.s8 %v11401
        %v11403 = vlaneseq
        %v11404 = vshrl.u32 %v11403, 7
        %v11405 = vsub.s32 %v11402, %v11404
        %v11406 = vrot.slane %v11378, %v11405
        %v11407 = vcombine.high %v11385, %v11385
        %v11408 = vcombine.high %v11392, %v11392
        %v11409 = vcombine.high %v11399, %v11399
        %v11410 = vcombine.high %v11406, %v11406
        %v11411 = vcombine.high %v11189, %v11189
        %v11413 = vunpack.c.l.s4 1966171168
        %v11414 = vunpack.c.0.s8 %v11413
        %v11415 = vlaneseq
        %v11416 = vshrl.u32 %v11415, 7
        %v11417 = vsub.s32 %v11414, %v11416
        %v11418 = vrot.slane %v11189, %v11417
        %v11420 = vunpack.c.l.s4 1966171168
        %v11421 = vunpack.c.0.s8 %v11420
        %v11422 = vlaneseq
        %v11423 = vshrl.u32 %v11422, 7
        %v11424 = vsub.s32 %v11421, %v11423
        %v11425 = vrot.slane %v11411, %v11424
        %v11426 = vcombine.high %v11418, %v11418
        %v11427 = vcombine.high %v11425, %v11425
        %v11429 = vunpack.c.l.s4 1966171168
        %v11430 = vunpack.c.0.s8 %v11429
        %v11431 = vlaneseq
        %v11432 = vshrl.u32 %v11431, 7
        %v11433 = vsub.s32 %v11430, %v11432
        %v11434 = vrot.slane %v11418, %v11433
        %v11436 = vunpack.c.l.s4 1966171168
        %v11437 = vunpack.c.0.s8 %v11436
        %v11438 = vlaneseq
        %v11439 = vshrl.u32 %v11438, 7
        %v11440 = vsub.s32 %v11437, %v11439
        %v11441 = vrot.slane %v11425, %v11440
        %v11443 = vunpack.c.l.s4 1966171168
        %v11444 = vunpack.c.0.s8 %v11443
        %v11445 = vlaneseq
        %v11446 = vshrl.u32 %v11445, 7
        %v11447 = vsub.s32 %v11444, %v11446
        %v11448 = vrot.slane %v11426, %v11447
        %v11450 = vunpack.c.l.s4 1966171168
        %v11451 = vunpack.c.0.s8 %v11450
        %v11452 = vlaneseq
        %v11453 = vshrl.u32 %v11452, 7
        %v11454 = vsub.s32 %v11451, %v11453
        %v11455 = vrot.slane %v11427, %v11454
        %v11456 = vcombine.high %v11434, %v11434
        %v11457 = vcombine.high %v11441, %v11441
        %v11458 = vcombine.high %v11448, %v11448
        %v11459 = vcombine.high %v11455, %v11455
        %v11460 = vcombine.high %v11194, %v11194
        %v11462 = vunpack.c.l.s4 1966171168
        %v11463 = vunpack.c.0.s8 %v11462
        %v11464 = vlaneseq
        %v11465 = vshrl.u32 %v11464, 7
        %v11466 = vsub.s32 %v11463, %v11465
        %v11467 = vrot.slane %v11194, %v11466
        %v11469 = vunpack.c.l.s4 1966171168
        %v11470 = vunpack.c.0.s8 %v11469
        %v11471 = vlaneseq
        %v11472 = vshrl.u32 %v11471, 7
        %v11473 = vsub.s32 %v11470, %v11472
        %v11474 = vrot.slane %v11460, %v11473
        %v11475 = vcombine.high %v11467, %v11467
        %v11476 = vcombine.high %v11474, %v11474
        %v11478 = vunpack.c.l.s4 1966171168
        %v11479 = vunpack.c.0.s8 %v11478
        %v11480 = vlaneseq
        %v11481 = vshrl.u32 %v11480, 7
        %v11482 = vsub.s32 %v11479, %v11481
        %v11483 = vrot.slane %v11467, %v11482
        %v11485 = vunpack.c.l.s4 1966171168
        %v11486 = vunpack.c.0.s8 %v11485
        %v11487 = vlaneseq
        %v11488 = vshrl.u32 %v11487, 7
        %v11489 = vsub.s32 %v11486, %v11488
        %v11490 = vrot.slane %v11474, %v11489
        %v11492 = vunpack.c.l.s4 1966171168
        %v11493 = vunpack.c.0.s8 %v11492
        %v11494 = vlaneseq
        %v11495 = vshrl.u32 %v11494, 7
        %v11496 = vsub.s32 %v11493, %v11495
        %v11497 = vrot.slane %v11475, %v11496
        %v11499 = vunpack.c.l.s4 1966171168
        %v11500 = vunpack.c.0.s8 %v11499
        %v11501 = vlaneseq
        %v11502 = vshrl.u32 %v11501, 7
        %v11503 = vsub.s32 %v11500, %v11502
        %v11504 = vrot.slane %v11476, %v11503
        %v11505 = vcombine.high %v11483, %v11483
        %v11506 = vcombine.high %v11490, %v11490
        %v11507 = vcombine.high %v11497, %v11497
        %v11508 = vcombine.high %v11504, %v11504
        %v11509 = vcombine.high %v11197, %v11197
        %v11511 = vunpack.c.l.s4 1966171168
        %v11512 = vunpack.c.0.s8 %v11511
        %v11513 = vlaneseq
        %v11514 = vshrl.u32 %v11513, 7
        %v11515 = vsub.s32 %v11512, %v11514
        %v11516 = vrot.slane %v11197, %v11515
        %v11518 = vunpack.c.l.s4 1966171168
        %v11519 = vunpack.c.0.s8 %v11518
        %v11520 = vlaneseq
        %v11521 = vshrl.u32 %v11520, 7
        %v11522 = vsub.s32 %v11519, %v11521
        %v11523 = vrot.slane %v11509, %v11522
        %v11524 = vcombine.high %v11516, %v11516
        %v11525 = vcombine.high %v11523, %v11523
        %v11527 = vunpack.c.l.s4 1966171168
        %v11528 = vunpack.c.0.s8 %v11527
        %v11529 = vlaneseq
        %v11530 = vshrl.u32 %v11529, 7
        %v11531 = vsub.s32 %v11528, %v11530
        %v11532 = vrot.slane %v11516, %v11531
        %v11534 = vunpack.c.l.s4 1966171168
        %v11535 = vunpack.c.0.s8 %v11534
        %v11536 = vlaneseq
        %v11537 = vshrl.u32 %v11536, 7
        %v11538 = vsub.s32 %v11535, %v11537
        %v11539 = vrot.slane %v11523, %v11538
        %v11541 = vunpack.c.l.s4 1966171168
        %v11542 = vunpack.c.0.s8 %v11541
        %v11543 = vlaneseq
        %v11544 = vshrl.u32 %v11543, 7
        %v11545 = vsub.s32 %v11542, %v11544
        %v11546 = vrot.slane %v11524, %v11545
        %v11548 = vunpack.c.l.s4 1966171168
        %v11549 = vunpack.c.0.s8 %v11548
        %v11550 = vlaneseq
        %v11551 = vshrl.u32 %v11550, 7
        %v11552 = vsub.s32 %v11549, %v11551
        %v11553 = vrot.slane %v11525, %v11552
        %v11554 = vcombine.high %v11532, %v11532
        %v11555 = vcombine.high %v11539, %v11539
        %v11556 = vcombine.high %v11546, %v11546
        %v11557 = vcombine.high %v11553, %v11553
        %v11558 = vcombine.high %v11202, %v11202
        %v11560 = vunpack.c.l.s4 1966171168
        %v11561 = vunpack.c.0.s8 %v11560
        %v11562 = vlaneseq
        %v11563 = vshrl.u32 %v11562, 7
        %v11564 = vsub.s32 %v11561, %v11563
        %v11565 = vrot.slane %v11202, %v11564
        %v11567 = vunpack.c.l.s4 1966171168
        %v11568 = vunpack.c.0.s8 %v11567
        %v11569 = vlaneseq
        %v11570 = vshrl.u32 %v11569, 7
        %v11571 = vsub.s32 %v11568, %v11570
        %v11572 = vrot.slane %v11558, %v11571
        %v11573 = vcombine.high %v11565, %v11565
        %v11574 = vcombine.high %v11572, %v11572
        %v11576 = vunpack.c.l.s4 1966171168
        %v11577 = vunpack.c.0.s8 %v11576
        %v11578 = vlaneseq
        %v11579 = vshrl.u32 %v11578, 7
        %v11580 = vsub.s32 %v11577, %v11579
        %v11581 = vrot.slane %v11565, %v11580
        %v11583 = vunpack.c.l.s4 1966171168
        %v11584 = vunpack.c.0.s8 %v11583
        %v11585 = vlaneseq
        %v11586 = vshrl.u32 %v11585, 7
        %v11587 = vsub.s32 %v11584, %v11586
        %v11588 = vrot.slane %v11572, %v11587
        %v11590 = vunpack.c.l.s4 1966171168
        %v11591 = vunpack.c.0.s8 %v11590
        %v11592 = vlaneseq
        %v11593 = vshrl.u32 %v11592, 7
        %v11594 = vsub.s32 %v11591, %v11593
        %v11595 = vrot.slane %v11573, %v11594
        %v11597 = vunpack.c.l.s4 1966171168
        %v11598 = vunpack.c.0.s8 %v11597
        %v11599 = vlaneseq
        %v11600 = vshrl.u32 %v11599, 7
        %v11601 = vsub.s32 %v11598, %v11600
        %v11602 = vrot.slane %v11574, %v11601
        %v11603 = vcombine.high %v11581, %v11581
        %v11604 = vcombine.high %v11588, %v11588
        %v11605 = vcombine.high %v11595, %v11595
        %v11606 = vcombine.high %v11602, %v11602
        %v11607 = vcombine.high %v11205, %v11205
        %v11609 = vunpack.c.l.s4 1966171168
        %v11610 = vunpack.c.0.s8 %v11609
        %v11611 = vlaneseq
        %v11612 = vshrl.u32 %v11611, 7
        %v11613 = vsub.s32 %v11610, %v11612
        %v11614 = vrot.slane %v11205, %v11613
        %v11616 = vunpack.c.l.s4 1966171168
        %v11617 = vunpack.c.0.s8 %v11616
        %v11618 = vlaneseq
        %v11619 = vshrl.u32 %v11618, 7
        %v11620 = vsub.s32 %v11617, %v11619
        %v11621 = vrot.slane %v11607, %v11620
        %v11622 = vcombine.high %v11614, %v11614
        %v11623 = vcombine.high %v11621, %v11621
        %v11625 = vunpack.c.l.s4 1966171168
        %v11626 = vunpack.c.0.s8 %v11625
        %v11627 = vlaneseq
        %v11628 = vshrl.u32 %v11627, 7
        %v11629 = vsub.s32 %v11626, %v11628
        %v11630 = vrot.slane %v11614, %v11629
        %v11632 = vunpack.c.l.s4 1966171168
        %v11633 = vunpack.c.0.s8 %v11632
        %v11634 = vlaneseq
        %v11635 = vshrl.u32 %v11634, 7
        %v11636 = vsub.s32 %v11633, %v11635
        %v11637 = vrot.slane %v11621, %v11636
        %v11639 = vunpack.c.l.s4 1966171168
        %v11640 = vunpack.c.0.s8 %v11639
        %v11641 = vlaneseq
        %v11642 = vshrl.u32 %v11641, 7
        %v11643 = vsub.s32 %v11640, %v11642
        %v11644 = vrot.slane %v11622, %v11643
        %v11646 = vunpack.c.l.s4 1966171168
        %v11647 = vunpack.c.0.s8 %v11646
        %v11648 = vlaneseq
        %v11649 = vshrl.u32 %v11648, 7
        %v11650 = vsub.s32 %v11647, %v11649
        %v11651 = vrot.slane %v11623, %v11650
        %v11652 = vcombine.high %v11630, %v11630
        %v11653 = vcombine.high %v11637, %v11637
        %v11654 = vcombine.high %v11644, %v11644
        %v11655 = vcombine.high %v11651, %v11651
        %v11656 = vcombine.high %v11210, %v11210
        %v11658 = vunpack.c.l.s4 1966171168
        %v11659 = vunpack.c.0.s8 %v11658
        %v11660 = vlaneseq
        %v11661 = vshrl.u32 %v11660, 7
        %v11662 = vsub.s32 %v11659, %v11661
        %v11663 = vrot.slane %v11210, %v11662
        %v11665 = vunpack.c.l.s4 1966171168
        %v11666 = vunpack.c.0.s8 %v11665
        %v11667 = vlaneseq
        %v11668 = vshrl.u32 %v11667, 7
        %v11669 = vsub.s32 %v11666, %v11668
        %v11670 = vrot.slane %v11656, %v11669
        %v11671 = vcombine.high %v11663, %v11663
        %v11672 = vcombine.high %v11670, %v11670
        %v11674 = vunpack.c.l.s4 1966171168
        %v11675 = vunpack.c.0.s8 %v11674
        %v11676 = vlaneseq
        %v11677 = vshrl.u32 %v11676, 7
        %v11678 = vsub.s32 %v11675, %v11677
        %v11679 = vrot.slane %v11663, %v11678
        %v11681 = vunpack.c.l.s4 1966171168
        %v11682 = vunpack.c.0.s8 %v11681
        %v11683 = vlaneseq
        %v11684 = vshrl.u32 %v11683, 7
        %v11685 = vsub.s32 %v11682, %v11684
        %v11686 = vrot.slane %v11670, %v11685
        %v11688 = vunpack.c.l.s4 1966171168
        %v11689 = vunpack.c.0.s8 %v11688
        %v11690 = vlaneseq
        %v11691 = vshrl.u32 %v11690, 7
        %v11692 = vsub.s32 %v11689, %v11691
        %v11693 = vrot.slane %v11671, %v11692
        %v11695 = vunpack.c.l.s4 1966171168
        %v11696 = vunpack.c.0.s8 %v11695
        %v11697 = vlaneseq
        %v11698 = vshrl.u32 %v11697, 7
        %v11699 = vsub.s32 %v11696, %v11698
        %v11700 = vrot.slane %v11672, %v11699
        %v11701 = vcombine.high %v11679, %v11679
        %v11702 = vcombine.high %v11686, %v11686
        %v11703 = vcombine.high %v11693, %v11693
        %v11704 = vcombine.high %v11700, %v11700
        %v11705 = vcombine.high %v11213, %v11213
        %v11707 = vunpack.c.l.s4 1966171168
        %v11708 = vunpack.c.0.s8 %v11707
        %v11709 = vlaneseq
        %v11710 = vshrl.u32 %v11709, 7
        %v11711 = vsub.s32 %v11708, %v11710
        %v11712 = vrot.slane %v11213, %v11711
        %v11714 = vunpack.c.l.s4 1966171168
        %v11715 = vunpack.c.0.s8 %v11714
        %v11716 = vlaneseq
        %v11717 = vshrl.u32 %v11716, 7
        %v11718 = vsub.s32 %v11715, %v11717
        %v11719 = vrot.slane %v11705, %v11718
        %v11720 = vcombine.high %v11712, %v11712
        %v11721 = vcombine.high %v11719, %v11719
        %v11723 = vunpack.c.l.s4 1966171168
        %v11724 = vunpack.c.0.s8 %v11723
        %v11725 = vlaneseq
        %v11726 = vshrl.u32 %v11725, 7
        %v11727 = vsub.s32 %v11724, %v11726
        %v11728 = vrot.slane %v11712, %v11727
        %v11730 = vunpack.c.l.s4 1966171168
        %v11731 = vunpack.c.0.s8 %v11730
        %v11732 = vlaneseq
        %v11733 = vshrl.u32 %v11732, 7
        %v11734 = vsub.s32 %v11731, %v11733
        %v11735 = vrot.slane %v11719, %v11734
        %v11737 = vunpack.c.l.s4 1966171168
        %v11738 = vunpack.c.0.s8 %v11737
        %v11739 = vlaneseq
        %v11740 = vshrl.u32 %v11739, 7
        %v11741 = vsub.s32 %v11738, %v11740
        %v11742 = vrot.slane %v11720, %v11741
        %v11744 = vunpack.c.l.s4 1966171168
        %v11745 = vunpack.c.0.s8 %v11744
        %v11746 = vlaneseq
        %v11747 = vshrl.u32 %v11746, 7
        %v11748 = vsub.s32 %v11745, %v11747
        %v11749 = vrot.slane %v11721, %v11748
        %v11750 = vcombine.high %v11728, %v11728
        %v11751 = vcombine.high %v11735, %v11735
        %v11752 = vcombine.high %v11742, %v11742
        %v11753 = vcombine.high %v11749, %v11749
        %v11754 = vcombine.high %v11218, %v11218
        %v11756 = vunpack.c.l.s4 1966171168
        %v11757 = vunpack.c.0.s8 %v11756
        %v11758 = vlaneseq
        %v11759 = vshrl.u32 %v11758, 7
        %v11760 = vsub.s32 %v11757, %v11759
        %v11761 = vrot.slane %v11218, %v11760
        %v11763 = vunpack.c.l.s4 1966171168
        %v11764 = vunpack.c.0.s8 %v11763
        %v11765 = vlaneseq
        %v11766 = vshrl.u32 %v11765, 7
        %v11767 = vsub.s32 %v11764, %v11766
        %v11768 = vrot.slane %v11754, %v11767
        %v11769 = vcombine.high %v11761, %v11761
        %v11770 = vcombine.high %v11768, %v11768
        %v11772 = vunpack.c.l.s4 1966171168
        %v11773 = vunpack.c.0.s8 %v11772
        %v11774 = vlaneseq
        %v11775 = vshrl.u32 %v11774, 7
        %v11776 = vsub.s32 %v11773, %v11775
        %v11777 = vrot.slane %v11761, %v11776
        %v11779 = vunpack.c.l.s4 1966171168
        %v11780 = vunpack.c.0.s8 %v11779
        %v11781 = vlaneseq
        %v11782 = vshrl.u32 %v11781, 7
        %v11783 = vsub.s32 %v11780, %v11782
        %v11784 = vrot.slane %v11768, %v11783
        %v11786 = vunpack.c.l.s4 1966171168
        %v11787 = vunpack.c.0.s8 %v11786
        %v11788 = vlaneseq
        %v11789 = vshrl.u32 %v11788, 7
        %v11790 = vsub.s32 %v11787, %v11789
        %v11791 = vrot.slane %v11769, %v11790
        %v11793 = vunpack.c.l.s4 1966171168
        %v11794 = vunpack.c.0.s8 %v11793
        %v11795 = vlaneseq
        %v11796 = vshrl.u32 %v11795, 7
        %v11797 = vsub.s32 %v11794, %v11796
        %v11798 = vrot.slane %v11770, %v11797
        %v11799 = vcombine.high %v11777, %v11777
        %v11800 = vcombine.high %v11784, %v11784
        %v11801 = vcombine.high %v11791, %v11791
        %v11802 = vcombine.high %v11798, %v11798
        %v11803 = vcombine.high %v11221, %v11221
        %v11805 = vunpack.c.l.s4 1966171168
        %v11806 = vunpack.c.0.s8 %v11805
        %v11807 = vlaneseq
        %v11808 = vshrl.u32 %v11807, 7
        %v11809 = vsub.s32 %v11806, %v11808
        %v11810 = vrot.slane %v11221, %v11809
        %v11812 = vunpack.c.l.s4 1966171168
        %v11813 = vunpack.c.0.s8 %v11812
        %v11814 = vlaneseq
        %v11815 = vshrl.u32 %v11814, 7
        %v11816 = vsub.s32 %v11813, %v11815
        %v11817 = vrot.slane %v11803, %v11816
        %v11818 = vcombine.high %v11810, %v11810
        %v11819 = vcombine.high %v11817, %v11817
        %v11821 = vunpack.c.l.s4 1966171168
        %v11822 = vunpack.c.0.s8 %v11821
        %v11823 = vlaneseq
        %v11824 = vshrl.u32 %v11823, 7
        %v11825 = vsub.s32 %v11822, %v11824
        %v11826 = vrot.slane %v11810, %v11825
        %v11828 = vunpack.c.l.s4 1966171168
        %v11829 = vunpack.c.0.s8 %v11828
        %v11830 = vlaneseq
        %v11831 = vshrl.u32 %v11830, 7
        %v11832 = vsub.s32 %v11829, %v11831
        %v11833 = vrot.slane %v11817, %v11832
        %v11835 = vunpack.c.l.s4 1966171168
        %v11836 = vunpack.c.0.s8 %v11835
        %v11837 = vlaneseq
        %v11838 = vshrl.u32 %v11837, 7
        %v11839 = vsub.s32 %v11836, %v11838
        %v11840 = vrot.slane %v11818, %v11839
        %v11842 = vunpack.c.l.s4 1966171168
        %v11843 = vunpack.c.0.s8 %v11842
        %v11844 = vlaneseq
        %v11845 = vshrl.u32 %v11844, 7
        %v11846 = vsub.s32 %v11843, %v11845
        %v11847 = vrot.slane %v11819, %v11846
        %v11848 = vcombine.high %v11826, %v11826
        %v11849 = vcombine.high %v11833, %v11833
        %v11850 = vcombine.high %v11840, %v11840
        %v11851 = vcombine.high %v11847, %v11847
        %v11852 = vcombine.high %v11226, %v11226
        %v11854 = vunpack.c.l.s4 1966171168
        %v11855 = vunpack.c.0.s8 %v11854
        %v11856 = vlaneseq
        %v11857 = vshrl.u32 %v11856, 7
        %v11858 = vsub.s32 %v11855, %v11857
        %v11859 = vrot.slane %v11226, %v11858
        %v11861 = vunpack.c.l.s4 1966171168
        %v11862 = vunpack.c.0.s8 %v11861
        %v11863 = vlaneseq
        %v11864 = vshrl.u32 %v11863, 7
        %v11865 = vsub.s32 %v11862, %v11864
        %v11866 = vrot.slane %v11852, %v11865
        %v11867 = vcombine.high %v11859, %v11859
        %v11868 = vcombine.high %v11866, %v11866
        %v11870 = vunpack.c.l.s4 1966171168
        %v11871 = vunpack.c.0.s8 %v11870
        %v11872 = vlaneseq
        %v11873 = vshrl.u32 %v11872, 7
        %v11874 = vsub.s32 %v11871, %v11873
        %v11875 = vrot.slane %v11859, %v11874
        %v11877 = vunpack.c.l.s4 1966171168
        %v11878 = vunpack.c.0.s8 %v11877
        %v11879 = vlaneseq
        %v11880 = vshrl.u32 %v11879, 7
        %v11881 = vsub.s32 %v11878, %v11880
        %v11882 = vrot.slane %v11866, %v11881
        %v11884 = vunpack.c.l.s4 1966171168
        %v11885 = vunpack.c.0.s8 %v11884
        %v11886 = vlaneseq
        %v11887 = vshrl.u32 %v11886, 7
        %v11888 = vsub.s32 %v11885, %v11887
        %v11889 = vrot.slane %v11867, %v11888
        %v11891 = vunpack.c.l.s4 1966171168
        %v11892 = vunpack.c.0.s8 %v11891
        %v11893 = vlaneseq
        %v11894 = vshrl.u32 %v11893, 7
        %v11895 = vsub.s32 %v11892, %v11894
        %v11896 = vrot.slane %v11868, %v11895
        %v11897 = vcombine.high %v11875, %v11875
        %v11898 = vcombine.high %v11882, %v11882
        %v11899 = vcombine.high %v11889, %v11889
        %v11900 = vcombine.high %v11896, %v11896
        %v11901 = vcombine.high %v11229, %v11229
        %v11903 = vunpack.c.l.s4 1966171168
        %v11904 = vunpack.c.0.s8 %v11903
        %v11905 = vlaneseq
        %v11906 = vshrl.u32 %v11905, 7
        %v11907 = vsub.s32 %v11904, %v11906
        %v11908 = vrot.slane %v11229, %v11907
        %v11910 = vunpack.c.l.s4 1966171168
        %v11911 = vunpack.c.0.s8 %v11910
        %v11912 = vlaneseq
        %v11913 = vshrl.u32 %v11912, 7
        %v11914 = vsub.s32 %v11911, %v11913
        %v11915 = vrot.slane %v11901, %v11914
        %v11916 = vcombine.high %v11908, %v11908
        %v11917 = vcombine.high %v11915, %v11915
        %v11919 = vunpack.c.l.s4 1966171168
        %v11920 = vunpack.c.0.s8 %v11919
        %v11921 = vlaneseq
        %v11922 = vshrl.u32 %v11921, 7
        %v11923 = vsub.s32 %v11920, %v11922
        %v11924 = vrot.slane %v11908, %v11923
        %v11926 = vunpack.c.l.s4 1966171168
        %v11927 = vunpack.c.0.s8 %v11926
        %v11928 = vlaneseq
        %v11929 = vshrl.u32 %v11928, 7
        %v11930 = vsub.s32 %v11927, %v11929
        %v11931 = vrot.slane %v11915, %v11930
        %v11933 = vunpack.c.l.s4 1966171168
        %v11934 = vunpack.c.0.s8 %v11933
        %v11935 = vlaneseq
        %v11936 = vshrl.u32 %v11935, 7
        %v11937 = vsub.s32 %v11934, %v11936
        %v11938 = vrot.slane %v11916, %v11937
        %v11940 = vunpack.c.l.s4 1966171168
        %v11941 = vunpack.c.0.s8 %v11940
        %v11942 = vlaneseq
        %v11943 = vshrl.u32 %v11942, 7
        %v11944 = vsub.s32 %v11941, %v11943
        %v11945 = vrot.slane %v11917, %v11944
        %v11946 = vcombine.high %v11924, %v11924
        %v11947 = vcombine.high %v11931, %v11931
        %v11948 = vcombine.high %v11938, %v11938
        %v11949 = vcombine.high %v11945, %v11945
        %v11950 = vcombine.high %v11234, %v11234
        %v11952 = vunpack.c.l.s4 1966171168
        %v11953 = vunpack.c.0.s8 %v11952
        %v11954 = vlaneseq
        %v11955 = vshrl.u32 %v11954, 7
        %v11956 = vsub.s32 %v11953, %v11955
        %v11957 = vrot.slane %v11234, %v11956
        %v11959 = vunpack.c.l.s4 1966171168
        %v11960 = vunpack.c.0.s8 %v11959
        %v11961 = vlaneseq
        %v11962 = vshrl.u32 %v11961, 7
        %v11963 = vsub.s32 %v11960, %v11962
        %v11964 = vrot.slane %v11950, %v11963
        %v11965 = vcombine.high %v11957, %v11957
        %v11966 = vcombine.high %v11964, %v11964
        %v11968 = vunpack.c.l.s4 1966171168
        %v11969 = vunpack.c.0.s8 %v11968
        %v11970 = vlaneseq
        %v11971 = vshrl.u32 %v11970, 7
        %v11972 = vsub.s32 %v11969, %v11971
        %v11973 = vrot.slane %v11957, %v11972
        %v11975 = vunpack.c.l.s4 1966171168
        %v11976 = vunpack.c.0.s8 %v11975
        %v11977 = vlaneseq
        %v11978 = vshrl.u32 %v11977, 7
        %v11979 = vsub.s32 %v11976, %v11978
        %v11980 = vrot.slane %v11964, %v11979
        %v11982 = vunpack.c.l.s4 1966171168
        %v11983 = vunpack.c.0.s8 %v11982
        %v11984 = vlaneseq
        %v11985 = vshrl.u32 %v11984, 7
        %v11986 = vsub.s32 %v11983, %v11985
        %v11987 = vrot.slane %v11965, %v11986
        %v11989 = vunpack.c.l.s4 1966171168
        %v11990 = vunpack.c.0.s8 %v11989
        %v11991 = vlaneseq
        %v11992 = vshrl.u32 %v11991, 7
        %v11993 = vsub.s32 %v11990, %v11992
        %v11994 = vrot.slane %v11966, %v11993
        %v11995 = vcombine.high %v11973, %v11973
        %v11996 = vcombine.high %v11980, %v11980
        %v11997 = vcombine.high %v11987, %v11987
        %v11998 = vcombine.high %v11994, %v11994
        %v11999 = vcombine.high %v11237, %v11237
        %v12001 = vunpack.c.l.s4 1966171168
        %v12002 = vunpack.c.0.s8 %v12001
        %v12003 = vlaneseq
        %v12004 = vshrl.u32 %v12003, 7
        %v12005 = vsub.s32 %v12002, %v12004
        %v12006 = vrot.slane %v11237, %v12005
        %v12008 = vunpack.c.l.s4 1966171168
        %v12009 = vunpack.c.0.s8 %v12008
        %v12010 = vlaneseq
        %v12011 = vshrl.u32 %v12010, 7
        %v12012 = vsub.s32 %v12009, %v12011
        %v12013 = vrot.slane %v11999, %v12012
        %v12014 = vcombine.high %v12006, %v12006
        %v12015 = vcombine.high %v12013, %v12013
        %v12017 = vunpack.c.l.s4 1966171168
        %v12018 = vunpack.c.0.s8 %v12017
        %v12019 = vlaneseq
        %v12020 = vshrl.u32 %v12019, 7
        %v12021 = vsub.s32 %v12018, %v12020
        %v12022 = vrot.slane %v12006, %v12021
        %v12024 = vunpack.c.l.s4 1966171168
        %v12025 = vunpack.c.0.s8 %v12024
        %v12026 = vlaneseq
        %v12027 = vshrl.u32 %v12026, 7
        %v12028 = vsub.s32 %v12025, %v12027
        %v12029 = vrot.slane %v12013, %v12028
        %v12031 = vunpack.c.l.s4 1966171168
        %v12032 = vunpack.c.0.s8 %v12031
        %v12033 = vlaneseq
        %v12034 = vshrl.u32 %v12033, 7
        %v12035 = vsub.s32 %v12032, %v12034
        %v12036 = vrot.slane %v12014, %v12035
        %v12038 = vunpack.c.l.s4 1966171168
        %v12039 = vunpack.c.0.s8 %v12038
        %v12040 = vlaneseq
        %v12041 = vshrl.u32 %v12040, 7
        %v12042 = vsub.s32 %v12039, %v12041
        %v12043 = vrot.slane %v12015, %v12042
        %v12044 = vcombine.high %v12022, %v12022
        %v12045 = vcombine.high %v12029, %v12029
        %v12046 = vcombine.high %v12036, %v12036
        %v12047 = vcombine.high %v12043, %v12043
        %v12048 = vcombine.high %v11242, %v11242
        %v12050 = vunpack.c.l.s4 1966171168
        %v12051 = vunpack.c.0.s8 %v12050
        %v12052 = vlaneseq
        %v12053 = vshrl.u32 %v12052, 7
        %v12054 = vsub.s32 %v12051, %v12053
        %v12055 = vrot.slane %v11242, %v12054
        %v12057 = vunpack.c.l.s4 1966171168
        %v12058 = vunpack.c.0.s8 %v12057
        %v12059 = vlaneseq
        %v12060 = vshrl.u32 %v12059, 7
        %v12061 = vsub.s32 %v12058, %v12060
        %v12062 = vrot.slane %v12048, %v12061
        %v12063 = vcombine.high %v12055, %v12055
        %v12064 = vcombine.high %v12062, %v12062
        %v12066 = vunpack.c.l.s4 1966171168
        %v12067 = vunpack.c.0.s8 %v12066
        %v12068 = vlaneseq
        %v12069 = vshrl.u32 %v12068, 7
        %v12070 = vsub.s32 %v12067, %v12069
        %v12071 = vrot.slane %v12055, %v12070
        %v12073 = vunpack.c.l.s4 1966171168
        %v12074 = vunpack.c.0.s8 %v12073
        %v12075 = vlaneseq
        %v12076 = vshrl.u32 %v12075, 7
        %v12077 = vsub.s32 %v12074, %v12076
        %v12078 = vrot.slane %v12062, %v12077
        %v12080 = vunpack.c.l.s4 1966171168
        %v12081 = vunpack.c.0.s8 %v12080
        %v12082 = vlaneseq
        %v12083 = vshrl.u32 %v12082, 7
        %v12084 = vsub.s32 %v12081, %v12083
        %v12085 = vrot.slane %v12063, %v12084
        %v12087 = vunpack.c.l.s4 1966171168
        %v12088 = vunpack.c.0.s8 %v12087
        %v12089 = vlaneseq
        %v12090 = vshrl.u32 %v12089, 7
        %v12091 = vsub.s32 %v12088, %v12090
        %v12092 = vrot.slane %v12064, %v12091
        %v12093 = vcombine.high %v12071, %v12071
        %v12094 = vcombine.high %v12078, %v12078
        %v12095 = vcombine.high %v12085, %v12085
        %v12096 = vcombine.high %v12092, %v12092
        %12233 = vrot.lane.b32.xlu0 %v2726, 96
        %v12234 = vpop.permute.xlu0 %12233
        %12235 = vrot.lane.b32.xlu0 %v2740, 96
        %v12236 = vpop.permute.xlu0 %12235
        %12237 = vrot.lane.b32.xlu0 %v2748, 96
        %v12238 = vpop.permute.xlu0 %12237
        %12239 = vrot.lane.b32.xlu0 %v2750, 96
        %v12240 = vpop.permute.xlu0 %12239
        %12241 = vrot.lane.b32.xlu0 %v2733, 96
        %v12242 = vpop.permute.xlu0 %12241
        %12243 = vrot.lane.b32.xlu0 %v2747, 96
        %v12244 = vpop.permute.xlu0 %12243
        %12245 = vrot.lane.b32.xlu0 %v2749, 96
        %v12246 = vpop.permute.xlu0 %12245
        %12247 = vrot.lane.b32.xlu0 %v2751, 96
        %v12248 = vpop.permute.xlu0 %12247
        %12249 = vrot.lane.b32.xlu0 %v2775, 96
        %v12250 = vpop.permute.xlu0 %12249
        %12251 = vrot.lane.b32.xlu0 %v2789, 96
        %v12252 = vpop.permute.xlu0 %12251
        %12253 = vrot.lane.b32.xlu0 %v2797, 96
        %v12254 = vpop.permute.xlu0 %12253
        %12255 = vrot.lane.b32.xlu0 %v2799, 96
        %v12256 = vpop.permute.xlu0 %12255
        %12257 = vrot.lane.b32.xlu0 %v2782, 96
        %v12258 = vpop.permute.xlu0 %12257
        %12259 = vrot.lane.b32.xlu0 %v2796, 96
        %v12260 = vpop.permute.xlu0 %12259
        %12261 = vrot.lane.b32.xlu0 %v2798, 96
        %v12262 = vpop.permute.xlu0 %12261
        %12263 = vrot.lane.b32.xlu0 %v2800, 96
        %v12264 = vpop.permute.xlu0 %12263
        %12265 = vrot.lane.b32.xlu0 %v2824, 96
        %v12266 = vpop.permute.xlu0 %12265
        %12267 = vrot.lane.b32.xlu0 %v2838, 96
        %v12268 = vpop.permute.xlu0 %12267
        %12269 = vrot.lane.b32.xlu0 %v2846, 96
        %v12270 = vpop.permute.xlu0 %12269
        %12271 = vrot.lane.b32.xlu0 %v2848, 96
        %v12272 = vpop.permute.xlu0 %12271
        %12273 = vrot.lane.b32.xlu0 %v2831, 96
        %v12274 = vpop.permute.xlu0 %12273
        %12275 = vrot.lane.b32.xlu0 %v2845, 96
        %v12276 = vpop.permute.xlu0 %12275
        %12277 = vrot.lane.b32.xlu0 %v2847, 96
        %v12278 = vpop.permute.xlu0 %12277
        %12279 = vrot.lane.b32.xlu0 %v2849, 96
        %v12280 = vpop.permute.xlu0 %12279
        %12281 = vrot.lane.b32.xlu0 %v2873, 96
        %v12282 = vpop.permute.xlu0 %12281
        %12283 = vrot.lane.b32.xlu0 %v2887, 96
        %v12284 = vpop.permute.xlu0 %12283
        %12285 = vrot.lane.b32.xlu0 %v2895, 96
        %v12286 = vpop.permute.xlu0 %12285
        %12287 = vrot.lane.b32.xlu0 %v2897, 96
        %v12288 = vpop.permute.xlu0 %12287
        %12289 = vrot.lane.b32.xlu0 %v2880, 96
        %v12290 = vpop.permute.xlu0 %12289
        %12291 = vrot.lane.b32.xlu0 %v2894, 96
        %v12292 = vpop.permute.xlu0 %12291
        %12293 = vrot.lane.b32.xlu0 %v2896, 96
        %v12294 = vpop.permute.xlu0 %12293
        %12295 = vrot.lane.b32.xlu0 %v2898, 96
        %v12296 = vpop.permute.xlu0 %12295
        %12297 = vrot.lane.b32.xlu0 %v2922, 96
        %v12298 = vpop.permute.xlu0 %12297
        %12299 = vrot.lane.b32.xlu0 %v2936, 96
        %v12300 = vpop.permute.xlu0 %12299
        %12301 = vrot.lane.b32.xlu0 %v2944, 96
        %v12302 = vpop.permute.xlu0 %12301
        %12303 = vrot.lane.b32.xlu0 %v2946, 96
        %v12304 = vpop.permute.xlu0 %12303
        %12305 = vrot.lane.b32.xlu0 %v2929, 96
        %v12306 = vpop.permute.xlu0 %12305
        %12307 = vrot.lane.b32.xlu0 %v2943, 96
        %v12308 = vpop.permute.xlu0 %12307
        %12309 = vrot.lane.b32.xlu0 %v2945, 96
        %v12310 = vpop.permute.xlu0 %12309
        %12311 = vrot.lane.b32.xlu0 %v2947, 96
        %v12312 = vpop.permute.xlu0 %12311
        %12313 = vrot.lane.b32.xlu0 %v2971, 96
        %v12314 = vpop.permute.xlu0 %12313
        %12315 = vrot.lane.b32.xlu0 %v2985, 96
        %v12316 = vpop.permute.xlu0 %12315
        %12317 = vrot.lane.b32.xlu0 %v2993, 96
        %v12318 = vpop.permute.xlu0 %12317
        %12319 = vrot.lane.b32.xlu0 %v2995, 96
        %v12320 = vpop.permute.xlu0 %12319
        %12321 = vrot.lane.b32.xlu0 %v2978, 96
        %v12322 = vpop.permute.xlu0 %12321
        %12323 = vrot.lane.b32.xlu0 %v2992, 96
        %v12324 = vpop.permute.xlu0 %12323
        %12325 = vrot.lane.b32.xlu0 %v2994, 96
        %v12326 = vpop.permute.xlu0 %12325
        %12327 = vrot.lane.b32.xlu0 %v2996, 96
        %v12328 = vpop.permute.xlu0 %12327
        %12329 = vrot.lane.b32.xlu0 %v3020, 96
        %v12330 = vpop.permute.xlu0 %12329
        %12331 = vrot.lane.b32.xlu0 %v3034, 96
        %v12332 = vpop.permute.xlu0 %12331
        %12333 = vrot.lane.b32.xlu0 %v3042, 96
        %v12334 = vpop.permute.xlu0 %12333
        %12335 = vrot.lane.b32.xlu0 %v3044, 96
        %v12336 = vpop.permute.xlu0 %12335
        %12337 = vrot.lane.b32.xlu0 %v3027, 96
        %v12338 = vpop.permute.xlu0 %12337
        %12339 = vrot.lane.b32.xlu0 %v3041, 96
        %v12340 = vpop.permute.xlu0 %12339
        %12341 = vrot.lane.b32.xlu0 %v3043, 96
        %v12342 = vpop.permute.xlu0 %12341
        %12343 = vrot.lane.b32.xlu0 %v3045, 96
        %v12344 = vpop.permute.xlu0 %12343
        %12345 = vrot.lane.b32.xlu0 %v3069, 96
        %v12346 = vpop.permute.xlu0 %12345
        %12347 = vrot.lane.b32.xlu0 %v3083, 96
        %v12348 = vpop.permute.xlu0 %12347
        %12349 = vrot.lane.b32.xlu0 %v3091, 96
        %v12350 = vpop.permute.xlu0 %12349
        %12351 = vrot.lane.b32.xlu0 %v3093, 96
        %v12352 = vpop.permute.xlu0 %12351
        %12353 = vrot.lane.b32.xlu0 %v3076, 96
        %v12354 = vpop.permute.xlu0 %12353
        %12355 = vrot.lane.b32.xlu0 %v3090, 96
        %v12356 = vpop.permute.xlu0 %12355
        %12357 = vrot.lane.b32.xlu0 %v3092, 96
        %v12358 = vpop.permute.xlu0 %12357
        %12359 = vrot.lane.b32.xlu0 %v3094, 96
        %v12360 = vpop.permute.xlu0 %12359
        %12361 = vrot.lane.b32.xlu0 %v3118, 96
        %v12362 = vpop.permute.xlu0 %12361
        %12363 = vrot.lane.b32.xlu0 %v3132, 96
        %v12364 = vpop.permute.xlu0 %12363
        %12365 = vrot.lane.b32.xlu0 %v3140, 96
        %v12366 = vpop.permute.xlu0 %12365
        %12367 = vrot.lane.b32.xlu0 %v3142, 96
        %v12368 = vpop.permute.xlu0 %12367
        %12369 = vrot.lane.b32.xlu0 %v3125, 96
        %v12370 = vpop.permute.xlu0 %12369
        %12371 = vrot.lane.b32.xlu0 %v3139, 96
        %v12372 = vpop.permute.xlu0 %12371
        %12373 = vrot.lane.b32.xlu0 %v3141, 96
        %v12374 = vpop.permute.xlu0 %12373
        %12375 = vrot.lane.b32.xlu0 %v3143, 96
        %v12376 = vpop.permute.xlu0 %12375
        %12377 = vrot.lane.b32.xlu0 %v3167, 96
        %v12378 = vpop.permute.xlu0 %12377
        %12379 = vrot.lane.b32.xlu0 %v3181, 96
        %v12380 = vpop.permute.xlu0 %12379
        %12381 = vrot.lane.b32.xlu0 %v3189, 96
        %v12382 = vpop.permute.xlu0 %12381
        %12383 = vrot.lane.b32.xlu0 %v3191, 96
        %v12384 = vpop.permute.xlu0 %12383
        %12385 = vrot.lane.b32.xlu0 %v3174, 96
        %v12386 = vpop.permute.xlu0 %12385
        %12387 = vrot.lane.b32.xlu0 %v3188, 96
        %v12388 = vpop.permute.xlu0 %12387
        %12389 = vrot.lane.b32.xlu0 %v3190, 96
        %v12390 = vpop.permute.xlu0 %12389
        %12391 = vrot.lane.b32.xlu0 %v3192, 96
        %v12392 = vpop.permute.xlu0 %12391
        %12393 = vrot.lane.b32.xlu0 %v3216, 96
        %v12394 = vpop.permute.xlu0 %12393
        %12395 = vrot.lane.b32.xlu0 %v3230, 96
        %v12396 = vpop.permute.xlu0 %12395
        %12397 = vrot.lane.b32.xlu0 %v3238, 96
        %v12398 = vpop.permute.xlu0 %12397
        %12399 = vrot.lane.b32.xlu0 %v3240, 96
        %v12400 = vpop.permute.xlu0 %12399
        %12401 = vrot.lane.b32.xlu0 %v3223, 96
        %v12402 = vpop.permute.xlu0 %12401
        %12403 = vrot.lane.b32.xlu0 %v3237, 96
        %v12404 = vpop.permute.xlu0 %12403
        %12405 = vrot.lane.b32.xlu0 %v3239, 96
        %v12406 = vpop.permute.xlu0 %12405
        %12407 = vrot.lane.b32.xlu0 %v3241, 96
        %v12408 = vpop.permute.xlu0 %12407
        %12409 = vrot.lane.b32.xlu0 %v3265, 96
        %v12410 = vpop.permute.xlu0 %12409
        %12411 = vrot.lane.b32.xlu0 %v3279, 96
        %v12412 = vpop.permute.xlu0 %12411
        %12413 = vrot.lane.b32.xlu0 %v3287, 96
        %v12414 = vpop.permute.xlu0 %12413
        %12415 = vrot.lane.b32.xlu0 %v3289, 96
        %v12416 = vpop.permute.xlu0 %12415
        %12417 = vrot.lane.b32.xlu0 %v3272, 96
        %v12418 = vpop.permute.xlu0 %12417
        %12419 = vrot.lane.b32.xlu0 %v3286, 96
        %v12420 = vpop.permute.xlu0 %12419
        %12421 = vrot.lane.b32.xlu0 %v3288, 96
        %v12422 = vpop.permute.xlu0 %12421
        %12423 = vrot.lane.b32.xlu0 %v3290, 96
        %v12424 = vpop.permute.xlu0 %12423
        %12425 = vrot.lane.b32.xlu0 %v3314, 96
        %v12426 = vpop.permute.xlu0 %12425
        %12427 = vrot.lane.b32.xlu0 %v3328, 96
        %v12428 = vpop.permute.xlu0 %12427
        %12429 = vrot.lane.b32.xlu0 %v3336, 96
        %v12430 = vpop.permute.xlu0 %12429
        %12431 = vrot.lane.b32.xlu0 %v3338, 96
        %v12432 = vpop.permute.xlu0 %12431
        %12433 = vrot.lane.b32.xlu0 %v3321, 96
        %v12434 = vpop.permute.xlu0 %12433
        %12435 = vrot.lane.b32.xlu0 %v3335, 96
        %v12436 = vpop.permute.xlu0 %12435
        %12437 = vrot.lane.b32.xlu0 %v3337, 96
        %v12438 = vpop.permute.xlu0 %12437
        %12439 = vrot.lane.b32.xlu0 %v3339, 96
        %v12440 = vpop.permute.xlu0 %12439
        %12441 = vrot.lane.b32.xlu0 %v3363, 96
        %v12442 = vpop.permute.xlu0 %12441
        %12443 = vrot.lane.b32.xlu0 %v3377, 96
        %v12444 = vpop.permute.xlu0 %12443
        %12445 = vrot.lane.b32.xlu0 %v3385, 96
        %v12446 = vpop.permute.xlu0 %12445
        %12447 = vrot.lane.b32.xlu0 %v3387, 96
        %v12448 = vpop.permute.xlu0 %12447
        %12449 = vrot.lane.b32.xlu0 %v3370, 96
        %v12450 = vpop.permute.xlu0 %12449
        %12451 = vrot.lane.b32.xlu0 %v3384, 96
        %v12452 = vpop.permute.xlu0 %12451
        %12453 = vrot.lane.b32.xlu0 %v3386, 96
        %v12454 = vpop.permute.xlu0 %12453
        %12455 = vrot.lane.b32.xlu0 %v3388, 96
        %v12456 = vpop.permute.xlu0 %12455
        %12457 = vrot.lane.b32.xlu0 %v3412, 96
        %v12458 = vpop.permute.xlu0 %12457
        %12459 = vrot.lane.b32.xlu0 %v3426, 96
        %v12460 = vpop.permute.xlu0 %12459
        %12461 = vrot.lane.b32.xlu0 %v3434, 96
        %v12462 = vpop.permute.xlu0 %12461
        %12463 = vrot.lane.b32.xlu0 %v3436, 96
        %v12464 = vpop.permute.xlu0 %12463
        %12465 = vrot.lane.b32.xlu0 %v3419, 96
        %v12466 = vpop.permute.xlu0 %12465
        %12467 = vrot.lane.b32.xlu0 %v3433, 96
        %v12468 = vpop.permute.xlu0 %12467
        %12469 = vrot.lane.b32.xlu0 %v3435, 96
        %v12470 = vpop.permute.xlu0 %12469
        %12471 = vrot.lane.b32.xlu0 %v3437, 96
        %v12472 = vpop.permute.xlu0 %12471
        %12473 = vrot.lane.b32.xlu0 %v3461, 96
        %v12474 = vpop.permute.xlu0 %12473
        %12475 = vrot.lane.b32.xlu0 %v3475, 96
        %v12476 = vpop.permute.xlu0 %12475
        %12477 = vrot.lane.b32.xlu0 %v3483, 96
        %v12478 = vpop.permute.xlu0 %12477
        %12479 = vrot.lane.b32.xlu0 %v3485, 96
        %v12480 = vpop.permute.xlu0 %12479
        %12481 = vrot.lane.b32.xlu0 %v3468, 96
        %v12482 = vpop.permute.xlu0 %12481
        %12483 = vrot.lane.b32.xlu0 %v3482, 96
        %v12484 = vpop.permute.xlu0 %12483
        %12485 = vrot.lane.b32.xlu0 %v3484, 96
        %v12486 = vpop.permute.xlu0 %12485
        %12487 = vrot.lane.b32.xlu0 %v3486, 96
        %v12488 = vpop.permute.xlu0 %12487
        %12489 = vrot.lane.b32.xlu0 %v3510, 96
        %v12490 = vpop.permute.xlu0 %12489
        %12491 = vrot.lane.b32.xlu0 %v3524, 96
        %v12492 = vpop.permute.xlu0 %12491
        %12493 = vrot.lane.b32.xlu0 %v3532, 96
        %v12494 = vpop.permute.xlu0 %12493
        %12495 = vrot.lane.b32.xlu0 %v3534, 96
        %v12496 = vpop.permute.xlu0 %12495
        %12497 = vrot.lane.b32.xlu0 %v3517, 96
        %v12498 = vpop.permute.xlu0 %12497
        %12499 = vrot.lane.b32.xlu0 %v3531, 96
        %v12500 = vpop.permute.xlu0 %12499
        %12501 = vrot.lane.b32.xlu0 %v3533, 96
        %v12502 = vpop.permute.xlu0 %12501
        %12503 = vrot.lane.b32.xlu0 %v3535, 96
        %v12504 = vpop.permute.xlu0 %12503
        %v12641 = vmul.f32 %v11287, %v12234
        %v12642 = vmul.f32 %v11301, %v12236
        %v12643 = vmul.f32 %v11309, %v12238
        %v12644 = vmul.f32 %v11311, %v12240
        %v12645 = vmul.f32 %v11294, %v12242
        %v12646 = vmul.f32 %v11308, %v12244
        %v12647 = vmul.f32 %v11310, %v12246
        %v12648 = vmul.f32 %v11312, %v12248
        %v12649 = vmul.f32 %v11336, %v12250
        %v12650 = vmul.f32 %v11350, %v12252
        %v12651 = vmul.f32 %v11358, %v12254
        %v12652 = vmul.f32 %v11360, %v12256
        %v12653 = vmul.f32 %v11343, %v12258
        %v12654 = vmul.f32 %v11357, %v12260
        %v12655 = vmul.f32 %v11359, %v12262
        %v12656 = vmul.f32 %v11361, %v12264
        %v12657 = vmul.f32 %v11385, %v12266
        %v12658 = vmul.f32 %v11399, %v12268
        %v12659 = vmul.f32 %v11407, %v12270
        %v12660 = vmul.f32 %v11409, %v12272
        %v12661 = vmul.f32 %v11392, %v12274
        %v12662 = vmul.f32 %v11406, %v12276
        %v12663 = vmul.f32 %v11408, %v12278
        %v12664 = vmul.f32 %v11410, %v12280
        %v12665 = vmul.f32 %v11434, %v12282
        %v12666 = vmul.f32 %v11448, %v12284
        %v12667 = vmul.f32 %v11456, %v12286
        %v12668 = vmul.f32 %v11458, %v12288
        %v12669 = vmul.f32 %v11441, %v12290
        %v12670 = vmul.f32 %v11455, %v12292
        %v12671 = vmul.f32 %v11457, %v12294
        %v12672 = vmul.f32 %v11459, %v12296
        %v12673 = vmul.f32 %v11483, %v12298
        %v12674 = vmul.f32 %v11497, %v12300
        %v12675 = vmul.f32 %v11505, %v12302
        %v12676 = vmul.f32 %v11507, %v12304
        %v12677 = vmul.f32 %v11490, %v12306
        %v12678 = vmul.f32 %v11504, %v12308
        %v12679 = vmul.f32 %v11506, %v12310
        %v12680 = vmul.f32 %v11508, %v12312
        %v12681 = vmul.f32 %v11532, %v12314
        %v12682 = vmul.f32 %v11546, %v12316
        %v12683 = vmul.f32 %v11554, %v12318
        %v12684 = vmul.f32 %v11556, %v12320
        %v12685 = vmul.f32 %v11539, %v12322
        %v12686 = vmul.f32 %v11553, %v12324
        %v12687 = vmul.f32 %v11555, %v12326
        %v12688 = vmul.f32 %v11557, %v12328
        %v12689 = vmul.f32 %v11581, %v12330
        %v12690 = vmul.f32 %v11595, %v12332
        %v12691 = vmul.f32 %v11603, %v12334
        %v12692 = vmul.f32 %v11605, %v12336
        %v12693 = vmul.f32 %v11588, %v12338
        %v12694 = vmul.f32 %v11602, %v12340
        %v12695 = vmul.f32 %v11604, %v12342
        %v12696 = vmul.f32 %v11606, %v12344
        %v12697 = vmul.f32 %v11630, %v12346
        %v12698 = vmul.f32 %v11644, %v12348
        %v12699 = vmul.f32 %v11652, %v12350
        %v12700 = vmul.f32 %v11654, %v12352
        %v12701 = vmul.f32 %v11637, %v12354
        %v12702 = vmul.f32 %v11651, %v12356
        %v12703 = vmul.f32 %v11653, %v12358
        %v12704 = vmul.f32 %v11655, %v12360
        %v12705 = vmul.f32 %v11679, %v12362
        %v12706 = vmul.f32 %v11693, %v12364
        %v12707 = vmul.f32 %v11701, %v12366
        %v12708 = vmul.f32 %v11703, %v12368
        %v12709 = vmul.f32 %v11686, %v12370
        %v12710 = vmul.f32 %v11700, %v12372
        %v12711 = vmul.f32 %v11702, %v12374
        %v12712 = vmul.f32 %v11704, %v12376
        %v12713 = vmul.f32 %v11728, %v12378
        %v12714 = vmul.f32 %v11742, %v12380
        %v12715 = vmul.f32 %v11750, %v12382
        %v12716 = vmul.f32 %v11752, %v12384
        %v12717 = vmul.f32 %v11735, %v12386
        %v12718 = vmul.f32 %v11749, %v12388
        %v12719 = vmul.f32 %v11751, %v12390
        %v12720 = vmul.f32 %v11753, %v12392
        %v12721 = vmul.f32 %v11777, %v12394
        %v12722 = vmul.f32 %v11791, %v12396
        %v12723 = vmul.f32 %v11799, %v12398
        %v12724 = vmul.f32 %v11801, %v12400
        %v12725 = vmul.f32 %v11784, %v12402
        %v12726 = vmul.f32 %v11798, %v12404
        %v12727 = vmul.f32 %v11800, %v12406
        %v12728 = vmul.f32 %v11802, %v12408
        %v12729 = vmul.f32 %v11826, %v12410
        %v12730 = vmul.f32 %v11840, %v12412
        %v12731 = vmul.f32 %v11848, %v12414
        %v12732 = vmul.f32 %v11850, %v12416
        %v12733 = vmul.f32 %v11833, %v12418
        %v12734 = vmul.f32 %v11847, %v12420
        %v12735 = vmul.f32 %v11849, %v12422
        %v12736 = vmul.f32 %v11851, %v12424
        %v12737 = vmul.f32 %v11875, %v12426
        %v12738 = vmul.f32 %v11889, %v12428
        %v12739 = vmul.f32 %v11897, %v12430
        %v12740 = vmul.f32 %v11899, %v12432
        %v12741 = vmul.f32 %v11882, %v12434
        %v12742 = vmul.f32 %v11896, %v12436
        %v12743 = vmul.f32 %v11898, %v12438
        %v12744 = vmul.f32 %v11900, %v12440
        %v12745 = vmul.f32 %v11924, %v12442
        %v12746 = vmul.f32 %v11938, %v12444
        %v12747 = vmul.f32 %v11946, %v12446
        %v12748 = vmul.f32 %v11948, %v12448
        %v12749 = vmul.f32 %v11931, %v12450
        %v12750 = vmul.f32 %v11945, %v12452
        %v12751 = vmul.f32 %v11947, %v12454
        %v12752 = vmul.f32 %v11949, %v12456
        %v12753 = vmul.f32 %v11973, %v12458
        %v12754 = vmul.f32 %v11987, %v12460
        %v12755 = vmul.f32 %v11995, %v12462
        %v12756 = vmul.f32 %v11997, %v12464
        %v12757 = vmul.f32 %v11980, %v12466
        %v12758 = vmul.f32 %v11994, %v12468
        %v12759 = vmul.f32 %v11996, %v12470
        %v12760 = vmul.f32 %v11998, %v12472
        %v12761 = vmul.f32 %v12022, %v12474
        %v12762 = vmul.f32 %v12036, %v12476
        %v12763 = vmul.f32 %v12044, %v12478
        %v12764 = vmul.f32 %v12046, %v12480
        %v12765 = vmul.f32 %v12029, %v12482
        %v12766 = vmul.f32 %v12043, %v12484
        %v12767 = vmul.f32 %v12045, %v12486
        %v12768 = vmul.f32 %v12047, %v12488
        %v12769 = vmul.f32 %v12071, %v12490
        %v12770 = vmul.f32 %v12085, %v12492
        %v12771 = vmul.f32 %v12093, %v12494
        %v12772 = vmul.f32 %v12095, %v12496
        %v12773 = vmul.f32 %v12078, %v12498
        %v12774 = vmul.f32 %v12092, %v12500
        %v12775 = vmul.f32 %v12094, %v12502
        %v12776 = vmul.f32 %v12096, %v12504
        %v12913 = vcombine.low %v12641, %v12642
        %v12914 = vcombine.low %v12643, %v12644
        %v12915 = vcombine.low %v12645, %v12646
        %v12916 = vcombine.low %v12647, %v12648
        %v12918 = vunpack.c.l.s4 1966171168
        %v12919 = vunpack.c.0.s8 %v12918
        %v12920 = vlaneseq
        %v12921 = vshrl.u32 %v12920, 7
        %v12922 = vsub.s32 %v12919, %v12921
        %v12923 = vrot.slane %v12913, %v12922
        %v12925 = vunpack.c.l.s4 1966171168
        %v12926 = vunpack.c.0.s8 %v12925
        %v12927 = vlaneseq
        %v12928 = vshrl.u32 %v12927, 7
        %v12929 = vsub.s32 %v12926, %v12928
        %v12930 = vrot.slane %v12914, %v12929
        %v12932 = vunpack.c.l.s4 1966171168
        %v12933 = vunpack.c.0.s8 %v12932
        %v12934 = vlaneseq
        %v12935 = vshrl.u32 %v12934, 7
        %v12936 = vsub.s32 %v12933, %v12935
        %v12937 = vrot.slane %v12915, %v12936
        %v12939 = vunpack.c.l.s4 1966171168
        %v12940 = vunpack.c.0.s8 %v12939
        %v12941 = vlaneseq
        %v12942 = vshrl.u32 %v12941, 7
        %v12943 = vsub.s32 %v12940, %v12942
        %v12944 = vrot.slane %v12916, %v12943
        %v12945 = vcombine.low %v12923, %v12930
        %v12946 = vcombine.low %v12937, %v12944
        %v12948 = vunpack.c.l.s4 1966171168
        %v12949 = vunpack.c.0.s8 %v12948
        %v12950 = vlaneseq
        %v12951 = vshrl.u32 %v12950, 7
        %v12952 = vsub.s32 %v12949, %v12951
        %v12953 = vrot.slane %v12945, %v12952
        %v12955 = vunpack.c.l.s4 1966171168
        %v12956 = vunpack.c.0.s8 %v12955
        %v12957 = vlaneseq
        %v12958 = vshrl.u32 %v12957, 7
        %v12959 = vsub.s32 %v12956, %v12958
        %v12960 = vrot.slane %v12946, %v12959
        %v12961 = vcombine.low %v12953, %v12960
        %v12962 = vcombine.low %v12649, %v12650
        %v12963 = vcombine.low %v12651, %v12652
        %v12964 = vcombine.low %v12653, %v12654
        %v12965 = vcombine.low %v12655, %v12656
        %v12967 = vunpack.c.l.s4 1966171168
        %v12968 = vunpack.c.0.s8 %v12967
        %v12969 = vlaneseq
        %v12970 = vshrl.u32 %v12969, 7
        %v12971 = vsub.s32 %v12968, %v12970
        %v12972 = vrot.slane %v12962, %v12971
        %v12974 = vunpack.c.l.s4 1966171168
        %v12975 = vunpack.c.0.s8 %v12974
        %v12976 = vlaneseq
        %v12977 = vshrl.u32 %v12976, 7
        %v12978 = vsub.s32 %v12975, %v12977
        %v12979 = vrot.slane %v12963, %v12978
        %v12981 = vunpack.c.l.s4 1966171168
        %v12982 = vunpack.c.0.s8 %v12981
        %v12983 = vlaneseq
        %v12984 = vshrl.u32 %v12983, 7
        %v12985 = vsub.s32 %v12982, %v12984
        %v12986 = vrot.slane %v12964, %v12985
        %v12988 = vunpack.c.l.s4 1966171168
        %v12989 = vunpack.c.0.s8 %v12988
        %v12990 = vlaneseq
        %v12991 = vshrl.u32 %v12990, 7
        %v12992 = vsub.s32 %v12989, %v12991
        %v12993 = vrot.slane %v12965, %v12992
        %v12994 = vcombine.low %v12972, %v12979
        %v12995 = vcombine.low %v12986, %v12993
        %v12997 = vunpack.c.l.s4 1966171168
        %v12998 = vunpack.c.0.s8 %v12997
        %v12999 = vlaneseq
        %v13000 = vshrl.u32 %v12999, 7
        %v13001 = vsub.s32 %v12998, %v13000
        %v13002 = vrot.slane %v12994, %v13001
        %v13004 = vunpack.c.l.s4 1966171168
        %v13005 = vunpack.c.0.s8 %v13004
        %v13006 = vlaneseq
        %v13007 = vshrl.u32 %v13006, 7
        %v13008 = vsub.s32 %v13005, %v13007
        %v13009 = vrot.slane %v12995, %v13008
        %v13010 = vcombine.low %v13002, %v13009
        %v13012 = vunpack.c.l.s4 1966171168
        %v13013 = vunpack.c.0.s8 %v13012
        %v13014 = vlaneseq
        %v13015 = vshrl.u32 %v13014, 7
        %v13016 = vsub.s32 %v13013, %v13015
        %v13017 = vrot.slane %v12657, %v13016
        %v13019 = vunpack.c.l.s4 1966171168
        %v13020 = vunpack.c.0.s8 %v13019
        %v13021 = vlaneseq
        %v13022 = vshrl.u32 %v13021, 7
        %v13023 = vsub.s32 %v13020, %v13022
        %v13024 = vrot.slane %v13017, %v13023
        %v13025 = vcombine.low %v12658, %v12659
        %v13026 = vcombine.low %v12660, %v12661
        %v13027 = vcombine.low %v12662, %v12663
        %v13028 = vcombine.low %v12664, %v12665
        %v13030 = vunpack.c.l.s4 1966171168
        %v13031 = vunpack.c.0.s8 %v13030
        %v13032 = vlaneseq
        %v13033 = vshrl.u32 %v13032, 7
        %v13034 = vsub.s32 %v13031, %v13033
        %v13035 = vrot.slane %v13025, %v13034
        %v13037 = vunpack.c.l.s4 1966171168
        %v13038 = vunpack.c.0.s8 %v13037
        %v13039 = vlaneseq
        %v13040 = vshrl.u32 %v13039, 7
        %v13041 = vsub.s32 %v13038, %v13040
        %v13042 = vrot.slane %v13026, %v13041
        %v13044 = vunpack.c.l.s4 1966171168
        %v13045 = vunpack.c.0.s8 %v13044
        %v13046 = vlaneseq
        %v13047 = vshrl.u32 %v13046, 7
        %v13048 = vsub.s32 %v13045, %v13047
        %v13049 = vrot.slane %v13027, %v13048
        %v13051 = vunpack.c.l.s4 1966171168
        %v13052 = vunpack.c.0.s8 %v13051
        %v13053 = vlaneseq
        %v13054 = vshrl.u32 %v13053, 7
        %v13055 = vsub.s32 %v13052, %v13054
        %v13056 = vrot.slane %v13028, %v13055
        %v13057 = vcombine.low %v13035, %v13042
        %v13058 = vcombine.low %v13049, %v13056
        %v13060 = vunpack.c.l.s4 1966171168
        %v13061 = vunpack.c.0.s8 %v13060
        %v13062 = vlaneseq
        %v13063 = vshrl.u32 %v13062, 7
        %v13064 = vsub.s32 %v13061, %v13063
        %v13065 = vrot.slane %v13057, %v13064
        %v13067 = vunpack.c.l.s4 1966171168
        %v13068 = vunpack.c.0.s8 %v13067
        %v13069 = vlaneseq
        %v13070 = vshrl.u32 %v13069, 7
        %v13071 = vsub.s32 %v13068, %v13070
        %v13072 = vrot.slane %v13058, %v13071
        %v13073 = vcombine.low %v13065, %v13072
        %v13074 = vcombine.low %v12666, %v12667
        %v13075 = vcombine.low %v12668, %v12669
        %v13076 = vcombine.low %v12670, %v12671
        %v13077 = vcombine.low %v12672, %v12673
        %v13079 = vunpack.c.l.s4 1966171168
        %v13080 = vunpack.c.0.s8 %v13079
        %v13081 = vlaneseq
        %v13082 = vshrl.u32 %v13081, 7
        %v13083 = vsub.s32 %v13080, %v13082
        %v13084 = vrot.slane %v13074, %v13083
        %v13086 = vunpack.c.l.s4 1966171168
        %v13087 = vunpack.c.0.s8 %v13086
        %v13088 = vlaneseq
        %v13089 = vshrl.u32 %v13088, 7
        %v13090 = vsub.s32 %v13087, %v13089
        %v13091 = vrot.slane %v13075, %v13090
        %v13093 = vunpack.c.l.s4 1966171168
        %v13094 = vunpack.c.0.s8 %v13093
        %v13095 = vlaneseq
        %v13096 = vshrl.u32 %v13095, 7
        %v13097 = vsub.s32 %v13094, %v13096
        %v13098 = vrot.slane %v13076, %v13097
        %v13100 = vunpack.c.l.s4 1966171168
        %v13101 = vunpack.c.0.s8 %v13100
        %v13102 = vlaneseq
        %v13103 = vshrl.u32 %v13102, 7
        %v13104 = vsub.s32 %v13101, %v13103
        %v13105 = vrot.slane %v13077, %v13104
        %v13106 = vcombine.low %v13084, %v13091
        %v13107 = vcombine.low %v13098, %v13105
        %v13109 = vunpack.c.l.s4 1966171168
        %v13110 = vunpack.c.0.s8 %v13109
        %v13111 = vlaneseq
        %v13112 = vshrl.u32 %v13111, 7
        %v13113 = vsub.s32 %v13110, %v13112
        %v13114 = vrot.slane %v13106, %v13113
        %v13116 = vunpack.c.l.s4 1966171168
        %v13117 = vunpack.c.0.s8 %v13116
        %v13118 = vlaneseq
        %v13119 = vshrl.u32 %v13118, 7
        %v13120 = vsub.s32 %v13117, %v13119
        %v13121 = vrot.slane %v13107, %v13120
        %v13122 = vcombine.low %v13114, %v13121
        %v13124 = vunpack.c.l.s4 1966171168
        %v13125 = vunpack.c.0.s8 %v13124
        %v13126 = vlaneseq
        %v13127 = vshrl.u32 %v13126, 7
        %v13128 = vsub.s32 %v13125, %v13127
        %v13129 = vrot.slane %v12674, %v13128
        %v13131 = vunpack.c.l.s4 1966171168
        %v13132 = vunpack.c.0.s8 %v13131
        %v13133 = vlaneseq
        %v13134 = vshrl.u32 %v13133, 7
        %v13135 = vsub.s32 %v13132, %v13134
        %v13136 = vrot.slane %v13129, %v13135
        %v13137 = vcombine.low %v12675, %v12676
        %v13138 = vcombine.low %v12677, %v12678
        %v13139 = vcombine.low %v12679, %v12680
        %v13140 = vcombine.low %v12681, %v12682
        %v13142 = vunpack.c.l.s4 1966171168
        %v13143 = vunpack.c.0.s8 %v13142
        %v13144 = vlaneseq
        %v13145 = vshrl.u32 %v13144, 7
        %v13146 = vsub.s32 %v13143, %v13145
        %v13147 = vrot.slane %v13137, %v13146
        %v13149 = vunpack.c.l.s4 1966171168
        %v13150 = vunpack.c.0.s8 %v13149
        %v13151 = vlaneseq
        %v13152 = vshrl.u32 %v13151, 7
        %v13153 = vsub.s32 %v13150, %v13152
        %v13154 = vrot.slane %v13138, %v13153
        %v13156 = vunpack.c.l.s4 1966171168
        %v13157 = vunpack.c.0.s8 %v13156
        %v13158 = vlaneseq
        %v13159 = vshrl.u32 %v13158, 7
        %v13160 = vsub.s32 %v13157, %v13159
        %v13161 = vrot.slane %v13139, %v13160
        %v13163 = vunpack.c.l.s4 1966171168
        %v13164 = vunpack.c.0.s8 %v13163
        %v13165 = vlaneseq
        %v13166 = vshrl.u32 %v13165, 7
        %v13167 = vsub.s32 %v13164, %v13166
        %v13168 = vrot.slane %v13140, %v13167
        %v13169 = vcombine.low %v13147, %v13154
        %v13170 = vcombine.low %v13161, %v13168
        %v13172 = vunpack.c.l.s4 1966171168
        %v13173 = vunpack.c.0.s8 %v13172
        %v13174 = vlaneseq
        %v13175 = vshrl.u32 %v13174, 7
        %v13176 = vsub.s32 %v13173, %v13175
        %v13177 = vrot.slane %v13169, %v13176
        %v13179 = vunpack.c.l.s4 1966171168
        %v13180 = vunpack.c.0.s8 %v13179
        %v13181 = vlaneseq
        %v13182 = vshrl.u32 %v13181, 7
        %v13183 = vsub.s32 %v13180, %v13182
        %v13184 = vrot.slane %v13170, %v13183
        %v13185 = vcombine.low %v13177, %v13184
        %v13186 = vcombine.low %v12683, %v12684
        %v13187 = vcombine.low %v12685, %v12686
        %v13188 = vcombine.low %v12687, %v12688
        %v13189 = vcombine.low %v12689, %v12690
        %v13191 = vunpack.c.l.s4 1966171168
        %v13192 = vunpack.c.0.s8 %v13191
        %v13193 = vlaneseq
        %v13194 = vshrl.u32 %v13193, 7
        %v13195 = vsub.s32 %v13192, %v13194
        %v13196 = vrot.slane %v13186, %v13195
        %v13198 = vunpack.c.l.s4 1966171168
        %v13199 = vunpack.c.0.s8 %v13198
        %v13200 = vlaneseq
        %v13201 = vshrl.u32 %v13200, 7
        %v13202 = vsub.s32 %v13199, %v13201
        %v13203 = vrot.slane %v13187, %v13202
        %v13205 = vunpack.c.l.s4 1966171168
        %v13206 = vunpack.c.0.s8 %v13205
        %v13207 = vlaneseq
        %v13208 = vshrl.u32 %v13207, 7
        %v13209 = vsub.s32 %v13206, %v13208
        %v13210 = vrot.slane %v13188, %v13209
        %v13212 = vunpack.c.l.s4 1966171168
        %v13213 = vunpack.c.0.s8 %v13212
        %v13214 = vlaneseq
        %v13215 = vshrl.u32 %v13214, 7
        %v13216 = vsub.s32 %v13213, %v13215
        %v13217 = vrot.slane %v13189, %v13216
        %v13218 = vcombine.low %v13196, %v13203
        %v13219 = vcombine.low %v13210, %v13217
        %v13221 = vunpack.c.l.s4 1966171168
        %v13222 = vunpack.c.0.s8 %v13221
        %v13223 = vlaneseq
        %v13224 = vshrl.u32 %v13223, 7
        %v13225 = vsub.s32 %v13222, %v13224
        %v13226 = vrot.slane %v13218, %v13225
        %v13228 = vunpack.c.l.s4 1966171168
        %v13229 = vunpack.c.0.s8 %v13228
        %v13230 = vlaneseq
        %v13231 = vshrl.u32 %v13230, 7
        %v13232 = vsub.s32 %v13229, %v13231
        %v13233 = vrot.slane %v13219, %v13232
        %v13234 = vcombine.low %v13226, %v13233
        %v13236 = vunpack.c.l.s4 1966171168
        %v13237 = vunpack.c.0.s8 %v13236
        %v13238 = vlaneseq
        %v13239 = vshrl.u32 %v13238, 7
        %v13240 = vsub.s32 %v13237, %v13239
        %v13241 = vrot.slane %v12691, %v13240
        %v13243 = vunpack.c.l.s4 1966171168
        %v13244 = vunpack.c.0.s8 %v13243
        %v13245 = vlaneseq
        %v13246 = vshrl.u32 %v13245, 7
        %v13247 = vsub.s32 %v13244, %v13246
        %v13248 = vrot.slane %v13241, %v13247
        %v13249 = vcombine.low %v12692, %v12693
        %v13250 = vcombine.low %v12694, %v12695
        %v13251 = vcombine.low %v12696, %v12697
        %v13252 = vcombine.low %v12698, %v12699
        %v13254 = vunpack.c.l.s4 1966171168
        %v13255 = vunpack.c.0.s8 %v13254
        %v13256 = vlaneseq
        %v13257 = vshrl.u32 %v13256, 7
        %v13258 = vsub.s32 %v13255, %v13257
        %v13259 = vrot.slane %v13249, %v13258
        %v13261 = vunpack.c.l.s4 1966171168
        %v13262 = vunpack.c.0.s8 %v13261
        %v13263 = vlaneseq
        %v13264 = vshrl.u32 %v13263, 7
        %v13265 = vsub.s32 %v13262, %v13264
        %v13266 = vrot.slane %v13250, %v13265
        %v13268 = vunpack.c.l.s4 1966171168
        %v13269 = vunpack.c.0.s8 %v13268
        %v13270 = vlaneseq
        %v13271 = vshrl.u32 %v13270, 7
        %v13272 = vsub.s32 %v13269, %v13271
        %v13273 = vrot.slane %v13251, %v13272
        %v13275 = vunpack.c.l.s4 1966171168
        %v13276 = vunpack.c.0.s8 %v13275
        %v13277 = vlaneseq
        %v13278 = vshrl.u32 %v13277, 7
        %v13279 = vsub.s32 %v13276, %v13278
        %v13280 = vrot.slane %v13252, %v13279
        %v13281 = vcombine.low %v13259, %v13266
        %v13282 = vcombine.low %v13273, %v13280
        %v13284 = vunpack.c.l.s4 1966171168
        %v13285 = vunpack.c.0.s8 %v13284
        %v13286 = vlaneseq
        %v13287 = vshrl.u32 %v13286, 7
        %v13288 = vsub.s32 %v13285, %v13287
        %v13289 = vrot.slane %v13281, %v13288
        %v13291 = vunpack.c.l.s4 1966171168
        %v13292 = vunpack.c.0.s8 %v13291
        %v13293 = vlaneseq
        %v13294 = vshrl.u32 %v13293, 7
        %v13295 = vsub.s32 %v13292, %v13294
        %v13296 = vrot.slane %v13282, %v13295
        %v13297 = vcombine.low %v13289, %v13296
        %v13298 = vcombine.low %v12700, %v12701
        %v13299 = vcombine.low %v12702, %v12703
        %v13300 = vcombine.low %v12704, %v12705
        %v13301 = vcombine.low %v12706, %v12707
        %v13303 = vunpack.c.l.s4 1966171168
        %v13304 = vunpack.c.0.s8 %v13303
        %v13305 = vlaneseq
        %v13306 = vshrl.u32 %v13305, 7
        %v13307 = vsub.s32 %v13304, %v13306
        %v13308 = vrot.slane %v13298, %v13307
        %v13310 = vunpack.c.l.s4 1966171168
        %v13311 = vunpack.c.0.s8 %v13310
        %v13312 = vlaneseq
        %v13313 = vshrl.u32 %v13312, 7
        %v13314 = vsub.s32 %v13311, %v13313
        %v13315 = vrot.slane %v13299, %v13314
        %v13317 = vunpack.c.l.s4 1966171168
        %v13318 = vunpack.c.0.s8 %v13317
        %v13319 = vlaneseq
        %v13320 = vshrl.u32 %v13319, 7
        %v13321 = vsub.s32 %v13318, %v13320
        %v13322 = vrot.slane %v13300, %v13321
        %v13324 = vunpack.c.l.s4 1966171168
        %v13325 = vunpack.c.0.s8 %v13324
        %v13326 = vlaneseq
        %v13327 = vshrl.u32 %v13326, 7
        %v13328 = vsub.s32 %v13325, %v13327
        %v13329 = vrot.slane %v13301, %v13328
        %v13330 = vcombine.low %v13308, %v13315
        %v13331 = vcombine.low %v13322, %v13329
        %v13333 = vunpack.c.l.s4 1966171168
        %v13334 = vunpack.c.0.s8 %v13333
        %v13335 = vlaneseq
        %v13336 = vshrl.u32 %v13335, 7
        %v13337 = vsub.s32 %v13334, %v13336
        %v13338 = vrot.slane %v13330, %v13337
        %v13340 = vunpack.c.l.s4 1966171168
        %v13341 = vunpack.c.0.s8 %v13340
        %v13342 = vlaneseq
        %v13343 = vshrl.u32 %v13342, 7
        %v13344 = vsub.s32 %v13341, %v13343
        %v13345 = vrot.slane %v13331, %v13344
        %v13346 = vcombine.low %v13338, %v13345
        %v13348 = vunpack.c.l.s4 1966171168
        %v13349 = vunpack.c.0.s8 %v13348
        %v13350 = vlaneseq
        %v13351 = vshrl.u32 %v13350, 7
        %v13352 = vsub.s32 %v13349, %v13351
        %v13353 = vrot.slane %v12708, %v13352
        %v13355 = vunpack.c.l.s4 1966171168
        %v13356 = vunpack.c.0.s8 %v13355
        %v13357 = vlaneseq
        %v13358 = vshrl.u32 %v13357, 7
        %v13359 = vsub.s32 %v13356, %v13358
        %v13360 = vrot.slane %v13353, %v13359
        %v13361 = vcombine.low %v12709, %v12710
        %v13362 = vcombine.low %v12711, %v12712
        %v13363 = vcombine.low %v12713, %v12714
        %v13364 = vcombine.low %v12715, %v12716
        %v13366 = vunpack.c.l.s4 1966171168
        %v13367 = vunpack.c.0.s8 %v13366
        %v13368 = vlaneseq
        %v13369 = vshrl.u32 %v13368, 7
        %v13370 = vsub.s32 %v13367, %v13369
        %v13371 = vrot.slane %v13361, %v13370
        %v13373 = vunpack.c.l.s4 1966171168
        %v13374 = vunpack.c.0.s8 %v13373
        %v13375 = vlaneseq
        %v13376 = vshrl.u32 %v13375, 7
        %v13377 = vsub.s32 %v13374, %v13376
        %v13378 = vrot.slane %v13362, %v13377
        %v13380 = vunpack.c.l.s4 1966171168
        %v13381 = vunpack.c.0.s8 %v13380
        %v13382 = vlaneseq
        %v13383 = vshrl.u32 %v13382, 7
        %v13384 = vsub.s32 %v13381, %v13383
        %v13385 = vrot.slane %v13363, %v13384
        %v13387 = vunpack.c.l.s4 1966171168
        %v13388 = vunpack.c.0.s8 %v13387
        %v13389 = vlaneseq
        %v13390 = vshrl.u32 %v13389, 7
        %v13391 = vsub.s32 %v13388, %v13390
        %v13392 = vrot.slane %v13364, %v13391
        %v13393 = vcombine.low %v13371, %v13378
        %v13394 = vcombine.low %v13385, %v13392
        %v13396 = vunpack.c.l.s4 1966171168
        %v13397 = vunpack.c.0.s8 %v13396
        %v13398 = vlaneseq
        %v13399 = vshrl.u32 %v13398, 7
        %v13400 = vsub.s32 %v13397, %v13399
        %v13401 = vrot.slane %v13393, %v13400
        %v13403 = vunpack.c.l.s4 1966171168
        %v13404 = vunpack.c.0.s8 %v13403
        %v13405 = vlaneseq
        %v13406 = vshrl.u32 %v13405, 7
        %v13407 = vsub.s32 %v13404, %v13406
        %v13408 = vrot.slane %v13394, %v13407
        %v13409 = vcombine.low %v13401, %v13408
        %v13410 = vcombine.low %v12717, %v12718
        %v13411 = vcombine.low %v12719, %v12720
        %v13412 = vcombine.low %v12721, %v12722
        %v13413 = vcombine.low %v12723, %v12724
        %v13415 = vunpack.c.l.s4 1966171168
        %v13416 = vunpack.c.0.s8 %v13415
        %v13417 = vlaneseq
        %v13418 = vshrl.u32 %v13417, 7
        %v13419 = vsub.s32 %v13416, %v13418
        %v13420 = vrot.slane %v13410, %v13419
        %v13422 = vunpack.c.l.s4 1966171168
        %v13423 = vunpack.c.0.s8 %v13422
        %v13424 = vlaneseq
        %v13425 = vshrl.u32 %v13424, 7
        %v13426 = vsub.s32 %v13423, %v13425
        %v13427 = vrot.slane %v13411, %v13426
        %v13429 = vunpack.c.l.s4 1966171168
        %v13430 = vunpack.c.0.s8 %v13429
        %v13431 = vlaneseq
        %v13432 = vshrl.u32 %v13431, 7
        %v13433 = vsub.s32 %v13430, %v13432
        %v13434 = vrot.slane %v13412, %v13433
        %v13436 = vunpack.c.l.s4 1966171168
        %v13437 = vunpack.c.0.s8 %v13436
        %v13438 = vlaneseq
        %v13439 = vshrl.u32 %v13438, 7
        %v13440 = vsub.s32 %v13437, %v13439
        %v13441 = vrot.slane %v13413, %v13440
        %v13442 = vcombine.low %v13420, %v13427
        %v13443 = vcombine.low %v13434, %v13441
        %v13445 = vunpack.c.l.s4 1966171168
        %v13446 = vunpack.c.0.s8 %v13445
        %v13447 = vlaneseq
        %v13448 = vshrl.u32 %v13447, 7
        %v13449 = vsub.s32 %v13446, %v13448
        %v13450 = vrot.slane %v13442, %v13449
        %v13452 = vunpack.c.l.s4 1966171168
        %v13453 = vunpack.c.0.s8 %v13452
        %v13454 = vlaneseq
        %v13455 = vshrl.u32 %v13454, 7
        %v13456 = vsub.s32 %v13453, %v13455
        %v13457 = vrot.slane %v13443, %v13456
        %v13458 = vcombine.low %v13450, %v13457
        %v13460 = vunpack.c.l.s4 1966171168
        %v13461 = vunpack.c.0.s8 %v13460
        %v13462 = vlaneseq
        %v13463 = vshrl.u32 %v13462, 7
        %v13464 = vsub.s32 %v13461, %v13463
        %v13465 = vrot.slane %v12725, %v13464
        %v13467 = vunpack.c.l.s4 1966171168
        %v13468 = vunpack.c.0.s8 %v13467
        %v13469 = vlaneseq
        %v13470 = vshrl.u32 %v13469, 7
        %v13471 = vsub.s32 %v13468, %v13470
        %v13472 = vrot.slane %v13465, %v13471
        %v13473 = vcombine.low %v12726, %v12727
        %v13474 = vcombine.low %v12728, %v12729
        %v13475 = vcombine.low %v12730, %v12731
        %v13476 = vcombine.low %v12732, %v12733
        %v13478 = vunpack.c.l.s4 1966171168
        %v13479 = vunpack.c.0.s8 %v13478
        %v13480 = vlaneseq
        %v13481 = vshrl.u32 %v13480, 7
        %v13482 = vsub.s32 %v13479, %v13481
        %v13483 = vrot.slane %v13473, %v13482
        %v13485 = vunpack.c.l.s4 1966171168
        %v13486 = vunpack.c.0.s8 %v13485
        %v13487 = vlaneseq
        %v13488 = vshrl.u32 %v13487, 7
        %v13489 = vsub.s32 %v13486, %v13488
        %v13490 = vrot.slane %v13474, %v13489
        %v13492 = vunpack.c.l.s4 1966171168
        %v13493 = vunpack.c.0.s8 %v13492
        %v13494 = vlaneseq
        %v13495 = vshrl.u32 %v13494, 7
        %v13496 = vsub.s32 %v13493, %v13495
        %v13497 = vrot.slane %v13475, %v13496
        %v13499 = vunpack.c.l.s4 1966171168
        %v13500 = vunpack.c.0.s8 %v13499
        %v13501 = vlaneseq
        %v13502 = vshrl.u32 %v13501, 7
        %v13503 = vsub.s32 %v13500, %v13502
        %v13504 = vrot.slane %v13476, %v13503
        %v13505 = vcombine.low %v13483, %v13490
        %v13506 = vcombine.low %v13497, %v13504
        %v13508 = vunpack.c.l.s4 1966171168
        %v13509 = vunpack.c.0.s8 %v13508
        %v13510 = vlaneseq
        %v13511 = vshrl.u32 %v13510, 7
        %v13512 = vsub.s32 %v13509, %v13511
        %v13513 = vrot.slane %v13505, %v13512
        %v13515 = vunpack.c.l.s4 1966171168
        %v13516 = vunpack.c.0.s8 %v13515
        %v13517 = vlaneseq
        %v13518 = vshrl.u32 %v13517, 7
        %v13519 = vsub.s32 %v13516, %v13518
        %v13520 = vrot.slane %v13506, %v13519
        %v13521 = vcombine.low %v13513, %v13520
        %v13522 = vcombine.low %v12734, %v12735
        %v13523 = vcombine.low %v12736, %v12737
        %v13524 = vcombine.low %v12738, %v12739
        %v13525 = vcombine.low %v12740, %v12741
        %v13527 = vunpack.c.l.s4 1966171168
        %v13528 = vunpack.c.0.s8 %v13527
        %v13529 = vlaneseq
        %v13530 = vshrl.u32 %v13529, 7
        %v13531 = vsub.s32 %v13528, %v13530
        %v13532 = vrot.slane %v13522, %v13531
        %v13534 = vunpack.c.l.s4 1966171168
        %v13535 = vunpack.c.0.s8 %v13534
        %v13536 = vlaneseq
        %v13537 = vshrl.u32 %v13536, 7
        %v13538 = vsub.s32 %v13535, %v13537
        %v13539 = vrot.slane %v13523, %v13538
        %v13541 = vunpack.c.l.s4 1966171168
        %v13542 = vunpack.c.0.s8 %v13541
        %v13543 = vlaneseq
        %v13544 = vshrl.u32 %v13543, 7
        %v13545 = vsub.s32 %v13542, %v13544
        %v13546 = vrot.slane %v13524, %v13545
        %v13548 = vunpack.c.l.s4 1966171168
        %v13549 = vunpack.c.0.s8 %v13548
        %v13550 = vlaneseq
        %v13551 = vshrl.u32 %v13550, 7
        %v13552 = vsub.s32 %v13549, %v13551
        %v13553 = vrot.slane %v13525, %v13552
        %v13554 = vcombine.low %v13532, %v13539
        %v13555 = vcombine.low %v13546, %v13553
        %v13557 = vunpack.c.l.s4 1966171168
        %v13558 = vunpack.c.0.s8 %v13557
        %v13559 = vlaneseq
        %v13560 = vshrl.u32 %v13559, 7
        %v13561 = vsub.s32 %v13558, %v13560
        %v13562 = vrot.slane %v13554, %v13561
        %v13564 = vunpack.c.l.s4 1966171168
        %v13565 = vunpack.c.0.s8 %v13564
        %v13566 = vlaneseq
        %v13567 = vshrl.u32 %v13566, 7
        %v13568 = vsub.s32 %v13565, %v13567
        %v13569 = vrot.slane %v13555, %v13568
        %v13570 = vcombine.low %v13562, %v13569
        %v13572 = vunpack.c.l.s4 1966171168
        %v13573 = vunpack.c.0.s8 %v13572
        %v13574 = vlaneseq
        %v13575 = vshrl.u32 %v13574, 7
        %v13576 = vsub.s32 %v13573, %v13575
        %v13577 = vrot.slane %v12742, %v13576
        %v13579 = vunpack.c.l.s4 1966171168
        %v13580 = vunpack.c.0.s8 %v13579
        %v13581 = vlaneseq
        %v13582 = vshrl.u32 %v13581, 7
        %v13583 = vsub.s32 %v13580, %v13582
        %v13584 = vrot.slane %v13577, %v13583
        %v13585 = vcombine.low %v12743, %v12744
        %v13586 = vcombine.low %v12745, %v12746
        %v13587 = vcombine.low %v12747, %v12748
        %v13588 = vcombine.low %v12749, %v12750
        %v13590 = vunpack.c.l.s4 1966171168
        %v13591 = vunpack.c.0.s8 %v13590
        %v13592 = vlaneseq
        %v13593 = vshrl.u32 %v13592, 7
        %v13594 = vsub.s32 %v13591, %v13593
        %v13595 = vrot.slane %v13585, %v13594
        %v13597 = vunpack.c.l.s4 1966171168
        %v13598 = vunpack.c.0.s8 %v13597
        %v13599 = vlaneseq
        %v13600 = vshrl.u32 %v13599, 7
        %v13601 = vsub.s32 %v13598, %v13600
        %v13602 = vrot.slane %v13586, %v13601
        %v13604 = vunpack.c.l.s4 1966171168
        %v13605 = vunpack.c.0.s8 %v13604
        %v13606 = vlaneseq
        %v13607 = vshrl.u32 %v13606, 7
        %v13608 = vsub.s32 %v13605, %v13607
        %v13609 = vrot.slane %v13587, %v13608
        %v13611 = vunpack.c.l.s4 1966171168
        %v13612 = vunpack.c.0.s8 %v13611
        %v13613 = vlaneseq
        %v13614 = vshrl.u32 %v13613, 7
        %v13615 = vsub.s32 %v13612, %v13614
        %v13616 = vrot.slane %v13588, %v13615
        %v13617 = vcombine.low %v13595, %v13602
        %v13618 = vcombine.low %v13609, %v13616
        %v13620 = vunpack.c.l.s4 1966171168
        %v13621 = vunpack.c.0.s8 %v13620
        %v13622 = vlaneseq
        %v13623 = vshrl.u32 %v13622, 7
        %v13624 = vsub.s32 %v13621, %v13623
        %v13625 = vrot.slane %v13617, %v13624
        %v13627 = vunpack.c.l.s4 1966171168
        %v13628 = vunpack.c.0.s8 %v13627
        %v13629 = vlaneseq
        %v13630 = vshrl.u32 %v13629, 7
        %v13631 = vsub.s32 %v13628, %v13630
        %v13632 = vrot.slane %v13618, %v13631
        %v13633 = vcombine.low %v13625, %v13632
        %v13634 = vcombine.low %v12751, %v12752
        %v13635 = vcombine.low %v12753, %v12754
        %v13636 = vcombine.low %v12755, %v12756
        %v13637 = vcombine.low %v12757, %v12758
        %v13639 = vunpack.c.l.s4 1966171168
        %v13640 = vunpack.c.0.s8 %v13639
        %v13641 = vlaneseq
        %v13642 = vshrl.u32 %v13641, 7
        %v13643 = vsub.s32 %v13640, %v13642
        %v13644 = vrot.slane %v13634, %v13643
        %v13646 = vunpack.c.l.s4 1966171168
        %v13647 = vunpack.c.0.s8 %v13646
        %v13648 = vlaneseq
        %v13649 = vshrl.u32 %v13648, 7
        %v13650 = vsub.s32 %v13647, %v13649
        %v13651 = vrot.slane %v13635, %v13650
        %v13653 = vunpack.c.l.s4 1966171168
        %v13654 = vunpack.c.0.s8 %v13653
        %v13655 = vlaneseq
        %v13656 = vshrl.u32 %v13655, 7
        %v13657 = vsub.s32 %v13654, %v13656
        %v13658 = vrot.slane %v13636, %v13657
        %v13660 = vunpack.c.l.s4 1966171168
        %v13661 = vunpack.c.0.s8 %v13660
        %v13662 = vlaneseq
        %v13663 = vshrl.u32 %v13662, 7
        %v13664 = vsub.s32 %v13661, %v13663
        %v13665 = vrot.slane %v13637, %v13664
        %v13666 = vcombine.low %v13644, %v13651
        %v13667 = vcombine.low %v13658, %v13665
        %v13669 = vunpack.c.l.s4 1966171168
        %v13670 = vunpack.c.0.s8 %v13669
        %v13671 = vlaneseq
        %v13672 = vshrl.u32 %v13671, 7
        %v13673 = vsub.s32 %v13670, %v13672
        %v13674 = vrot.slane %v13666, %v13673
        %v13676 = vunpack.c.l.s4 1966171168
        %v13677 = vunpack.c.0.s8 %v13676
        %v13678 = vlaneseq
        %v13679 = vshrl.u32 %v13678, 7
        %v13680 = vsub.s32 %v13677, %v13679
        %v13681 = vrot.slane %v13667, %v13680
        %v13682 = vcombine.low %v13674, %v13681
        %v13684 = vunpack.c.l.s4 1966171168
        %v13685 = vunpack.c.0.s8 %v13684
        %v13686 = vlaneseq
        %v13687 = vshrl.u32 %v13686, 7
        %v13688 = vsub.s32 %v13685, %v13687
        %v13689 = vrot.slane %v12759, %v13688
        %v13691 = vunpack.c.l.s4 1966171168
        %v13692 = vunpack.c.0.s8 %v13691
        %v13693 = vlaneseq
        %v13694 = vshrl.u32 %v13693, 7
        %v13695 = vsub.s32 %v13692, %v13694
        %v13696 = vrot.slane %v13689, %v13695
        %v13697 = vcombine.low %v12760, %v12761
        %v13698 = vcombine.low %v12762, %v12763
        %v13699 = vcombine.low %v12764, %v12765
        %v13700 = vcombine.low %v12766, %v12767
        %v13702 = vunpack.c.l.s4 1966171168
        %v13703 = vunpack.c.0.s8 %v13702
        %v13704 = vlaneseq
        %v13705 = vshrl.u32 %v13704, 7
        %v13706 = vsub.s32 %v13703, %v13705
        %v13707 = vrot.slane %v13697, %v13706
        %v13709 = vunpack.c.l.s4 1966171168
        %v13710 = vunpack.c.0.s8 %v13709
        %v13711 = vlaneseq
        %v13712 = vshrl.u32 %v13711, 7
        %v13713 = vsub.s32 %v13710, %v13712
        %v13714 = vrot.slane %v13698, %v13713
        %v13716 = vunpack.c.l.s4 1966171168
        %v13717 = vunpack.c.0.s8 %v13716
        %v13718 = vlaneseq
        %v13719 = vshrl.u32 %v13718, 7
        %v13720 = vsub.s32 %v13717, %v13719
        %v13721 = vrot.slane %v13699, %v13720
        %v13723 = vunpack.c.l.s4 1966171168
        %v13724 = vunpack.c.0.s8 %v13723
        %v13725 = vlaneseq
        %v13726 = vshrl.u32 %v13725, 7
        %v13727 = vsub.s32 %v13724, %v13726
        %v13728 = vrot.slane %v13700, %v13727
        %v13729 = vcombine.low %v13707, %v13714
        %v13730 = vcombine.low %v13721, %v13728
        %v13732 = vunpack.c.l.s4 1966171168
        %v13733 = vunpack.c.0.s8 %v13732
        %v13734 = vlaneseq
        %v13735 = vshrl.u32 %v13734, 7
        %v13736 = vsub.s32 %v13733, %v13735
        %v13737 = vrot.slane %v13729, %v13736
        %v13739 = vunpack.c.l.s4 1966171168
        %v13740 = vunpack.c.0.s8 %v13739
        %v13741 = vlaneseq
        %v13742 = vshrl.u32 %v13741, 7
        %v13743 = vsub.s32 %v13740, %v13742
        %v13744 = vrot.slane %v13730, %v13743
        %v13745 = vcombine.low %v13737, %v13744
        %v13746 = vcombine.low %v12768, %v12769
        %v13747 = vcombine.low %v12770, %v12771
        %v13748 = vcombine.low %v12772, %v12773
        %v13749 = vcombine.low %v12774, %v12775
        %v13751 = vunpack.c.l.s4 1966171168
        %v13752 = vunpack.c.0.s8 %v13751
        %v13753 = vlaneseq
        %v13754 = vshrl.u32 %v13753, 7
        %v13755 = vsub.s32 %v13752, %v13754
        %v13756 = vrot.slane %v13746, %v13755
        %v13758 = vunpack.c.l.s4 1966171168
        %v13759 = vunpack.c.0.s8 %v13758
        %v13760 = vlaneseq
        %v13761 = vshrl.u32 %v13760, 7
        %v13762 = vsub.s32 %v13759, %v13761
        %v13763 = vrot.slane %v13747, %v13762
        %v13765 = vunpack.c.l.s4 1966171168
        %v13766 = vunpack.c.0.s8 %v13765
        %v13767 = vlaneseq
        %v13768 = vshrl.u32 %v13767, 7
        %v13769 = vsub.s32 %v13766, %v13768
        %v13770 = vrot.slane %v13748, %v13769
        %v13772 = vunpack.c.l.s4 1966171168
        %v13773 = vunpack.c.0.s8 %v13772
        %v13774 = vlaneseq
        %v13775 = vshrl.u32 %v13774, 7
        %v13776 = vsub.s32 %v13773, %v13775
        %v13777 = vrot.slane %v13749, %v13776
        %v13778 = vcombine.low %v13756, %v13763
        %v13779 = vcombine.low %v13770, %v13777
        %v13781 = vunpack.c.l.s4 1966171168
        %v13782 = vunpack.c.0.s8 %v13781
        %v13783 = vlaneseq
        %v13784 = vshrl.u32 %v13783, 7
        %v13785 = vsub.s32 %v13782, %v13784
        %v13786 = vrot.slane %v13778, %v13785
        %v13788 = vunpack.c.l.s4 1966171168
        %v13789 = vunpack.c.0.s8 %v13788
        %v13790 = vlaneseq
        %v13791 = vshrl.u32 %v13790, 7
        %v13792 = vsub.s32 %v13789, %v13791
        %v13793 = vrot.slane %v13779, %v13792
        %v13794 = vcombine.low %v13786, %v13793
        %v13796 = vunpack.c.l.s4 1966171168
        %v13797 = vunpack.c.0.s8 %v13796
        %v13798 = vlaneseq
        %v13799 = vshrl.u32 %v13798, 7
        %v13800 = vsub.s32 %v13797, %v13799
        %v13801 = vrot.slane %v12776, %v13800
        %v13803 = vunpack.c.l.s4 1966171168
        %v13804 = vunpack.c.0.s8 %v13803
        %v13805 = vlaneseq
        %v13806 = vshrl.u32 %v13805, 7
        %v13807 = vsub.s32 %v13804, %v13806
        %v13808 = vrot.slane %v13801, %v13807
        %v13833 = vsel %vm450, %v12961, 0.0
        %v13834 = vsel %vm450, %v13010, 0.0
        %v13835 = vadd.f32 %v13833, %v13834
        %vm13836 = vcmask 253952
        %v13837 = vsel %vm13836, %v13024, 0.0
        %v13838 = vadd.f32 %v13835, %v13837
        %v13839 = vrot.slane %v13838, 4
        %v13840 = vadd.f32 %v13838, %v13839
        %v13841 = vrot.slane %v13840, 2
        %v13842 = vadd.f32 %v13840, %v13841
        %v13843 = vrot.slane %v13842, 1
        %v13844 = vadd.f32 %v13842, %v13843
        %v13845 = vsel %vm450, %v13073, 0.0
        %v13846 = vsel %vm450, %v13122, 0.0
        %v13847 = vadd.f32 %v13845, %v13846
        %v13848 = vsel %vm13836, %v13136, 0.0
        %v13849 = vadd.f32 %v13847, %v13848
        %v13850 = vrot.slane %v13849, 4
        %v13851 = vadd.f32 %v13849, %v13850
        %v13852 = vrot.slane %v13851, 2
        %v13853 = vadd.f32 %v13851, %v13852
        %v13854 = vrot.slane %v13853, 1
        %v13855 = vadd.f32 %v13853, %v13854
        %v13856 = vsel %vm450, %v13185, 0.0
        %v13857 = vsel %vm450, %v13234, 0.0
        %v13858 = vadd.f32 %v13856, %v13857
        %v13859 = vsel %vm13836, %v13248, 0.0
        %v13860 = vadd.f32 %v13858, %v13859
        %v13861 = vrot.slane %v13860, 4
        %v13862 = vadd.f32 %v13860, %v13861
        %v13863 = vrot.slane %v13862, 2
        %v13864 = vadd.f32 %v13862, %v13863
        %v13865 = vrot.slane %v13864, 1
        %v13866 = vadd.f32 %v13864, %v13865
        %v13867 = vsel %vm450, %v13297, 0.0
        %v13868 = vsel %vm450, %v13346, 0.0
        %v13869 = vadd.f32 %v13867, %v13868
        %v13870 = vsel %vm13836, %v13360, 0.0
        %v13871 = vadd.f32 %v13869, %v13870
        %v13872 = vrot.slane %v13871, 4
        %v13873 = vadd.f32 %v13871, %v13872
        %v13874 = vrot.slane %v13873, 2
        %v13875 = vadd.f32 %v13873, %v13874
        %v13876 = vrot.slane %v13875, 1
        %v13877 = vadd.f32 %v13875, %v13876
        %v13878 = vsel %vm450, %v13409, 0.0
        %v13879 = vsel %vm450, %v13458, 0.0
        %v13880 = vadd.f32 %v13878, %v13879
        %v13881 = vsel %vm13836, %v13472, 0.0
        %v13882 = vadd.f32 %v13880, %v13881
        %v13883 = vrot.slane %v13882, 4
        %v13884 = vadd.f32 %v13882, %v13883
        %v13885 = vrot.slane %v13884, 2
        %v13886 = vadd.f32 %v13884, %v13885
        %v13887 = vrot.slane %v13886, 1
        %v13888 = vadd.f32 %v13886, %v13887
        %v13889 = vsel %vm450, %v13521, 0.0
        %v13890 = vsel %vm450, %v13570, 0.0
        %v13891 = vadd.f32 %v13889, %v13890
        %v13892 = vsel %vm13836, %v13584, 0.0
        %v13893 = vadd.f32 %v13891, %v13892
        %v13894 = vrot.slane %v13893, 4
        %v13895 = vadd.f32 %v13893, %v13894
        %v13896 = vrot.slane %v13895, 2
        %v13897 = vadd.f32 %v13895, %v13896
        %v13898 = vrot.slane %v13897, 1
        %v13899 = vadd.f32 %v13897, %v13898
        %v13900 = vsel %vm450, %v13633, 0.0
        %v13901 = vsel %vm450, %v13682, 0.0
        %v13902 = vadd.f32 %v13900, %v13901
        %v13903 = vsel %vm13836, %v13696, 0.0
        %v13904 = vadd.f32 %v13902, %v13903
        %v13905 = vrot.slane %v13904, 4
        %v13906 = vadd.f32 %v13904, %v13905
        %v13907 = vrot.slane %v13906, 2
        %v13908 = vadd.f32 %v13906, %v13907
        %v13909 = vrot.slane %v13908, 1
        %v13910 = vadd.f32 %v13908, %v13909
        %v13911 = vsel %vm450, %v13745, 0.0
        %v13912 = vsel %vm450, %v13794, 0.0
        %v13913 = vadd.f32 %v13911, %v13912
        %v13914 = vsel %vm13836, %v13808, 0.0
        %v13915 = vadd.f32 %v13913, %v13914
        %v13916 = vrot.slane %v13915, 4
        %v13917 = vadd.f32 %v13915, %v13916
        %v13918 = vrot.slane %v13917, 2
        %v13919 = vadd.f32 %v13917, %v13918
        %v13920 = vrot.slane %v13919, 1
        %v13921 = vadd.f32 %v13919, %v13920
        %v13922 = vpack.c.bf16 %v13844, %v13844
        %v13923 = vpack.c.bf16 %v13855, %v13855
        %v13924 = vpack.c.bf16 %v13866, %v13866
        %v13925 = vpack.c.bf16 %v13877, %v13877
        %v13926 = vpack.c.bf16 %v13888, %v13888
        %v13927 = vpack.c.bf16 %v13899, %v13899
        %v13928 = vpack.c.bf16 %v13910, %v13910
        %v13929 = vpack.c.bf16 %v13921, %v13921
        %v13930 = vld [vmem:[%s4] sm:$0xf]
        %v13931 = vld [vmem:[%s4 + $0x4] sm:$0xf]
        %v13932 = vld [vmem:[%s4 + $0x8] sm:$0xf]
        %v13933 = vld [vmem:[%s4 + $0xc] sm:$0xf]
        %v13934 = vld [vmem:[#allocation10] sm:$0x1]
        %v13936 = vlaneseq
        %v13937 = vshrl.u32 %v13936, 7
        %v13938 = vsub.s32 0, %v13937
        %v13939 = vrot.slane %v13934, %v13938
        %v13949 = vunpack.c.l.b16 %v13922
        %v13950 = vunpack.c.l.b16 %v13923
        %v13951 = vunpack.c.l.b16 %v13924
        %v13952 = vunpack.c.l.b16 %v13925
        %v13953 = vunpack.c.l.b16 %v13926
        %v13954 = vunpack.c.l.b16 %v13927
        %v13955 = vunpack.c.l.b16 %v13928
        %v13956 = vunpack.c.l.b16 %v13929
        %v13957 = vsel %vm1597, %v13950, %v13949
        %v13958 = vsel %vm1600, %v13951, %v13957
        %v13959 = vsel %vm1603, %v13952, %v13958
        %v13960 = vsel %vm1606, %v13953, %v13959
        %v13961 = vsel %vm1609, %v13954, %v13960
        %v13962 = vsel %vm1612, %v13955, %v13961
        %v13963 = vsel %vm1615, %v13956, %v13962
        %v13964 = vpack.c.b16 %v13963, %v13963
        %v13969 = vunpack.c.l.b16 %v13930
        %v13970 = vunpack.c.l.b16 %v13931
        %v13971 = vunpack.c.l.b16 %v13932
        %v13972 = vunpack.c.l.b16 %v13933
        %v13973 = vpack.c.b16 %v13970, %v13969
        %v13974 = vpack.c.b16 %v13972, %v13971
        %v13978 = vsel %vm450, %v13964, 0
        %13980 = vmatprep.subr.bf16.mxu0 0
        %13981 = vmatpush1.bf16.msra.mxu0 0
        %13982 = vmatprep.subr.bf16.mxu0 0
        %13983 = vmatpush1.bf16.msra.mxu0 0
        %13984 = vmatprep.subr.bf16.mxu0 0
        %13985 = vmatpush1.bf16.msra.mxu0 0
        %13986 = vmatprep.subr.bf16.mxu0 0
        %13987 = vmatpush1.bf16.msra.mxu0 0
        %13988 = vmatprep.subr.bf16.mxu0 0
        %13989 = vmatpush1.bf16.msra.mxu0 0
        %13990 = vmatprep.subr.bf16.mxu0 0
        %13991 = vmatpush1.bf16.msra.mxu0 0
        %13992 = vmatprep.subr.bf16.mxu0 0
        %13993 = vmatpush1.bf16.msra.mxu0 %v13974
        %13994 = vmatprep.subr.bf16.mxu0 0
        %13995 = vmatpush1.bf16.msra.mxu0 %v13973
        %13996 = vmatprep.subr.bf16.mxu0 0
        %13997 = vmatpush2.bf16.msra.mxu0 0
        %13998 = vmatprep.subr.bf16.mxu0 0
        %13999 = vmatpush2.bf16.msra.mxu0 0
        %14000 = vmatprep.subr.bf16.mxu0 0
        %14001 = vmatpush2.bf16.msra.mxu0 0
        %14002 = vmatprep.subr.bf16.mxu0 0
        %14003 = vmatpush2.bf16.msra.mxu0 0
        %14004 = vmatprep.subr.bf16.mxu0 0
        %14005 = vmatpush2.bf16.msra.mxu0 0
        %14006 = vmatprep.subr.bf16.mxu0 0
        %14007 = vmatpush2.bf16.msra.mxu0 0
        %14008 = vmatprep.subr.bf16.mxu0 0
        %14009 = vmatpush2.bf16.msra.mxu0 0
        %14010 = vmatprep.subr.bf16.mxu0 0
        %14011 = vmatpush2.bf16.msra.mxu0 0
        %14012 = vmatprep.mubr.bf16.mxu0 0
        %14013 = vmatmul.mubr.bf16.gmra.mxu0 %v13978
        %v14014 = vpop.f32.mrf.mxu0
        %v14015 = vadd.f32 %v13939, %v14014
        %v14016 = vpop.f32.mrf.mxu0
        %v14017 = vpop.f32.mrf.mxu0
        %v14018 = vpop.f32.mrf.mxu0
        %14019 = vdwg.mxu0
        %vm14020 = vcmask 130048
        %14021 = vst.msk [vmem:[%s428] sm:$0xff] %vm14020, %v14015
        %s14022 = sand.u32 %s252, 1
        %s14023 = scalar_lea.sflag [#allocation4], %s14022
        %s14024 = sand.u32 %s252, 1
        %s14025 = smul.addr %s14024, 8
        %s14026 = scalar_lea.vmem [#allocation11], %s14025
        // Predicated region
        $region81: #{attention_pool_2d.1} parent=59 // pred_check
          %p14027 = pneg %p262
        $region82: #{attention_pool_2d.1} parent=59 // pred_check_branch
          %14029 = sbr.rel (%p14027) target = $region84
        $region83: #{attention_pool_2d.1} parent=59 // pred_region
          %s14031 = ssub.s32 128, 128
          %14032 = vsyncadd %s14023, %s14031
          %s14033 = smul.addr %s29, 128
          %s14034 = scalar_lea.hbm %s10, %s14033
          %s14036 = sshll.u32 %s14026, 4
          %s14037 = int_to_ptr.vmem [resolvable:$true] %s14036
          %14039 = dma.vmem_to_hbm [thread:$0]  %s14037, 128, %s14034, %s14023
        $region84: #{attention_pool_2d.1} parent=59 // pred_fallthru
          _
      $region60: #{attention_pool_2d.1} parent=5 // pred_fallthru
        _
      %p14040 = scmp.le.s32.totalorder 2, %s24
      // Predicated region
      $region85: #{attention_pool_2d.1} parent=5 // pred_check
        %p14041 = pneg %p14040
      $region86: #{attention_pool_2d.1} parent=5 // pred_check_branch
        %14043 = sbr.rel (%p14041) target = $region88
      $region87: #{attention_pool_2d.1} parent=5 // pred_region
        %s14044 = ssub.s32 %s24, 2
        // Predicated region
        $region89: #{attention_pool_2d.1} parent=87 // pred_check
          %p14045 = pneg %p268
        $region90: #{attention_pool_2d.1} parent=87 // pred_check_branch
          %14047 = sbr.rel (%p14045) target = $region92
        $region91: #{attention_pool_2d.1} parent=87 // pred_region
          %s14048 = sand.u32 %s253, 1
          %s14049 = scalar_lea.sflag [#allocation4], %s14048
          %s14050 = sand.u32 %s253, 1
          %s14051 = smul.addr %s14050, 8
          %s14052 = scalar_lea.vmem [#allocation11], %s14051
          %14053 = dma.done %s14049, 128
        $region92: #{attention_pool_2d.1} parent=87 // pred_fallthru
          _
      $region88: #{attention_pool_2d.1} parent=5 // pred_fallthru
        _
    $region6: #{attention_pool_2d.1} parent=1 // loop_footer
      %s28 = sadd.s32 1, %s24
    $region7: #{attention_pool_2d.1} parent=1 // loop_footer_branch
      %23 = sbr.rel target = $region3
    $region8: #{attention_pool_2d.1} parent=1 // loop_exit
      _
    %14054 = vsyncpa [#allocation3], 1
    %s14055 = scalar_lea.sflag [#allocation3], 1
    %14056 = vsyncpa %s14055, 1
    %14057 = vsyncpa [#allocation6], 1
    %14058 = vsyncpa [#allocation9], 1
    %14059 = vsyncpa [#allocation4], 1
    %s14060 = scalar_lea.sflag [#allocation4], 1
    %14061 = vsyncpa %s14060, 1

</llo_original>
